<compile_context>
chip_gen: v7x
topology: tpu7x:2x2x1
jax: 0.10.0
libtpu: 0.0.40
codegen_flags: <defaults>
</compile_context>

<pallas_src>
import functools

import jax
import jax.numpy as jnp
import numpy as np
from jax.experimental import pallas as pl
from jax.experimental.pallas import tpu as pltpu

NEG_SLOPE = 0.1          # matches F.leaky_relu(x, 0.1) in the PyTorch module
BN_EPS = 1e-5            # nn.BatchNorm2d default
_VMEM_BUDGET = 8 * 1024 * 1024   # conservative working-set budget (v7x-safe)


def _leaky(v):
    return jnp.where(v >= 0.0, v, NEG_SLOPE * v)


# ----------------------------------------------------------------------------
# Pallas kernels
# ----------------------------------------------------------------------------
def _matmul_bias_act_kernel(x_ref, w_ref, b_ref, o_ref, *, act):
    """Tiled conv-as-matmul: [tm, K] @ [K, C] + bias, optional fused activation."""
    y = jnp.dot(x_ref[...], w_ref[...], preferred_element_type=jnp.float32)
    y = y + b_ref[...]
    if act == "leaky":
        y = _leaky(y)
    elif act == "sigmoid":
        y = jax.nn.sigmoid(y)
    o_ref[...] = y.astype(o_ref.dtype)


def _conv_bn_leaky_kernel(x_ref, w_ref, b_ref, g_ref, bt_ref, o_ref, *, n_rows):
    """Whole layer in one block: matmul + batch-stat BN + leaky, all fused."""
    y = jnp.dot(x_ref[...], w_ref[...], preferred_element_type=jnp.float32)
    y = y + b_ref[...]
    inv_m = 1.0 / n_rows
    mean = jnp.sum(y, axis=0, keepdims=True) * inv_m
    var = jnp.sum(y * y, axis=0, keepdims=True) * inv_m - mean * mean
    scale = g_ref[...] * jax.lax.rsqrt(var + BN_EPS)
    shift = bt_ref[...] - mean * scale
    o_ref[...] = _leaky(y * scale + shift).astype(o_ref.dtype)


def _conv_stats_kernel(x_ref, w_ref, b_ref, y_ref, s_ref):
    """Fallback (large M): tiled matmul with per-channel sum / sum-sq fused as a
    second output accumulated across the row-grid axis."""
    @pl.when(pl.program_id(0) == 0)
    def _init():
        s_ref[...] = jnp.zeros_like(s_ref)

    y = jnp.dot(x_ref[...], w_ref[...], preferred_element_type=jnp.float32)
    y = y + b_ref[...]
    y_ref[...] = y
    s_ref[0:1, :] += jnp.sum(y, axis=0, keepdims=True)
    s_ref[1:2, :] += jnp.sum(y * y, axis=0, keepdims=True)


def _scale_shift_leaky_kernel(x_ref, s_ref, t_ref, o_ref):
    """Fallback second pass: x*scale + shift, then leaky_relu."""
    o_ref[...] = _leaky(x_ref[...] * s_ref[...] + t_ref[...]).astype(o_ref.dtype)


def _conv_bn_leaky_final_kernel(x_ref, w_ref, b_ref, g_ref, bt_ref,
                                wf_ref, sel_ref, bf_ref, o_ref, *, n_rows):
    """conv5 + BN + leaky + conv_final(2x2 valid, -> 1x1) + sigmoid, fused.

    The 2x2 final conv on a 2x2 input is a full per-sample contraction, so it is
    an elementwise product with a tiled weight + a per-sample row reduction
    (selection matmul) -- no im2col / extra pallas_call needed.
    """
    y = jnp.dot(x_ref[...], w_ref[...], preferred_element_type=jnp.float32)
    y = y + b_ref[...]
    inv_m = 1.0 / n_rows
    mean = jnp.sum(y, axis=0, keepdims=True) * inv_m
    var = jnp.sum(y * y, axis=0, keepdims=True) * inv_m - mean * mean
    scale = g_ref[...] * jax.lax.rsqrt(var + BN_EPS)
    shift = bt_ref[...] - mean * scale
    a = _leaky(y * scale + shift)                       # [n_rows, C], f32
    z = a * wf_ref[...]                                 # conv_final products
    per_sample = jnp.dot(sel_ref[...], z,               # sum the 4 spatial rows
                         preferred_element_type=jnp.float32,
                         precision=jax.lax.Precision.HIGHEST)   # tiny, exact
    logit = jnp.sum(per_sample, axis=1, keepdims=True) + bf_ref[...]
    o_ref[...] = jax.nn.sigmoid(logit).astype(o_ref.dtype)


# ----------------------------------------------------------------------------
# Pallas wrappers
# ----------------------------------------------------------------------------
def _pick_row_tile(m, per_row_bytes):
    """Largest row tile (divisor of m) whose working set stays under budget."""
    max_rows = max(8, _VMEM_BUDGET // max(per_row_bytes, 1))
    if m <= max_rows:
        return m
    for t in (8192, 4096, 2048, 1024, 512, 256, 128, 64, 32, 16, 8):
        if t <= max_rows and m % t == 0:
            return t
    return m  # TODO(synk): ragged M with no aligned divisor falls back to one block


def conv_act(patches, w2d, bias, act, out_dtype):
    """patches: [M, K], w2d: [K, C], bias: [C]. Tiled matmul + bias + activation."""
    M, K = patches.shape
    C = w2d.shape[1]
    per_row = 2 * K * patches.dtype.itemsize + 4 * C * 4
    tm = _pick_row_tile(M, per_row)
    return pl.pallas_call(
        functools.partial(_matmul_bias_act_kernel, act=act),
        out_shape=jax.ShapeDtypeStruct((M, C), out_dtype),
        grid=(M // tm,),
        in_specs=[
            pl.BlockSpec((tm, K), lambda i: (i, 0)),
            pl.BlockSpec((K, C), lambda i: (0, 0)),
            pl.BlockSpec((1, C), lambda i: (0, 0)),
        ],
        out_specs=pl.BlockSpec((tm, C), lambda i: (i, 0)),
        compiler_params=pltpu.CompilerParams(dimension_semantics=("parallel",)),
    )(patches, w2d, bias.reshape(1, C))


def conv_bn_leaky(patches, w2d, bias, gamma, beta, out_dtype=jnp.bfloat16):
    """Conv (as matmul) + training-mode BatchNorm + leaky_relu."""
    M, K = patches.shape
    C = w2d.shape[1]
    fused_bytes = (2 * (M * K * patches.dtype.itemsize + K * C * w2d.dtype.itemsize)
                   + 3 * M * C * 4)
    if fused_bytes <= _VMEM_BUDGET:
        # Fast path: whole layer in one block, fully fused, single pallas_call.
        return pl.pallas_call(
            functools.partial(_conv_bn_leaky_kernel, n_rows=M),
            out_shape=jax.ShapeDtypeStruct((M, C), out_dtype),
            grid=(1,),
            in_specs=[
                pl.BlockSpec((M, K), lambda i: (0, 0)),
                pl.BlockSpec((K, C), lambda i: (0, 0)),
                pl.BlockSpec((1, C), lambda i: (0, 0)),
                pl.BlockSpec((1, C), lambda i: (0, 0)),
                pl.BlockSpec((1, C), lambda i: (0, 0)),
            ],
            out_specs=pl.BlockSpec((M, C), lambda i: (0, 0)),
            compiler_params=pltpu.CompilerParams(dimension_semantics=("arbitrary",)),
        )(patches, w2d, bias.reshape(1, C), gamma.reshape(1, C), beta.reshape(1, C))

    # Fallback for large M: tiled conv with stats accumulated across the row
    # grid (second output, same block each step), then one apply pass.
    tm = _pick_row_tile(M, 2 * K * patches.dtype.itemsize + 6 * C * 4)
    y, stats = pl.pallas_call(
        _conv_stats_kernel,
        out_shape=(jax.ShapeDtypeStruct((M, C), jnp.float32),
                   jax.ShapeDtypeStruct((2, C), jnp.float32)),
        grid=(M // tm,),
        in_specs=[
            pl.BlockSpec((tm, K), lambda i: (i, 0)),
            pl.BlockSpec((K, C), lambda i: (0, 0)),
            pl.BlockSpec((1, C), lambda i: (0, 0)),
        ],
        out_specs=(pl.BlockSpec((tm, C), lambda i: (i, 0)),
                   pl.BlockSpec((2, C), lambda i: (0, 0))),
        compiler_params=pltpu.CompilerParams(dimension_semantics=("arbitrary",)),
    )(patches, w2d, bias.reshape(1, C))
    mean = stats[0] / M
    var = stats[1] / M - mean * mean
    scale = gamma / jnp.sqrt(var + BN_EPS)
    shift = beta - mean * scale
    tm2 = _pick_row_tile(M, 12 * C)
    return pl.pallas_call(
        _scale_shift_leaky_kernel,
        out_shape=jax.ShapeDtypeStruct((M, C), out_dtype),
        grid=(M // tm2,),
        in_specs=[
            pl.BlockSpec((tm2, C), lambda i: (i, 0)),
            pl.BlockSpec((1, C), lambda i: (0, 0)),
            pl.BlockSpec((1, C), lambda i: (0, 0)),
        ],
        out_specs=pl.BlockSpec((tm2, C), lambda i: (i, 0)),
        compiler_params=pltpu.CompilerParams(dimension_semantics=("parallel",)),
    )(y, scale.reshape(1, C), shift.reshape(1, C))


def conv_bn_leaky_final(patches, w2d, bias, gamma, beta, wf, bf, n_batch):
    """Fused tail: conv5 + BN + leaky + conv_final(2x2 valid) + sigmoid -> [N, 1]."""
    M, K = patches.shape
    C = w2d.shape[1]
    ppos = M // n_batch          # spatial positions per sample (2x2 -> 4)
    fused_bytes = (2 * (M * K * patches.dtype.itemsize + K * C * w2d.dtype.itemsize)
                   + 4 * M * C * 4)
    if fused_bytes <= _VMEM_BUDGET:
        wf_tiled = jnp.tile(wf.reshape(ppos, C).astype(jnp.float32), (n_batch, 1))
        sel = (jnp.arange(M)[None, :] // ppos
               == jnp.arange(n_batch)[:, None]).astype(jnp.float32)
        return pl.pallas_call(
            functools.partial(_conv_bn_leaky_final_kernel, n_rows=M),
            out_shape=jax.ShapeDtypeStruct((n_batch, 1), jnp.float32),
            grid=(1,),
            in_specs=[
                pl.BlockSpec((M, K), lambda i: (0, 0)),
                pl.BlockSpec((K, C), lambda i: (0, 0)),
                pl.BlockSpec((1, C), lambda i: (0, 0)),
                pl.BlockSpec((1, C), lambda i: (0, 0)),
                pl.BlockSpec((1, C), lambda i: (0, 0)),
                pl.BlockSpec((M, C), lambda i: (0, 0)),
                pl.BlockSpec((n_batch, M), lambda i: (0, 0)),
                pl.BlockSpec((1, 1), lambda i: (0, 0)),
            ],
            out_specs=pl.BlockSpec((n_batch, 1), lambda i: (0, 0)),
            compiler_params=pltpu.CompilerParams(dimension_semantics=("arbitrary",)),
        )(patches, w2d, bias.reshape(1, C), gamma.reshape(1, C),
          beta.reshape(1, C), wf_tiled, sel, bf.reshape(1, 1))

    # Fallback: fused/tiled conv5+BN+leaky, then conv_final as matmul + sigmoid.
    a = conv_bn_leaky(patches, w2d, bias, gamma, beta, out_dtype=jnp.float32)
    a = a.reshape(n_batch, ppos * C)
    wf_full = wf.reshape(ppos * C, 1).astype(jnp.float32)
    return conv_act(a, wf_full, bf, act="sigmoid", out_dtype=jnp.float32)


# ----------------------------------------------------------------------------
# Glue (im2col, parameter setup, forward)
# ----------------------------------------------------------------------------
def im2col(x_nhwc, kh, kw, stride, pad):
    """Returns patches [N*Ho*Wo, kh*kw*Cin] with column order (kh, kw, Cin)."""
    N, H, W, C = x_nhwc.shape
    xp = jnp.pad(x_nhwc, ((0, 0), (pad, pad), (pad, pad), (0, 0)))
    Ho = (H + 2 * pad - kh) // stride + 1
    Wo = (W + 2 * pad - kw) // stride + 1
    cols = []
    for i in range(kh):
        for j in range(kw):
            cols.append(
                xp[:, i:i + (Ho - 1) * stride + 1:stride,
                      j:j + (Wo - 1) * stride + 1:stride, :]
            )
    patches = jnp.stack(cols, axis=3)                 # (N, Ho, Wo, kh*kw, C)
    return patches.reshape(N * Ho * Wo, kh * kw * C), Ho, Wo


def init_params(key):
    conv_shapes = {
        "1": (4, 4, 3, 16),
        "2": (4, 4, 16, 32),
        "3": (4, 4, 32, 64),
        "4": (4, 4, 64, 128),
        "5": (4, 4, 128, 256),
        "f": (2, 2, 256, 1),
    }
    params = {}
    keys = jax.random.split(key, 2 * len(conv_shapes))
    for idx, (name, shp) in enumerate(conv_shapes.items()):
        fan_in = shp[0] * shp[1] * shp[2]
        params["w" + name] = (jax.random.normal(keys[2 * idx], shp, jnp.float32)
                              / np.sqrt(fan_in))
        params["b" + name] = 0.01 * jax.random.normal(keys[2 * idx + 1],
                                                      (shp[3],), jnp.float32)
    for i, (name, c) in enumerate(zip(("2", "3", "4", "5"), (32, 64, 128, 256))):
        kg, kb = jax.random.split(jax.random.fold_in(key, 100 + i))
        params["gamma" + name] = 1.0 + 0.1 * jax.random.normal(kg, (c,), jnp.float32)
        params["beta" + name] = 0.1 * jax.random.normal(kb, (c,), jnp.float32)
    return params


def discriminator_forward(params, x_nchw):
    N = x_nchw.shape[0]
    # NCHW -> NHWC; activations travel between layers in bf16 (MXU-native,
    # halves im2col HBM traffic). All in-kernel elementwise/BN math is f32.
    x = jnp.transpose(x_nchw, (0, 2, 3, 1)).astype(jnp.bfloat16)

    def flat_w(name):
        w = params["w" + name]
        kh, kw, cin, cout = w.shape
        return w.reshape(kh * kw * cin, cout).astype(jnp.bfloat16), cout

    # conv1 + leaky_relu(0.1), fused
    patches, Ho, Wo = im2col(x, 4, 4, 2, 1)
    w, cout = flat_w("1")
    y = conv_act(patches, w, params["b1"], act="leaky", out_dtype=jnp.bfloat16)
    x = y.reshape(N, Ho, Wo, cout)

    # conv{2,3,4} + BatchNorm(batch stats) + leaky, one fused pallas_call each
    for name in ("2", "3", "4"):
        patches, Ho, Wo = im2col(x, 4, 4, 2, 1)
        w, cout = flat_w(name)
        y = conv_bn_leaky(patches, w, params["b" + name],
                          params["gamma" + name], params["beta" + name])
        x = y.reshape(N, Ho, Wo, cout)

    # conv5 + BN + leaky + conv_final + sigmoid
    patches, Ho, Wo = im2col(x, 4, 4, 2, 1)
    w, cout = flat_w("5")
    if (Ho, Wo) == (2, 2):
        out = conv_bn_leaky_final(patches, w, params["b5"], params["gamma5"],
                                  params["beta5"], params["wf"], params["bf"], N)
        return out.reshape(N, 1, 1, 1)                 # NCHW (H=W=1)

    # General-shape tail (input spatial != 64): unfused final conv.
    y = conv_bn_leaky(patches, w, params["b5"], params["gamma5"], params["beta5"])
    x = y.reshape(N, Ho, Wo, cout)
    pf, Hf, Wf = im2col(x, 2, 2, 1, 0)
    wf = params["wf"].reshape(2 * 2 * cout, 1).astype(jnp.bfloat16)
    out = conv_act(pf, wf, params["bf"], act="sigmoid", out_dtype=jnp.float32)
    return jnp.transpose(out.reshape(N, Hf, Wf, 1), (0, 3, 1, 2))


# ----------------------------------------------------------------------------
# Pure-JAX reference (mirrors the bf16 MXU casting of the kernels)
# ----------------------------------------------------------------------------
def reference_forward(params, x_nchw):
    x = jnp.transpose(x_nchw, (0, 2, 3, 1))

    def conv_bf16(v, w, b, stride, pad):
        y = jax.lax.conv_general_dilated(
            v.astype(jnp.bfloat16), w.astype(jnp.bfloat16),
            (stride, stride), ((pad, pad), (pad, pad)),
            dimension_numbers=("NHWC", "HWIO", "NHWC"),
            preferred_element_type=jnp.float32)
        return y + b

    def leaky(v):
        return jnp.where(v >= 0.0, v, NEG_SLOPE * v)

    def bn(v, g, bt):
        m = jnp.mean(v, axis=(0, 1, 2))
        var = jnp.mean(jnp.square(v - m), axis=(0, 1, 2))
        return (v - m) / jnp.sqrt(var + BN_EPS) * g + bt

    x = leaky(conv_bf16(x, params["w1"], params["b1"], 2, 1))
    for name in ("2", "3", "4", "5"):
        x = leaky(bn(conv_bf16(x, params["w" + name], params["b" + name], 2, 1),
                     params["gamma" + name], params["beta" + name]))
    # final 2x2 conv stays in f32 (the fused kernel keeps this contraction in f32)
    y = jax.lax.conv_general_dilated(
        x, params["wf"].astype(jnp.float32), (1, 1), ((0, 0), (0, 0)),
        dimension_numbers=("NHWC", "HWIO", "NHWC"),
        precision=jax.lax.Precision.HIGHEST) + params["bf"]
    return jnp.transpose(jax.nn.sigmoid(y), (0, 3, 1, 2))


# ----------------------------------------------------------------------------
if __name__ == "__main__":
    key = jax.random.PRNGKey(0)
    pkey, xkey = jax.random.split(key)
    params = init_params(pkey)

    # 64x64 input -> 32,16,8,4,2 -> conv_final(2x2) -> 1x1
    x = jax.random.normal(xkey, (2, 3, 64, 64), jnp.float32)

    fwd = jax.jit(functools.partial(discriminator_forward, params))
    out = jax.block_until_ready(fwd(x))
    assert out.shape == (2, 1, 1, 1), out.shape

    ref = jax.block_until_ready(jax.jit(functools.partial(reference_forward, params))(x))
    np.testing.assert_allclose(np.asarray(out, dtype=np.float32),
                               np.asarray(ref, dtype=np.float32),
                               rtol=2e-3, atol=2e-3)

    print("KERNEL_OK")
</pallas_src>

<mosaic_0001>
module attributes {stable_mosaic.version = 11 : i64} {
  func.func @_matmul_bias_act_kernel(%arg0: i32, %arg1: memref<2048x48xbf16, #tpu.memory_space<vmem>>, %arg2: memref<48x16xbf16, #tpu.memory_space<vmem>>, %arg3: memref<1x16xf32, #tpu.memory_space<vmem>>, %arg4: memref<2048x16xbf16, #tpu.memory_space<vmem>>) attributes {dimension_semantics = [#tpu.dimension_semantics<parallel>], iteration_bounds = array<i64: 1>, scalar_prefetch = 0 : i64, scratch_operands = 0 : i64, tpu.core_type = #tpu.core_type<tc>, window_params = [{transform_indices = @transform_0, window_bounds = array<i64: 2048, 48>}, {pipeline_mode = #tpu.pipeline_mode<synchronous>, transform_indices = @transform_1, window_bounds = array<i64: 48, 16>}, {pipeline_mode = #tpu.pipeline_mode<synchronous>, transform_indices = @transform_2, window_bounds = array<i64: 1, 16>}, {transform_indices = @transform_3, window_bounds = array<i64: 2048, 16>}]} {
    %c0 = arith.constant 0 : index
    %c0_0 = arith.constant 0 : index
    %0 = vector.load %arg1[%c0, %c0_0] : memref<2048x48xbf16, #tpu.memory_space<vmem>>, vector<2048x48xbf16>
    %c0_1 = arith.constant 0 : index
    %c0_2 = arith.constant 0 : index
    %1 = vector.load %arg2[%c0_1, %c0_2] : memref<48x16xbf16, #tpu.memory_space<vmem>>, vector<48x16xbf16>
    %cst = arith.constant dense<0.000000e+00> : vector<2048x16xf32>
    %2 = tpu.matmul %0, %1, %cst {dimension_numbers = #tpu.dot_dimension_numbers<[1], [0], [0], [1], [0, 0, 1, 1], [], []>} : vector<2048x48xbf16>, vector<48x16xbf16>, vector<2048x16xf32> -> vector<2048x16xf32>
    %c0_3 = arith.constant 0 : index
    %c0_4 = arith.constant 0 : index
    %3 = vector.load %arg3[%c0_3, %c0_4] : memref<1x16xf32, #tpu.memory_space<vmem>>, vector<1x16xf32>
    %4 = vector.broadcast %3 : vector<1x16xf32> to vector<2048x16xf32>
    %5 = arith.addf %2, %4 : vector<2048x16xf32>
    %cst_5 = arith.constant 0.000000e+00 : f32
    %6 = vector.broadcast %cst_5 : f32 to vector<2048x16xf32>
    %7 = arith.cmpf oge, %5, %6 : vector<2048x16xf32>
    %cst_6 = arith.constant 1.000000e-01 : f32
    %8 = vector.broadcast %cst_6 : f32 to vector<2048x16xf32>
    %9 = arith.mulf %8, %5 : vector<2048x16xf32>
    %10 = arith.select %7, %5, %9 : vector<2048x16xi1>, vector<2048x16xf32>
    %11 = arith.truncf %10 : vector<2048x16xf32> to vector<2048x16xbf16>
    %c0_7 = arith.constant 0 : index
    %c0_8 = arith.constant 0 : index
    %12 = vector.load %arg4[%c0_7, %c0_8] : memref<2048x16xbf16, #tpu.memory_space<vmem>>, vector<2048x16xbf16>
    tpu.vector_store %arg4[%c0_7, %c0_8], %11 {strides = array<i32>} : memref<2048x16xbf16, #tpu.memory_space<vmem>>, vector<2048x16xbf16>,
    return
  }
  func.func @transform_0(%arg0: i32) -> (i32, i32) {
    %c0_i32 = arith.constant 0 : i32
    %c0_i32_0 = arith.constant 0 : i32
    return %arg0, %c0_i32 : i32, i32
  }
  func.func @transform_1(%arg0: i32) -> (i32, i32) {
    %c0_i32 = arith.constant 0 : i32
    %c0_i32_0 = arith.constant 0 : i32
    %c0_i32_1 = arith.constant 0 : i32
    return %c0_i32, %c0_i32_0 : i32, i32
  }
  func.func @transform_2(%arg0: i32) -> (i32, i32) {
    %c0_i32 = arith.constant 0 : i32
    %c0_i32_0 = arith.constant 0 : i32
    %c0_i32_1 = arith.constant 0 : i32
    return %c0_i32, %c0_i32_0 : i32, i32
  }
  func.func @transform_3(%arg0: i32) -> (i32, i32) {
    %c0_i32 = arith.constant 0 : i32
    %c0_i32_0 = arith.constant 0 : i32
    return %arg0, %c0_i32 : i32, i32
  }
}

module attributes {stable_mosaic.version = 11 : i64} {
  func.func @_conv_bn_leaky_kernel(%arg0: i32, %arg1: memref<512x256xbf16, #tpu.memory_space<vmem>>, %arg2: memref<256x32xbf16, #tpu.memory_space<vmem>>, %arg3: memref<1x32xf32, #tpu.memory_space<vmem>>, %arg4: memref<1x32xf32, #tpu.memory_space<vmem>>, %arg5: memref<1x32xf32, #tpu.memory_space<vmem>>, %arg6: memref<512x32xbf16, #tpu.memory_space<vmem>>) attributes {dimension_semantics = [#tpu.dimension_semantics<arbitrary>], iteration_bounds = array<i64: 1>, scalar_prefetch = 0 : i64, scratch_operands = 0 : i64, tpu.core_type = #tpu.core_type<tc>, window_params = [{pipeline_mode = #tpu.pipeline_mode<synchronous>, transform_indices = @transform_0, window_bounds = array<i64: 512, 256>}, {pipeline_mode = #tpu.pipeline_mode<synchronous>, transform_indices = @transform_1, window_bounds = array<i64: 256, 32>}, {pipeline_mode = #tpu.pipeline_mode<synchronous>, transform_indices = @transform_2, window_bounds = array<i64: 1, 32>}, {pipeline_mode = #tpu.pipeline_mode<synchronous>, transform_indices = @transform_3, window_bounds = array<i64: 1, 32>}, {pipeline_mode = #tpu.pipeline_mode<synchronous>, transform_indices = @transform_4, window_bounds = array<i64: 1, 32>}, {pipeline_mode = #tpu.pipeline_mode<synchronous>, transform_indices = @transform_5, window_bounds = array<i64: 512, 32>}]} {
    %c0 = arith.constant 0 : index
    %c0_0 = arith.constant 0 : index
    %0 = vector.load %arg1[%c0, %c0_0] : memref<512x256xbf16, #tpu.memory_space<vmem>>, vector<512x256xbf16>
    %c0_1 = arith.constant 0 : index
    %c0_2 = arith.constant 0 : index
    %1 = vector.load %arg2[%c0_1, %c0_2] : memref<256x32xbf16, #tpu.memory_space<vmem>>, vector<256x32xbf16>
    %cst = arith.constant dense<0.000000e+00> : vector<512x32xf32>
    %2 = tpu.matmul %0, %1, %cst {dimension_numbers = #tpu.dot_dimension_numbers<[1], [0], [0], [1], [0, 0, 1, 1], [], []>} : vector<512x256xbf16>, vector<256x32xbf16>, vector<512x32xf32> -> vector<512x32xf32>
    %c0_3 = arith.constant 0 : index
    %c0_4 = arith.constant 0 : index
    %3 = vector.load %arg3[%c0_3, %c0_4] : memref<1x32xf32, #tpu.memory_space<vmem>>, vector<1x32xf32>
    %4 = vector.broadcast %3 : vector<1x32xf32> to vector<512x32xf32>
    %5 = arith.addf %2, %4 : vector<512x32xf32>
    %cst_5 = arith.constant dense<0.000000e+00> : vector<32xf32>
    %6 = vector.multi_reduction <add>, %5, %cst_5 [0] : vector<512x32xf32> to vector<32xf32>
    %7 = vector.shape_cast %6 : vector<32xf32> to vector<1x32xf32>
    %cst_6 = arith.constant 0.001953125 : f32
    %8 = vector.broadcast %cst_6 : f32 to vector<1x32xf32>
    %9 = arith.mulf %7, %8 : vector<1x32xf32>
    %10 = arith.mulf %5, %5 : vector<512x32xf32>
    %cst_7 = arith.constant dense<0.000000e+00> : vector<32xf32>
    %11 = vector.multi_reduction <add>, %10, %cst_7 [0] : vector<512x32xf32> to vector<32xf32>
    %12 = vector.shape_cast %11 : vector<32xf32> to vector<1x32xf32>
    %cst_8 = arith.constant 0.001953125 : f32
    %13 = vector.broadcast %cst_8 : f32 to vector<1x32xf32>
    %14 = arith.mulf %12, %13 : vector<1x32xf32>
    %15 = arith.mulf %9, %9 : vector<1x32xf32>
    %16 = arith.subf %14, %15 : vector<1x32xf32>
    %c0_9 = arith.constant 0 : index
    %c0_10 = arith.constant 0 : index
    %17 = vector.load %arg4[%c0_9, %c0_10] : memref<1x32xf32, #tpu.memory_space<vmem>>, vector<1x32xf32>
    %cst_11 = arith.constant 9.99999974E-6 : f32
    %18 = vector.broadcast %cst_11 : f32 to vector<1x32xf32>
    %19 = arith.addf %16, %18 : vector<1x32xf32>
    %20 = math.rsqrt %19 : vector<1x32xf32>
    %21 = arith.mulf %17, %20 : vector<1x32xf32>
    %c0_12 = arith.constant 0 : index
    %c0_13 = arith.constant 0 : index
    %22 = vector.load %arg5[%c0_12, %c0_13] : memref<1x32xf32, #tpu.memory_space<vmem>>, vector<1x32xf32>
    %23 = arith.mulf %9, %21 : vector<1x32xf32>
    %24 = arith.subf %22, %23 : vector<1x32xf32>
    %25 = vector.broadcast %21 : vector<1x32xf32> to vector<512x32xf32>
    %26 = arith.mulf %5, %25 : vector<512x32xf32>
    %27 = vector.broadcast %24 : vector<1x32xf32> to vector<512x32xf32>
    %28 = arith.addf %26, %27 : vector<512x32xf32>
    %cst_14 = arith.constant 0.000000e+00 : f32
    %29 = vector.broadcast %cst_14 : f32 to vector<512x32xf32>
    %30 = arith.cmpf oge, %28, %29 : vector<512x32xf32>
    %cst_15 = arith.constant 1.000000e-01 : f32
    %31 = vector.broadcast %cst_15 : f32 to vector<512x32xf32>
    %32 = arith.mulf %31, %28 : vector<512x32xf32>
    %33 = arith.select %30, %28, %32 : vector<512x32xi1>, vector<512x32xf32>
    %34 = arith.truncf %33 : vector<512x32xf32> to vector<512x32xbf16>
    %c0_16 = arith.constant 0 : index
    %c0_17 = arith.constant 0 : index
    %35 = vector.load %arg6[%c0_16, %c0_17] : memref<512x32xbf16, #tpu.memory_space<vmem>>, vector<512x32xbf16>
    tpu.vector_store %arg6[%c0_16, %c0_17], %34 {strides = array<i32>} : memref<512x32xbf16, #tpu.memory_space<vmem>>, vector<512x32xbf16>,
    return
  }
  func.func @transform_0(%arg0: i32) -> (i32, i32) {
    %c0_i32 = arith.constant 0 : i32
    %c0_i32_0 = arith.constant 0 : i32
    %c0_i32_1 = arith.constant 0 : i32
    return %c0_i32, %c0_i32_0 : i32, i32
  }
  func.func @transform_1(%arg0: i32) -> (i32, i32) {
    %c0_i32 = arith.constant 0 : i32
    %c0_i32_0 = arith.constant 0 : i32
    %c0_i32_1 = arith.constant 0 : i32
    return %c0_i32, %c0_i32_0 : i32, i32
  }
  func.func @transform_2(%arg0: i32) -> (i32, i32) {
    %c0_i32 = arith.constant 0 : i32
    %c0_i32_0 = arith.constant 0 : i32
    %c0_i32_1 = arith.constant 0 : i32
    return %c0_i32, %c0_i32_0 : i32, i32
  }
  func.func @transform_3(%arg0: i32) -> (i32, i32) {
    %c0_i32 = arith.constant 0 : i32
    %c0_i32_0 = arith.constant 0 : i32
    %c0_i32_1 = arith.constant 0 : i32
    return %c0_i32, %c0_i32_0 : i32, i32
  }
  func.func @transform_4(%arg0: i32) -> (i32, i32) {
    %c0_i32 = arith.constant 0 : i32
    %c0_i32_0 = arith.constant 0 : i32
    %c0_i32_1 = arith.constant 0 : i32
    return %c0_i32, %c0_i32_0 : i32, i32
  }
  func.func @transform_5(%arg0: i32) -> (i32, i32) {
    %c0_i32 = arith.constant 0 : i32
    %c0_i32_0 = arith.constant 0 : i32
    %c0_i32_1 = arith.constant 0 : i32
    return %c0_i32, %c0_i32_0 : i32, i32
  }
}

module attributes {stable_mosaic.version = 11 : i64} {
  func.func @_conv_bn_leaky_kernel(%arg0: i32, %arg1: memref<128x512xbf16, #tpu.memory_space<vmem>>, %arg2: memref<512x64xbf16, #tpu.memory_space<vmem>>, %arg3: memref<1x64xf32, #tpu.memory_space<vmem>>, %arg4: memref<1x64xf32, #tpu.memory_space<vmem>>, %arg5: memref<1x64xf32, #tpu.memory_space<vmem>>, %arg6: memref<128x64xbf16, #tpu.memory_space<vmem>>) attributes {dimension_semantics = [#tpu.dimension_semantics<arbitrary>], iteration_bounds = array<i64: 1>, scalar_prefetch = 0 : i64, scratch_operands = 0 : i64, tpu.core_type = #tpu.core_type<tc>, window_params = [{pipeline_mode = #tpu.pipeline_mode<synchronous>, transform_indices = @transform_0, window_bounds = array<i64: 128, 512>}, {pipeline_mode = #tpu.pipeline_mode<synchronous>, transform_indices = @transform_1, window_bounds = array<i64: 512, 64>}, {pipeline_mode = #tpu.pipeline_mode<synchronous>, transform_indices = @transform_2, window_bounds = array<i64: 1, 64>}, {pipeline_mode = #tpu.pipeline_mode<synchronous>, transform_indices = @transform_3, window_bounds = array<i64: 1, 64>}, {pipeline_mode = #tpu.pipeline_mode<synchronous>, transform_indices = @transform_4, window_bounds = array<i64: 1, 64>}, {pipeline_mode = #tpu.pipeline_mode<synchronous>, transform_indices = @transform_5, window_bounds = array<i64: 128, 64>}]} {
    %c0 = arith.constant 0 : index
    %c0_0 = arith.constant 0 : index
    %0 = vector.load %arg1[%c0, %c0_0] : memref<128x512xbf16, #tpu.memory_space<vmem>>, vector<128x512xbf16>
    %c0_1 = arith.constant 0 : index
    %c0_2 = arith.constant 0 : index
    %1 = vector.load %arg2[%c0_1, %c0_2] : memref<512x64xbf16, #tpu.memory_space<vmem>>, vector<512x64xbf16>
    %cst = arith.constant dense<0.000000e+00> : vector<128x64xf32>
    %2 = tpu.matmul %0, %1, %cst {dimension_numbers = #tpu.dot_dimension_numbers<[1], [0], [0], [1], [0, 0, 1, 1], [], []>} : vector<128x512xbf16>, vector<512x64xbf16>, vector<128x64xf32> -> vector<128x64xf32>
    %c0_3 = arith.constant 0 : index
    %c0_4 = arith.constant 0 : index
    %3 = vector.load %arg3[%c0_3, %c0_4] : memref<1x64xf32, #tpu.memory_space<vmem>>, vector<1x64xf32>
    %4 = vector.broadcast %3 : vector<1x64xf32> to vector<128x64xf32>
    %5 = arith.addf %2, %4 : vector<128x64xf32>
    %cst_5 = arith.constant dense<0.000000e+00> : vector<64xf32>
    %6 = vector.multi_reduction <add>, %5, %cst_5 [0] : vector<128x64xf32> to vector<64xf32>
    %7 = vector.shape_cast %6 : vector<64xf32> to vector<1x64xf32>
    %cst_6 = arith.constant 7.812500e-03 : f32
    %8 = vector.broadcast %cst_6 : f32 to vector<1x64xf32>
    %9 = arith.mulf %7, %8 : vector<1x64xf32>
    %10 = arith.mulf %5, %5 : vector<128x64xf32>
    %cst_7 = arith.constant dense<0.000000e+00> : vector<64xf32>
    %11 = vector.multi_reduction <add>, %10, %cst_7 [0] : vector<128x64xf32> to vector<64xf32>
    %12 = vector.shape_cast %11 : vector<64xf32> to vector<1x64xf32>
    %cst_8 = arith.constant 7.812500e-03 : f32
    %13 = vector.broadcast %cst_8 : f32 to vector<1x64xf32>
    %14 = arith.mulf %12, %13 : vector<1x64xf32>
    %15 = arith.mulf %9, %9 : vector<1x64xf32>
    %16 = arith.subf %14, %15 : vector<1x64xf32>
    %c0_9 = arith.constant 0 : index
    %c0_10 = arith.constant 0 : index
    %17 = vector.load %arg4[%c0_9, %c0_10] : memref<1x64xf32, #tpu.memory_space<vmem>>, vector<1x64xf32>
    %cst_11 = arith.constant 9.99999974E-6 : f32
    %18 = vector.broadcast %cst_11 : f32 to vector<1x64xf32>
    %19 = arith.addf %16, %18 : vector<1x64xf32>
    %20 = math.rsqrt %19 : vector<1x64xf32>
    %21 = arith.mulf %17, %20 : vector<1x64xf32>
    %c0_12 = arith.constant 0 : index
    %c0_13 = arith.constant 0 : index
    %22 = vector.load %arg5[%c0_12, %c0_13] : memref<1x64xf32, #tpu.memory_space<vmem>>, vector<1x64xf32>
    %23 = arith.mulf %9, %21 : vector<1x64xf32>
    %24 = arith.subf %22, %23 : vector<1x64xf32>
    %25 = vector.broadcast %21 : vector<1x64xf32> to vector<128x64xf32>
    %26 = arith.mulf %5, %25 : vector<128x64xf32>
    %27 = vector.broadcast %24 : vector<1x64xf32> to vector<128x64xf32>
    %28 = arith.addf %26, %27 : vector<128x64xf32>
    %cst_14 = arith.constant 0.000000e+00 : f32
    %29 = vector.broadcast %cst_14 : f32 to vector<128x64xf32>
    %30 = arith.cmpf oge, %28, %29 : vector<128x64xf32>
    %cst_15 = arith.constant 1.000000e-01 : f32
    %31 = vector.broadcast %cst_15 : f32 to vector<128x64xf32>
    %32 = arith.mulf %31, %28 : vector<128x64xf32>
    %33 = arith.select %30, %28, %32 : vector<128x64xi1>, vector<128x64xf32>
    %34 = arith.truncf %33 : vector<128x64xf32> to vector<128x64xbf16>
    %c0_16 = arith.constant 0 : index
    %c0_17 = arith.constant 0 : index
    %35 = vector.load %arg6[%c0_16, %c0_17] : memref<128x64xbf16, #tpu.memory_space<vmem>>, vector<128x64xbf16>
    tpu.vector_store %arg6[%c0_16, %c0_17], %34 {strides = array<i32>} : memref<128x64xbf16, #tpu.memory_space<vmem>>, vector<128x64xbf16>,
    return
  }
  func.func @transform_0(%arg0: i32) -> (i32, i32) {
    %c0_i32 = arith.constant 0 : i32
    %c0_i32_0 = arith.constant 0 : i32
    %c0_i32_1 = arith.constant 0 : i32
    return %c0_i32, %c0_i32_0 : i32, i32
  }
  func.func @transform_1(%arg0: i32) -> (i32, i32) {
    %c0_i32 = arith.constant 0 : i32
    %c0_i32_0 = arith.constant 0 : i32
    %c0_i32_1 = arith.constant 0 : i32
    return %c0_i32, %c0_i32_0 : i32, i32
  }
  func.func @transform_2(%arg0: i32) -> (i32, i32) {
    %c0_i32 = arith.constant 0 : i32
    %c0_i32_0 = arith.constant 0 : i32
    %c0_i32_1 = arith.constant 0 : i32
    return %c0_i32, %c0_i32_0 : i32, i32
  }
  func.func @transform_3(%arg0: i32) -> (i32, i32) {
    %c0_i32 = arith.constant 0 : i32
    %c0_i32_0 = arith.constant 0 : i32
    %c0_i32_1 = arith.constant 0 : i32
    return %c0_i32, %c0_i32_0 : i32, i32
  }
  func.func @transform_4(%arg0: i32) -> (i32, i32) {
    %c0_i32 = arith.constant 0 : i32
    %c0_i32_0 = arith.constant 0 : i32
    %c0_i32_1 = arith.constant 0 : i32
    return %c0_i32, %c0_i32_0 : i32, i32
  }
  func.func @transform_5(%arg0: i32) -> (i32, i32) {
    %c0_i32 = arith.constant 0 : i32
    %c0_i32_0 = arith.constant 0 : i32
    %c0_i32_1 = arith.constant 0 : i32
    return %c0_i32, %c0_i32_0 : i32, i32
  }
}

module attributes {stable_mosaic.version = 11 : i64} {
  func.func @_conv_bn_leaky_kernel(%arg0: i32, %arg1: memref<32x1024xbf16, #tpu.memory_space<vmem>>, %arg2: memref<1024x128xbf16, #tpu.memory_space<vmem>>, %arg3: memref<1x128xf32, #tpu.memory_space<vmem>>, %arg4: memref<1x128xf32, #tpu.memory_space<vmem>>, %arg5: memref<1x128xf32, #tpu.memory_space<vmem>>, %arg6: memref<32x128xbf16, #tpu.memory_space<vmem>>) attributes {dimension_semantics = [#tpu.dimension_semantics<arbitrary>], iteration_bounds = array<i64: 1>, scalar_prefetch = 0 : i64, scratch_operands = 0 : i64, tpu.core_type = #tpu.core_type<tc>, window_params = [{pipeline_mode = #tpu.pipeline_mode<synchronous>, transform_indices = @transform_0, window_bounds = array<i64: 32, 1024>}, {pipeline_mode = #tpu.pipeline_mode<synchronous>, transform_indices = @transform_1, window_bounds = array<i64: 1024, 128>}, {pipeline_mode = #tpu.pipeline_mode<synchronous>, transform_indices = @transform_2, window_bounds = array<i64: 1, 128>}, {pipeline_mode = #tpu.pipeline_mode<synchronous>, transform_indices = @transform_3, window_bounds = array<i64: 1, 128>}, {pipeline_mode = #tpu.pipeline_mode<synchronous>, transform_indices = @transform_4, window_bounds = array<i64: 1, 128>}, {pipeline_mode = #tpu.pipeline_mode<synchronous>, transform_indices = @transform_5, window_bounds = array<i64: 32, 128>}]} {
    %c0 = arith.constant 0 : index
    %c0_0 = arith.constant 0 : index
    %0 = vector.load %arg1[%c0, %c0_0] : memref<32x1024xbf16, #tpu.memory_space<vmem>>, vector<32x1024xbf16>
    %c0_1 = arith.constant 0 : index
    %c0_2 = arith.constant 0 : index
    %1 = vector.load %arg2[%c0_1, %c0_2] : memref<1024x128xbf16, #tpu.memory_space<vmem>>, vector<1024x128xbf16>
    %cst = arith.constant dense<0.000000e+00> : vector<32x128xf32>
    %2 = tpu.matmul %0, %1, %cst {dimension_numbers = #tpu.dot_dimension_numbers<[1], [0], [0], [1], [0, 0, 1, 1], [], []>} : vector<32x1024xbf16>, vector<1024x128xbf16>, vector<32x128xf32> -> vector<32x128xf32>
    %c0_3 = arith.constant 0 : index
    %c0_4 = arith.constant 0 : index
    %3 = vector.load %arg3[%c0_3, %c0_4] : memref<1x128xf32, #tpu.memory_space<vmem>>, vector<1x128xf32>
    %4 = vector.broadcast %3 : vector<1x128xf32> to vector<32x128xf32>
    %5 = arith.addf %2, %4 : vector<32x128xf32>
    %cst_5 = arith.constant dense<0.000000e+00> : vector<128xf32>
    %6 = vector.multi_reduction <add>, %5, %cst_5 [0] : vector<32x128xf32> to vector<128xf32>
    %7 = vector.shape_cast %6 : vector<128xf32> to vector<1x128xf32>
    %cst_6 = arith.constant 3.125000e-02 : f32
    %8 = vector.broadcast %cst_6 : f32 to vector<1x128xf32>
    %9 = arith.mulf %7, %8 : vector<1x128xf32>
    %10 = arith.mulf %5, %5 : vector<32x128xf32>
    %cst_7 = arith.constant dense<0.000000e+00> : vector<128xf32>
    %11 = vector.multi_reduction <add>, %10, %cst_7 [0] : vector<32x128xf32> to vector<128xf32>
    %12 = vector.shape_cast %11 : vector<128xf32> to vector<1x128xf32>
    %cst_8 = arith.constant 3.125000e-02 : f32
    %13 = vector.broadcast %cst_8 : f32 to vector<1x128xf32>
    %14 = arith.mulf %12, %13 : vector<1x128xf32>
    %15 = arith.mulf %9, %9 : vector<1x128xf32>
    %16 = arith.subf %14, %15 : vector<1x128xf32>
    %c0_9 = arith.constant 0 : index
    %c0_10 = arith.constant 0 : index
    %17 = vector.load %arg4[%c0_9, %c0_10] : memref<1x128xf32, #tpu.memory_space<vmem>>, vector<1x128xf32>
    %cst_11 = arith.constant 9.99999974E-6 : f32
    %18 = vector.broadcast %cst_11 : f32 to vector<1x128xf32>
    %19 = arith.addf %16, %18 : vector<1x128xf32>
    %20 = math.rsqrt %19 : vector<1x128xf32>
    %21 = arith.mulf %17, %20 : vector<1x128xf32>
    %c0_12 = arith.constant 0 : index
    %c0_13 = arith.constant 0 : index
    %22 = vector.load %arg5[%c0_12, %c0_13] : memref<1x128xf32, #tpu.memory_space<vmem>>, vector<1x128xf32>
    %23 = arith.mulf %9, %21 : vector<1x128xf32>
    %24 = arith.subf %22, %23 : vector<1x128xf32>
    %25 = vector.broadcast %21 : vector<1x128xf32> to vector<32x128xf32>
    %26 = arith.mulf %5, %25 : vector<32x128xf32>
    %27 = vector.broadcast %24 : vector<1x128xf32> to vector<32x128xf32>
    %28 = arith.addf %26, %27 : vector<32x128xf32>
    %cst_14 = arith.constant 0.000000e+00 : f32
    %29 = vector.broadcast %cst_14 : f32 to vector<32x128xf32>
    %30 = arith.cmpf oge, %28, %29 : vector<32x128xf32>
    %cst_15 = arith.constant 1.000000e-01 : f32
    %31 = vector.broadcast %cst_15 : f32 to vector<32x128xf32>
    %32 = arith.mulf %31, %28 : vector<32x128xf32>
    %33 = arith.select %30, %28, %32 : vector<32x128xi1>, vector<32x128xf32>
    %34 = arith.truncf %33 : vector<32x128xf32> to vector<32x128xbf16>
    %c0_16 = arith.constant 0 : index
    %c0_17 = arith.constant 0 : index
    %35 = vector.load %arg6[%c0_16, %c0_17] : memref<32x128xbf16, #tpu.memory_space<vmem>>, vector<32x128xbf16>
    tpu.vector_store %arg6[%c0_16, %c0_17], %34 {strides = array<i32>} : memref<32x128xbf16, #tpu.memory_space<vmem>>, vector<32x128xbf16>,
    return
  }
  func.func @transform_0(%arg0: i32) -> (i32, i32) {
    %c0_i32 = arith.constant 0 : i32
    %c0_i32_0 = arith.constant 0 : i32
    %c0_i32_1 = arith.constant 0 : i32
    return %c0_i32, %c0_i32_0 : i32, i32
  }
  func.func @transform_1(%arg0: i32) -> (i32, i32) {
    %c0_i32 = arith.constant 0 : i32
    %c0_i32_0 = arith.constant 0 : i32
    %c0_i32_1 = arith.constant 0 : i32
    return %c0_i32, %c0_i32_0 : i32, i32
  }
  func.func @transform_2(%arg0: i32) -> (i32, i32) {
    %c0_i32 = arith.constant 0 : i32
    %c0_i32_0 = arith.constant 0 : i32
    %c0_i32_1 = arith.constant 0 : i32
    return %c0_i32, %c0_i32_0 : i32, i32
  }
  func.func @transform_3(%arg0: i32) -> (i32, i32) {
    %c0_i32 = arith.constant 0 : i32
    %c0_i32_0 = arith.constant 0 : i32
    %c0_i32_1 = arith.constant 0 : i32
    return %c0_i32, %c0_i32_0 : i32, i32
  }
  func.func @transform_4(%arg0: i32) -> (i32, i32) {
    %c0_i32 = arith.constant 0 : i32
    %c0_i32_0 = arith.constant 0 : i32
    %c0_i32_1 = arith.constant 0 : i32
    return %c0_i32, %c0_i32_0 : i32, i32
  }
  func.func @transform_5(%arg0: i32) -> (i32, i32) {
    %c0_i32 = arith.constant 0 : i32
    %c0_i32_0 = arith.constant 0 : i32
    %c0_i32_1 = arith.constant 0 : i32
    return %c0_i32, %c0_i32_0 : i32, i32
  }
}

module attributes {stable_mosaic.version = 11 : i64} {
  func.func @_conv_bn_leaky_final_kernel(%arg0: i32, %arg1: memref<8x2048xbf16, #tpu.memory_space<vmem>>, %arg2: memref<2048x256xbf16, #tpu.memory_space<vmem>>, %arg3: memref<1x256xf32, #tpu.memory_space<vmem>>, %arg4: memref<1x256xf32, #tpu.memory_space<vmem>>, %arg5: memref<1x256xf32, #tpu.memory_space<vmem>>, %arg6: memref<8x256xf32, #tpu.memory_space<vmem>>, %arg7: memref<2x8xf32, #tpu.memory_space<vmem>>, %arg8: memref<1x1xf32, #tpu.memory_space<vmem>>, %arg9: memref<2x1xf32, #tpu.memory_space<vmem>>) attributes {dimension_semantics = [#tpu.dimension_semantics<arbitrary>], iteration_bounds = array<i64: 1>, scalar_prefetch = 0 : i64, scratch_operands = 0 : i64, tpu.core_type = #tpu.core_type<tc>, window_params = [{pipeline_mode = #tpu.pipeline_mode<synchronous>, transform_indices = @transform_0, window_bounds = array<i64: 8, 2048>}, {pipeline_mode = #tpu.pipeline_mode<synchronous>, transform_indices = @transform_1, window_bounds = array<i64: 2048, 256>}, {pipeline_mode = #tpu.pipeline_mode<synchronous>, transform_indices = @transform_2, window_bounds = array<i64: 1, 256>}, {pipeline_mode = #tpu.pipeline_mode<synchronous>, transform_indices = @transform_3, window_bounds = array<i64: 1, 256>}, {pipeline_mode = #tpu.pipeline_mode<synchronous>, transform_indices = @transform_4, window_bounds = array<i64: 1, 256>}, {pipeline_mode = #tpu.pipeline_mode<synchronous>, transform_indices = @transform_5, window_bounds = array<i64: 8, 256>}, {pipeline_mode = #tpu.pipeline_mode<synchronous>, transform_indices = @transform_6, window_bounds = array<i64: 2, 8>}, {pipeline_mode = #tpu.pipeline_mode<synchronous>, transform_indices = @transform_7, window_bounds = array<i64: 1, 1>}, {pipeline_mode = #tpu.pipeline_mode<synchronous>, transform_indices = @transform_8, window_bounds = array<i64: 2, 1>}]} {
    %c0 = arith.constant 0 : index
    %c0_0 = arith.constant 0 : index
    %0 = vector.load %arg1[%c0, %c0_0] : memref<8x2048xbf16, #tpu.memory_space<vmem>>, vector<8x2048xbf16>
    %c0_1 = arith.constant 0 : index
    %c0_2 = arith.constant 0 : index
    %1 = vector.load %arg2[%c0_1, %c0_2] : memref<2048x256xbf16, #tpu.memory_space<vmem>>, vector<2048x256xbf16>
    %cst = arith.constant dense<0.000000e+00> : vector<8x256xf32>
    %2 = tpu.matmul %0, %1, %cst {dimension_numbers = #tpu.dot_dimension_numbers<[1], [0], [0], [1], [0, 0, 1, 1], [], []>} : vector<8x2048xbf16>, vector<2048x256xbf16>, vector<8x256xf32> -> vector<8x256xf32>
    %c0_3 = arith.constant 0 : index
    %c0_4 = arith.constant 0 : index
    %3 = vector.load %arg3[%c0_3, %c0_4] : memref<1x256xf32, #tpu.memory_space<vmem>>, vector<1x256xf32>
    %4 = vector.broadcast %3 : vector<1x256xf32> to vector<8x256xf32>
    %5 = arith.addf %2, %4 : vector<8x256xf32>
    %cst_5 = arith.constant dense<0.000000e+00> : vector<256xf32>
    %6 = vector.multi_reduction <add>, %5, %cst_5 [0] : vector<8x256xf32> to vector<256xf32>
    %7 = vector.shape_cast %6 : vector<256xf32> to vector<1x256xf32>
    %cst_6 = arith.constant 1.250000e-01 : f32
    %8 = vector.broadcast %cst_6 : f32 to vector<1x256xf32>
    %9 = arith.mulf %7, %8 : vector<1x256xf32>
    %10 = arith.mulf %5, %5 : vector<8x256xf32>
    %cst_7 = arith.constant dense<0.000000e+00> : vector<256xf32>
    %11 = vector.multi_reduction <add>, %10, %cst_7 [0] : vector<8x256xf32> to vector<256xf32>
    %12 = vector.shape_cast %11 : vector<256xf32> to vector<1x256xf32>
    %cst_8 = arith.constant 1.250000e-01 : f32
    %13 = vector.broadcast %cst_8 : f32 to vector<1x256xf32>
    %14 = arith.mulf %12, %13 : vector<1x256xf32>
    %15 = arith.mulf %9, %9 : vector<1x256xf32>
    %16 = arith.subf %14, %15 : vector<1x256xf32>
    %c0_9 = arith.constant 0 : index
    %c0_10 = arith.constant 0 : index
    %17 = vector.load %arg4[%c0_9, %c0_10] : memref<1x256xf32, #tpu.memory_space<vmem>>, vector<1x256xf32>
    %cst_11 = arith.constant 9.99999974E-6 : f32
    %18 = vector.broadcast %cst_11 : f32 to vector<1x256xf32>
    %19 = arith.addf %16, %18 : vector<1x256xf32>
    %20 = math.rsqrt %19 : vector<1x256xf32>
    %21 = arith.mulf %17, %20 : vector<1x256xf32>
    %c0_12 = arith.constant 0 : index
    %c0_13 = arith.constant 0 : index
    %22 = vector.load %arg5[%c0_12, %c0_13] : memref<1x256xf32, #tpu.memory_space<vmem>>, vector<1x256xf32>
    %23 = arith.mulf %9, %21 : vector<1x256xf32>
    %24 = arith.subf %22, %23 : vector<1x256xf32>
    %25 = vector.broadcast %21 : vector<1x256xf32> to vector<8x256xf32>
    %26 = arith.mulf %5, %25 : vector<8x256xf32>
    %27 = vector.broadcast %24 : vector<1x256xf32> to vector<8x256xf32>
    %28 = arith.addf %26, %27 : vector<8x256xf32>
    %cst_14 = arith.constant 0.000000e+00 : f32
    %29 = vector.broadcast %cst_14 : f32 to vector<8x256xf32>
    %30 = arith.cmpf oge, %28, %29 : vector<8x256xf32>
    %cst_15 = arith.constant 1.000000e-01 : f32
    %31 = vector.broadcast %cst_15 : f32 to vector<8x256xf32>
    %32 = arith.mulf %31, %28 : vector<8x256xf32>
    %33 = arith.select %30, %28, %32 : vector<8x256xi1>, vector<8x256xf32>
    %c0_16 = arith.constant 0 : index
    %c0_17 = arith.constant 0 : index
    %34 = vector.load %arg6[%c0_16, %c0_17] : memref<8x256xf32, #tpu.memory_space<vmem>>, vector<8x256xf32>
    %35 = arith.mulf %33, %34 : vector<8x256xf32>
    %c0_18 = arith.constant 0 : index
    %c0_19 = arith.constant 0 : index
    %36 = vector.load %arg7[%c0_18, %c0_19] : memref<2x8xf32, #tpu.memory_space<vmem>>, vector<2x8xf32>
    %cst_20 = arith.constant dense<0.000000e+00> : vector<2x256xf32>
    %37 = tpu.matmul %36, %35, %cst_20 {dimension_numbers = #tpu.dot_dimension_numbers<[1], [0], [0], [1], [0, 0, 1, 1], [], []>, precision = #tpu.contract_precision<fp32>} : vector<2x8xf32>, vector<8x256xf32>, vector<2x256xf32> -> vector<2x256xf32>
    %cst_21 = arith.constant dense<0.000000e+00> : vector<2xf32>
    %38 = vector.multi_reduction <add>, %37, %cst_21 [1] : vector<2x256xf32> to vector<2xf32>
    %39 = vector.shape_cast %38 : vector<2xf32> to vector<2x1xf32>
    %c0_22 = arith.constant 0 : index
    %c0_23 = arith.constant 0 : index
    %40 = vector.load %arg8[%c0_22, %c0_23] : memref<1x1xf32, #tpu.memory_space<vmem>>, vector<1x1xf32>
    %41 = vector.broadcast %40 : vector<1x1xf32> to vector<2x1xf32>
    %42 = arith.addf %39, %41 : vector<2x1xf32>
    %43 = arith.negf %42 : vector<2x1xf32>
    %44 = math.exp %43 : vector<2x1xf32>
    %cst_24 = arith.constant 1.000000e+00 : f32
    %45 = vector.broadcast %cst_24 : f32 to vector<2x1xf32>
    %46 = arith.addf %45, %44 : vector<2x1xf32>
    %47 = arith.divf %45, %46 : vector<2x1xf32>
    %c0_25 = arith.constant 0 : index
    %c0_26 = arith.constant 0 : index
    %48 = vector.load %arg9[%c0_25, %c0_26] : memref<2x1xf32, #tpu.memory_space<vmem>>, vector<2x1xf32>
    tpu.vector_store %arg9[%c0_25, %c0_26], %47 {strides = array<i32>} : memref<2x1xf32, #tpu.memory_space<vmem>>, vector<2x1xf32>,
    return
  }
  func.func @transform_0(%arg0: i32) -> (i32, i32) {
    %c0_i32 = arith.constant 0 : i32
    %c0_i32_0 = arith.constant 0 : i32
    %c0_i32_1 = arith.constant 0 : i32
    return %c0_i32, %c0_i32_0 : i32, i32
  }
  func.func @transform_1(%arg0: i32) -> (i32, i32) {
    %c0_i32 = arith.constant 0 : i32
    %c0_i32_0 = arith.constant 0 : i32
    %c0_i32_1 = arith.constant 0 : i32
    return %c0_i32, %c0_i32_0 : i32, i32
  }
  func.func @transform_2(%arg0: i32) -> (i32, i32) {
    %c0_i32 = arith.constant 0 : i32
    %c0_i32_0 = arith.constant 0 : i32
    %c0_i32_1 = arith.constant 0 : i32
    return %c0_i32, %c0_i32_0 : i32, i32
  }
  func.func @transform_3(%arg0: i32) -> (i32, i32) {
    %c0_i32 = arith.constant 0 : i32
    %c0_i32_0 = arith.constant 0 : i32
    %c0_i32_1 = arith.constant 0 : i32
    return %c0_i32, %c0_i32_0 : i32, i32
  }
  func.func @transform_4(%arg0: i32) -> (i32, i32) {
    %c0_i32 = arith.constant 0 : i32
    %c0_i32_0 = arith.constant 0 : i32
    %c0_i32_1 = arith.constant 0 : i32
    return %c0_i32, %c0_i32_0 : i32, i32
  }
  func.func @transform_5(%arg0: i32) -> (i32, i32) {
    %c0_i32 = arith.constant 0 : i32
    %c0_i32_0 = arith.constant 0 : i32
    %c0_i32_1 = arith.constant 0 : i32
    return %c0_i32, %c0_i32_0 : i32, i32
  }
  func.func @transform_6(%arg0: i32) -> (i32, i32) {
    %c0_i32 = arith.constant 0 : i32
    %c0_i32_0 = arith.constant 0 : i32
    %c0_i32_1 = arith.constant 0 : i32
    return %c0_i32, %c0_i32_0 : i32, i32
  }
  func.func @transform_7(%arg0: i32) -> (i32, i32) {
    %c0_i32 = arith.constant 0 : i32
    %c0_i32_0 = arith.constant 0 : i32
    %c0_i32_1 = arith.constant 0 : i32
    return %c0_i32, %c0_i32_0 : i32, i32
  }
  func.func @transform_8(%arg0: i32) -> (i32, i32) {
    %c0_i32 = arith.constant 0 : i32
    %c0_i32_0 = arith.constant 0 : i32
    %c0_i32_1 = arith.constant 0 : i32
    return %c0_i32, %c0_i32_0 : i32, i32
  }
}

</mosaic_0001>

<llo_original>
// kernel: discriminator_forward.5
$region0: #{discriminator_forward.5}
  #allocation0 [shape = 'u32[]', space=smem, size = 0x4, offset = 0x4, fixed_abs, tag = 'smem constant byte address 0x4 - core index']
  #allocation1 [shape = 'u32[144,128]{1,0:T(1,128)}', space=vmem, size = 0x12000, scoped, tag = 'internal scratch']
  %s0 = inlined_call_operand.vmem [shape: bf16[2048,48], index: 0, kind: input, shape index: {}]
  %s1 = inlined_call_operand.vmem [shape: bf16[48,16], index: 1, kind: input, shape index: {}]
  %s2 = inlined_call_operand.vmem [shape: f32[1,16], index: 2, kind: input, shape index: {}]
  %s3 = inlined_call_operand.vmem [shape: bf16[2048,16], index: 3, kind: output, shape index: {}]
  %s4 = sld [smem:[#allocation0]]
  $region22: #{discriminator_forward.5} parent=0
    _
  %s6 = ssub.s32 1, %s4
  %s7 = scalar_select 0, %s6, %s4
  // Predicated region
  $region2: #{discriminator_forward.5} parent=0 // pred_check
    _
  $region3: #{discriminator_forward.5} parent=0 // pred_check_branch
    %9 = sbr.rel (0) target = $region5
  $region4: #{discriminator_forward.5} parent=0 // pred_region
    _
  $region5: #{discriminator_forward.5} parent=0 // pred_fallthru
    _
  // Predicated region
  $region6: #{discriminator_forward.5} parent=0 // pred_check
    _
  $region7: #{discriminator_forward.5} parent=0 // pred_check_branch
    %11 = sbr.rel (0) target = $region9
  $region8: #{discriminator_forward.5} parent=0 // pred_region
    _
  $region9: #{discriminator_forward.5} parent=0 // pred_fallthru
    _
  // Predicated region
  $region10: #{discriminator_forward.5} parent=0 // pred_check
    _
  $region11: #{discriminator_forward.5} parent=0 // pred_check_branch
    %13 = sbr.rel (0) target = $region13
  $region12: #{discriminator_forward.5} parent=0 // pred_region
    _
  $region13: #{discriminator_forward.5} parent=0 // pred_fallthru
    _
  %v15 = vld [vmem:[%s0] sm:$0xf]
  %v16 = vld [vmem:[%s0 + $0x4] sm:$0xf]
  %v17 = vld [vmem:[%s0 + $0x8] sm:$0xf]
  %v18 = vld [vmem:[%s0 + $0xc] sm:$0xf]
  %v19 = vld [vmem:[%s0 + $0x10] sm:$0xf]
  %v20 = vld [vmem:[%s0 + $0x14] sm:$0xf]
  %v21 = vld [vmem:[%s0 + $0x18] sm:$0xf]
  %v22 = vld [vmem:[%s0 + $0x1c] sm:$0xf]
  %v23 = vld [vmem:[%s0 + $0x20] sm:$0xf]
  %v24 = vld [vmem:[%s0 + $0x24] sm:$0xf]
  %v25 = vld [vmem:[%s0 + $0x28] sm:$0xf]
  %v26 = vld [vmem:[%s0 + $0x2c] sm:$0xf]
  %v27 = vld [vmem:[%s0 + $0x30] sm:$0xf]
  %v28 = vld [vmem:[%s0 + $0x34] sm:$0xf]
  %v29 = vld [vmem:[%s0 + $0x38] sm:$0xf]
  %v30 = vld [vmem:[%s0 + $0x3c] sm:$0xf]
  %v31 = vld [vmem:[%s0 + $0x40] sm:$0xf]
  %v32 = vld [vmem:[%s0 + $0x44] sm:$0xf]
  %v33 = vld [vmem:[%s0 + $0x48] sm:$0xf]
  %v34 = vld [vmem:[%s0 + $0x4c] sm:$0xf]
  %v35 = vld [vmem:[%s0 + $0x50] sm:$0xf]
  %v36 = vld [vmem:[%s0 + $0x54] sm:$0xf]
  %v37 = vld [vmem:[%s0 + $0x58] sm:$0xf]
  %v38 = vld [vmem:[%s0 + $0x5c] sm:$0xf]
  %v39 = vld [vmem:[%s0 + $0x60] sm:$0xf]
  %v40 = vld [vmem:[%s0 + $0x64] sm:$0xf]
  %v41 = vld [vmem:[%s0 + $0x68] sm:$0xf]
  %v42 = vld [vmem:[%s0 + $0x6c] sm:$0xf]
  %v43 = vld [vmem:[%s0 + $0x70] sm:$0xf]
  %v44 = vld [vmem:[%s0 + $0x74] sm:$0xf]
  %v45 = vld [vmem:[%s0 + $0x78] sm:$0xf]
  %v46 = vld [vmem:[%s0 + $0x7c] sm:$0xf]
  %v47 = vld [vmem:[%s0 + $0x80] sm:$0xf]
  %v48 = vld [vmem:[%s0 + $0x84] sm:$0xf]
  %v49 = vld [vmem:[%s0 + $0x88] sm:$0xf]
  %v50 = vld [vmem:[%s0 + $0x8c] sm:$0xf]
  %v51 = vld [vmem:[%s0 + $0x90] sm:$0xf]
  %v52 = vld [vmem:[%s0 + $0x94] sm:$0xf]
  %v53 = vld [vmem:[%s0 + $0x98] sm:$0xf]
  %v54 = vld [vmem:[%s0 + $0x9c] sm:$0xf]
  %v55 = vld [vmem:[%s0 + $0xa0] sm:$0xf]
  %v56 = vld [vmem:[%s0 + $0xa4] sm:$0xf]
  %v57 = vld [vmem:[%s0 + $0xa8] sm:$0xf]
  %v58 = vld [vmem:[%s0 + $0xac] sm:$0xf]
  %v59 = vld [vmem:[%s0 + $0xb0] sm:$0xf]
  %v60 = vld [vmem:[%s0 + $0xb4] sm:$0xf]
  %v61 = vld [vmem:[%s0 + $0xb8] sm:$0xf]
  %v62 = vld [vmem:[%s0 + $0xbc] sm:$0xf]
  %v63 = vld [vmem:[%s0 + $0xc0] sm:$0xf]
  %v64 = vld [vmem:[%s0 + $0xc4] sm:$0xf]
  %v65 = vld [vmem:[%s0 + $0xc8] sm:$0xf]
  %v66 = vld [vmem:[%s0 + $0xcc] sm:$0xf]
  %v67 = vld [vmem:[%s0 + $0xd0] sm:$0xf]
  %v68 = vld [vmem:[%s0 + $0xd4] sm:$0xf]
  %v69 = vld [vmem:[%s0 + $0xd8] sm:$0xf]
  %v70 = vld [vmem:[%s0 + $0xdc] sm:$0xf]
  %v71 = vld [vmem:[%s0 + $0xe0] sm:$0xf]
  %v72 = vld [vmem:[%s0 + $0xe4] sm:$0xf]
  %v73 = vld [vmem:[%s0 + $0xe8] sm:$0xf]
  %v74 = vld [vmem:[%s0 + $0xec] sm:$0xf]
  %v75 = vld [vmem:[%s0 + $0xf0] sm:$0xf]
  %v76 = vld [vmem:[%s0 + $0xf4] sm:$0xf]
  %v77 = vld [vmem:[%s0 + $0xf8] sm:$0xf]
  %v78 = vld [vmem:[%s0 + $0xfc] sm:$0xf]
  %v79 = vld [vmem:[%s0 + $0x100] sm:$0xf]
  %v80 = vld [vmem:[%s0 + $0x104] sm:$0xf]
  %v81 = vld [vmem:[%s0 + $0x108] sm:$0xf]
  %v82 = vld [vmem:[%s0 + $0x10c] sm:$0xf]
  %v83 = vld [vmem:[%s0 + $0x110] sm:$0xf]
  %v84 = vld [vmem:[%s0 + $0x114] sm:$0xf]
  %v85 = vld [vmem:[%s0 + $0x118] sm:$0xf]
  %v86 = vld [vmem:[%s0 + $0x11c] sm:$0xf]
  %v87 = vld [vmem:[%s0 + $0x120] sm:$0xf]
  %v88 = vld [vmem:[%s0 + $0x124] sm:$0xf]
  %v89 = vld [vmem:[%s0 + $0x128] sm:$0xf]
  %v90 = vld [vmem:[%s0 + $0x12c] sm:$0xf]
  %v91 = vld [vmem:[%s0 + $0x130] sm:$0xf]
  %v92 = vld [vmem:[%s0 + $0x134] sm:$0xf]
  %v93 = vld [vmem:[%s0 + $0x138] sm:$0xf]
  %v94 = vld [vmem:[%s0 + $0x13c] sm:$0xf]
  %v95 = vld [vmem:[%s0 + $0x140] sm:$0xf]
  %v96 = vld [vmem:[%s0 + $0x144] sm:$0xf]
  %v97 = vld [vmem:[%s0 + $0x148] sm:$0xf]
  %v98 = vld [vmem:[%s0 + $0x14c] sm:$0xf]
  %v99 = vld [vmem:[%s0 + $0x150] sm:$0xf]
  %v100 = vld [vmem:[%s0 + $0x154] sm:$0xf]
  %v101 = vld [vmem:[%s0 + $0x158] sm:$0xf]
  %v102 = vld [vmem:[%s0 + $0x15c] sm:$0xf]
  %v103 = vld [vmem:[%s0 + $0x160] sm:$0xf]
  %v104 = vld [vmem:[%s0 + $0x164] sm:$0xf]
  %v105 = vld [vmem:[%s0 + $0x168] sm:$0xf]
  %v106 = vld [vmem:[%s0 + $0x16c] sm:$0xf]
  %v107 = vld [vmem:[%s0 + $0x170] sm:$0xf]
  %v108 = vld [vmem:[%s0 + $0x174] sm:$0xf]
  %v109 = vld [vmem:[%s0 + $0x178] sm:$0xf]
  %v110 = vld [vmem:[%s0 + $0x17c] sm:$0xf]
  %v111 = vld [vmem:[%s0 + $0x180] sm:$0xf]
  %v112 = vld [vmem:[%s0 + $0x184] sm:$0xf]
  %v113 = vld [vmem:[%s0 + $0x188] sm:$0xf]
  %v114 = vld [vmem:[%s0 + $0x18c] sm:$0xf]
  %v115 = vld [vmem:[%s0 + $0x190] sm:$0xf]
  %v116 = vld [vmem:[%s0 + $0x194] sm:$0xf]
  %v117 = vld [vmem:[%s0 + $0x198] sm:$0xf]
  %v118 = vld [vmem:[%s0 + $0x19c] sm:$0xf]
  %v119 = vld [vmem:[%s0 + $0x1a0] sm:$0xf]
  %v120 = vld [vmem:[%s0 + $0x1a4] sm:$0xf]
  %v121 = vld [vmem:[%s0 + $0x1a8] sm:$0xf]
  %v122 = vld [vmem:[%s0 + $0x1ac] sm:$0xf]
  %v123 = vld [vmem:[%s0 + $0x1b0] sm:$0xf]
  %v124 = vld [vmem:[%s0 + $0x1b4] sm:$0xf]
  %v125 = vld [vmem:[%s0 + $0x1b8] sm:$0xf]
  %v126 = vld [vmem:[%s0 + $0x1bc] sm:$0xf]
  %v127 = vld [vmem:[%s0 + $0x1c0] sm:$0xf]
  %v128 = vld [vmem:[%s0 + $0x1c4] sm:$0xf]
  %v129 = vld [vmem:[%s0 + $0x1c8] sm:$0xf]
  %v130 = vld [vmem:[%s0 + $0x1cc] sm:$0xf]
  %v131 = vld [vmem:[%s0 + $0x1d0] sm:$0xf]
  %v132 = vld [vmem:[%s0 + $0x1d4] sm:$0xf]
  %v133 = vld [vmem:[%s0 + $0x1d8] sm:$0xf]
  %v134 = vld [vmem:[%s0 + $0x1dc] sm:$0xf]
  %v135 = vld [vmem:[%s0 + $0x1e0] sm:$0xf]
  %v136 = vld [vmem:[%s0 + $0x1e4] sm:$0xf]
  %v137 = vld [vmem:[%s0 + $0x1e8] sm:$0xf]
  %v138 = vld [vmem:[%s0 + $0x1ec] sm:$0xf]
  %v139 = vld [vmem:[%s0 + $0x1f0] sm:$0xf]
  %v140 = vld [vmem:[%s0 + $0x1f4] sm:$0xf]
  %v141 = vld [vmem:[%s0 + $0x1f8] sm:$0xf]
  %v142 = vld [vmem:[%s0 + $0x1fc] sm:$0xf]
  %v143 = vld [vmem:[%s0 + $0x200] sm:$0xf]
  %v144 = vld [vmem:[%s0 + $0x204] sm:$0xf]
  %v145 = vld [vmem:[%s0 + $0x208] sm:$0xf]
  %v146 = vld [vmem:[%s0 + $0x20c] sm:$0xf]
  %v147 = vld [vmem:[%s0 + $0x210] sm:$0xf]
  %v148 = vld [vmem:[%s0 + $0x214] sm:$0xf]
  %v149 = vld [vmem:[%s0 + $0x218] sm:$0xf]
  %v150 = vld [vmem:[%s0 + $0x21c] sm:$0xf]
  %v151 = vld [vmem:[%s0 + $0x220] sm:$0xf]
  %v152 = vld [vmem:[%s0 + $0x224] sm:$0xf]
  %v153 = vld [vmem:[%s0 + $0x228] sm:$0xf]
  %v154 = vld [vmem:[%s0 + $0x22c] sm:$0xf]
  %v155 = vld [vmem:[%s0 + $0x230] sm:$0xf]
  %v156 = vld [vmem:[%s0 + $0x234] sm:$0xf]
  %v157 = vld [vmem:[%s0 + $0x238] sm:$0xf]
  %v158 = vld [vmem:[%s0 + $0x23c] sm:$0xf]
  %v159 = vld [vmem:[%s0 + $0x240] sm:$0xf]
  %v160 = vld [vmem:[%s0 + $0x244] sm:$0xf]
  %v161 = vld [vmem:[%s0 + $0x248] sm:$0xf]
  %v162 = vld [vmem:[%s0 + $0x24c] sm:$0xf]
  %v163 = vld [vmem:[%s0 + $0x250] sm:$0xf]
  %v164 = vld [vmem:[%s0 + $0x254] sm:$0xf]
  %v165 = vld [vmem:[%s0 + $0x258] sm:$0xf]
  %v166 = vld [vmem:[%s0 + $0x25c] sm:$0xf]
  %v167 = vld [vmem:[%s0 + $0x260] sm:$0xf]
  %v168 = vld [vmem:[%s0 + $0x264] sm:$0xf]
  %v169 = vld [vmem:[%s0 + $0x268] sm:$0xf]
  %v170 = vld [vmem:[%s0 + $0x26c] sm:$0xf]
  %v171 = vld [vmem:[%s0 + $0x270] sm:$0xf]
  %v172 = vld [vmem:[%s0 + $0x274] sm:$0xf]
  %v173 = vld [vmem:[%s0 + $0x278] sm:$0xf]
  %v174 = vld [vmem:[%s0 + $0x27c] sm:$0xf]
  %v175 = vld [vmem:[%s0 + $0x280] sm:$0xf]
  %v176 = vld [vmem:[%s0 + $0x284] sm:$0xf]
  %v177 = vld [vmem:[%s0 + $0x288] sm:$0xf]
  %v178 = vld [vmem:[%s0 + $0x28c] sm:$0xf]
  %v179 = vld [vmem:[%s0 + $0x290] sm:$0xf]
  %v180 = vld [vmem:[%s0 + $0x294] sm:$0xf]
  %v181 = vld [vmem:[%s0 + $0x298] sm:$0xf]
  %v182 = vld [vmem:[%s0 + $0x29c] sm:$0xf]
  %v183 = vld [vmem:[%s0 + $0x2a0] sm:$0xf]
  %v184 = vld [vmem:[%s0 + $0x2a4] sm:$0xf]
  %v185 = vld [vmem:[%s0 + $0x2a8] sm:$0xf]
  %v186 = vld [vmem:[%s0 + $0x2ac] sm:$0xf]
  %v187 = vld [vmem:[%s0 + $0x2b0] sm:$0xf]
  %v188 = vld [vmem:[%s0 + $0x2b4] sm:$0xf]
  %v189 = vld [vmem:[%s0 + $0x2b8] sm:$0xf]
  %v190 = vld [vmem:[%s0 + $0x2bc] sm:$0xf]
  %v191 = vld [vmem:[%s0 + $0x2c0] sm:$0xf]
  %v192 = vld [vmem:[%s0 + $0x2c4] sm:$0xf]
  %v193 = vld [vmem:[%s0 + $0x2c8] sm:$0xf]
  %v194 = vld [vmem:[%s0 + $0x2cc] sm:$0xf]
  %v195 = vld [vmem:[%s0 + $0x2d0] sm:$0xf]
  %v196 = vld [vmem:[%s0 + $0x2d4] sm:$0xf]
  %v197 = vld [vmem:[%s0 + $0x2d8] sm:$0xf]
  %v198 = vld [vmem:[%s0 + $0x2dc] sm:$0xf]
  %v199 = vld [vmem:[%s0 + $0x2e0] sm:$0xf]
  %v200 = vld [vmem:[%s0 + $0x2e4] sm:$0xf]
  %v201 = vld [vmem:[%s0 + $0x2e8] sm:$0xf]
  %v202 = vld [vmem:[%s0 + $0x2ec] sm:$0xf]
  %v203 = vld [vmem:[%s0 + $0x2f0] sm:$0xf]
  %v204 = vld [vmem:[%s0 + $0x2f4] sm:$0xf]
  %v205 = vld [vmem:[%s0 + $0x2f8] sm:$0xf]
  %v206 = vld [vmem:[%s0 + $0x2fc] sm:$0xf]
  %v207 = vld [vmem:[%s0 + $0x300] sm:$0xf]
  %v208 = vld [vmem:[%s0 + $0x304] sm:$0xf]
  %v209 = vld [vmem:[%s0 + $0x308] sm:$0xf]
  %v210 = vld [vmem:[%s0 + $0x30c] sm:$0xf]
  %v211 = vld [vmem:[%s0 + $0x310] sm:$0xf]
  %v212 = vld [vmem:[%s0 + $0x314] sm:$0xf]
  %v213 = vld [vmem:[%s0 + $0x318] sm:$0xf]
  %v214 = vld [vmem:[%s0 + $0x31c] sm:$0xf]
  %v215 = vld [vmem:[%s0 + $0x320] sm:$0xf]
  %v216 = vld [vmem:[%s0 + $0x324] sm:$0xf]
  %v217 = vld [vmem:[%s0 + $0x328] sm:$0xf]
  %v218 = vld [vmem:[%s0 + $0x32c] sm:$0xf]
  %v219 = vld [vmem:[%s0 + $0x330] sm:$0xf]
  %v220 = vld [vmem:[%s0 + $0x334] sm:$0xf]
  %v221 = vld [vmem:[%s0 + $0x338] sm:$0xf]
  %v222 = vld [vmem:[%s0 + $0x33c] sm:$0xf]
  %v223 = vld [vmem:[%s0 + $0x340] sm:$0xf]
  %v224 = vld [vmem:[%s0 + $0x344] sm:$0xf]
  %v225 = vld [vmem:[%s0 + $0x348] sm:$0xf]
  %v226 = vld [vmem:[%s0 + $0x34c] sm:$0xf]
  %v227 = vld [vmem:[%s0 + $0x350] sm:$0xf]
  %v228 = vld [vmem:[%s0 + $0x354] sm:$0xf]
  %v229 = vld [vmem:[%s0 + $0x358] sm:$0xf]
  %v230 = vld [vmem:[%s0 + $0x35c] sm:$0xf]
  %v231 = vld [vmem:[%s0 + $0x360] sm:$0xf]
  %v232 = vld [vmem:[%s0 + $0x364] sm:$0xf]
  %v233 = vld [vmem:[%s0 + $0x368] sm:$0xf]
  %v234 = vld [vmem:[%s0 + $0x36c] sm:$0xf]
  %v235 = vld [vmem:[%s0 + $0x370] sm:$0xf]
  %v236 = vld [vmem:[%s0 + $0x374] sm:$0xf]
  %v237 = vld [vmem:[%s0 + $0x378] sm:$0xf]
  %v238 = vld [vmem:[%s0 + $0x37c] sm:$0xf]
  %v239 = vld [vmem:[%s0 + $0x380] sm:$0xf]
  %v240 = vld [vmem:[%s0 + $0x384] sm:$0xf]
  %v241 = vld [vmem:[%s0 + $0x388] sm:$0xf]
  %v242 = vld [vmem:[%s0 + $0x38c] sm:$0xf]
  %v243 = vld [vmem:[%s0 + $0x390] sm:$0xf]
  %v244 = vld [vmem:[%s0 + $0x394] sm:$0xf]
  %v245 = vld [vmem:[%s0 + $0x398] sm:$0xf]
  %v246 = vld [vmem:[%s0 + $0x39c] sm:$0xf]
  %v247 = vld [vmem:[%s0 + $0x3a0] sm:$0xf]
  %v248 = vld [vmem:[%s0 + $0x3a4] sm:$0xf]
  %v249 = vld [vmem:[%s0 + $0x3a8] sm:$0xf]
  %v250 = vld [vmem:[%s0 + $0x3ac] sm:$0xf]
  %v251 = vld [vmem:[%s0 + $0x3b0] sm:$0xf]
  %v252 = vld [vmem:[%s0 + $0x3b4] sm:$0xf]
  %v253 = vld [vmem:[%s0 + $0x3b8] sm:$0xf]
  %v254 = vld [vmem:[%s0 + $0x3bc] sm:$0xf]
  %v255 = vld [vmem:[%s0 + $0x3c0] sm:$0xf]
  %v256 = vld [vmem:[%s0 + $0x3c4] sm:$0xf]
  %v257 = vld [vmem:[%s0 + $0x3c8] sm:$0xf]
  %v258 = vld [vmem:[%s0 + $0x3cc] sm:$0xf]
  %v259 = vld [vmem:[%s0 + $0x3d0] sm:$0xf]
  %v260 = vld [vmem:[%s0 + $0x3d4] sm:$0xf]
  %v261 = vld [vmem:[%s0 + $0x3d8] sm:$0xf]
  %v262 = vld [vmem:[%s0 + $0x3dc] sm:$0xf]
  %v263 = vld [vmem:[%s0 + $0x3e0] sm:$0xf]
  %v264 = vld [vmem:[%s0 + $0x3e4] sm:$0xf]
  %v265 = vld [vmem:[%s0 + $0x3e8] sm:$0xf]
  %v266 = vld [vmem:[%s0 + $0x3ec] sm:$0xf]
  %v267 = vld [vmem:[%s0 + $0x3f0] sm:$0xf]
  %v268 = vld [vmem:[%s0 + $0x3f4] sm:$0xf]
  %v269 = vld [vmem:[%s0 + $0x3f8] sm:$0xf]
  %v270 = vld [vmem:[%s0 + $0x3fc] sm:$0xf]
  %v271 = vld [vmem:[%s1] sm:$0xf]
  %v272 = vld [vmem:[%s1 + $0x4] sm:$0xf]
  %v273 = vld [vmem:[%s1 + $0x8] sm:$0xf]
  %v274 = vld [vmem:[%s1 + $0xc] sm:$0xf]
  %v275 = vld [vmem:[%s1 + $0x10] sm:$0xf]
  %v276 = vld [vmem:[%s1 + $0x14] sm:$0xf]
  %v277 = vld [vmem:[%s2] sm:$0x1]
  %v279 = vlaneseq
  %v280 = vshrl.u32 %v279, 7
  %v281 = vsub.s32 0, %v280
  %v282 = vrot.slane %v277, %v281
  %v540 = vunpack.c.l.b16 %v15
  %v541 = vunpack.c.l.b16 %v16
  %v542 = vunpack.c.l.b16 %v17
  %v543 = vunpack.c.l.b16 %v18
  %v544 = vunpack.c.l.b16 %v19
  %v545 = vunpack.c.l.b16 %v20
  %v546 = vunpack.c.l.b16 %v21
  %v547 = vunpack.c.l.b16 %v22
  %v548 = vunpack.c.l.b16 %v23
  %v549 = vunpack.c.l.b16 %v24
  %v550 = vunpack.c.l.b16 %v25
  %v551 = vunpack.c.l.b16 %v26
  %v552 = vunpack.c.l.b16 %v27
  %v553 = vunpack.c.l.b16 %v28
  %v554 = vunpack.c.l.b16 %v29
  %v555 = vunpack.c.l.b16 %v30
  %v556 = vunpack.c.l.b16 %v31
  %v557 = vunpack.c.l.b16 %v32
  %v558 = vunpack.c.l.b16 %v33
  %v559 = vunpack.c.l.b16 %v34
  %v560 = vunpack.c.l.b16 %v35
  %v561 = vunpack.c.l.b16 %v36
  %v562 = vunpack.c.l.b16 %v37
  %v563 = vunpack.c.l.b16 %v38
  %v564 = vunpack.c.l.b16 %v39
  %v565 = vunpack.c.l.b16 %v40
  %v566 = vunpack.c.l.b16 %v41
  %v567 = vunpack.c.l.b16 %v42
  %v568 = vunpack.c.l.b16 %v43
  %v569 = vunpack.c.l.b16 %v44
  %v570 = vunpack.c.l.b16 %v45
  %v571 = vunpack.c.l.b16 %v46
  %v572 = vunpack.c.l.b16 %v47
  %v573 = vunpack.c.l.b16 %v48
  %v574 = vunpack.c.l.b16 %v49
  %v575 = vunpack.c.l.b16 %v50
  %v576 = vunpack.c.l.b16 %v51
  %v577 = vunpack.c.l.b16 %v52
  %v578 = vunpack.c.l.b16 %v53
  %v579 = vunpack.c.l.b16 %v54
  %v580 = vunpack.c.l.b16 %v55
  %v581 = vunpack.c.l.b16 %v56
  %v582 = vunpack.c.l.b16 %v57
  %v583 = vunpack.c.l.b16 %v58
  %v584 = vunpack.c.l.b16 %v59
  %v585 = vunpack.c.l.b16 %v60
  %v586 = vunpack.c.l.b16 %v61
  %v587 = vunpack.c.l.b16 %v62
  %v588 = vunpack.c.l.b16 %v63
  %v589 = vunpack.c.l.b16 %v64
  %v590 = vunpack.c.l.b16 %v65
  %v591 = vunpack.c.l.b16 %v66
  %v592 = vunpack.c.l.b16 %v67
  %v593 = vunpack.c.l.b16 %v68
  %v594 = vunpack.c.l.b16 %v69
  %v595 = vunpack.c.l.b16 %v70
  %v596 = vunpack.c.l.b16 %v71
  %v597 = vunpack.c.l.b16 %v72
  %v598 = vunpack.c.l.b16 %v73
  %v599 = vunpack.c.l.b16 %v74
  %v600 = vunpack.c.l.b16 %v75
  %v601 = vunpack.c.l.b16 %v76
  %v602 = vunpack.c.l.b16 %v77
  %v603 = vunpack.c.l.b16 %v78
  %v604 = vunpack.c.l.b16 %v79
  %v605 = vunpack.c.l.b16 %v80
  %v606 = vunpack.c.l.b16 %v81
  %v607 = vunpack.c.l.b16 %v82
  %v608 = vunpack.c.l.b16 %v83
  %v609 = vunpack.c.l.b16 %v84
  %v610 = vunpack.c.l.b16 %v85
  %v611 = vunpack.c.l.b16 %v86
  %v612 = vunpack.c.l.b16 %v87
  %v613 = vunpack.c.l.b16 %v88
  %v614 = vunpack.c.l.b16 %v89
  %v615 = vunpack.c.l.b16 %v90
  %v616 = vunpack.c.l.b16 %v91
  %v617 = vunpack.c.l.b16 %v92
  %v618 = vunpack.c.l.b16 %v93
  %v619 = vunpack.c.l.b16 %v94
  %v620 = vunpack.c.l.b16 %v95
  %v621 = vunpack.c.l.b16 %v96
  %v622 = vunpack.c.l.b16 %v97
  %v623 = vunpack.c.l.b16 %v98
  %v624 = vunpack.c.l.b16 %v99
  %v625 = vunpack.c.l.b16 %v100
  %v626 = vunpack.c.l.b16 %v101
  %v627 = vunpack.c.l.b16 %v102
  %v628 = vunpack.c.l.b16 %v103
  %v629 = vunpack.c.l.b16 %v104
  %v630 = vunpack.c.l.b16 %v105
  %v631 = vunpack.c.l.b16 %v106
  %v632 = vunpack.c.l.b16 %v107
  %v633 = vunpack.c.l.b16 %v108
  %v634 = vunpack.c.l.b16 %v109
  %v635 = vunpack.c.l.b16 %v110
  %v636 = vunpack.c.l.b16 %v111
  %v637 = vunpack.c.l.b16 %v112
  %v638 = vunpack.c.l.b16 %v113
  %v639 = vunpack.c.l.b16 %v114
  %v640 = vunpack.c.l.b16 %v115
  %v641 = vunpack.c.l.b16 %v116
  %v642 = vunpack.c.l.b16 %v117
  %v643 = vunpack.c.l.b16 %v118
  %v644 = vunpack.c.l.b16 %v119
  %v645 = vunpack.c.l.b16 %v120
  %v646 = vunpack.c.l.b16 %v121
  %v647 = vunpack.c.l.b16 %v122
  %v648 = vunpack.c.l.b16 %v123
  %v649 = vunpack.c.l.b16 %v124
  %v650 = vunpack.c.l.b16 %v125
  %v651 = vunpack.c.l.b16 %v126
  %v652 = vunpack.c.l.b16 %v127
  %v653 = vunpack.c.l.b16 %v128
  %v654 = vunpack.c.l.b16 %v129
  %v655 = vunpack.c.l.b16 %v130
  %v656 = vunpack.c.l.b16 %v131
  %v657 = vunpack.c.l.b16 %v132
  %v658 = vunpack.c.l.b16 %v133
  %v659 = vunpack.c.l.b16 %v134
  %v660 = vunpack.c.l.b16 %v135
  %v661 = vunpack.c.l.b16 %v136
  %v662 = vunpack.c.l.b16 %v137
  %v663 = vunpack.c.l.b16 %v138
  %v664 = vunpack.c.l.b16 %v139
  %v665 = vunpack.c.l.b16 %v140
  %v666 = vunpack.c.l.b16 %v141
  %v667 = vunpack.c.l.b16 %v142
  %v668 = vunpack.c.l.b16 %v143
  %v669 = vunpack.c.l.b16 %v144
  %v670 = vunpack.c.l.b16 %v145
  %v671 = vunpack.c.l.b16 %v146
  %v672 = vunpack.c.l.b16 %v147
  %v673 = vunpack.c.l.b16 %v148
  %v674 = vunpack.c.l.b16 %v149
  %v675 = vunpack.c.l.b16 %v150
  %v676 = vunpack.c.l.b16 %v151
  %v677 = vunpack.c.l.b16 %v152
  %v678 = vunpack.c.l.b16 %v153
  %v679 = vunpack.c.l.b16 %v154
  %v680 = vunpack.c.l.b16 %v155
  %v681 = vunpack.c.l.b16 %v156
  %v682 = vunpack.c.l.b16 %v157
  %v683 = vunpack.c.l.b16 %v158
  %v684 = vunpack.c.l.b16 %v159
  %v685 = vunpack.c.l.b16 %v160
  %v686 = vunpack.c.l.b16 %v161
  %v687 = vunpack.c.l.b16 %v162
  %v688 = vunpack.c.l.b16 %v163
  %v689 = vunpack.c.l.b16 %v164
  %v690 = vunpack.c.l.b16 %v165
  %v691 = vunpack.c.l.b16 %v166
  %v692 = vunpack.c.l.b16 %v167
  %v693 = vunpack.c.l.b16 %v168
  %v694 = vunpack.c.l.b16 %v169
  %v695 = vunpack.c.l.b16 %v170
  %v696 = vunpack.c.l.b16 %v171
  %v697 = vunpack.c.l.b16 %v172
  %v698 = vunpack.c.l.b16 %v173
  %v699 = vunpack.c.l.b16 %v174
  %v700 = vunpack.c.l.b16 %v175
  %v701 = vunpack.c.l.b16 %v176
  %v702 = vunpack.c.l.b16 %v177
  %v703 = vunpack.c.l.b16 %v178
  %v704 = vunpack.c.l.b16 %v179
  %v705 = vunpack.c.l.b16 %v180
  %v706 = vunpack.c.l.b16 %v181
  %v707 = vunpack.c.l.b16 %v182
  %v708 = vunpack.c.l.b16 %v183
  %v709 = vunpack.c.l.b16 %v184
  %v710 = vunpack.c.l.b16 %v185
  %v711 = vunpack.c.l.b16 %v186
  %v712 = vunpack.c.l.b16 %v187
  %v713 = vunpack.c.l.b16 %v188
  %v714 = vunpack.c.l.b16 %v189
  %v715 = vunpack.c.l.b16 %v190
  %v716 = vunpack.c.l.b16 %v191
  %v717 = vunpack.c.l.b16 %v192
  %v718 = vunpack.c.l.b16 %v193
  %v719 = vunpack.c.l.b16 %v194
  %v720 = vunpack.c.l.b16 %v195
  %v721 = vunpack.c.l.b16 %v196
  %v722 = vunpack.c.l.b16 %v197
  %v723 = vunpack.c.l.b16 %v198
  %v724 = vunpack.c.l.b16 %v199
  %v725 = vunpack.c.l.b16 %v200
  %v726 = vunpack.c.l.b16 %v201
  %v727 = vunpack.c.l.b16 %v202
  %v728 = vunpack.c.l.b16 %v203
  %v729 = vunpack.c.l.b16 %v204
  %v730 = vunpack.c.l.b16 %v205
  %v731 = vunpack.c.l.b16 %v206
  %v732 = vunpack.c.l.b16 %v207
  %v733 = vunpack.c.l.b16 %v208
  %v734 = vunpack.c.l.b16 %v209
  %v735 = vunpack.c.l.b16 %v210
  %v736 = vunpack.c.l.b16 %v211
  %v737 = vunpack.c.l.b16 %v212
  %v738 = vunpack.c.l.b16 %v213
  %v739 = vunpack.c.l.b16 %v214
  %v740 = vunpack.c.l.b16 %v215
  %v741 = vunpack.c.l.b16 %v216
  %v742 = vunpack.c.l.b16 %v217
  %v743 = vunpack.c.l.b16 %v218
  %v744 = vunpack.c.l.b16 %v219
  %v745 = vunpack.c.l.b16 %v220
  %v746 = vunpack.c.l.b16 %v221
  %v747 = vunpack.c.l.b16 %v222
  %v748 = vunpack.c.l.b16 %v223
  %v749 = vunpack.c.l.b16 %v224
  %v750 = vunpack.c.l.b16 %v225
  %v751 = vunpack.c.l.b16 %v226
  %v752 = vunpack.c.l.b16 %v227
  %v753 = vunpack.c.l.b16 %v228
  %v754 = vunpack.c.l.b16 %v229
  %v755 = vunpack.c.l.b16 %v230
  %v756 = vunpack.c.l.b16 %v231
  %v757 = vunpack.c.l.b16 %v232
  %v758 = vunpack.c.l.b16 %v233
  %v759 = vunpack.c.l.b16 %v234
  %v760 = vunpack.c.l.b16 %v235
  %v761 = vunpack.c.l.b16 %v236
  %v762 = vunpack.c.l.b16 %v237
  %v763 = vunpack.c.l.b16 %v238
  %v764 = vunpack.c.l.b16 %v239
  %v765 = vunpack.c.l.b16 %v240
  %v766 = vunpack.c.l.b16 %v241
  %v767 = vunpack.c.l.b16 %v242
  %v768 = vunpack.c.l.b16 %v243
  %v769 = vunpack.c.l.b16 %v244
  %v770 = vunpack.c.l.b16 %v245
  %v771 = vunpack.c.l.b16 %v246
  %v772 = vunpack.c.l.b16 %v247
  %v773 = vunpack.c.l.b16 %v248
  %v774 = vunpack.c.l.b16 %v249
  %v775 = vunpack.c.l.b16 %v250
  %v776 = vunpack.c.l.b16 %v251
  %v777 = vunpack.c.l.b16 %v252
  %v778 = vunpack.c.l.b16 %v253
  %v779 = vunpack.c.l.b16 %v254
  %v780 = vunpack.c.l.b16 %v255
  %v781 = vunpack.c.l.b16 %v256
  %v782 = vunpack.c.l.b16 %v257
  %v783 = vunpack.c.l.b16 %v258
  %v784 = vunpack.c.l.b16 %v259
  %v785 = vunpack.c.l.b16 %v260
  %v786 = vunpack.c.l.b16 %v261
  %v787 = vunpack.c.l.b16 %v262
  %v788 = vunpack.c.l.b16 %v263
  %v789 = vunpack.c.l.b16 %v264
  %v790 = vunpack.c.l.b16 %v265
  %v791 = vunpack.c.l.b16 %v266
  %v792 = vunpack.c.l.b16 %v267
  %v793 = vunpack.c.l.b16 %v268
  %v794 = vunpack.c.l.b16 %v269
  %v795 = vunpack.c.l.b16 %v270
  %v796 = vpack.c.b16 %v541, %v540
  %v797 = vpack.c.b16 %v543, %v542
  %v798 = vpack.c.b16 %v545, %v544
  %v799 = vpack.c.b16 %v547, %v546
  %v800 = vpack.c.b16 %v549, %v548
  %v801 = vpack.c.b16 %v551, %v550
  %v802 = vpack.c.b16 %v553, %v552
  %v803 = vpack.c.b16 %v555, %v554
  %v804 = vpack.c.b16 %v557, %v556
  %v805 = vpack.c.b16 %v559, %v558
  %v806 = vpack.c.b16 %v561, %v560
  %v807 = vpack.c.b16 %v563, %v562
  %v808 = vpack.c.b16 %v565, %v564
  %v809 = vpack.c.b16 %v567, %v566
  %v810 = vpack.c.b16 %v569, %v568
  %v811 = vpack.c.b16 %v571, %v570
  %v812 = vpack.c.b16 %v573, %v572
  %v813 = vpack.c.b16 %v575, %v574
  %v814 = vpack.c.b16 %v577, %v576
  %v815 = vpack.c.b16 %v579, %v578
  %v816 = vpack.c.b16 %v581, %v580
  %v817 = vpack.c.b16 %v583, %v582
  %v818 = vpack.c.b16 %v585, %v584
  %v819 = vpack.c.b16 %v587, %v586
  %v820 = vpack.c.b16 %v589, %v588
  %v821 = vpack.c.b16 %v591, %v590
  %v822 = vpack.c.b16 %v593, %v592
  %v823 = vpack.c.b16 %v595, %v594
  %v824 = vpack.c.b16 %v597, %v596
  %v825 = vpack.c.b16 %v599, %v598
  %v826 = vpack.c.b16 %v601, %v600
  %v827 = vpack.c.b16 %v603, %v602
  %v828 = vpack.c.b16 %v605, %v604
  %v829 = vpack.c.b16 %v607, %v606
  %v830 = vpack.c.b16 %v609, %v608
  %v831 = vpack.c.b16 %v611, %v610
  %v832 = vpack.c.b16 %v613, %v612
  %v833 = vpack.c.b16 %v615, %v614
  %v834 = vpack.c.b16 %v617, %v616
  %v835 = vpack.c.b16 %v619, %v618
  %v836 = vpack.c.b16 %v621, %v620
  %v837 = vpack.c.b16 %v623, %v622
  %v838 = vpack.c.b16 %v625, %v624
  %v839 = vpack.c.b16 %v627, %v626
  %v840 = vpack.c.b16 %v629, %v628
  %v841 = vpack.c.b16 %v631, %v630
  %v842 = vpack.c.b16 %v633, %v632
  %v843 = vpack.c.b16 %v635, %v634
  %v844 = vpack.c.b16 %v637, %v636
  %v845 = vpack.c.b16 %v639, %v638
  %v846 = vpack.c.b16 %v641, %v640
  %v847 = vpack.c.b16 %v643, %v642
  %v848 = vpack.c.b16 %v645, %v644
  %v849 = vpack.c.b16 %v647, %v646
  %v850 = vpack.c.b16 %v649, %v648
  %v851 = vpack.c.b16 %v651, %v650
  %v852 = vpack.c.b16 %v653, %v652
  %v853 = vpack.c.b16 %v655, %v654
  %v854 = vpack.c.b16 %v657, %v656
  %v855 = vpack.c.b16 %v659, %v658
  %v856 = vpack.c.b16 %v661, %v660
  %v857 = vpack.c.b16 %v663, %v662
  %v858 = vpack.c.b16 %v665, %v664
  %v859 = vpack.c.b16 %v667, %v666
  %v860 = vpack.c.b16 %v669, %v668
  %v861 = vpack.c.b16 %v671, %v670
  %v862 = vpack.c.b16 %v673, %v672
  %v863 = vpack.c.b16 %v675, %v674
  %v864 = vpack.c.b16 %v677, %v676
  %v865 = vpack.c.b16 %v679, %v678
  %v866 = vpack.c.b16 %v681, %v680
  %v867 = vpack.c.b16 %v683, %v682
  %v868 = vpack.c.b16 %v685, %v684
  %v869 = vpack.c.b16 %v687, %v686
  %v870 = vpack.c.b16 %v689, %v688
  %v871 = vpack.c.b16 %v691, %v690
  %v872 = vpack.c.b16 %v693, %v692
  %v873 = vpack.c.b16 %v695, %v694
  %v874 = vpack.c.b16 %v697, %v696
  %v875 = vpack.c.b16 %v699, %v698
  %v876 = vpack.c.b16 %v701, %v700
  %v877 = vpack.c.b16 %v703, %v702
  %v878 = vpack.c.b16 %v705, %v704
  %v879 = vpack.c.b16 %v707, %v706
  %v880 = vpack.c.b16 %v709, %v708
  %v881 = vpack.c.b16 %v711, %v710
  %v882 = vpack.c.b16 %v713, %v712
  %v883 = vpack.c.b16 %v715, %v714
  %v884 = vpack.c.b16 %v717, %v716
  %v885 = vpack.c.b16 %v719, %v718
  %v886 = vpack.c.b16 %v721, %v720
  %v887 = vpack.c.b16 %v723, %v722
  %v888 = vpack.c.b16 %v725, %v724
  %v889 = vpack.c.b16 %v727, %v726
  %v890 = vpack.c.b16 %v729, %v728
  %v891 = vpack.c.b16 %v731, %v730
  %v892 = vpack.c.b16 %v733, %v732
  %v893 = vpack.c.b16 %v735, %v734
  %v894 = vpack.c.b16 %v737, %v736
  %v895 = vpack.c.b16 %v739, %v738
  %v896 = vpack.c.b16 %v741, %v740
  %v897 = vpack.c.b16 %v743, %v742
  %v898 = vpack.c.b16 %v745, %v744
  %v899 = vpack.c.b16 %v747, %v746
  %v900 = vpack.c.b16 %v749, %v748
  %v901 = vpack.c.b16 %v751, %v750
  %v902 = vpack.c.b16 %v753, %v752
  %v903 = vpack.c.b16 %v755, %v754
  %v904 = vpack.c.b16 %v757, %v756
  %v905 = vpack.c.b16 %v759, %v758
  %v906 = vpack.c.b16 %v761, %v760
  %v907 = vpack.c.b16 %v763, %v762
  %v908 = vpack.c.b16 %v765, %v764
  %v909 = vpack.c.b16 %v767, %v766
  %v910 = vpack.c.b16 %v769, %v768
  %v911 = vpack.c.b16 %v771, %v770
  %v912 = vpack.c.b16 %v773, %v772
  %v913 = vpack.c.b16 %v775, %v774
  %v914 = vpack.c.b16 %v777, %v776
  %v915 = vpack.c.b16 %v779, %v778
  %v916 = vpack.c.b16 %v781, %v780
  %v917 = vpack.c.b16 %v783, %v782
  %v918 = vpack.c.b16 %v785, %v784
  %v919 = vpack.c.b16 %v787, %v786
  %v920 = vpack.c.b16 %v789, %v788
  %v921 = vpack.c.b16 %v791, %v790
  %v922 = vpack.c.b16 %v793, %v792
  %v923 = vpack.c.b16 %v795, %v794
  %v930 = vunpack.c.l.b16 %v271
  %v931 = vunpack.c.l.b16 %v272
  %v932 = vunpack.c.l.b16 %v273
  %v933 = vunpack.c.l.b16 %v274
  %v934 = vunpack.c.l.b16 %v275
  %v935 = vunpack.c.l.b16 %v276
  %v936 = vpack.c.b16 %v931, %v930
  %v937 = vpack.c.b16 %v933, %v932
  %v938 = vpack.c.b16 %v935, %v934
  %vm942 = vcmask 392192
  %v944 = vsel %vm942, %v796, 0
  %v947 = vsel %vm942, %v797, 0
  %v950 = vsel %vm942, %v798, 0
  %v953 = vsel %vm942, %v799, 0
  %v956 = vsel %vm942, %v800, 0
  %v959 = vsel %vm942, %v801, 0
  %v962 = vsel %vm942, %v802, 0
  %v965 = vsel %vm942, %v803, 0
  %v968 = vsel %vm942, %v804, 0
  %v971 = vsel %vm942, %v805, 0
  %v974 = vsel %vm942, %v806, 0
  %v977 = vsel %vm942, %v807, 0
  %v980 = vsel %vm942, %v808, 0
  %v983 = vsel %vm942, %v809, 0
  %v986 = vsel %vm942, %v810, 0
  %v989 = vsel %vm942, %v811, 0
  %v992 = vsel %vm942, %v812, 0
  %v995 = vsel %vm942, %v813, 0
  %v998 = vsel %vm942, %v814, 0
  %v1001 = vsel %vm942, %v815, 0
  %v1004 = vsel %vm942, %v816, 0
  %v1007 = vsel %vm942, %v817, 0
  %v1010 = vsel %vm942, %v818, 0
  %v1013 = vsel %vm942, %v819, 0
  %v1016 = vsel %vm942, %v820, 0
  %v1019 = vsel %vm942, %v821, 0
  %v1022 = vsel %vm942, %v822, 0
  %v1025 = vsel %vm942, %v823, 0
  %v1028 = vsel %vm942, %v824, 0
  %v1031 = vsel %vm942, %v825, 0
  %v1034 = vsel %vm942, %v826, 0
  %v1037 = vsel %vm942, %v827, 0
  %v1040 = vsel %vm942, %v828, 0
  %v1043 = vsel %vm942, %v829, 0
  %v1046 = vsel %vm942, %v830, 0
  %v1049 = vsel %vm942, %v831, 0
  %v1052 = vsel %vm942, %v832, 0
  %v1055 = vsel %vm942, %v833, 0
  %v1058 = vsel %vm942, %v834, 0
  %v1061 = vsel %vm942, %v835, 0
  %v1064 = vsel %vm942, %v836, 0
  %v1067 = vsel %vm942, %v837, 0
  %v1070 = vsel %vm942, %v838, 0
  %v1073 = vsel %vm942, %v839, 0
  %v1076 = vsel %vm942, %v840, 0
  %v1079 = vsel %vm942, %v841, 0
  %v1082 = vsel %vm942, %v842, 0
  %v1085 = vsel %vm942, %v843, 0
  %v1088 = vsel %vm942, %v844, 0
  %v1091 = vsel %vm942, %v845, 0
  %v1094 = vsel %vm942, %v846, 0
  %v1097 = vsel %vm942, %v847, 0
  %v1100 = vsel %vm942, %v848, 0
  %v1103 = vsel %vm942, %v849, 0
  %v1106 = vsel %vm942, %v850, 0
  %v1109 = vsel %vm942, %v851, 0
  %v1112 = vsel %vm942, %v852, 0
  %v1115 = vsel %vm942, %v853, 0
  %v1118 = vsel %vm942, %v854, 0
  %v1121 = vsel %vm942, %v855, 0
  %v1124 = vsel %vm942, %v856, 0
  %v1127 = vsel %vm942, %v857, 0
  %v1130 = vsel %vm942, %v858, 0
  %v1133 = vsel %vm942, %v859, 0
  %v1136 = vsel %vm942, %v860, 0
  %v1139 = vsel %vm942, %v861, 0
  %v1142 = vsel %vm942, %v862, 0
  %v1145 = vsel %vm942, %v863, 0
  %v1148 = vsel %vm942, %v864, 0
  %v1151 = vsel %vm942, %v865, 0
  %v1154 = vsel %vm942, %v866, 0
  %v1157 = vsel %vm942, %v867, 0
  %v1160 = vsel %vm942, %v868, 0
  %v1163 = vsel %vm942, %v869, 0
  %v1166 = vsel %vm942, %v870, 0
  %v1169 = vsel %vm942, %v871, 0
  %v1172 = vsel %vm942, %v872, 0
  %v1175 = vsel %vm942, %v873, 0
  %v1178 = vsel %vm942, %v874, 0
  %v1181 = vsel %vm942, %v875, 0
  %v1184 = vsel %vm942, %v876, 0
  %v1187 = vsel %vm942, %v877, 0
  %v1190 = vsel %vm942, %v878, 0
  %v1193 = vsel %vm942, %v879, 0
  %v1196 = vsel %vm942, %v880, 0
  %v1199 = vsel %vm942, %v881, 0
  %v1202 = vsel %vm942, %v882, 0
  %v1205 = vsel %vm942, %v883, 0
  %v1208 = vsel %vm942, %v884, 0
  %v1211 = vsel %vm942, %v885, 0
  %v1214 = vsel %vm942, %v886, 0
  %v1217 = vsel %vm942, %v887, 0
  %v1220 = vsel %vm942, %v888, 0
  %v1223 = vsel %vm942, %v889, 0
  %v1226 = vsel %vm942, %v890, 0
  %v1229 = vsel %vm942, %v891, 0
  %v1232 = vsel %vm942, %v892, 0
  %v1235 = vsel %vm942, %v893, 0
  %v1238 = vsel %vm942, %v894, 0
  %v1241 = vsel %vm942, %v895, 0
  %v1244 = vsel %vm942, %v896, 0
  %v1247 = vsel %vm942, %v897, 0
  %v1250 = vsel %vm942, %v898, 0
  %v1253 = vsel %vm942, %v899, 0
  %v1256 = vsel %vm942, %v900, 0
  %v1259 = vsel %vm942, %v901, 0
  %v1262 = vsel %vm942, %v902, 0
  %v1265 = vsel %vm942, %v903, 0
  %v1268 = vsel %vm942, %v904, 0
  %v1271 = vsel %vm942, %v905, 0
  %v1274 = vsel %vm942, %v906, 0
  %v1277 = vsel %vm942, %v907, 0
  %v1280 = vsel %vm942, %v908, 0
  %v1283 = vsel %vm942, %v909, 0
  %v1286 = vsel %vm942, %v910, 0
  %v1289 = vsel %vm942, %v911, 0
  %v1292 = vsel %vm942, %v912, 0
  %v1295 = vsel %vm942, %v913, 0
  %v1298 = vsel %vm942, %v914, 0
  %v1301 = vsel %vm942, %v915, 0
  %v1304 = vsel %vm942, %v916, 0
  %v1307 = vsel %vm942, %v917, 0
  %v1310 = vsel %vm942, %v918, 0
  %v1313 = vsel %vm942, %v919, 0
  %v1316 = vsel %vm942, %v920, 0
  %v1319 = vsel %vm942, %v921, 0
  %v1322 = vsel %vm942, %v922, 0
  %v1325 = vsel %vm942, %v923, 0
  %1327 = vmatprep.subr.bf16.mxu0 0
  %1328 = vmatpush1.bf16.msra.mxu0 %v936
  %1329 = vmatprep.subr.bf16.mxu0 0
  %1330 = vmatpush1.bf16.msra.mxu0 %v937
  %1331 = vmatprep.subr.bf16.mxu0 0
  %1332 = vmatpush1.bf16.msra.mxu0 %v938
  %1333 = vmatprep.subr.bf16.mxu0 0
  %1334 = vmatpush1.bf16.msra.mxu0 0
  %1335 = vmatprep.subr.bf16.mxu0 0
  %1336 = vmatpush1.bf16.msra.mxu0 0
  %1337 = vmatprep.subr.bf16.mxu0 0
  %1338 = vmatpush1.bf16.msra.mxu0 0
  %1339 = vmatprep.subr.bf16.mxu0 0
  %1340 = vmatpush1.bf16.msra.mxu0 0
  %1341 = vmatprep.subr.bf16.mxu0 0
  %1342 = vmatpush1.bf16.msra.mxu0 0
  %1343 = vmatprep.subr.bf16.mxu0 0
  %1344 = vmatpush1.bf16.msra.mxu0 0
  %1345 = vmatprep.subr.bf16.mxu0 0
  %1346 = vmatpush1.bf16.msra.mxu0 0
  %1347 = vmatprep.subr.bf16.mxu0 0
  %1348 = vmatpush1.bf16.msra.mxu0 0
  %1349 = vmatprep.subr.bf16.mxu0 0
  %1350 = vmatpush1.bf16.msra.mxu0 0
  %1351 = vmatprep.subr.bf16.mxu0 0
  %1352 = vmatpush1.bf16.msra.mxu0 0
  %1353 = vmatprep.subr.bf16.mxu0 0
  %1354 = vmatpush1.bf16.msra.mxu0 0
  %1355 = vmatprep.subr.bf16.mxu0 0
  %1356 = vmatpush1.bf16.msra.mxu0 0
  %1357 = vmatprep.subr.bf16.mxu0 0
  %1358 = vmatpush1.bf16.msra.mxu0 0
  %1359 = vmatprep.mubr.bf16.mxu0 0
  %1360 = vmatmul.mubr.bf16.gmra.mrb[0].mxu0 %v944
  %v1361 = vpop.f32.mrb[0].mxu0
  %v1362 = vadd.f32 %v282, %v1361
  %v1363 = vpop.f32.mrb[0].mxu0
  %v1364 = vpop.f32.mrb[0].mxu0
  %v1365 = vadd.f32 %v282, %v1364
  %v1366 = vpop.f32.mrb[0].mxu0
  %1367 = vmatprep.mubr.bf16.mxu0 0
  %1368 = vmatmul.mubr.bf16.gmra.mrb[0].mxu0 %v947
  %v1369 = vpop.f32.mrb[0].mxu0
  %v1370 = vadd.f32 %v282, %v1369
  %v1371 = vpop.f32.mrb[0].mxu0
  %v1372 = vpop.f32.mrb[0].mxu0
  %v1373 = vadd.f32 %v282, %v1372
  %v1374 = vpop.f32.mrb[0].mxu0
  %1375 = vmatprep.mubr.bf16.mxu0 0
  %1376 = vmatmul.mubr.bf16.gmra.mrb[0].mxu0 %v950
  %v1377 = vpop.f32.mrb[0].mxu0
  %v1378 = vadd.f32 %v282, %v1377
  %v1379 = vpop.f32.mrb[0].mxu0
  %v1380 = vpop.f32.mrb[0].mxu0
  %v1381 = vadd.f32 %v282, %v1380
  %v1382 = vpop.f32.mrb[0].mxu0
  %1383 = vmatprep.mubr.bf16.mxu0 0
  %1384 = vmatmul.mubr.bf16.gmra.mrb[0].mxu0 %v953
  %v1385 = vpop.f32.mrb[0].mxu0
  %v1386 = vadd.f32 %v282, %v1385
  %v1387 = vpop.f32.mrb[0].mxu0
  %v1388 = vpop.f32.mrb[0].mxu0
  %v1389 = vadd.f32 %v282, %v1388
  %v1390 = vpop.f32.mrb[0].mxu0
  %1391 = vmatprep.mubr.bf16.mxu0 0
  %1392 = vmatmul.mubr.bf16.gmra.mrb[0].mxu0 %v956
  %v1393 = vpop.f32.mrb[0].mxu0
  %v1394 = vadd.f32 %v282, %v1393
  %v1395 = vpop.f32.mrb[0].mxu0
  %v1396 = vpop.f32.mrb[0].mxu0
  %v1397 = vadd.f32 %v282, %v1396
  %v1398 = vpop.f32.mrb[0].mxu0
  %1399 = vmatprep.mubr.bf16.mxu0 0
  %1400 = vmatmul.mubr.bf16.gmra.mrb[0].mxu0 %v959
  %v1401 = vpop.f32.mrb[0].mxu0
  %v1402 = vadd.f32 %v282, %v1401
  %v1403 = vpop.f32.mrb[0].mxu0
  %v1404 = vpop.f32.mrb[0].mxu0
  %v1405 = vadd.f32 %v282, %v1404
  %v1406 = vpop.f32.mrb[0].mxu0
  %1407 = vmatprep.mubr.bf16.mxu0 0
  %1408 = vmatmul.mubr.bf16.gmra.mrb[0].mxu0 %v962
  %v1409 = vpop.f32.mrb[0].mxu0
  %v1410 = vadd.f32 %v282, %v1409
  %v1411 = vpop.f32.mrb[0].mxu0
  %v1412 = vpop.f32.mrb[0].mxu0
  %v1413 = vadd.f32 %v282, %v1412
  %v1414 = vpop.f32.mrb[0].mxu0
  %1415 = vmatprep.mubr.bf16.mxu0 0
  %1416 = vmatmul.mubr.bf16.gmra.mrb[0].mxu0 %v965
  %v1417 = vpop.f32.mrb[0].mxu0
  %v1418 = vadd.f32 %v282, %v1417
  %v1419 = vpop.f32.mrb[0].mxu0
  %v1420 = vpop.f32.mrb[0].mxu0
  %v1421 = vadd.f32 %v282, %v1420
  %v1422 = vpop.f32.mrb[0].mxu0
  %1423 = vmatprep.mubr.bf16.mxu0 0
  %1424 = vmatmul.mubr.bf16.gmra.mrb[0].mxu0 %v968
  %v1425 = vpop.f32.mrb[0].mxu0
  %v1426 = vadd.f32 %v282, %v1425
  %v1427 = vpop.f32.mrb[0].mxu0
  %v1428 = vpop.f32.mrb[0].mxu0
  %v1429 = vadd.f32 %v282, %v1428
  %v1430 = vpop.f32.mrb[0].mxu0
  %1431 = vmatprep.mubr.bf16.mxu0 0
  %1432 = vmatmul.mubr.bf16.gmra.mrb[0].mxu0 %v971
  %v1433 = vpop.f32.mrb[0].mxu0
  %v1434 = vadd.f32 %v282, %v1433
  %v1435 = vpop.f32.mrb[0].mxu0
  %v1436 = vpop.f32.mrb[0].mxu0
  %v1437 = vadd.f32 %v282, %v1436
  %v1438 = vpop.f32.mrb[0].mxu0
  %1439 = vmatprep.mubr.bf16.mxu0 0
  %1440 = vmatmul.mubr.bf16.gmra.mrb[0].mxu0 %v974
  %v1441 = vpop.f32.mrb[0].mxu0
  %v1442 = vadd.f32 %v282, %v1441
  %v1443 = vpop.f32.mrb[0].mxu0
  %v1444 = vpop.f32.mrb[0].mxu0
  %v1445 = vadd.f32 %v282, %v1444
  %v1446 = vpop.f32.mrb[0].mxu0
  %1447 = vmatprep.mubr.bf16.mxu0 0
  %1448 = vmatmul.mubr.bf16.gmra.mrb[0].mxu0 %v977
  %v1449 = vpop.f32.mrb[0].mxu0
  %v1450 = vadd.f32 %v282, %v1449
  %v1451 = vpop.f32.mrb[0].mxu0
  %v1452 = vpop.f32.mrb[0].mxu0
  %v1453 = vadd.f32 %v282, %v1452
  %v1454 = vpop.f32.mrb[0].mxu0
  %1455 = vmatprep.mubr.bf16.mxu0 0
  %1456 = vmatmul.mubr.bf16.gmra.mrb[0].mxu0 %v980
  %v1457 = vpop.f32.mrb[0].mxu0
  %v1458 = vadd.f32 %v282, %v1457
  %v1459 = vpop.f32.mrb[0].mxu0
  %v1460 = vpop.f32.mrb[0].mxu0
  %v1461 = vadd.f32 %v282, %v1460
  %v1462 = vpop.f32.mrb[0].mxu0
  %1463 = vmatprep.mubr.bf16.mxu0 0
  %1464 = vmatmul.mubr.bf16.gmra.mrb[0].mxu0 %v983
  %v1465 = vpop.f32.mrb[0].mxu0
  %v1466 = vadd.f32 %v282, %v1465
  %v1467 = vpop.f32.mrb[0].mxu0
  %v1468 = vpop.f32.mrb[0].mxu0
  %v1469 = vadd.f32 %v282, %v1468
  %v1470 = vpop.f32.mrb[0].mxu0
  %1471 = vmatprep.mubr.bf16.mxu0 0
  %1472 = vmatmul.mubr.bf16.gmra.mrb[0].mxu0 %v986
  %v1473 = vpop.f32.mrb[0].mxu0
  %v1474 = vadd.f32 %v282, %v1473
  %v1475 = vpop.f32.mrb[0].mxu0
  %v1476 = vpop.f32.mrb[0].mxu0
  %v1477 = vadd.f32 %v282, %v1476
  %v1478 = vpop.f32.mrb[0].mxu0
  %1479 = vmatprep.mubr.bf16.mxu0 0
  %1480 = vmatmul.mubr.bf16.gmra.mrb[0].mxu0 %v989
  %v1481 = vpop.f32.mrb[0].mxu0
  %v1482 = vadd.f32 %v282, %v1481
  %v1483 = vpop.f32.mrb[0].mxu0
  %v1484 = vpop.f32.mrb[0].mxu0
  %v1485 = vadd.f32 %v282, %v1484
  %v1486 = vpop.f32.mrb[0].mxu0
  %1487 = vmatprep.mubr.bf16.mxu0 0
  %1488 = vmatmul.mubr.bf16.gmra.mrb[0].mxu0 %v992
  %v1489 = vpop.f32.mrb[0].mxu0
  %v1490 = vadd.f32 %v282, %v1489
  %v1491 = vpop.f32.mrb[0].mxu0
  %v1492 = vpop.f32.mrb[0].mxu0
  %v1493 = vadd.f32 %v282, %v1492
  %v1494 = vpop.f32.mrb[0].mxu0
  %1495 = vmatprep.mubr.bf16.mxu0 0
  %1496 = vmatmul.mubr.bf16.gmra.mrb[0].mxu0 %v995
  %v1497 = vpop.f32.mrb[0].mxu0
  %v1498 = vadd.f32 %v282, %v1497
  %v1499 = vpop.f32.mrb[0].mxu0
  %v1500 = vpop.f32.mrb[0].mxu0
  %v1501 = vadd.f32 %v282, %v1500
  %v1502 = vpop.f32.mrb[0].mxu0
  %1503 = vmatprep.mubr.bf16.mxu0 0
  %1504 = vmatmul.mubr.bf16.gmra.mrb[0].mxu0 %v998
  %v1505 = vpop.f32.mrb[0].mxu0
  %v1506 = vadd.f32 %v282, %v1505
  %v1507 = vpop.f32.mrb[0].mxu0
  %v1508 = vpop.f32.mrb[0].mxu0
  %v1509 = vadd.f32 %v282, %v1508
  %v1510 = vpop.f32.mrb[0].mxu0
  %1511 = vmatprep.mubr.bf16.mxu0 0
  %1512 = vmatmul.mubr.bf16.gmra.mrb[0].mxu0 %v1001
  %v1513 = vpop.f32.mrb[0].mxu0
  %v1514 = vadd.f32 %v282, %v1513
  %v1515 = vpop.f32.mrb[0].mxu0
  %v1516 = vpop.f32.mrb[0].mxu0
  %v1517 = vadd.f32 %v282, %v1516
  %v1518 = vpop.f32.mrb[0].mxu0
  %1519 = vmatprep.mubr.bf16.mxu0 0
  %1520 = vmatmul.mubr.bf16.gmra.mrb[0].mxu0 %v1004
  %v1521 = vpop.f32.mrb[0].mxu0
  %v1522 = vadd.f32 %v282, %v1521
  %v1523 = vpop.f32.mrb[0].mxu0
  %v1524 = vpop.f32.mrb[0].mxu0
  %v1525 = vadd.f32 %v282, %v1524
  %v1526 = vpop.f32.mrb[0].mxu0
  %1527 = vmatprep.mubr.bf16.mxu0 0
  %1528 = vmatmul.mubr.bf16.gmra.mrb[0].mxu0 %v1007
  %v1529 = vpop.f32.mrb[0].mxu0
  %v1530 = vadd.f32 %v282, %v1529
  %v1531 = vpop.f32.mrb[0].mxu0
  %v1532 = vpop.f32.mrb[0].mxu0
  %v1533 = vadd.f32 %v282, %v1532
  %v1534 = vpop.f32.mrb[0].mxu0
  %1535 = vmatprep.mubr.bf16.mxu0 0
  %1536 = vmatmul.mubr.bf16.gmra.mrb[0].mxu0 %v1010
  %v1537 = vpop.f32.mrb[0].mxu0
  %v1538 = vadd.f32 %v282, %v1537
  %v1539 = vpop.f32.mrb[0].mxu0
  %v1540 = vpop.f32.mrb[0].mxu0
  %v1541 = vadd.f32 %v282, %v1540
  %v1542 = vpop.f32.mrb[0].mxu0
  %1543 = vmatprep.mubr.bf16.mxu0 0
  %1544 = vmatmul.mubr.bf16.gmra.mrb[0].mxu0 %v1013
  %v1545 = vpop.f32.mrb[0].mxu0
  %v1546 = vadd.f32 %v282, %v1545
  %v1547 = vpop.f32.mrb[0].mxu0
  %v1548 = vpop.f32.mrb[0].mxu0
  %v1549 = vadd.f32 %v282, %v1548
  %v1550 = vpop.f32.mrb[0].mxu0
  %1551 = vmatprep.mubr.bf16.mxu0 0
  %1552 = vmatmul.mubr.bf16.gmra.mrb[0].mxu0 %v1016
  %v1553 = vpop.f32.mrb[0].mxu0
  %v1554 = vadd.f32 %v282, %v1553
  %v1555 = vpop.f32.mrb[0].mxu0
  %v1556 = vpop.f32.mrb[0].mxu0
  %v1557 = vadd.f32 %v282, %v1556
  %v1558 = vpop.f32.mrb[0].mxu0
  %1559 = vmatprep.mubr.bf16.mxu0 0
  %1560 = vmatmul.mubr.bf16.gmra.mrb[0].mxu0 %v1019
  %v1561 = vpop.f32.mrb[0].mxu0
  %v1562 = vadd.f32 %v282, %v1561
  %v1563 = vpop.f32.mrb[0].mxu0
  %v1564 = vpop.f32.mrb[0].mxu0
  %v1565 = vadd.f32 %v282, %v1564
  %v1566 = vpop.f32.mrb[0].mxu0
  %1567 = vmatprep.mubr.bf16.mxu0 0
  %1568 = vmatmul.mubr.bf16.gmra.mrb[0].mxu0 %v1022
  %v1569 = vpop.f32.mrb[0].mxu0
  %v1570 = vadd.f32 %v282, %v1569
  %v1571 = vpop.f32.mrb[0].mxu0
  %v1572 = vpop.f32.mrb[0].mxu0
  %v1573 = vadd.f32 %v282, %v1572
  %v1574 = vpop.f32.mrb[0].mxu0
  %1575 = vmatprep.mubr.bf16.mxu0 0
  %1576 = vmatmul.mubr.bf16.gmra.mrb[0].mxu0 %v1025
  %v1577 = vpop.f32.mrb[0].mxu0
  %v1578 = vadd.f32 %v282, %v1577
  %v1579 = vpop.f32.mrb[0].mxu0
  %v1580 = vpop.f32.mrb[0].mxu0
  %v1581 = vadd.f32 %v282, %v1580
  %v1582 = vpop.f32.mrb[0].mxu0
  %1583 = vmatprep.mubr.bf16.mxu0 0
  %1584 = vmatmul.mubr.bf16.gmra.mrb[0].mxu0 %v1028
  %v1585 = vpop.f32.mrb[0].mxu0
  %v1586 = vadd.f32 %v282, %v1585
  %v1587 = vpop.f32.mrb[0].mxu0
  %v1588 = vpop.f32.mrb[0].mxu0
  %v1589 = vadd.f32 %v282, %v1588
  %v1590 = vpop.f32.mrb[0].mxu0
  %1591 = vmatprep.mubr.bf16.mxu0 0
  %1592 = vmatmul.mubr.bf16.gmra.mrb[0].mxu0 %v1031
  %v1593 = vpop.f32.mrb[0].mxu0
  %v1594 = vadd.f32 %v282, %v1593
  %v1595 = vpop.f32.mrb[0].mxu0
  %v1596 = vpop.f32.mrb[0].mxu0
  %v1597 = vadd.f32 %v282, %v1596
  %v1598 = vpop.f32.mrb[0].mxu0
  %1599 = vmatprep.mubr.bf16.mxu0 0
  %1600 = vmatmul.mubr.bf16.gmra.mrb[0].mxu0 %v1034
  %v1601 = vpop.f32.mrb[0].mxu0
  %v1602 = vadd.f32 %v282, %v1601
  %v1603 = vpop.f32.mrb[0].mxu0
  %v1604 = vpop.f32.mrb[0].mxu0
  %v1605 = vadd.f32 %v282, %v1604
  %v1606 = vpop.f32.mrb[0].mxu0
  %1607 = vmatprep.mubr.bf16.mxu0 0
  %1608 = vmatmul.mubr.bf16.gmra.mrb[0].mxu0 %v1037
  %v1609 = vpop.f32.mrb[0].mxu0
  %v1610 = vadd.f32 %v282, %v1609
  %v1611 = vpop.f32.mrb[0].mxu0
  %v1612 = vpop.f32.mrb[0].mxu0
  %v1613 = vadd.f32 %v282, %v1612
  %v1614 = vpop.f32.mrb[0].mxu0
  %1615 = vmatprep.mubr.bf16.mxu0 0
  %1616 = vmatmul.mubr.bf16.gmra.mrb[0].mxu0 %v1040
  %v1617 = vpop.f32.mrb[0].mxu0
  %v1618 = vadd.f32 %v282, %v1617
  %v1619 = vpop.f32.mrb[0].mxu0
  %v1620 = vpop.f32.mrb[0].mxu0
  %v1621 = vadd.f32 %v282, %v1620
  %v1622 = vpop.f32.mrb[0].mxu0
  %1623 = vmatprep.mubr.bf16.mxu0 0
  %1624 = vmatmul.mubr.bf16.gmra.mrb[0].mxu0 %v1043
  %v1625 = vpop.f32.mrb[0].mxu0
  %v1626 = vadd.f32 %v282, %v1625
  %v1627 = vpop.f32.mrb[0].mxu0
  %v1628 = vpop.f32.mrb[0].mxu0
  %v1629 = vadd.f32 %v282, %v1628
  %v1630 = vpop.f32.mrb[0].mxu0
  %1631 = vmatprep.mubr.bf16.mxu0 0
  %1632 = vmatmul.mubr.bf16.gmra.mrb[0].mxu0 %v1046
  %v1633 = vpop.f32.mrb[0].mxu0
  %v1634 = vadd.f32 %v282, %v1633
  %v1635 = vpop.f32.mrb[0].mxu0
  %v1636 = vpop.f32.mrb[0].mxu0
  %v1637 = vadd.f32 %v282, %v1636
  %v1638 = vpop.f32.mrb[0].mxu0
  %1639 = vmatprep.mubr.bf16.mxu0 0
  %1640 = vmatmul.mubr.bf16.gmra.mrb[0].mxu0 %v1049
  %v1641 = vpop.f32.mrb[0].mxu0
  %v1642 = vadd.f32 %v282, %v1641
  %v1643 = vpop.f32.mrb[0].mxu0
  %v1644 = vpop.f32.mrb[0].mxu0
  %v1645 = vadd.f32 %v282, %v1644
  %v1646 = vpop.f32.mrb[0].mxu0
  %1647 = vmatprep.mubr.bf16.mxu0 0
  %1648 = vmatmul.mubr.bf16.gmra.mrb[0].mxu0 %v1052
  %v1649 = vpop.f32.mrb[0].mxu0
  %v1650 = vadd.f32 %v282, %v1649
  %v1651 = vpop.f32.mrb[0].mxu0
  %v1652 = vpop.f32.mrb[0].mxu0
  %v1653 = vadd.f32 %v282, %v1652
  %v1654 = vpop.f32.mrb[0].mxu0
  %1655 = vmatprep.mubr.bf16.mxu0 0
  %1656 = vmatmul.mubr.bf16.gmra.mrb[0].mxu0 %v1055
  %v1657 = vpop.f32.mrb[0].mxu0
  %v1658 = vadd.f32 %v282, %v1657
  %v1659 = vpop.f32.mrb[0].mxu0
  %v1660 = vpop.f32.mrb[0].mxu0
  %v1661 = vadd.f32 %v282, %v1660
  %v1662 = vpop.f32.mrb[0].mxu0
  %1663 = vmatprep.mubr.bf16.mxu0 0
  %1664 = vmatmul.mubr.bf16.gmra.mrb[0].mxu0 %v1058
  %v1665 = vpop.f32.mrb[0].mxu0
  %v1666 = vadd.f32 %v282, %v1665
  %v1667 = vpop.f32.mrb[0].mxu0
  %v1668 = vpop.f32.mrb[0].mxu0
  %v1669 = vadd.f32 %v282, %v1668
  %v1670 = vpop.f32.mrb[0].mxu0
  %1671 = vmatprep.mubr.bf16.mxu0 0
  %1672 = vmatmul.mubr.bf16.gmra.mrb[0].mxu0 %v1061
  %v1673 = vpop.f32.mrb[0].mxu0
  %v1674 = vadd.f32 %v282, %v1673
  %v1675 = vpop.f32.mrb[0].mxu0
  %v1676 = vpop.f32.mrb[0].mxu0
  %v1677 = vadd.f32 %v282, %v1676
  %v1678 = vpop.f32.mrb[0].mxu0
  %1679 = vmatprep.mubr.bf16.mxu0 0
  %1680 = vmatmul.mubr.bf16.gmra.mrb[0].mxu0 %v1064
  %v1681 = vpop.f32.mrb[0].mxu0
  %v1682 = vadd.f32 %v282, %v1681
  %v1683 = vpop.f32.mrb[0].mxu0
  %v1684 = vpop.f32.mrb[0].mxu0
  %v1685 = vadd.f32 %v282, %v1684
  %v1686 = vpop.f32.mrb[0].mxu0
  %1687 = vmatprep.mubr.bf16.mxu0 0
  %1688 = vmatmul.mubr.bf16.gmra.mrb[0].mxu0 %v1067
  %v1689 = vpop.f32.mrb[0].mxu0
  %v1690 = vadd.f32 %v282, %v1689
  %v1691 = vpop.f32.mrb[0].mxu0
  %v1692 = vpop.f32.mrb[0].mxu0
  %v1693 = vadd.f32 %v282, %v1692
  %v1694 = vpop.f32.mrb[0].mxu0
  %1695 = vmatprep.mubr.bf16.mxu0 0
  %1696 = vmatmul.mubr.bf16.gmra.mrb[0].mxu0 %v1070
  %v1697 = vpop.f32.mrb[0].mxu0
  %v1698 = vadd.f32 %v282, %v1697
  %v1699 = vpop.f32.mrb[0].mxu0
  %v1700 = vpop.f32.mrb[0].mxu0
  %v1701 = vadd.f32 %v282, %v1700
  %v1702 = vpop.f32.mrb[0].mxu0
  %1703 = vmatprep.mubr.bf16.mxu0 0
  %1704 = vmatmul.mubr.bf16.gmra.mrb[0].mxu0 %v1073
  %v1705 = vpop.f32.mrb[0].mxu0
  %v1706 = vadd.f32 %v282, %v1705
  %v1707 = vpop.f32.mrb[0].mxu0
  %v1708 = vpop.f32.mrb[0].mxu0
  %v1709 = vadd.f32 %v282, %v1708
  %v1710 = vpop.f32.mrb[0].mxu0
  %1711 = vmatprep.mubr.bf16.mxu0 0
  %1712 = vmatmul.mubr.bf16.gmra.mrb[0].mxu0 %v1076
  %v1713 = vpop.f32.mrb[0].mxu0
  %v1714 = vadd.f32 %v282, %v1713
  %v1715 = vpop.f32.mrb[0].mxu0
  %v1716 = vpop.f32.mrb[0].mxu0
  %v1717 = vadd.f32 %v282, %v1716
  %v1718 = vpop.f32.mrb[0].mxu0
  %1719 = vmatprep.mubr.bf16.mxu0 0
  %1720 = vmatmul.mubr.bf16.gmra.mrb[0].mxu0 %v1079
  %v1721 = vpop.f32.mrb[0].mxu0
  %v1722 = vadd.f32 %v282, %v1721
  %v1723 = vpop.f32.mrb[0].mxu0
  %v1724 = vpop.f32.mrb[0].mxu0
  %v1725 = vadd.f32 %v282, %v1724
  %v1726 = vpop.f32.mrb[0].mxu0
  %1727 = vmatprep.mubr.bf16.mxu0 0
  %1728 = vmatmul.mubr.bf16.gmra.mrb[0].mxu0 %v1082
  %v1729 = vpop.f32.mrb[0].mxu0
  %v1730 = vadd.f32 %v282, %v1729
  %v1731 = vpop.f32.mrb[0].mxu0
  %v1732 = vpop.f32.mrb[0].mxu0
  %v1733 = vadd.f32 %v282, %v1732
  %v1734 = vpop.f32.mrb[0].mxu0
  %1735 = vmatprep.mubr.bf16.mxu0 0
  %1736 = vmatmul.mubr.bf16.gmra.mrb[0].mxu0 %v1085
  %v1737 = vpop.f32.mrb[0].mxu0
  %v1738 = vadd.f32 %v282, %v1737
  %v1739 = vpop.f32.mrb[0].mxu0
  %v1740 = vpop.f32.mrb[0].mxu0
  %v1741 = vadd.f32 %v282, %v1740
  %v1742 = vpop.f32.mrb[0].mxu0
  %1743 = vmatprep.mubr.bf16.mxu0 0
  %1744 = vmatmul.mubr.bf16.gmra.mrb[0].mxu0 %v1088
  %v1745 = vpop.f32.mrb[0].mxu0
  %v1746 = vadd.f32 %v282, %v1745
  %v1747 = vpop.f32.mrb[0].mxu0
  %v1748 = vpop.f32.mrb[0].mxu0
  %v1749 = vadd.f32 %v282, %v1748
  %v1750 = vpop.f32.mrb[0].mxu0
  %1751 = vmatprep.mubr.bf16.mxu0 0
  %1752 = vmatmul.mubr.bf16.gmra.mrb[0].mxu0 %v1091
  %v1753 = vpop.f32.mrb[0].mxu0
  %v1754 = vadd.f32 %v282, %v1753
  %v1755 = vpop.f32.mrb[0].mxu0
  %v1756 = vpop.f32.mrb[0].mxu0
  %v1757 = vadd.f32 %v282, %v1756
  %v1758 = vpop.f32.mrb[0].mxu0
  %1759 = vmatprep.mubr.bf16.mxu0 0
  %1760 = vmatmul.mubr.bf16.gmra.mrb[0].mxu0 %v1094
  %v1761 = vpop.f32.mrb[0].mxu0
  %v1762 = vadd.f32 %v282, %v1761
  %v1763 = vpop.f32.mrb[0].mxu0
  %v1764 = vpop.f32.mrb[0].mxu0
  %v1765 = vadd.f32 %v282, %v1764
  %v1766 = vpop.f32.mrb[0].mxu0
  %1767 = vmatprep.mubr.bf16.mxu0 0
  %1768 = vmatmul.mubr.bf16.gmra.mrb[0].mxu0 %v1097
  %v1769 = vpop.f32.mrb[0].mxu0
  %v1770 = vadd.f32 %v282, %v1769
  %v1771 = vpop.f32.mrb[0].mxu0
  %v1772 = vpop.f32.mrb[0].mxu0
  %v1773 = vadd.f32 %v282, %v1772
  %v1774 = vpop.f32.mrb[0].mxu0
  %1775 = vmatprep.mubr.bf16.mxu0 0
  %1776 = vmatmul.mubr.bf16.gmra.mrb[0].mxu0 %v1100
  %v1777 = vpop.f32.mrb[0].mxu0
  %v1778 = vadd.f32 %v282, %v1777
  %v1779 = vpop.f32.mrb[0].mxu0
  %v1780 = vpop.f32.mrb[0].mxu0
  %v1781 = vadd.f32 %v282, %v1780
  %v1782 = vpop.f32.mrb[0].mxu0
  %1783 = vmatprep.mubr.bf16.mxu0 0
  %1784 = vmatmul.mubr.bf16.gmra.mrb[0].mxu0 %v1103
  %v1785 = vpop.f32.mrb[0].mxu0
  %v1786 = vadd.f32 %v282, %v1785
  %v1787 = vpop.f32.mrb[0].mxu0
  %v1788 = vpop.f32.mrb[0].mxu0
  %v1789 = vadd.f32 %v282, %v1788
  %v1790 = vpop.f32.mrb[0].mxu0
  %1791 = vmatprep.mubr.bf16.mxu0 0
  %1792 = vmatmul.mubr.bf16.gmra.mrb[0].mxu0 %v1106
  %v1793 = vpop.f32.mrb[0].mxu0
  %v1794 = vadd.f32 %v282, %v1793
  %v1795 = vpop.f32.mrb[0].mxu0
  %v1796 = vpop.f32.mrb[0].mxu0
  %v1797 = vadd.f32 %v282, %v1796
  %v1798 = vpop.f32.mrb[0].mxu0
  %1799 = vmatprep.mubr.bf16.mxu0 0
  %1800 = vmatmul.mubr.bf16.gmra.mrb[0].mxu0 %v1109
  %v1801 = vpop.f32.mrb[0].mxu0
  %v1802 = vadd.f32 %v282, %v1801
  %v1803 = vpop.f32.mrb[0].mxu0
  %v1804 = vpop.f32.mrb[0].mxu0
  %v1805 = vadd.f32 %v282, %v1804
  %v1806 = vpop.f32.mrb[0].mxu0
  %1807 = vmatprep.mubr.bf16.mxu0 0
  %1808 = vmatmul.mubr.bf16.gmra.mrb[0].mxu0 %v1112
  %v1809 = vpop.f32.mrb[0].mxu0
  %v1810 = vadd.f32 %v282, %v1809
  %v1811 = vpop.f32.mrb[0].mxu0
  %v1812 = vpop.f32.mrb[0].mxu0
  %v1813 = vadd.f32 %v282, %v1812
  %v1814 = vpop.f32.mrb[0].mxu0
  %1815 = vmatprep.mubr.bf16.mxu0 0
  %1816 = vmatmul.mubr.bf16.gmra.mrb[0].mxu0 %v1115
  %v1817 = vpop.f32.mrb[0].mxu0
  %v1818 = vadd.f32 %v282, %v1817
  %v1819 = vpop.f32.mrb[0].mxu0
  %v1820 = vpop.f32.mrb[0].mxu0
  %v1821 = vadd.f32 %v282, %v1820
  %v1822 = vpop.f32.mrb[0].mxu0
  %1823 = vmatprep.mubr.bf16.mxu0 0
  %1824 = vmatmul.mubr.bf16.gmra.mrb[0].mxu0 %v1118
  %v1825 = vpop.f32.mrb[0].mxu0
  %v1826 = vadd.f32 %v282, %v1825
  %v1827 = vpop.f32.mrb[0].mxu0
  %v1828 = vpop.f32.mrb[0].mxu0
  %v1829 = vadd.f32 %v282, %v1828
  %v1830 = vpop.f32.mrb[0].mxu0
  %1831 = vmatprep.mubr.bf16.mxu0 0
  %1832 = vmatmul.mubr.bf16.gmra.mrb[0].mxu0 %v1121
  %v1833 = vpop.f32.mrb[0].mxu0
  %v1834 = vadd.f32 %v282, %v1833
  %v1835 = vpop.f32.mrb[0].mxu0
  %v1836 = vpop.f32.mrb[0].mxu0
  %v1837 = vadd.f32 %v282, %v1836
  %v1838 = vpop.f32.mrb[0].mxu0
  %1839 = vmatprep.mubr.bf16.mxu0 0
  %1840 = vmatmul.mubr.bf16.gmra.mrb[0].mxu0 %v1124
  %v1841 = vpop.f32.mrb[0].mxu0
  %v1842 = vadd.f32 %v282, %v1841
  %v1843 = vpop.f32.mrb[0].mxu0
  %v1844 = vpop.f32.mrb[0].mxu0
  %v1845 = vadd.f32 %v282, %v1844
  %v1846 = vpop.f32.mrb[0].mxu0
  %1847 = vmatprep.mubr.bf16.mxu0 0
  %1848 = vmatmul.mubr.bf16.gmra.mrb[0].mxu0 %v1127
  %v1849 = vpop.f32.mrb[0].mxu0
  %v1850 = vadd.f32 %v282, %v1849
  %v1851 = vpop.f32.mrb[0].mxu0
  %v1852 = vpop.f32.mrb[0].mxu0
  %v1853 = vadd.f32 %v282, %v1852
  %v1854 = vpop.f32.mrb[0].mxu0
  %1855 = vmatprep.mubr.bf16.mxu0 0
  %1856 = vmatmul.mubr.bf16.gmra.mrb[0].mxu0 %v1130
  %v1857 = vpop.f32.mrb[0].mxu0
  %v1858 = vadd.f32 %v282, %v1857
  %v1859 = vpop.f32.mrb[0].mxu0
  %v1860 = vpop.f32.mrb[0].mxu0
  %v1861 = vadd.f32 %v282, %v1860
  %v1862 = vpop.f32.mrb[0].mxu0
  %1863 = vmatprep.mubr.bf16.mxu0 0
  %1864 = vmatmul.mubr.bf16.gmra.mrb[0].mxu0 %v1133
  %v1865 = vpop.f32.mrb[0].mxu0
  %v1866 = vadd.f32 %v282, %v1865
  %v1867 = vpop.f32.mrb[0].mxu0
  %v1868 = vpop.f32.mrb[0].mxu0
  %v1869 = vadd.f32 %v282, %v1868
  %v1870 = vpop.f32.mrb[0].mxu0
  %1871 = vmatprep.mubr.bf16.mxu0 0
  %1872 = vmatmul.mubr.bf16.gmra.mrb[0].mxu0 %v1136
  %v1873 = vpop.f32.mrb[0].mxu0
  %v1874 = vadd.f32 %v282, %v1873
  %v1875 = vpop.f32.mrb[0].mxu0
  %v1876 = vpop.f32.mrb[0].mxu0
  %v1877 = vadd.f32 %v282, %v1876
  %v1878 = vpop.f32.mrb[0].mxu0
  %1879 = vmatprep.mubr.bf16.mxu0 0
  %1880 = vmatmul.mubr.bf16.gmra.mrb[0].mxu0 %v1139
  %v1881 = vpop.f32.mrb[0].mxu0
  %v1882 = vadd.f32 %v282, %v1881
  %v1883 = vpop.f32.mrb[0].mxu0
  %v1884 = vpop.f32.mrb[0].mxu0
  %v1885 = vadd.f32 %v282, %v1884
  %v1886 = vpop.f32.mrb[0].mxu0
  %1887 = vmatprep.mubr.bf16.mxu0 0
  %1888 = vmatmul.mubr.bf16.gmra.mrb[0].mxu0 %v1142
  %v1889 = vpop.f32.mrb[0].mxu0
  %v1890 = vadd.f32 %v282, %v1889
  %v1891 = vpop.f32.mrb[0].mxu0
  %v1892 = vpop.f32.mrb[0].mxu0
  %v1893 = vadd.f32 %v282, %v1892
  %v1894 = vpop.f32.mrb[0].mxu0
  %1895 = vmatprep.mubr.bf16.mxu0 0
  %1896 = vmatmul.mubr.bf16.gmra.mrb[0].mxu0 %v1145
  %v1897 = vpop.f32.mrb[0].mxu0
  %v1898 = vadd.f32 %v282, %v1897
  %v1899 = vpop.f32.mrb[0].mxu0
  %v1900 = vpop.f32.mrb[0].mxu0
  %v1901 = vadd.f32 %v282, %v1900
  %v1902 = vpop.f32.mrb[0].mxu0
  %1903 = vmatprep.mubr.bf16.mxu0 0
  %1904 = vmatmul.mubr.bf16.gmra.mrb[0].mxu0 %v1148
  %v1905 = vpop.f32.mrb[0].mxu0
  %v1906 = vadd.f32 %v282, %v1905
  %v1907 = vpop.f32.mrb[0].mxu0
  %v1908 = vpop.f32.mrb[0].mxu0
  %v1909 = vadd.f32 %v282, %v1908
  %v1910 = vpop.f32.mrb[0].mxu0
  %1911 = vmatprep.mubr.bf16.mxu0 0
  %1912 = vmatmul.mubr.bf16.gmra.mrb[0].mxu0 %v1151
  %v1913 = vpop.f32.mrb[0].mxu0
  %v1914 = vadd.f32 %v282, %v1913
  %v1915 = vpop.f32.mrb[0].mxu0
  %v1916 = vpop.f32.mrb[0].mxu0
  %v1917 = vadd.f32 %v282, %v1916
  %v1918 = vpop.f32.mrb[0].mxu0
  %1919 = vmatprep.mubr.bf16.mxu0 0
  %1920 = vmatmul.mubr.bf16.gmra.mrb[0].mxu0 %v1154
  %v1921 = vpop.f32.mrb[0].mxu0
  %v1922 = vadd.f32 %v282, %v1921
  %v1923 = vpop.f32.mrb[0].mxu0
  %v1924 = vpop.f32.mrb[0].mxu0
  %v1925 = vadd.f32 %v282, %v1924
  %v1926 = vpop.f32.mrb[0].mxu0
  %1927 = vmatprep.mubr.bf16.mxu0 0
  %1928 = vmatmul.mubr.bf16.gmra.mrb[0].mxu0 %v1157
  %v1929 = vpop.f32.mrb[0].mxu0
  %v1930 = vadd.f32 %v282, %v1929
  %v1931 = vpop.f32.mrb[0].mxu0
  %v1932 = vpop.f32.mrb[0].mxu0
  %v1933 = vadd.f32 %v282, %v1932
  %v1934 = vpop.f32.mrb[0].mxu0
  %1935 = vmatprep.mubr.bf16.mxu0 0
  %1936 = vmatmul.mubr.bf16.gmra.mrb[0].mxu0 %v1160
  %v1937 = vpop.f32.mrb[0].mxu0
  %v1938 = vadd.f32 %v282, %v1937
  %v1939 = vpop.f32.mrb[0].mxu0
  %v1940 = vpop.f32.mrb[0].mxu0
  %v1941 = vadd.f32 %v282, %v1940
  %v1942 = vpop.f32.mrb[0].mxu0
  %1943 = vmatprep.mubr.bf16.mxu0 0
  %1944 = vmatmul.mubr.bf16.gmra.mrb[0].mxu0 %v1163
  %v1945 = vpop.f32.mrb[0].mxu0
  %v1946 = vadd.f32 %v282, %v1945
  %v1947 = vpop.f32.mrb[0].mxu0
  %v1948 = vpop.f32.mrb[0].mxu0
  %v1949 = vadd.f32 %v282, %v1948
  %v1950 = vpop.f32.mrb[0].mxu0
  %1951 = vmatprep.mubr.bf16.mxu0 0
  %1952 = vmatmul.mubr.bf16.gmra.mrb[0].mxu0 %v1166
  %v1953 = vpop.f32.mrb[0].mxu0
  %v1954 = vadd.f32 %v282, %v1953
  %v1955 = vpop.f32.mrb[0].mxu0
  %v1956 = vpop.f32.mrb[0].mxu0
  %v1957 = vadd.f32 %v282, %v1956
  %v1958 = vpop.f32.mrb[0].mxu0
  %1959 = vmatprep.mubr.bf16.mxu0 0
  %1960 = vmatmul.mubr.bf16.gmra.mrb[0].mxu0 %v1169
  %v1961 = vpop.f32.mrb[0].mxu0
  %v1962 = vadd.f32 %v282, %v1961
  %v1963 = vpop.f32.mrb[0].mxu0
  %v1964 = vpop.f32.mrb[0].mxu0
  %v1965 = vadd.f32 %v282, %v1964
  %v1966 = vpop.f32.mrb[0].mxu0
  %1967 = vmatprep.mubr.bf16.mxu0 0
  %1968 = vmatmul.mubr.bf16.gmra.mrb[0].mxu0 %v1172
  %v1969 = vpop.f32.mrb[0].mxu0
  %v1970 = vadd.f32 %v282, %v1969
  %v1971 = vpop.f32.mrb[0].mxu0
  %v1972 = vpop.f32.mrb[0].mxu0
  %v1973 = vadd.f32 %v282, %v1972
  %v1974 = vpop.f32.mrb[0].mxu0
  %1975 = vmatprep.mubr.bf16.mxu0 0
  %1976 = vmatmul.mubr.bf16.gmra.mrb[0].mxu0 %v1175
  %v1977 = vpop.f32.mrb[0].mxu0
  %v1978 = vadd.f32 %v282, %v1977
  %v1979 = vpop.f32.mrb[0].mxu0
  %v1980 = vpop.f32.mrb[0].mxu0
  %v1981 = vadd.f32 %v282, %v1980
  %v1982 = vpop.f32.mrb[0].mxu0
  %1983 = vmatprep.mubr.bf16.mxu0 0
  %1984 = vmatmul.mubr.bf16.gmra.mrb[0].mxu0 %v1178
  %v1985 = vpop.f32.mrb[0].mxu0
  %v1986 = vadd.f32 %v282, %v1985
  %v1987 = vpop.f32.mrb[0].mxu0
  %v1988 = vpop.f32.mrb[0].mxu0
  %v1989 = vadd.f32 %v282, %v1988
  %v1990 = vpop.f32.mrb[0].mxu0
  %1991 = vmatprep.mubr.bf16.mxu0 0
  %1992 = vmatmul.mubr.bf16.gmra.mrb[0].mxu0 %v1181
  %v1993 = vpop.f32.mrb[0].mxu0
  %v1994 = vadd.f32 %v282, %v1993
  %v1995 = vpop.f32.mrb[0].mxu0
  %v1996 = vpop.f32.mrb[0].mxu0
  %v1997 = vadd.f32 %v282, %v1996
  %v1998 = vpop.f32.mrb[0].mxu0
  %1999 = vmatprep.mubr.bf16.mxu0 0
  %2000 = vmatmul.mubr.bf16.gmra.mrb[0].mxu0 %v1184
  %v2001 = vpop.f32.mrb[0].mxu0
  %v2002 = vadd.f32 %v282, %v2001
  %v2003 = vpop.f32.mrb[0].mxu0
  %v2004 = vpop.f32.mrb[0].mxu0
  %v2005 = vadd.f32 %v282, %v2004
  %v2006 = vpop.f32.mrb[0].mxu0
  %2007 = vmatprep.mubr.bf16.mxu0 0
  %2008 = vmatmul.mubr.bf16.gmra.mrb[0].mxu0 %v1187
  %v2009 = vpop.f32.mrb[0].mxu0
  %v2010 = vadd.f32 %v282, %v2009
  %v2011 = vpop.f32.mrb[0].mxu0
  %v2012 = vpop.f32.mrb[0].mxu0
  %v2013 = vadd.f32 %v282, %v2012
  %v2014 = vpop.f32.mrb[0].mxu0
  %2015 = vmatprep.mubr.bf16.mxu0 0
  %2016 = vmatmul.mubr.bf16.gmra.mrb[0].mxu0 %v1190
  %v2017 = vpop.f32.mrb[0].mxu0
  %v2018 = vadd.f32 %v282, %v2017
  %v2019 = vpop.f32.mrb[0].mxu0
  %v2020 = vpop.f32.mrb[0].mxu0
  %v2021 = vadd.f32 %v282, %v2020
  %v2022 = vpop.f32.mrb[0].mxu0
  %2023 = vmatprep.mubr.bf16.mxu0 0
  %2024 = vmatmul.mubr.bf16.gmra.mrb[0].mxu0 %v1193
  %v2025 = vpop.f32.mrb[0].mxu0
  %v2026 = vadd.f32 %v282, %v2025
  %v2027 = vpop.f32.mrb[0].mxu0
  %v2028 = vpop.f32.mrb[0].mxu0
  %v2029 = vadd.f32 %v282, %v2028
  %v2030 = vpop.f32.mrb[0].mxu0
  %2031 = vmatprep.mubr.bf16.mxu0 0
  %2032 = vmatmul.mubr.bf16.gmra.mrb[0].mxu0 %v1196
  %v2033 = vpop.f32.mrb[0].mxu0
  %v2034 = vadd.f32 %v282, %v2033
  %v2035 = vpop.f32.mrb[0].mxu0
  %v2036 = vpop.f32.mrb[0].mxu0
  %v2037 = vadd.f32 %v282, %v2036
  %v2038 = vpop.f32.mrb[0].mxu0
  %2039 = vmatprep.mubr.bf16.mxu0 0
  %2040 = vmatmul.mubr.bf16.gmra.mrb[0].mxu0 %v1199
  %v2041 = vpop.f32.mrb[0].mxu0
  %v2042 = vadd.f32 %v282, %v2041
  %v2043 = vpop.f32.mrb[0].mxu0
  %v2044 = vpop.f32.mrb[0].mxu0
  %v2045 = vadd.f32 %v282, %v2044
  %v2046 = vpop.f32.mrb[0].mxu0
  %2047 = vmatprep.mubr.bf16.mxu0 0
  %2048 = vmatmul.mubr.bf16.gmra.mrb[0].mxu0 %v1202
  %v2049 = vpop.f32.mrb[0].mxu0
  %v2050 = vadd.f32 %v282, %v2049
  %v2051 = vpop.f32.mrb[0].mxu0
  %v2052 = vpop.f32.mrb[0].mxu0
  %v2053 = vadd.f32 %v282, %v2052
  %v2054 = vpop.f32.mrb[0].mxu0
  %2055 = vmatprep.mubr.bf16.mxu0 0
  %2056 = vmatmul.mubr.bf16.gmra.mrb[0].mxu0 %v1205
  %v2057 = vpop.f32.mrb[0].mxu0
  %v2058 = vadd.f32 %v282, %v2057
  %v2059 = vpop.f32.mrb[0].mxu0
  %v2060 = vpop.f32.mrb[0].mxu0
  %v2061 = vadd.f32 %v282, %v2060
  %v2062 = vpop.f32.mrb[0].mxu0
  %2063 = vmatprep.mubr.bf16.mxu0 0
  %2064 = vmatmul.mubr.bf16.gmra.mrb[0].mxu0 %v1208
  %v2065 = vpop.f32.mrb[0].mxu0
  %v2066 = vadd.f32 %v282, %v2065
  %v2067 = vpop.f32.mrb[0].mxu0
  %v2068 = vpop.f32.mrb[0].mxu0
  %v2069 = vadd.f32 %v282, %v2068
  %v2070 = vpop.f32.mrb[0].mxu0
  %2071 = vmatprep.mubr.bf16.mxu0 0
  %2072 = vmatmul.mubr.bf16.gmra.mrb[0].mxu0 %v1211
  %v2073 = vpop.f32.mrb[0].mxu0
  %v2074 = vadd.f32 %v282, %v2073
  %v2075 = vpop.f32.mrb[0].mxu0
  %v2076 = vpop.f32.mrb[0].mxu0
  %v2077 = vadd.f32 %v282, %v2076
  %v2078 = vpop.f32.mrb[0].mxu0
  %2079 = vmatprep.mubr.bf16.mxu0 0
  %2080 = vmatmul.mubr.bf16.gmra.mrb[0].mxu0 %v1214
  %v2081 = vpop.f32.mrb[0].mxu0
  %v2082 = vadd.f32 %v282, %v2081
  %v2083 = vpop.f32.mrb[0].mxu0
  %v2084 = vpop.f32.mrb[0].mxu0
  %v2085 = vadd.f32 %v282, %v2084
  %v2086 = vpop.f32.mrb[0].mxu0
  %2087 = vmatprep.mubr.bf16.mxu0 0
  %2088 = vmatmul.mubr.bf16.gmra.mrb[0].mxu0 %v1217
  %v2089 = vpop.f32.mrb[0].mxu0
  %v2090 = vadd.f32 %v282, %v2089
  %v2091 = vpop.f32.mrb[0].mxu0
  %v2092 = vpop.f32.mrb[0].mxu0
  %v2093 = vadd.f32 %v282, %v2092
  %v2094 = vpop.f32.mrb[0].mxu0
  %2095 = vmatprep.mubr.bf16.mxu0 0
  %2096 = vmatmul.mubr.bf16.gmra.mrb[0].mxu0 %v1220
  %v2097 = vpop.f32.mrb[0].mxu0
  %v2098 = vadd.f32 %v282, %v2097
  %v2099 = vpop.f32.mrb[0].mxu0
  %v2100 = vpop.f32.mrb[0].mxu0
  %v2101 = vadd.f32 %v282, %v2100
  %v2102 = vpop.f32.mrb[0].mxu0
  %2103 = vmatprep.mubr.bf16.mxu0 0
  %2104 = vmatmul.mubr.bf16.gmra.mrb[0].mxu0 %v1223
  %v2105 = vpop.f32.mrb[0].mxu0
  %v2106 = vadd.f32 %v282, %v2105
  %v2107 = vpop.f32.mrb[0].mxu0
  %v2108 = vpop.f32.mrb[0].mxu0
  %v2109 = vadd.f32 %v282, %v2108
  %v2110 = vpop.f32.mrb[0].mxu0
  %2111 = vmatprep.mubr.bf16.mxu0 0
  %2112 = vmatmul.mubr.bf16.gmra.mrb[0].mxu0 %v1226
  %v2113 = vpop.f32.mrb[0].mxu0
  %v2114 = vadd.f32 %v282, %v2113
  %v2115 = vpop.f32.mrb[0].mxu0
  %v2116 = vpop.f32.mrb[0].mxu0
  %v2117 = vadd.f32 %v282, %v2116
  %v2118 = vpop.f32.mrb[0].mxu0
  %2119 = vmatprep.mubr.bf16.mxu0 0
  %2120 = vmatmul.mubr.bf16.gmra.mrb[0].mxu0 %v1229
  %v2121 = vpop.f32.mrb[0].mxu0
  %v2122 = vadd.f32 %v282, %v2121
  %v2123 = vpop.f32.mrb[0].mxu0
  %v2124 = vpop.f32.mrb[0].mxu0
  %v2125 = vadd.f32 %v282, %v2124
  %v2126 = vpop.f32.mrb[0].mxu0
  %2127 = vmatprep.mubr.bf16.mxu0 0
  %2128 = vmatmul.mubr.bf16.gmra.mrb[0].mxu0 %v1232
  %v2129 = vpop.f32.mrb[0].mxu0
  %v2130 = vadd.f32 %v282, %v2129
  %v2131 = vpop.f32.mrb[0].mxu0
  %v2132 = vpop.f32.mrb[0].mxu0
  %v2133 = vadd.f32 %v282, %v2132
  %v2134 = vpop.f32.mrb[0].mxu0
  %2135 = vmatprep.mubr.bf16.mxu0 0
  %2136 = vmatmul.mubr.bf16.gmra.mrb[0].mxu0 %v1235
  %v2137 = vpop.f32.mrb[0].mxu0
  %v2138 = vadd.f32 %v282, %v2137
  %v2139 = vpop.f32.mrb[0].mxu0
  %v2140 = vpop.f32.mrb[0].mxu0
  %v2141 = vadd.f32 %v282, %v2140
  %v2142 = vpop.f32.mrb[0].mxu0
  %2143 = vmatprep.mubr.bf16.mxu0 0
  %2144 = vmatmul.mubr.bf16.gmra.mrb[0].mxu0 %v1238
  %v2145 = vpop.f32.mrb[0].mxu0
  %v2146 = vadd.f32 %v282, %v2145
  %v2147 = vpop.f32.mrb[0].mxu0
  %v2148 = vpop.f32.mrb[0].mxu0
  %v2149 = vadd.f32 %v282, %v2148
  %v2150 = vpop.f32.mrb[0].mxu0
  %2151 = vmatprep.mubr.bf16.mxu0 0
  %2152 = vmatmul.mubr.bf16.gmra.mrb[0].mxu0 %v1241
  %v2153 = vpop.f32.mrb[0].mxu0
  %v2154 = vadd.f32 %v282, %v2153
  %v2155 = vpop.f32.mrb[0].mxu0
  %v2156 = vpop.f32.mrb[0].mxu0
  %v2157 = vadd.f32 %v282, %v2156
  %v2158 = vpop.f32.mrb[0].mxu0
  %2159 = vmatprep.mubr.bf16.mxu0 0
  %2160 = vmatmul.mubr.bf16.gmra.mrb[0].mxu0 %v1244
  %v2161 = vpop.f32.mrb[0].mxu0
  %v2162 = vadd.f32 %v282, %v2161
  %v2163 = vpop.f32.mrb[0].mxu0
  %v2164 = vpop.f32.mrb[0].mxu0
  %v2165 = vadd.f32 %v282, %v2164
  %v2166 = vpop.f32.mrb[0].mxu0
  %2167 = vmatprep.mubr.bf16.mxu0 0
  %2168 = vmatmul.mubr.bf16.gmra.mrb[0].mxu0 %v1247
  %v2169 = vpop.f32.mrb[0].mxu0
  %v2170 = vadd.f32 %v282, %v2169
  %v2171 = vpop.f32.mrb[0].mxu0
  %v2172 = vpop.f32.mrb[0].mxu0
  %v2173 = vadd.f32 %v282, %v2172
  %v2174 = vpop.f32.mrb[0].mxu0
  %2175 = vmatprep.mubr.bf16.mxu0 0
  %2176 = vmatmul.mubr.bf16.gmra.mrb[0].mxu0 %v1250
  %v2177 = vpop.f32.mrb[0].mxu0
  %v2178 = vadd.f32 %v282, %v2177
  %v2179 = vpop.f32.mrb[0].mxu0
  %v2180 = vpop.f32.mrb[0].mxu0
  %v2181 = vadd.f32 %v282, %v2180
  %v2182 = vpop.f32.mrb[0].mxu0
  %2183 = vmatprep.mubr.bf16.mxu0 0
  %2184 = vmatmul.mubr.bf16.gmra.mrb[0].mxu0 %v1253
  %v2185 = vpop.f32.mrb[0].mxu0
  %v2186 = vadd.f32 %v282, %v2185
  %v2187 = vpop.f32.mrb[0].mxu0
  %v2188 = vpop.f32.mrb[0].mxu0
  %v2189 = vadd.f32 %v282, %v2188
  %v2190 = vpop.f32.mrb[0].mxu0
  %2191 = vmatprep.mubr.bf16.mxu0 0
  %2192 = vmatmul.mubr.bf16.gmra.mrb[0].mxu0 %v1256
  %v2193 = vpop.f32.mrb[0].mxu0
  %v2194 = vadd.f32 %v282, %v2193
  %v2195 = vpop.f32.mrb[0].mxu0
  %v2196 = vpop.f32.mrb[0].mxu0
  %v2197 = vadd.f32 %v282, %v2196
  %v2198 = vpop.f32.mrb[0].mxu0
  %2199 = vmatprep.mubr.bf16.mxu0 0
  %2200 = vmatmul.mubr.bf16.gmra.mrb[0].mxu0 %v1259
  %v2201 = vpop.f32.mrb[0].mxu0
  %v2202 = vadd.f32 %v282, %v2201
  %v2203 = vpop.f32.mrb[0].mxu0
  %v2204 = vpop.f32.mrb[0].mxu0
  %v2205 = vadd.f32 %v282, %v2204
  %v2206 = vpop.f32.mrb[0].mxu0
  %2207 = vmatprep.mubr.bf16.mxu0 0
  %2208 = vmatmul.mubr.bf16.gmra.mrb[0].mxu0 %v1262
  %v2209 = vpop.f32.mrb[0].mxu0
  %v2210 = vadd.f32 %v282, %v2209
  %v2211 = vpop.f32.mrb[0].mxu0
  %v2212 = vpop.f32.mrb[0].mxu0
  %v2213 = vadd.f32 %v282, %v2212
  %v2214 = vpop.f32.mrb[0].mxu0
  %2215 = vmatprep.mubr.bf16.mxu0 0
  %2216 = vmatmul.mubr.bf16.gmra.mrb[0].mxu0 %v1265
  %v2217 = vpop.f32.mrb[0].mxu0
  %v2218 = vadd.f32 %v282, %v2217
  %v2219 = vpop.f32.mrb[0].mxu0
  %v2220 = vpop.f32.mrb[0].mxu0
  %v2221 = vadd.f32 %v282, %v2220
  %v2222 = vpop.f32.mrb[0].mxu0
  %2223 = vmatprep.mubr.bf16.mxu0 0
  %2224 = vmatmul.mubr.bf16.gmra.mrb[0].mxu0 %v1268
  %v2225 = vpop.f32.mrb[0].mxu0
  %v2226 = vadd.f32 %v282, %v2225
  %v2227 = vpop.f32.mrb[0].mxu0
  %v2228 = vpop.f32.mrb[0].mxu0
  %v2229 = vadd.f32 %v282, %v2228
  %v2230 = vpop.f32.mrb[0].mxu0
  %2231 = vmatprep.mubr.bf16.mxu0 0
  %2232 = vmatmul.mubr.bf16.gmra.mrb[0].mxu0 %v1271
  %v2233 = vpop.f32.mrb[0].mxu0
  %v2234 = vadd.f32 %v282, %v2233
  %v2235 = vpop.f32.mrb[0].mxu0
  %v2236 = vpop.f32.mrb[0].mxu0
  %v2237 = vadd.f32 %v282, %v2236
  %v2238 = vpop.f32.mrb[0].mxu0
  %2239 = vmatprep.mubr.bf16.mxu0 0
  %2240 = vmatmul.mubr.bf16.gmra.mrb[0].mxu0 %v1274
  %v2241 = vpop.f32.mrb[0].mxu0
  %v2242 = vadd.f32 %v282, %v2241
  %v2243 = vpop.f32.mrb[0].mxu0
  %v2244 = vpop.f32.mrb[0].mxu0
  %v2245 = vadd.f32 %v282, %v2244
  %v2246 = vpop.f32.mrb[0].mxu0
  %2247 = vmatprep.mubr.bf16.mxu0 0
  %2248 = vmatmul.mubr.bf16.gmra.mrb[0].mxu0 %v1277
  %v2249 = vpop.f32.mrb[0].mxu0
  %v2250 = vadd.f32 %v282, %v2249
  %v2251 = vpop.f32.mrb[0].mxu0
  %v2252 = vpop.f32.mrb[0].mxu0
  %v2253 = vadd.f32 %v282, %v2252
  %v2254 = vpop.f32.mrb[0].mxu0
  %2255 = vmatprep.mubr.bf16.mxu0 0
  %2256 = vmatmul.mubr.bf16.gmra.mrb[0].mxu0 %v1280
  %v2257 = vpop.f32.mrb[0].mxu0
  %v2258 = vadd.f32 %v282, %v2257
  %v2259 = vpop.f32.mrb[0].mxu0
  %v2260 = vpop.f32.mrb[0].mxu0
  %v2261 = vadd.f32 %v282, %v2260
  %v2262 = vpop.f32.mrb[0].mxu0
  %2263 = vmatprep.mubr.bf16.mxu0 0
  %2264 = vmatmul.mubr.bf16.gmra.mrb[0].mxu0 %v1283
  %v2265 = vpop.f32.mrb[0].mxu0
  %v2266 = vadd.f32 %v282, %v2265
  %v2267 = vpop.f32.mrb[0].mxu0
  %v2268 = vpop.f32.mrb[0].mxu0
  %v2269 = vadd.f32 %v282, %v2268
  %v2270 = vpop.f32.mrb[0].mxu0
  %2271 = vmatprep.mubr.bf16.mxu0 0
  %2272 = vmatmul.mubr.bf16.gmra.mrb[0].mxu0 %v1286
  %v2273 = vpop.f32.mrb[0].mxu0
  %v2274 = vadd.f32 %v282, %v2273
  %v2275 = vpop.f32.mrb[0].mxu0
  %v2276 = vpop.f32.mrb[0].mxu0
  %v2277 = vadd.f32 %v282, %v2276
  %v2278 = vpop.f32.mrb[0].mxu0
  %2279 = vmatprep.mubr.bf16.mxu0 0
  %2280 = vmatmul.mubr.bf16.gmra.mrb[0].mxu0 %v1289
  %v2281 = vpop.f32.mrb[0].mxu0
  %v2282 = vadd.f32 %v282, %v2281
  %v2283 = vpop.f32.mrb[0].mxu0
  %v2284 = vpop.f32.mrb[0].mxu0
  %v2285 = vadd.f32 %v282, %v2284
  %v2286 = vpop.f32.mrb[0].mxu0
  %2287 = vmatprep.mubr.bf16.mxu0 0
  %2288 = vmatmul.mubr.bf16.gmra.mrb[0].mxu0 %v1292
  %v2289 = vpop.f32.mrb[0].mxu0
  %v2290 = vadd.f32 %v282, %v2289
  %v2291 = vpop.f32.mrb[0].mxu0
  %v2292 = vpop.f32.mrb[0].mxu0
  %v2293 = vadd.f32 %v282, %v2292
  %v2294 = vpop.f32.mrb[0].mxu0
  %2295 = vmatprep.mubr.bf16.mxu0 0
  %2296 = vmatmul.mubr.bf16.gmra.mrb[0].mxu0 %v1295
  %v2297 = vpop.f32.mrb[0].mxu0
  %v2298 = vadd.f32 %v282, %v2297
  %v2299 = vpop.f32.mrb[0].mxu0
  %v2300 = vpop.f32.mrb[0].mxu0
  %v2301 = vadd.f32 %v282, %v2300
  %v2302 = vpop.f32.mrb[0].mxu0
  %2303 = vmatprep.mubr.bf16.mxu0 0
  %2304 = vmatmul.mubr.bf16.gmra.mrb[0].mxu0 %v1298
  %v2305 = vpop.f32.mrb[0].mxu0
  %v2306 = vadd.f32 %v282, %v2305
  %v2307 = vpop.f32.mrb[0].mxu0
  %v2308 = vpop.f32.mrb[0].mxu0
  %v2309 = vadd.f32 %v282, %v2308
  %v2310 = vpop.f32.mrb[0].mxu0
  %2311 = vmatprep.mubr.bf16.mxu0 0
  %2312 = vmatmul.mubr.bf16.gmra.mrb[0].mxu0 %v1301
  %v2313 = vpop.f32.mrb[0].mxu0
  %v2314 = vadd.f32 %v282, %v2313
  %v2315 = vpop.f32.mrb[0].mxu0
  %v2316 = vpop.f32.mrb[0].mxu0
  %v2317 = vadd.f32 %v282, %v2316
  %v2318 = vpop.f32.mrb[0].mxu0
  %2319 = vmatprep.mubr.bf16.mxu0 0
  %2320 = vmatmul.mubr.bf16.gmra.mrb[0].mxu0 %v1304
  %v2321 = vpop.f32.mrb[0].mxu0
  %v2322 = vadd.f32 %v282, %v2321
  %v2323 = vpop.f32.mrb[0].mxu0
  %v2324 = vpop.f32.mrb[0].mxu0
  %v2325 = vadd.f32 %v282, %v2324
  %v2326 = vpop.f32.mrb[0].mxu0
  %2327 = vmatprep.mubr.bf16.mxu0 0
  %2328 = vmatmul.mubr.bf16.gmra.mrb[0].mxu0 %v1307
  %v2329 = vpop.f32.mrb[0].mxu0
  %v2330 = vadd.f32 %v282, %v2329
  %v2331 = vpop.f32.mrb[0].mxu0
  %v2332 = vpop.f32.mrb[0].mxu0
  %v2333 = vadd.f32 %v282, %v2332
  %v2334 = vpop.f32.mrb[0].mxu0
  %2335 = vmatprep.mubr.bf16.mxu0 0
  %2336 = vmatmul.mubr.bf16.gmra.mrb[0].mxu0 %v1310
  %v2337 = vpop.f32.mrb[0].mxu0
  %v2338 = vadd.f32 %v282, %v2337
  %v2339 = vpop.f32.mrb[0].mxu0
  %v2340 = vpop.f32.mrb[0].mxu0
  %v2341 = vadd.f32 %v282, %v2340
  %v2342 = vpop.f32.mrb[0].mxu0
  %2343 = vmatprep.mubr.bf16.mxu0 0
  %2344 = vmatmul.mubr.bf16.gmra.mrb[0].mxu0 %v1313
  %v2345 = vpop.f32.mrb[0].mxu0
  %v2346 = vadd.f32 %v282, %v2345
  %v2347 = vpop.f32.mrb[0].mxu0
  %v2348 = vpop.f32.mrb[0].mxu0
  %v2349 = vadd.f32 %v282, %v2348
  %v2350 = vpop.f32.mrb[0].mxu0
  %2351 = vmatprep.mubr.bf16.mxu0 0
  %2352 = vmatmul.mubr.bf16.gmra.mrb[0].mxu0 %v1316
  %v2353 = vpop.f32.mrb[0].mxu0
  %v2354 = vadd.f32 %v282, %v2353
  %v2355 = vpop.f32.mrb[0].mxu0
  %v2356 = vpop.f32.mrb[0].mxu0
  %v2357 = vadd.f32 %v282, %v2356
  %v2358 = vpop.f32.mrb[0].mxu0
  %2359 = vmatprep.mubr.bf16.mxu0 0
  %2360 = vmatmul.mubr.bf16.gmra.mrb[0].mxu0 %v1319
  %v2361 = vpop.f32.mrb[0].mxu0
  %v2362 = vadd.f32 %v282, %v2361
  %v2363 = vpop.f32.mrb[0].mxu0
  %v2364 = vpop.f32.mrb[0].mxu0
  %v2365 = vadd.f32 %v282, %v2364
  %v2366 = vpop.f32.mrb[0].mxu0
  %2367 = vmatprep.mubr.bf16.mxu0 0
  %2368 = vmatmul.mubr.bf16.gmra.mrb[0].mxu0 %v1322
  %v2369 = vpop.f32.mrb[0].mxu0
  %v2370 = vadd.f32 %v282, %v2369
  %v2371 = vpop.f32.mrb[0].mxu0
  %v2372 = vpop.f32.mrb[0].mxu0
  %v2373 = vadd.f32 %v282, %v2372
  %v2374 = vpop.f32.mrb[0].mxu0
  %2375 = vmatprep.mubr.bf16.mxu0 0
  %2376 = vmatmul.mubr.bf16.gmra.mrb[0].mxu0 %v1325
  %v2377 = vpop.f32.mrb[0].mxu0
  %v2378 = vadd.f32 %v282, %v2377
  %v2379 = vpop.f32.mrb[0].mxu0
  %v2380 = vpop.f32.mrb[0].mxu0
  %v2381 = vadd.f32 %v282, %v2380
  %v2382 = vpop.f32.mrb[0].mxu0
  %2383 = vdwg.mxu0
  %vm2384 = vcmp.ge.f32.partialorder %v1362, 0.0
  %vm2385 = vcmp.ge.f32.partialorder %v1365, 0.0
  %vm2386 = vcmp.ge.f32.partialorder %v1370, 0.0
  %vm2387 = vcmp.ge.f32.partialorder %v1373, 0.0
  %vm2388 = vcmp.ge.f32.partialorder %v1378, 0.0
  %vm2389 = vcmp.ge.f32.partialorder %v1381, 0.0
  %vm2390 = vcmp.ge.f32.partialorder %v1386, 0.0
  %vm2391 = vcmp.ge.f32.partialorder %v1389, 0.0
  %vm2392 = vcmp.ge.f32.partialorder %v1394, 0.0
  %vm2393 = vcmp.ge.f32.partialorder %v1397, 0.0
  %vm2394 = vcmp.ge.f32.partialorder %v1402, 0.0
  %vm2395 = vcmp.ge.f32.partialorder %v1405, 0.0
  %vm2396 = vcmp.ge.f32.partialorder %v1410, 0.0
  %vm2397 = vcmp.ge.f32.partialorder %v1413, 0.0
  %vm2398 = vcmp.ge.f32.partialorder %v1418, 0.0
  %vm2399 = vcmp.ge.f32.partialorder %v1421, 0.0
  %vm2400 = vcmp.ge.f32.partialorder %v1426, 0.0
  %vm2401 = vcmp.ge.f32.partialorder %v1429, 0.0
  %vm2402 = vcmp.ge.f32.partialorder %v1434, 0.0
  %vm2403 = vcmp.ge.f32.partialorder %v1437, 0.0
  %vm2404 = vcmp.ge.f32.partialorder %v1442, 0.0
  %vm2405 = vcmp.ge.f32.partialorder %v1445, 0.0
  %vm2406 = vcmp.ge.f32.partialorder %v1450, 0.0
  %vm2407 = vcmp.ge.f32.partialorder %v1453, 0.0
  %vm2408 = vcmp.ge.f32.partialorder %v1458, 0.0
  %vm2409 = vcmp.ge.f32.partialorder %v1461, 0.0
  %vm2410 = vcmp.ge.f32.partialorder %v1466, 0.0
  %vm2411 = vcmp.ge.f32.partialorder %v1469, 0.0
  %vm2412 = vcmp.ge.f32.partialorder %v1474, 0.0
  %vm2413 = vcmp.ge.f32.partialorder %v1477, 0.0
  %vm2414 = vcmp.ge.f32.partialorder %v1482, 0.0
  %vm2415 = vcmp.ge.f32.partialorder %v1485, 0.0
  %vm2416 = vcmp.ge.f32.partialorder %v1490, 0.0
  %vm2417 = vcmp.ge.f32.partialorder %v1493, 0.0
  %vm2418 = vcmp.ge.f32.partialorder %v1498, 0.0
  %vm2419 = vcmp.ge.f32.partialorder %v1501, 0.0
  %vm2420 = vcmp.ge.f32.partialorder %v1506, 0.0
  %vm2421 = vcmp.ge.f32.partialorder %v1509, 0.0
  %vm2422 = vcmp.ge.f32.partialorder %v1514, 0.0
  %vm2423 = vcmp.ge.f32.partialorder %v1517, 0.0
  %vm2424 = vcmp.ge.f32.partialorder %v1522, 0.0
  %vm2425 = vcmp.ge.f32.partialorder %v1525, 0.0
  %vm2426 = vcmp.ge.f32.partialorder %v1530, 0.0
  %vm2427 = vcmp.ge.f32.partialorder %v1533, 0.0
  %vm2428 = vcmp.ge.f32.partialorder %v1538, 0.0
  %vm2429 = vcmp.ge.f32.partialorder %v1541, 0.0
  %vm2430 = vcmp.ge.f32.partialorder %v1546, 0.0
  %vm2431 = vcmp.ge.f32.partialorder %v1549, 0.0
  %vm2432 = vcmp.ge.f32.partialorder %v1554, 0.0
  %vm2433 = vcmp.ge.f32.partialorder %v1557, 0.0
  %vm2434 = vcmp.ge.f32.partialorder %v1562, 0.0
  %vm2435 = vcmp.ge.f32.partialorder %v1565, 0.0
  %vm2436 = vcmp.ge.f32.partialorder %v1570, 0.0
  %vm2437 = vcmp.ge.f32.partialorder %v1573, 0.0
  %vm2438 = vcmp.ge.f32.partialorder %v1578, 0.0
  %vm2439 = vcmp.ge.f32.partialorder %v1581, 0.0
  %vm2440 = vcmp.ge.f32.partialorder %v1586, 0.0
  %vm2441 = vcmp.ge.f32.partialorder %v1589, 0.0
  %vm2442 = vcmp.ge.f32.partialorder %v1594, 0.0
  %vm2443 = vcmp.ge.f32.partialorder %v1597, 0.0
  %vm2444 = vcmp.ge.f32.partialorder %v1602, 0.0
  %vm2445 = vcmp.ge.f32.partialorder %v1605, 0.0
  %vm2446 = vcmp.ge.f32.partialorder %v1610, 0.0
  %vm2447 = vcmp.ge.f32.partialorder %v1613, 0.0
  %vm2448 = vcmp.ge.f32.partialorder %v1618, 0.0
  %vm2449 = vcmp.ge.f32.partialorder %v1621, 0.0
  %vm2450 = vcmp.ge.f32.partialorder %v1626, 0.0
  %vm2451 = vcmp.ge.f32.partialorder %v1629, 0.0
  %vm2452 = vcmp.ge.f32.partialorder %v1634, 0.0
  %vm2453 = vcmp.ge.f32.partialorder %v1637, 0.0
  %vm2454 = vcmp.ge.f32.partialorder %v1642, 0.0
  %vm2455 = vcmp.ge.f32.partialorder %v1645, 0.0
  %vm2456 = vcmp.ge.f32.partialorder %v1650, 0.0
  %vm2457 = vcmp.ge.f32.partialorder %v1653, 0.0
  %vm2458 = vcmp.ge.f32.partialorder %v1658, 0.0
  %vm2459 = vcmp.ge.f32.partialorder %v1661, 0.0
  %vm2460 = vcmp.ge.f32.partialorder %v1666, 0.0
  %vm2461 = vcmp.ge.f32.partialorder %v1669, 0.0
  %vm2462 = vcmp.ge.f32.partialorder %v1674, 0.0
  %vm2463 = vcmp.ge.f32.partialorder %v1677, 0.0
  %vm2464 = vcmp.ge.f32.partialorder %v1682, 0.0
  %vm2465 = vcmp.ge.f32.partialorder %v1685, 0.0
  %vm2466 = vcmp.ge.f32.partialorder %v1690, 0.0
  %vm2467 = vcmp.ge.f32.partialorder %v1693, 0.0
  %vm2468 = vcmp.ge.f32.partialorder %v1698, 0.0
  %vm2469 = vcmp.ge.f32.partialorder %v1701, 0.0
  %vm2470 = vcmp.ge.f32.partialorder %v1706, 0.0
  %vm2471 = vcmp.ge.f32.partialorder %v1709, 0.0
  %vm2472 = vcmp.ge.f32.partialorder %v1714, 0.0
  %vm2473 = vcmp.ge.f32.partialorder %v1717, 0.0
  %vm2474 = vcmp.ge.f32.partialorder %v1722, 0.0
  %vm2475 = vcmp.ge.f32.partialorder %v1725, 0.0
  %vm2476 = vcmp.ge.f32.partialorder %v1730, 0.0
  %vm2477 = vcmp.ge.f32.partialorder %v1733, 0.0
  %vm2478 = vcmp.ge.f32.partialorder %v1738, 0.0
  %vm2479 = vcmp.ge.f32.partialorder %v1741, 0.0
  %vm2480 = vcmp.ge.f32.partialorder %v1746, 0.0
  %vm2481 = vcmp.ge.f32.partialorder %v1749, 0.0
  %vm2482 = vcmp.ge.f32.partialorder %v1754, 0.0
  %vm2483 = vcmp.ge.f32.partialorder %v1757, 0.0
  %vm2484 = vcmp.ge.f32.partialorder %v1762, 0.0
  %vm2485 = vcmp.ge.f32.partialorder %v1765, 0.0
  %vm2486 = vcmp.ge.f32.partialorder %v1770, 0.0
  %vm2487 = vcmp.ge.f32.partialorder %v1773, 0.0
  %vm2488 = vcmp.ge.f32.partialorder %v1778, 0.0
  %vm2489 = vcmp.ge.f32.partialorder %v1781, 0.0
  %vm2490 = vcmp.ge.f32.partialorder %v1786, 0.0
  %vm2491 = vcmp.ge.f32.partialorder %v1789, 0.0
  %vm2492 = vcmp.ge.f32.partialorder %v1794, 0.0
  %vm2493 = vcmp.ge.f32.partialorder %v1797, 0.0
  %vm2494 = vcmp.ge.f32.partialorder %v1802, 0.0
  %vm2495 = vcmp.ge.f32.partialorder %v1805, 0.0
  %vm2496 = vcmp.ge.f32.partialorder %v1810, 0.0
  %vm2497 = vcmp.ge.f32.partialorder %v1813, 0.0
  %vm2498 = vcmp.ge.f32.partialorder %v1818, 0.0
  %vm2499 = vcmp.ge.f32.partialorder %v1821, 0.0
  %vm2500 = vcmp.ge.f32.partialorder %v1826, 0.0
  %vm2501 = vcmp.ge.f32.partialorder %v1829, 0.0
  %vm2502 = vcmp.ge.f32.partialorder %v1834, 0.0
  %vm2503 = vcmp.ge.f32.partialorder %v1837, 0.0
  %vm2504 = vcmp.ge.f32.partialorder %v1842, 0.0
  %vm2505 = vcmp.ge.f32.partialorder %v1845, 0.0
  %vm2506 = vcmp.ge.f32.partialorder %v1850, 0.0
  %vm2507 = vcmp.ge.f32.partialorder %v1853, 0.0
  %vm2508 = vcmp.ge.f32.partialorder %v1858, 0.0
  %vm2509 = vcmp.ge.f32.partialorder %v1861, 0.0
  %vm2510 = vcmp.ge.f32.partialorder %v1866, 0.0
  %vm2511 = vcmp.ge.f32.partialorder %v1869, 0.0
  %vm2512 = vcmp.ge.f32.partialorder %v1874, 0.0
  %vm2513 = vcmp.ge.f32.partialorder %v1877, 0.0
  %vm2514 = vcmp.ge.f32.partialorder %v1882, 0.0
  %vm2515 = vcmp.ge.f32.partialorder %v1885, 0.0
  %vm2516 = vcmp.ge.f32.partialorder %v1890, 0.0
  %vm2517 = vcmp.ge.f32.partialorder %v1893, 0.0
  %vm2518 = vcmp.ge.f32.partialorder %v1898, 0.0
  %vm2519 = vcmp.ge.f32.partialorder %v1901, 0.0
  %vm2520 = vcmp.ge.f32.partialorder %v1906, 0.0
  %vm2521 = vcmp.ge.f32.partialorder %v1909, 0.0
  %vm2522 = vcmp.ge.f32.partialorder %v1914, 0.0
  %vm2523 = vcmp.ge.f32.partialorder %v1917, 0.0
  %vm2524 = vcmp.ge.f32.partialorder %v1922, 0.0
  %vm2525 = vcmp.ge.f32.partialorder %v1925, 0.0
  %vm2526 = vcmp.ge.f32.partialorder %v1930, 0.0
  %vm2527 = vcmp.ge.f32.partialorder %v1933, 0.0
  %vm2528 = vcmp.ge.f32.partialorder %v1938, 0.0
  %vm2529 = vcmp.ge.f32.partialorder %v1941, 0.0
  %vm2530 = vcmp.ge.f32.partialorder %v1946, 0.0
  %vm2531 = vcmp.ge.f32.partialorder %v1949, 0.0
  %vm2532 = vcmp.ge.f32.partialorder %v1954, 0.0
  %vm2533 = vcmp.ge.f32.partialorder %v1957, 0.0
  %vm2534 = vcmp.ge.f32.partialorder %v1962, 0.0
  %vm2535 = vcmp.ge.f32.partialorder %v1965, 0.0
  %vm2536 = vcmp.ge.f32.partialorder %v1970, 0.0
  %vm2537 = vcmp.ge.f32.partialorder %v1973, 0.0
  %vm2538 = vcmp.ge.f32.partialorder %v1978, 0.0
  %vm2539 = vcmp.ge.f32.partialorder %v1981, 0.0
  %vm2540 = vcmp.ge.f32.partialorder %v1986, 0.0
  %vm2541 = vcmp.ge.f32.partialorder %v1989, 0.0
  %vm2542 = vcmp.ge.f32.partialorder %v1994, 0.0
  %vm2543 = vcmp.ge.f32.partialorder %v1997, 0.0
  %vm2544 = vcmp.ge.f32.partialorder %v2002, 0.0
  %vm2545 = vcmp.ge.f32.partialorder %v2005, 0.0
  %vm2546 = vcmp.ge.f32.partialorder %v2010, 0.0
  %vm2547 = vcmp.ge.f32.partialorder %v2013, 0.0
  %vm2548 = vcmp.ge.f32.partialorder %v2018, 0.0
  %vm2549 = vcmp.ge.f32.partialorder %v2021, 0.0
  %vm2550 = vcmp.ge.f32.partialorder %v2026, 0.0
  %vm2551 = vcmp.ge.f32.partialorder %v2029, 0.0
  %vm2552 = vcmp.ge.f32.partialorder %v2034, 0.0
  %vm2553 = vcmp.ge.f32.partialorder %v2037, 0.0
  %vm2554 = vcmp.ge.f32.partialorder %v2042, 0.0
  %vm2555 = vcmp.ge.f32.partialorder %v2045, 0.0
  %vm2556 = vcmp.ge.f32.partialorder %v2050, 0.0
  %vm2557 = vcmp.ge.f32.partialorder %v2053, 0.0
  %vm2558 = vcmp.ge.f32.partialorder %v2058, 0.0
  %vm2559 = vcmp.ge.f32.partialorder %v2061, 0.0
  %vm2560 = vcmp.ge.f32.partialorder %v2066, 0.0
  %vm2561 = vcmp.ge.f32.partialorder %v2069, 0.0
  %vm2562 = vcmp.ge.f32.partialorder %v2074, 0.0
  %vm2563 = vcmp.ge.f32.partialorder %v2077, 0.0
  %vm2564 = vcmp.ge.f32.partialorder %v2082, 0.0
  %vm2565 = vcmp.ge.f32.partialorder %v2085, 0.0
  %vm2566 = vcmp.ge.f32.partialorder %v2090, 0.0
  %vm2567 = vcmp.ge.f32.partialorder %v2093, 0.0
  %vm2568 = vcmp.ge.f32.partialorder %v2098, 0.0
  %vm2569 = vcmp.ge.f32.partialorder %v2101, 0.0
  %vm2570 = vcmp.ge.f32.partialorder %v2106, 0.0
  %vm2571 = vcmp.ge.f32.partialorder %v2109, 0.0
  %vm2572 = vcmp.ge.f32.partialorder %v2114, 0.0
  %vm2573 = vcmp.ge.f32.partialorder %v2117, 0.0
  %vm2574 = vcmp.ge.f32.partialorder %v2122, 0.0
  %vm2575 = vcmp.ge.f32.partialorder %v2125, 0.0
  %vm2576 = vcmp.ge.f32.partialorder %v2130, 0.0
  %vm2577 = vcmp.ge.f32.partialorder %v2133, 0.0
  %vm2578 = vcmp.ge.f32.partialorder %v2138, 0.0
  %vm2579 = vcmp.ge.f32.partialorder %v2141, 0.0
  %vm2580 = vcmp.ge.f32.partialorder %v2146, 0.0
  %vm2581 = vcmp.ge.f32.partialorder %v2149, 0.0
  %vm2582 = vcmp.ge.f32.partialorder %v2154, 0.0
  %vm2583 = vcmp.ge.f32.partialorder %v2157, 0.0
  %vm2584 = vcmp.ge.f32.partialorder %v2162, 0.0
  %vm2585 = vcmp.ge.f32.partialorder %v2165, 0.0
  %vm2586 = vcmp.ge.f32.partialorder %v2170, 0.0
  %vm2587 = vcmp.ge.f32.partialorder %v2173, 0.0
  %vm2588 = vcmp.ge.f32.partialorder %v2178, 0.0
  %vm2589 = vcmp.ge.f32.partialorder %v2181, 0.0
  %vm2590 = vcmp.ge.f32.partialorder %v2186, 0.0
  %vm2591 = vcmp.ge.f32.partialorder %v2189, 0.0
  %vm2592 = vcmp.ge.f32.partialorder %v2194, 0.0
  %vm2593 = vcmp.ge.f32.partialorder %v2197, 0.0
  %vm2594 = vcmp.ge.f32.partialorder %v2202, 0.0
  %vm2595 = vcmp.ge.f32.partialorder %v2205, 0.0
  %vm2596 = vcmp.ge.f32.partialorder %v2210, 0.0
  %vm2597 = vcmp.ge.f32.partialorder %v2213, 0.0
  %vm2598 = vcmp.ge.f32.partialorder %v2218, 0.0
  %vm2599 = vcmp.ge.f32.partialorder %v2221, 0.0
  %vm2600 = vcmp.ge.f32.partialorder %v2226, 0.0
  %vm2601 = vcmp.ge.f32.partialorder %v2229, 0.0
  %vm2602 = vcmp.ge.f32.partialorder %v2234, 0.0
  %vm2603 = vcmp.ge.f32.partialorder %v2237, 0.0
  %vm2604 = vcmp.ge.f32.partialorder %v2242, 0.0
  %vm2605 = vcmp.ge.f32.partialorder %v2245, 0.0
  %vm2606 = vcmp.ge.f32.partialorder %v2250, 0.0
  %vm2607 = vcmp.ge.f32.partialorder %v2253, 0.0
  %vm2608 = vcmp.ge.f32.partialorder %v2258, 0.0
  %vm2609 = vcmp.ge.f32.partialorder %v2261, 0.0
  %vm2610 = vcmp.ge.f32.partialorder %v2266, 0.0
  %vm2611 = vcmp.ge.f32.partialorder %v2269, 0.0
  %vm2612 = vcmp.ge.f32.partialorder %v2274, 0.0
  %vm2613 = vcmp.ge.f32.partialorder %v2277, 0.0
  %vm2614 = vcmp.ge.f32.partialorder %v2282, 0.0
  %vm2615 = vcmp.ge.f32.partialorder %v2285, 0.0
  %vm2616 = vcmp.ge.f32.partialorder %v2290, 0.0
  %vm2617 = vcmp.ge.f32.partialorder %v2293, 0.0
  %vm2618 = vcmp.ge.f32.partialorder %v2298, 0.0
  %vm2619 = vcmp.ge.f32.partialorder %v2301, 0.0
  %vm2620 = vcmp.ge.f32.partialorder %v2306, 0.0
  %vm2621 = vcmp.ge.f32.partialorder %v2309, 0.0
  %vm2622 = vcmp.ge.f32.partialorder %v2314, 0.0
  %vm2623 = vcmp.ge.f32.partialorder %v2317, 0.0
  %vm2624 = vcmp.ge.f32.partialorder %v2322, 0.0
  %vm2625 = vcmp.ge.f32.partialorder %v2325, 0.0
  %vm2626 = vcmp.ge.f32.partialorder %v2330, 0.0
  %vm2627 = vcmp.ge.f32.partialorder %v2333, 0.0
  %vm2628 = vcmp.ge.f32.partialorder %v2338, 0.0
  %vm2629 = vcmp.ge.f32.partialorder %v2341, 0.0
  %vm2630 = vcmp.ge.f32.partialorder %v2346, 0.0
  %vm2631 = vcmp.ge.f32.partialorder %v2349, 0.0
  %vm2632 = vcmp.ge.f32.partialorder %v2354, 0.0
  %vm2633 = vcmp.ge.f32.partialorder %v2357, 0.0
  %vm2634 = vcmp.ge.f32.partialorder %v2362, 0.0
  %vm2635 = vcmp.ge.f32.partialorder %v2365, 0.0
  %vm2636 = vcmp.ge.f32.partialorder %v2370, 0.0
  %vm2637 = vcmp.ge.f32.partialorder %v2373, 0.0
  %vm2638 = vcmp.ge.f32.partialorder %v2378, 0.0
  %vm2639 = vcmp.ge.f32.partialorder %v2381, 0.0
  %v2640 = vmul.f32 %v1362, 0.1
  %v2641 = vmul.f32 %v1365, 0.1
  %v2642 = vmul.f32 %v1370, 0.1
  %v2643 = vmul.f32 %v1373, 0.1
  %v2644 = vmul.f32 %v1378, 0.1
  %v2645 = vmul.f32 %v1381, 0.1
  %v2646 = vmul.f32 %v1386, 0.1
  %v2647 = vmul.f32 %v1389, 0.1
  %v2648 = vmul.f32 %v1394, 0.1
  %v2649 = vmul.f32 %v1397, 0.1
  %v2650 = vmul.f32 %v1402, 0.1
  %v2651 = vmul.f32 %v1405, 0.1
  %v2652 = vmul.f32 %v1410, 0.1
  %v2653 = vmul.f32 %v1413, 0.1
  %v2654 = vmul.f32 %v1418, 0.1
  %v2655 = vmul.f32 %v1421, 0.1
  %v2656 = vmul.f32 %v1426, 0.1
  %v2657 = vmul.f32 %v1429, 0.1
  %v2658 = vmul.f32 %v1434, 0.1
  %v2659 = vmul.f32 %v1437, 0.1
  %v2660 = vmul.f32 %v1442, 0.1
  %v2661 = vmul.f32 %v1445, 0.1
  %v2662 = vmul.f32 %v1450, 0.1
  %v2663 = vmul.f32 %v1453, 0.1
  %v2664 = vmul.f32 %v1458, 0.1
  %v2665 = vmul.f32 %v1461, 0.1
  %v2666 = vmul.f32 %v1466, 0.1
  %v2667 = vmul.f32 %v1469, 0.1
  %v2668 = vmul.f32 %v1474, 0.1
  %v2669 = vmul.f32 %v1477, 0.1
  %v2670 = vmul.f32 %v1482, 0.1
  %v2671 = vmul.f32 %v1485, 0.1
  %v2672 = vmul.f32 %v1490, 0.1
  %v2673 = vmul.f32 %v1493, 0.1
  %v2674 = vmul.f32 %v1498, 0.1
  %v2675 = vmul.f32 %v1501, 0.1
  %v2676 = vmul.f32 %v1506, 0.1
  %v2677 = vmul.f32 %v1509, 0.1
  %v2678 = vmul.f32 %v1514, 0.1
  %v2679 = vmul.f32 %v1517, 0.1
  %v2680 = vmul.f32 %v1522, 0.1
  %v2681 = vmul.f32 %v1525, 0.1
  %v2682 = vmul.f32 %v1530, 0.1
  %v2683 = vmul.f32 %v1533, 0.1
  %v2684 = vmul.f32 %v1538, 0.1
  %v2685 = vmul.f32 %v1541, 0.1
  %v2686 = vmul.f32 %v1546, 0.1
  %v2687 = vmul.f32 %v1549, 0.1
  %v2688 = vmul.f32 %v1554, 0.1
  %v2689 = vmul.f32 %v1557, 0.1
  %v2690 = vmul.f32 %v1562, 0.1
  %v2691 = vmul.f32 %v1565, 0.1
  %v2692 = vmul.f32 %v1570, 0.1
  %v2693 = vmul.f32 %v1573, 0.1
  %v2694 = vmul.f32 %v1578, 0.1
  %v2695 = vmul.f32 %v1581, 0.1
  %v2696 = vmul.f32 %v1586, 0.1
  %v2697 = vmul.f32 %v1589, 0.1
  %v2698 = vmul.f32 %v1594, 0.1
  %v2699 = vmul.f32 %v1597, 0.1
  %v2700 = vmul.f32 %v1602, 0.1
  %v2701 = vmul.f32 %v1605, 0.1
  %v2702 = vmul.f32 %v1610, 0.1
  %v2703 = vmul.f32 %v1613, 0.1
  %v2704 = vmul.f32 %v1618, 0.1
  %v2705 = vmul.f32 %v1621, 0.1
  %v2706 = vmul.f32 %v1626, 0.1
  %v2707 = vmul.f32 %v1629, 0.1
  %v2708 = vmul.f32 %v1634, 0.1
  %v2709 = vmul.f32 %v1637, 0.1
  %v2710 = vmul.f32 %v1642, 0.1
  %v2711 = vmul.f32 %v1645, 0.1
  %v2712 = vmul.f32 %v1650, 0.1
  %v2713 = vmul.f32 %v1653, 0.1
  %v2714 = vmul.f32 %v1658, 0.1
  %v2715 = vmul.f32 %v1661, 0.1
  %v2716 = vmul.f32 %v1666, 0.1
  %v2717 = vmul.f32 %v1669, 0.1
  %v2718 = vmul.f32 %v1674, 0.1
  %v2719 = vmul.f32 %v1677, 0.1
  %v2720 = vmul.f32 %v1682, 0.1
  %v2721 = vmul.f32 %v1685, 0.1
  %v2722 = vmul.f32 %v1690, 0.1
  %v2723 = vmul.f32 %v1693, 0.1
  %v2724 = vmul.f32 %v1698, 0.1
  %v2725 = vmul.f32 %v1701, 0.1
  %v2726 = vmul.f32 %v1706, 0.1
  %v2727 = vmul.f32 %v1709, 0.1
  %v2728 = vmul.f32 %v1714, 0.1
  %v2729 = vmul.f32 %v1717, 0.1
  %v2730 = vmul.f32 %v1722, 0.1
  %v2731 = vmul.f32 %v1725, 0.1
  %v2732 = vmul.f32 %v1730, 0.1
  %v2733 = vmul.f32 %v1733, 0.1
  %v2734 = vmul.f32 %v1738, 0.1
  %v2735 = vmul.f32 %v1741, 0.1
  %v2736 = vmul.f32 %v1746, 0.1
  %v2737 = vmul.f32 %v1749, 0.1
  %v2738 = vmul.f32 %v1754, 0.1
  %v2739 = vmul.f32 %v1757, 0.1
  %v2740 = vmul.f32 %v1762, 0.1
  %v2741 = vmul.f32 %v1765, 0.1
  %v2742 = vmul.f32 %v1770, 0.1
  %v2743 = vmul.f32 %v1773, 0.1
  %v2744 = vmul.f32 %v1778, 0.1
  %v2745 = vmul.f32 %v1781, 0.1
  %v2746 = vmul.f32 %v1786, 0.1
  %v2747 = vmul.f32 %v1789, 0.1
  %v2748 = vmul.f32 %v1794, 0.1
  %v2749 = vmul.f32 %v1797, 0.1
  %v2750 = vmul.f32 %v1802, 0.1
  %v2751 = vmul.f32 %v1805, 0.1
  %v2752 = vmul.f32 %v1810, 0.1
  %v2753 = vmul.f32 %v1813, 0.1
  %v2754 = vmul.f32 %v1818, 0.1
  %v2755 = vmul.f32 %v1821, 0.1
  %v2756 = vmul.f32 %v1826, 0.1
  %v2757 = vmul.f32 %v1829, 0.1
  %v2758 = vmul.f32 %v1834, 0.1
  %v2759 = vmul.f32 %v1837, 0.1
  %v2760 = vmul.f32 %v1842, 0.1
  %v2761 = vmul.f32 %v1845, 0.1
  %v2762 = vmul.f32 %v1850, 0.1
  %v2763 = vmul.f32 %v1853, 0.1
  %v2764 = vmul.f32 %v1858, 0.1
  %v2765 = vmul.f32 %v1861, 0.1
  %v2766 = vmul.f32 %v1866, 0.1
  %v2767 = vmul.f32 %v1869, 0.1
  %v2768 = vmul.f32 %v1874, 0.1
  %v2769 = vmul.f32 %v1877, 0.1
  %v2770 = vmul.f32 %v1882, 0.1
  %v2771 = vmul.f32 %v1885, 0.1
  %v2772 = vmul.f32 %v1890, 0.1
  %v2773 = vmul.f32 %v1893, 0.1
  %v2774 = vmul.f32 %v1898, 0.1
  %v2775 = vmul.f32 %v1901, 0.1
  %v2776 = vmul.f32 %v1906, 0.1
  %v2777 = vmul.f32 %v1909, 0.1
  %v2778 = vmul.f32 %v1914, 0.1
  %v2779 = vmul.f32 %v1917, 0.1
  %v2780 = vmul.f32 %v1922, 0.1
  %v2781 = vmul.f32 %v1925, 0.1
  %v2782 = vmul.f32 %v1930, 0.1
  %v2783 = vmul.f32 %v1933, 0.1
  %v2784 = vmul.f32 %v1938, 0.1
  %v2785 = vmul.f32 %v1941, 0.1
  %v2786 = vmul.f32 %v1946, 0.1
  %v2787 = vmul.f32 %v1949, 0.1
  %v2788 = vmul.f32 %v1954, 0.1
  %v2789 = vmul.f32 %v1957, 0.1
  %v2790 = vmul.f32 %v1962, 0.1
  %v2791 = vmul.f32 %v1965, 0.1
  %v2792 = vmul.f32 %v1970, 0.1
  %v2793 = vmul.f32 %v1973, 0.1
  %v2794 = vmul.f32 %v1978, 0.1
  %v2795 = vmul.f32 %v1981, 0.1
  %v2796 = vmul.f32 %v1986, 0.1
  %v2797 = vmul.f32 %v1989, 0.1
  %v2798 = vmul.f32 %v1994, 0.1
  %v2799 = vmul.f32 %v1997, 0.1
  %v2800 = vmul.f32 %v2002, 0.1
  %v2801 = vmul.f32 %v2005, 0.1
  %v2802 = vmul.f32 %v2010, 0.1
  %v2803 = vmul.f32 %v2013, 0.1
  %v2804 = vmul.f32 %v2018, 0.1
  %v2805 = vmul.f32 %v2021, 0.1
  %v2806 = vmul.f32 %v2026, 0.1
  %v2807 = vmul.f32 %v2029, 0.1
  %v2808 = vmul.f32 %v2034, 0.1
  %v2809 = vmul.f32 %v2037, 0.1
  %v2810 = vmul.f32 %v2042, 0.1
  %v2811 = vmul.f32 %v2045, 0.1
  %v2812 = vmul.f32 %v2050, 0.1
  %v2813 = vmul.f32 %v2053, 0.1
  %v2814 = vmul.f32 %v2058, 0.1
  %v2815 = vmul.f32 %v2061, 0.1
  %v2816 = vmul.f32 %v2066, 0.1
  %v2817 = vmul.f32 %v2069, 0.1
  %v2818 = vmul.f32 %v2074, 0.1
  %v2819 = vmul.f32 %v2077, 0.1
  %v2820 = vmul.f32 %v2082, 0.1
  %v2821 = vmul.f32 %v2085, 0.1
  %v2822 = vmul.f32 %v2090, 0.1
  %v2823 = vmul.f32 %v2093, 0.1
  %v2824 = vmul.f32 %v2098, 0.1
  %v2825 = vmul.f32 %v2101, 0.1
  %v2826 = vmul.f32 %v2106, 0.1
  %v2827 = vmul.f32 %v2109, 0.1
  %v2828 = vmul.f32 %v2114, 0.1
  %v2829 = vmul.f32 %v2117, 0.1
  %v2830 = vmul.f32 %v2122, 0.1
  %v2831 = vmul.f32 %v2125, 0.1
  %v2832 = vmul.f32 %v2130, 0.1
  %v2833 = vmul.f32 %v2133, 0.1
  %v2834 = vmul.f32 %v2138, 0.1
  %v2835 = vmul.f32 %v2141, 0.1
  %v2836 = vmul.f32 %v2146, 0.1
  %v2837 = vmul.f32 %v2149, 0.1
  %v2838 = vmul.f32 %v2154, 0.1
  %v2839 = vmul.f32 %v2157, 0.1
  %v2840 = vmul.f32 %v2162, 0.1
  %v2841 = vmul.f32 %v2165, 0.1
  %v2842 = vmul.f32 %v2170, 0.1
  %v2843 = vmul.f32 %v2173, 0.1
  %v2844 = vmul.f32 %v2178, 0.1
  %v2845 = vmul.f32 %v2181, 0.1
  %v2846 = vmul.f32 %v2186, 0.1
  %v2847 = vmul.f32 %v2189, 0.1
  %v2848 = vmul.f32 %v2194, 0.1
  %v2849 = vmul.f32 %v2197, 0.1
  %v2850 = vmul.f32 %v2202, 0.1
  %v2851 = vmul.f32 %v2205, 0.1
  %v2852 = vmul.f32 %v2210, 0.1
  %v2853 = vmul.f32 %v2213, 0.1
  %v2854 = vmul.f32 %v2218, 0.1
  %v2855 = vmul.f32 %v2221, 0.1
  %v2856 = vmul.f32 %v2226, 0.1
  %v2857 = vmul.f32 %v2229, 0.1
  %v2858 = vmul.f32 %v2234, 0.1
  %v2859 = vmul.f32 %v2237, 0.1
  %v2860 = vmul.f32 %v2242, 0.1
  %v2861 = vmul.f32 %v2245, 0.1
  %v2862 = vmul.f32 %v2250, 0.1
  %v2863 = vmul.f32 %v2253, 0.1
  %v2864 = vmul.f32 %v2258, 0.1
  %v2865 = vmul.f32 %v2261, 0.1
  %v2866 = vmul.f32 %v2266, 0.1
  %v2867 = vmul.f32 %v2269, 0.1
  %v2868 = vmul.f32 %v2274, 0.1
  %v2869 = vmul.f32 %v2277, 0.1
  %v2870 = vmul.f32 %v2282, 0.1
  %v2871 = vmul.f32 %v2285, 0.1
  %v2872 = vmul.f32 %v2290, 0.1
  %v2873 = vmul.f32 %v2293, 0.1
  %v2874 = vmul.f32 %v2298, 0.1
  %v2875 = vmul.f32 %v2301, 0.1
  %v2876 = vmul.f32 %v2306, 0.1
  %v2877 = vmul.f32 %v2309, 0.1
  %v2878 = vmul.f32 %v2314, 0.1
  %v2879 = vmul.f32 %v2317, 0.1
  %v2880 = vmul.f32 %v2322, 0.1
  %v2881 = vmul.f32 %v2325, 0.1
  %v2882 = vmul.f32 %v2330, 0.1
  %v2883 = vmul.f32 %v2333, 0.1
  %v2884 = vmul.f32 %v2338, 0.1
  %v2885 = vmul.f32 %v2341, 0.1
  %v2886 = vmul.f32 %v2346, 0.1
  %v2887 = vmul.f32 %v2349, 0.1
  %v2888 = vmul.f32 %v2354, 0.1
  %v2889 = vmul.f32 %v2357, 0.1
  %v2890 = vmul.f32 %v2362, 0.1
  %v2891 = vmul.f32 %v2365, 0.1
  %v2892 = vmul.f32 %v2370, 0.1
  %v2893 = vmul.f32 %v2373, 0.1
  %v2894 = vmul.f32 %v2378, 0.1
  %v2895 = vmul.f32 %v2381, 0.1
  %v2896 = vsel %vm2384, %v1362, %v2640
  %v2897 = vsel %vm2385, %v1365, %v2641
  %v2898 = vsel %vm2386, %v1370, %v2642
  %v2899 = vsel %vm2387, %v1373, %v2643
  %v2900 = vsel %vm2388, %v1378, %v2644
  %v2901 = vsel %vm2389, %v1381, %v2645
  %v2902 = vsel %vm2390, %v1386, %v2646
  %v2903 = vsel %vm2391, %v1389, %v2647
  %v2904 = vsel %vm2392, %v1394, %v2648
  %v2905 = vsel %vm2393, %v1397, %v2649
  %v2906 = vsel %vm2394, %v1402, %v2650
  %v2907 = vsel %vm2395, %v1405, %v2651
  %v2908 = vsel %vm2396, %v1410, %v2652
  %v2909 = vsel %vm2397, %v1413, %v2653
  %v2910 = vsel %vm2398, %v1418, %v2654
  %v2911 = vsel %vm2399, %v1421, %v2655
  %v2912 = vsel %vm2400, %v1426, %v2656
  %v2913 = vsel %vm2401, %v1429, %v2657
  %v2914 = vsel %vm2402, %v1434, %v2658
  %v2915 = vsel %vm2403, %v1437, %v2659
  %v2916 = vsel %vm2404, %v1442, %v2660
  %v2917 = vsel %vm2405, %v1445, %v2661
  %v2918 = vsel %vm2406, %v1450, %v2662
  %v2919 = vsel %vm2407, %v1453, %v2663
  %v2920 = vsel %vm2408, %v1458, %v2664
  %v2921 = vsel %vm2409, %v1461, %v2665
  %v2922 = vsel %vm2410, %v1466, %v2666
  %v2923 = vsel %vm2411, %v1469, %v2667
  %v2924 = vsel %vm2412, %v1474, %v2668
  %v2925 = vsel %vm2413, %v1477, %v2669
  %v2926 = vsel %vm2414, %v1482, %v2670
  %v2927 = vsel %vm2415, %v1485, %v2671
  %v2928 = vsel %vm2416, %v1490, %v2672
  %v2929 = vsel %vm2417, %v1493, %v2673
  %v2930 = vsel %vm2418, %v1498, %v2674
  %v2931 = vsel %vm2419, %v1501, %v2675
  %v2932 = vsel %vm2420, %v1506, %v2676
  %v2933 = vsel %vm2421, %v1509, %v2677
  %v2934 = vsel %vm2422, %v1514, %v2678
  %v2935 = vsel %vm2423, %v1517, %v2679
  %v2936 = vsel %vm2424, %v1522, %v2680
  %v2937 = vsel %vm2425, %v1525, %v2681
  %v2938 = vsel %vm2426, %v1530, %v2682
  %v2939 = vsel %vm2427, %v1533, %v2683
  %v2940 = vsel %vm2428, %v1538, %v2684
  %v2941 = vsel %vm2429, %v1541, %v2685
  %v2942 = vsel %vm2430, %v1546, %v2686
  %v2943 = vsel %vm2431, %v1549, %v2687
  %v2944 = vsel %vm2432, %v1554, %v2688
  %v2945 = vsel %vm2433, %v1557, %v2689
  %v2946 = vsel %vm2434, %v1562, %v2690
  %v2947 = vsel %vm2435, %v1565, %v2691
  %v2948 = vsel %vm2436, %v1570, %v2692
  %v2949 = vsel %vm2437, %v1573, %v2693
  %v2950 = vsel %vm2438, %v1578, %v2694
  %v2951 = vsel %vm2439, %v1581, %v2695
  %v2952 = vsel %vm2440, %v1586, %v2696
  %v2953 = vsel %vm2441, %v1589, %v2697
  %v2954 = vsel %vm2442, %v1594, %v2698
  %v2955 = vsel %vm2443, %v1597, %v2699
  %v2956 = vsel %vm2444, %v1602, %v2700
  %v2957 = vsel %vm2445, %v1605, %v2701
  %v2958 = vsel %vm2446, %v1610, %v2702
  %v2959 = vsel %vm2447, %v1613, %v2703
  %v2960 = vsel %vm2448, %v1618, %v2704
  %v2961 = vsel %vm2449, %v1621, %v2705
  %v2962 = vsel %vm2450, %v1626, %v2706
  %v2963 = vsel %vm2451, %v1629, %v2707
  %v2964 = vsel %vm2452, %v1634, %v2708
  %v2965 = vsel %vm2453, %v1637, %v2709
  %v2966 = vsel %vm2454, %v1642, %v2710
  %v2967 = vsel %vm2455, %v1645, %v2711
  %v2968 = vsel %vm2456, %v1650, %v2712
  %v2969 = vsel %vm2457, %v1653, %v2713
  %v2970 = vsel %vm2458, %v1658, %v2714
  %v2971 = vsel %vm2459, %v1661, %v2715
  %v2972 = vsel %vm2460, %v1666, %v2716
  %v2973 = vsel %vm2461, %v1669, %v2717
  %v2974 = vsel %vm2462, %v1674, %v2718
  %v2975 = vsel %vm2463, %v1677, %v2719
  %v2976 = vsel %vm2464, %v1682, %v2720
  %v2977 = vsel %vm2465, %v1685, %v2721
  %v2978 = vsel %vm2466, %v1690, %v2722
  %v2979 = vsel %vm2467, %v1693, %v2723
  %v2980 = vsel %vm2468, %v1698, %v2724
  %v2981 = vsel %vm2469, %v1701, %v2725
  %v2982 = vsel %vm2470, %v1706, %v2726
  %v2983 = vsel %vm2471, %v1709, %v2727
  %v2984 = vsel %vm2472, %v1714, %v2728
  %v2985 = vsel %vm2473, %v1717, %v2729
  %v2986 = vsel %vm2474, %v1722, %v2730
  %v2987 = vsel %vm2475, %v1725, %v2731
  %v2988 = vsel %vm2476, %v1730, %v2732
  %v2989 = vsel %vm2477, %v1733, %v2733
  %v2990 = vsel %vm2478, %v1738, %v2734
  %v2991 = vsel %vm2479, %v1741, %v2735
  %v2992 = vsel %vm2480, %v1746, %v2736
  %v2993 = vsel %vm2481, %v1749, %v2737
  %v2994 = vsel %vm2482, %v1754, %v2738
  %v2995 = vsel %vm2483, %v1757, %v2739
  %v2996 = vsel %vm2484, %v1762, %v2740
  %v2997 = vsel %vm2485, %v1765, %v2741
  %v2998 = vsel %vm2486, %v1770, %v2742
  %v2999 = vsel %vm2487, %v1773, %v2743
  %v3000 = vsel %vm2488, %v1778, %v2744
  %v3001 = vsel %vm2489, %v1781, %v2745
  %v3002 = vsel %vm2490, %v1786, %v2746
  %v3003 = vsel %vm2491, %v1789, %v2747
  %v3004 = vsel %vm2492, %v1794, %v2748
  %v3005 = vsel %vm2493, %v1797, %v2749
  %v3006 = vsel %vm2494, %v1802, %v2750
  %v3007 = vsel %vm2495, %v1805, %v2751
  %v3008 = vsel %vm2496, %v1810, %v2752
  %v3009 = vsel %vm2497, %v1813, %v2753
  %v3010 = vsel %vm2498, %v1818, %v2754
  %v3011 = vsel %vm2499, %v1821, %v2755
  %v3012 = vsel %vm2500, %v1826, %v2756
  %v3013 = vsel %vm2501, %v1829, %v2757
  %v3014 = vsel %vm2502, %v1834, %v2758
  %v3015 = vsel %vm2503, %v1837, %v2759
  %v3016 = vsel %vm2504, %v1842, %v2760
  %v3017 = vsel %vm2505, %v1845, %v2761
  %v3018 = vsel %vm2506, %v1850, %v2762
  %v3019 = vsel %vm2507, %v1853, %v2763
  %v3020 = vsel %vm2508, %v1858, %v2764
  %v3021 = vsel %vm2509, %v1861, %v2765
  %v3022 = vsel %vm2510, %v1866, %v2766
  %v3023 = vsel %vm2511, %v1869, %v2767
  %v3024 = vsel %vm2512, %v1874, %v2768
  %v3025 = vsel %vm2513, %v1877, %v2769
  %v3026 = vsel %vm2514, %v1882, %v2770
  %v3027 = vsel %vm2515, %v1885, %v2771
  %v3028 = vsel %vm2516, %v1890, %v2772
  %v3029 = vsel %vm2517, %v1893, %v2773
  %v3030 = vsel %vm2518, %v1898, %v2774
  %v3031 = vsel %vm2519, %v1901, %v2775
  %v3032 = vsel %vm2520, %v1906, %v2776
  %v3033 = vsel %vm2521, %v1909, %v2777
  %v3034 = vsel %vm2522, %v1914, %v2778
  %v3035 = vsel %vm2523, %v1917, %v2779
  %v3036 = vsel %vm2524, %v1922, %v2780
  %v3037 = vsel %vm2525, %v1925, %v2781
  %v3038 = vsel %vm2526, %v1930, %v2782
  %v3039 = vsel %vm2527, %v1933, %v2783
  %v3040 = vsel %vm2528, %v1938, %v2784
  %v3041 = vsel %vm2529, %v1941, %v2785
  %v3042 = vsel %vm2530, %v1946, %v2786
  %v3043 = vsel %vm2531, %v1949, %v2787
  %v3044 = vsel %vm2532, %v1954, %v2788
  %v3045 = vsel %vm2533, %v1957, %v2789
  %v3046 = vsel %vm2534, %v1962, %v2790
  %v3047 = vsel %vm2535, %v1965, %v2791
  %v3048 = vsel %vm2536, %v1970, %v2792
  %v3049 = vsel %vm2537, %v1973, %v2793
  %v3050 = vsel %vm2538, %v1978, %v2794
  %v3051 = vsel %vm2539, %v1981, %v2795
  %v3052 = vsel %vm2540, %v1986, %v2796
  %v3053 = vsel %vm2541, %v1989, %v2797
  %v3054 = vsel %vm2542, %v1994, %v2798
  %v3055 = vsel %vm2543, %v1997, %v2799
  %v3056 = vsel %vm2544, %v2002, %v2800
  %v3057 = vsel %vm2545, %v2005, %v2801
  %v3058 = vsel %vm2546, %v2010, %v2802
  %v3059 = vsel %vm2547, %v2013, %v2803
  %v3060 = vsel %vm2548, %v2018, %v2804
  %v3061 = vsel %vm2549, %v2021, %v2805
  %v3062 = vsel %vm2550, %v2026, %v2806
  %v3063 = vsel %vm2551, %v2029, %v2807
  %v3064 = vsel %vm2552, %v2034, %v2808
  %v3065 = vsel %vm2553, %v2037, %v2809
  %v3066 = vsel %vm2554, %v2042, %v2810
  %v3067 = vsel %vm2555, %v2045, %v2811
  %v3068 = vsel %vm2556, %v2050, %v2812
  %v3069 = vsel %vm2557, %v2053, %v2813
  %v3070 = vsel %vm2558, %v2058, %v2814
  %v3071 = vsel %vm2559, %v2061, %v2815
  %v3072 = vsel %vm2560, %v2066, %v2816
  %v3073 = vsel %vm2561, %v2069, %v2817
  %v3074 = vsel %vm2562, %v2074, %v2818
  %v3075 = vsel %vm2563, %v2077, %v2819
  %v3076 = vsel %vm2564, %v2082, %v2820
  %v3077 = vsel %vm2565, %v2085, %v2821
  %v3078 = vsel %vm2566, %v2090, %v2822
  %v3079 = vsel %vm2567, %v2093, %v2823
  %v3080 = vsel %vm2568, %v2098, %v2824
  %v3081 = vsel %vm2569, %v2101, %v2825
  %v3082 = vsel %vm2570, %v2106, %v2826
  %v3083 = vsel %vm2571, %v2109, %v2827
  %v3084 = vsel %vm2572, %v2114, %v2828
  %v3085 = vsel %vm2573, %v2117, %v2829
  %v3086 = vsel %vm2574, %v2122, %v2830
  %v3087 = vsel %vm2575, %v2125, %v2831
  %v3088 = vsel %vm2576, %v2130, %v2832
  %v3089 = vsel %vm2577, %v2133, %v2833
  %v3090 = vsel %vm2578, %v2138, %v2834
  %v3091 = vsel %vm2579, %v2141, %v2835
  %v3092 = vsel %vm2580, %v2146, %v2836
  %v3093 = vsel %vm2581, %v2149, %v2837
  %v3094 = vsel %vm2582, %v2154, %v2838
  %v3095 = vsel %vm2583, %v2157, %v2839
  %v3096 = vsel %vm2584, %v2162, %v2840
  %v3097 = vsel %vm2585, %v2165, %v2841
  %v3098 = vsel %vm2586, %v2170, %v2842
  %v3099 = vsel %vm2587, %v2173, %v2843
  %v3100 = vsel %vm2588, %v2178, %v2844
  %v3101 = vsel %vm2589, %v2181, %v2845
  %v3102 = vsel %vm2590, %v2186, %v2846
  %v3103 = vsel %vm2591, %v2189, %v2847
  %v3104 = vsel %vm2592, %v2194, %v2848
  %v3105 = vsel %vm2593, %v2197, %v2849
  %v3106 = vsel %vm2594, %v2202, %v2850
  %v3107 = vsel %vm2595, %v2205, %v2851
  %v3108 = vsel %vm2596, %v2210, %v2852
  %v3109 = vsel %vm2597, %v2213, %v2853
  %v3110 = vsel %vm2598, %v2218, %v2854
  %v3111 = vsel %vm2599, %v2221, %v2855
  %v3112 = vsel %vm2600, %v2226, %v2856
  %v3113 = vsel %vm2601, %v2229, %v2857
  %v3114 = vsel %vm2602, %v2234, %v2858
  %v3115 = vsel %vm2603, %v2237, %v2859
  %v3116 = vsel %vm2604, %v2242, %v2860
  %v3117 = vsel %vm2605, %v2245, %v2861
  %v3118 = vsel %vm2606, %v2250, %v2862
  %v3119 = vsel %vm2607, %v2253, %v2863
  %v3120 = vsel %vm2608, %v2258, %v2864
  %v3121 = vsel %vm2609, %v2261, %v2865
  %v3122 = vsel %vm2610, %v2266, %v2866
  %v3123 = vsel %vm2611, %v2269, %v2867
  %v3124 = vsel %vm2612, %v2274, %v2868
  %v3125 = vsel %vm2613, %v2277, %v2869
  %v3126 = vsel %vm2614, %v2282, %v2870
  %v3127 = vsel %vm2615, %v2285, %v2871
  %v3128 = vsel %vm2616, %v2290, %v2872
  %v3129 = vsel %vm2617, %v2293, %v2873
  %v3130 = vsel %vm2618, %v2298, %v2874
  %v3131 = vsel %vm2619, %v2301, %v2875
  %v3132 = vsel %vm2620, %v2306, %v2876
  %v3133 = vsel %vm2621, %v2309, %v2877
  %v3134 = vsel %vm2622, %v2314, %v2878
  %v3135 = vsel %vm2623, %v2317, %v2879
  %v3136 = vsel %vm2624, %v2322, %v2880
  %v3137 = vsel %vm2625, %v2325, %v2881
  %v3138 = vsel %vm2626, %v2330, %v2882
  %v3139 = vsel %vm2627, %v2333, %v2883
  %v3140 = vsel %vm2628, %v2338, %v2884
  %v3141 = vsel %vm2629, %v2341, %v2885
  %v3142 = vsel %vm2630, %v2346, %v2886
  %v3143 = vsel %vm2631, %v2349, %v2887
  %v3144 = vsel %vm2632, %v2354, %v2888
  %v3145 = vsel %vm2633, %v2357, %v2889
  %v3146 = vsel %vm2634, %v2362, %v2890
  %v3147 = vsel %vm2635, %v2365, %v2891
  %v3148 = vsel %vm2636, %v2370, %v2892
  %v3149 = vsel %vm2637, %v2373, %v2893
  %v3150 = vsel %vm2638, %v2378, %v2894
  %v3151 = vsel %vm2639, %v2381, %v2895
  %v3152 = vpack.c.bf16 %v2897, %v2896
  %v3153 = vpack.c.bf16 %v2899, %v2898
  %v3154 = vpack.c.bf16 %v2901, %v2900
  %v3155 = vpack.c.bf16 %v2903, %v2902
  %v3156 = vpack.c.bf16 %v2905, %v2904
  %v3157 = vpack.c.bf16 %v2907, %v2906
  %v3158 = vpack.c.bf16 %v2909, %v2908
  %v3159 = vpack.c.bf16 %v2911, %v2910
  %v3160 = vpack.c.bf16 %v2913, %v2912
  %v3161 = vpack.c.bf16 %v2915, %v2914
  %v3162 = vpack.c.bf16 %v2917, %v2916
  %v3163 = vpack.c.bf16 %v2919, %v2918
  %v3164 = vpack.c.bf16 %v2921, %v2920
  %v3165 = vpack.c.bf16 %v2923, %v2922
  %v3166 = vpack.c.bf16 %v2925, %v2924
  %v3167 = vpack.c.bf16 %v2927, %v2926
  %v3168 = vpack.c.bf16 %v2929, %v2928
  %v3169 = vpack.c.bf16 %v2931, %v2930
  %v3170 = vpack.c.bf16 %v2933, %v2932
  %v3171 = vpack.c.bf16 %v2935, %v2934
  %v3172 = vpack.c.bf16 %v2937, %v2936
  %v3173 = vpack.c.bf16 %v2939, %v2938
  %v3174 = vpack.c.bf16 %v2941, %v2940
  %v3175 = vpack.c.bf16 %v2943, %v2942
  %v3176 = vpack.c.bf16 %v2945, %v2944
  %v3177 = vpack.c.bf16 %v2947, %v2946
  %v3178 = vpack.c.bf16 %v2949, %v2948
  %v3179 = vpack.c.bf16 %v2951, %v2950
  %v3180 = vpack.c.bf16 %v2953, %v2952
  %v3181 = vpack.c.bf16 %v2955, %v2954
  %v3182 = vpack.c.bf16 %v2957, %v2956
  %v3183 = vpack.c.bf16 %v2959, %v2958
  %v3184 = vpack.c.bf16 %v2961, %v2960
  %v3185 = vpack.c.bf16 %v2963, %v2962
  %v3186 = vpack.c.bf16 %v2965, %v2964
  %v3187 = vpack.c.bf16 %v2967, %v2966
  %v3188 = vpack.c.bf16 %v2969, %v2968
  %v3189 = vpack.c.bf16 %v2971, %v2970
  %v3190 = vpack.c.bf16 %v2973, %v2972
  %v3191 = vpack.c.bf16 %v2975, %v2974
  %v3192 = vpack.c.bf16 %v2977, %v2976
  %v3193 = vpack.c.bf16 %v2979, %v2978
  %v3194 = vpack.c.bf16 %v2981, %v2980
  %v3195 = vpack.c.bf16 %v2983, %v2982
  %v3196 = vpack.c.bf16 %v2985, %v2984
  %v3197 = vpack.c.bf16 %v2987, %v2986
  %v3198 = vpack.c.bf16 %v2989, %v2988
  %v3199 = vpack.c.bf16 %v2991, %v2990
  %v3200 = vpack.c.bf16 %v2993, %v2992
  %v3201 = vpack.c.bf16 %v2995, %v2994
  %v3202 = vpack.c.bf16 %v2997, %v2996
  %v3203 = vpack.c.bf16 %v2999, %v2998
  %v3204 = vpack.c.bf16 %v3001, %v3000
  %v3205 = vpack.c.bf16 %v3003, %v3002
  %v3206 = vpack.c.bf16 %v3005, %v3004
  %v3207 = vpack.c.bf16 %v3007, %v3006
  %v3208 = vpack.c.bf16 %v3009, %v3008
  %v3209 = vpack.c.bf16 %v3011, %v3010
  %v3210 = vpack.c.bf16 %v3013, %v3012
  %v3211 = vpack.c.bf16 %v3015, %v3014
  %v3212 = vpack.c.bf16 %v3017, %v3016
  %v3213 = vpack.c.bf16 %v3019, %v3018
  %v3214 = vpack.c.bf16 %v3021, %v3020
  %v3215 = vpack.c.bf16 %v3023, %v3022
  %v3216 = vpack.c.bf16 %v3025, %v3024
  %v3217 = vpack.c.bf16 %v3027, %v3026
  %v3218 = vpack.c.bf16 %v3029, %v3028
  %v3219 = vpack.c.bf16 %v3031, %v3030
  %v3220 = vpack.c.bf16 %v3033, %v3032
  %v3221 = vpack.c.bf16 %v3035, %v3034
  %v3222 = vpack.c.bf16 %v3037, %v3036
  %v3223 = vpack.c.bf16 %v3039, %v3038
  %v3224 = vpack.c.bf16 %v3041, %v3040
  %v3225 = vpack.c.bf16 %v3043, %v3042
  %v3226 = vpack.c.bf16 %v3045, %v3044
  %v3227 = vpack.c.bf16 %v3047, %v3046
  %v3228 = vpack.c.bf16 %v3049, %v3048
  %v3229 = vpack.c.bf16 %v3051, %v3050
  %v3230 = vpack.c.bf16 %v3053, %v3052
  %v3231 = vpack.c.bf16 %v3055, %v3054
  %v3232 = vpack.c.bf16 %v3057, %v3056
  %v3233 = vpack.c.bf16 %v3059, %v3058
  %v3234 = vpack.c.bf16 %v3061, %v3060
  %v3235 = vpack.c.bf16 %v3063, %v3062
  %v3236 = vpack.c.bf16 %v3065, %v3064
  %v3237 = vpack.c.bf16 %v3067, %v3066
  %v3238 = vpack.c.bf16 %v3069, %v3068
  %v3239 = vpack.c.bf16 %v3071, %v3070
  %v3240 = vpack.c.bf16 %v3073, %v3072
  %v3241 = vpack.c.bf16 %v3075, %v3074
  %v3242 = vpack.c.bf16 %v3077, %v3076
  %v3243 = vpack.c.bf16 %v3079, %v3078
  %v3244 = vpack.c.bf16 %v3081, %v3080
  %v3245 = vpack.c.bf16 %v3083, %v3082
  %v3246 = vpack.c.bf16 %v3085, %v3084
  %v3247 = vpack.c.bf16 %v3087, %v3086
  %v3248 = vpack.c.bf16 %v3089, %v3088
  %v3249 = vpack.c.bf16 %v3091, %v3090
  %v3250 = vpack.c.bf16 %v3093, %v3092
  %v3251 = vpack.c.bf16 %v3095, %v3094
  %v3252 = vpack.c.bf16 %v3097, %v3096
  %v3253 = vpack.c.bf16 %v3099, %v3098
  %v3254 = vpack.c.bf16 %v3101, %v3100
  %v3255 = vpack.c.bf16 %v3103, %v3102
  %v3256 = vpack.c.bf16 %v3105, %v3104
  %v3257 = vpack.c.bf16 %v3107, %v3106
  %v3258 = vpack.c.bf16 %v3109, %v3108
  %v3259 = vpack.c.bf16 %v3111, %v3110
  %v3260 = vpack.c.bf16 %v3113, %v3112
  %v3261 = vpack.c.bf16 %v3115, %v3114
  %v3262 = vpack.c.bf16 %v3117, %v3116
  %v3263 = vpack.c.bf16 %v3119, %v3118
  %v3264 = vpack.c.bf16 %v3121, %v3120
  %v3265 = vpack.c.bf16 %v3123, %v3122
  %v3266 = vpack.c.bf16 %v3125, %v3124
  %v3267 = vpack.c.bf16 %v3127, %v3126
  %v3268 = vpack.c.bf16 %v3129, %v3128
  %v3269 = vpack.c.bf16 %v3131, %v3130
  %v3270 = vpack.c.bf16 %v3133, %v3132
  %v3271 = vpack.c.bf16 %v3135, %v3134
  %v3272 = vpack.c.bf16 %v3137, %v3136
  %v3273 = vpack.c.bf16 %v3139, %v3138
  %v3274 = vpack.c.bf16 %v3141, %v3140
  %v3275 = vpack.c.bf16 %v3143, %v3142
  %v3276 = vpack.c.bf16 %v3145, %v3144
  %v3277 = vpack.c.bf16 %v3147, %v3146
  %v3278 = vpack.c.bf16 %v3149, %v3148
  %v3279 = vpack.c.bf16 %v3151, %v3150
  %v3408 = vunpack.c.l.b16 %v3152
  %v3409 = vunpack.c.h.b16 %v3152
  %v3410 = vunpack.c.l.b16 %v3153
  %v3411 = vunpack.c.h.b16 %v3153
  %v3412 = vunpack.c.l.b16 %v3154
  %v3413 = vunpack.c.h.b16 %v3154
  %v3414 = vunpack.c.l.b16 %v3155
  %v3415 = vunpack.c.h.b16 %v3155
  %v3416 = vunpack.c.l.b16 %v3156
  %v3417 = vunpack.c.h.b16 %v3156
  %v3418 = vunpack.c.l.b16 %v3157
  %v3419 = vunpack.c.h.b16 %v3157
  %v3420 = vunpack.c.l.b16 %v3158
  %v3421 = vunpack.c.h.b16 %v3158
  %v3422 = vunpack.c.l.b16 %v3159
  %v3423 = vunpack.c.h.b16 %v3159
  %v3424 = vunpack.c.l.b16 %v3160
  %v3425 = vunpack.c.h.b16 %v3160
  %v3426 = vunpack.c.l.b16 %v3161
  %v3427 = vunpack.c.h.b16 %v3161
  %v3428 = vunpack.c.l.b16 %v3162
  %v3429 = vunpack.c.h.b16 %v3162
  %v3430 = vunpack.c.l.b16 %v3163
  %v3431 = vunpack.c.h.b16 %v3163
  %v3432 = vunpack.c.l.b16 %v3164
  %v3433 = vunpack.c.h.b16 %v3164
  %v3434 = vunpack.c.l.b16 %v3165
  %v3435 = vunpack.c.h.b16 %v3165
  %v3436 = vunpack.c.l.b16 %v3166
  %v3437 = vunpack.c.h.b16 %v3166
  %v3438 = vunpack.c.l.b16 %v3167
  %v3439 = vunpack.c.h.b16 %v3167
  %v3440 = vunpack.c.l.b16 %v3168
  %v3441 = vunpack.c.h.b16 %v3168
  %v3442 = vunpack.c.l.b16 %v3169
  %v3443 = vunpack.c.h.b16 %v3169
  %v3444 = vunpack.c.l.b16 %v3170
  %v3445 = vunpack.c.h.b16 %v3170
  %v3446 = vunpack.c.l.b16 %v3171
  %v3447 = vunpack.c.h.b16 %v3171
  %v3448 = vunpack.c.l.b16 %v3172
  %v3449 = vunpack.c.h.b16 %v3172
  %v3450 = vunpack.c.l.b16 %v3173
  %v3451 = vunpack.c.h.b16 %v3173
  %v3452 = vunpack.c.l.b16 %v3174
  %v3453 = vunpack.c.h.b16 %v3174
  %v3454 = vunpack.c.l.b16 %v3175
  %v3455 = vunpack.c.h.b16 %v3175
  %v3456 = vunpack.c.l.b16 %v3176
  %v3457 = vunpack.c.h.b16 %v3176
  %v3458 = vunpack.c.l.b16 %v3177
  %v3459 = vunpack.c.h.b16 %v3177
  %v3460 = vunpack.c.l.b16 %v3178
  %v3461 = vunpack.c.h.b16 %v3178
  %v3462 = vunpack.c.l.b16 %v3179
  %v3463 = vunpack.c.h.b16 %v3179
  %v3464 = vunpack.c.l.b16 %v3180
  %v3465 = vunpack.c.h.b16 %v3180
  %v3466 = vunpack.c.l.b16 %v3181
  %v3467 = vunpack.c.h.b16 %v3181
  %v3468 = vunpack.c.l.b16 %v3182
  %v3469 = vunpack.c.h.b16 %v3182
  %v3470 = vunpack.c.l.b16 %v3183
  %v3471 = vunpack.c.h.b16 %v3183
  %v3472 = vunpack.c.l.b16 %v3184
  %v3473 = vunpack.c.h.b16 %v3184
  %v3474 = vunpack.c.l.b16 %v3185
  %v3475 = vunpack.c.h.b16 %v3185
  %v3476 = vunpack.c.l.b16 %v3186
  %v3477 = vunpack.c.h.b16 %v3186
  %v3478 = vunpack.c.l.b16 %v3187
  %v3479 = vunpack.c.h.b16 %v3187
  %v3480 = vunpack.c.l.b16 %v3188
  %v3481 = vunpack.c.h.b16 %v3188
  %v3482 = vunpack.c.l.b16 %v3189
  %v3483 = vunpack.c.h.b16 %v3189
  %v3484 = vunpack.c.l.b16 %v3190
  %v3485 = vunpack.c.h.b16 %v3190
  %v3486 = vunpack.c.l.b16 %v3191
  %v3487 = vunpack.c.h.b16 %v3191
  %v3488 = vunpack.c.l.b16 %v3192
  %v3489 = vunpack.c.h.b16 %v3192
  %v3490 = vunpack.c.l.b16 %v3193
  %v3491 = vunpack.c.h.b16 %v3193
  %v3492 = vunpack.c.l.b16 %v3194
  %v3493 = vunpack.c.h.b16 %v3194
  %v3494 = vunpack.c.l.b16 %v3195
  %v3495 = vunpack.c.h.b16 %v3195
  %v3496 = vunpack.c.l.b16 %v3196
  %v3497 = vunpack.c.h.b16 %v3196
  %v3498 = vunpack.c.l.b16 %v3197
  %v3499 = vunpack.c.h.b16 %v3197
  %v3500 = vunpack.c.l.b16 %v3198
  %v3501 = vunpack.c.h.b16 %v3198
  %v3502 = vunpack.c.l.b16 %v3199
  %v3503 = vunpack.c.h.b16 %v3199
  %v3504 = vunpack.c.l.b16 %v3200
  %v3505 = vunpack.c.h.b16 %v3200
  %v3506 = vunpack.c.l.b16 %v3201
  %v3507 = vunpack.c.h.b16 %v3201
  %v3508 = vunpack.c.l.b16 %v3202
  %v3509 = vunpack.c.h.b16 %v3202
  %v3510 = vunpack.c.l.b16 %v3203
  %v3511 = vunpack.c.h.b16 %v3203
  %v3512 = vunpack.c.l.b16 %v3204
  %v3513 = vunpack.c.h.b16 %v3204
  %v3514 = vunpack.c.l.b16 %v3205
  %v3515 = vunpack.c.h.b16 %v3205
  %v3516 = vunpack.c.l.b16 %v3206
  %v3517 = vunpack.c.h.b16 %v3206
  %v3518 = vunpack.c.l.b16 %v3207
  %v3519 = vunpack.c.h.b16 %v3207
  %v3520 = vunpack.c.l.b16 %v3208
  %v3521 = vunpack.c.h.b16 %v3208
  %v3522 = vunpack.c.l.b16 %v3209
  %v3523 = vunpack.c.h.b16 %v3209
  %v3524 = vunpack.c.l.b16 %v3210
  %v3525 = vunpack.c.h.b16 %v3210
  %v3526 = vunpack.c.l.b16 %v3211
  %v3527 = vunpack.c.h.b16 %v3211
  %v3528 = vunpack.c.l.b16 %v3212
  %v3529 = vunpack.c.h.b16 %v3212
  %v3530 = vunpack.c.l.b16 %v3213
  %v3531 = vunpack.c.h.b16 %v3213
  %v3532 = vunpack.c.l.b16 %v3214
  %v3533 = vunpack.c.h.b16 %v3214
  %v3534 = vunpack.c.l.b16 %v3215
  %v3535 = vunpack.c.h.b16 %v3215
  %v3536 = vunpack.c.l.b16 %v3216
  %v3537 = vunpack.c.h.b16 %v3216
  %v3538 = vunpack.c.l.b16 %v3217
  %v3539 = vunpack.c.h.b16 %v3217
  %v3540 = vunpack.c.l.b16 %v3218
  %v3541 = vunpack.c.h.b16 %v3218
  %v3542 = vunpack.c.l.b16 %v3219
  %v3543 = vunpack.c.h.b16 %v3219
  %v3544 = vunpack.c.l.b16 %v3220
  %v3545 = vunpack.c.h.b16 %v3220
  %v3546 = vunpack.c.l.b16 %v3221
  %v3547 = vunpack.c.h.b16 %v3221
  %v3548 = vunpack.c.l.b16 %v3222
  %v3549 = vunpack.c.h.b16 %v3222
  %v3550 = vunpack.c.l.b16 %v3223
  %v3551 = vunpack.c.h.b16 %v3223
  %v3552 = vunpack.c.l.b16 %v3224
  %v3553 = vunpack.c.h.b16 %v3224
  %v3554 = vunpack.c.l.b16 %v3225
  %v3555 = vunpack.c.h.b16 %v3225
  %v3556 = vunpack.c.l.b16 %v3226
  %v3557 = vunpack.c.h.b16 %v3226
  %v3558 = vunpack.c.l.b16 %v3227
  %v3559 = vunpack.c.h.b16 %v3227
  %v3560 = vunpack.c.l.b16 %v3228
  %v3561 = vunpack.c.h.b16 %v3228
  %v3562 = vunpack.c.l.b16 %v3229
  %v3563 = vunpack.c.h.b16 %v3229
  %v3564 = vunpack.c.l.b16 %v3230
  %v3565 = vunpack.c.h.b16 %v3230
  %v3566 = vunpack.c.l.b16 %v3231
  %v3567 = vunpack.c.h.b16 %v3231
  %v3568 = vunpack.c.l.b16 %v3232
  %v3569 = vunpack.c.h.b16 %v3232
  %v3570 = vunpack.c.l.b16 %v3233
  %v3571 = vunpack.c.h.b16 %v3233
  %v3572 = vunpack.c.l.b16 %v3234
  %v3573 = vunpack.c.h.b16 %v3234
  %v3574 = vunpack.c.l.b16 %v3235
  %v3575 = vunpack.c.h.b16 %v3235
  %v3576 = vunpack.c.l.b16 %v3236
  %v3577 = vunpack.c.h.b16 %v3236
  %v3578 = vunpack.c.l.b16 %v3237
  %v3579 = vunpack.c.h.b16 %v3237
  %v3580 = vunpack.c.l.b16 %v3238
  %v3581 = vunpack.c.h.b16 %v3238
  %v3582 = vunpack.c.l.b16 %v3239
  %v3583 = vunpack.c.h.b16 %v3239
  %v3584 = vunpack.c.l.b16 %v3240
  %v3585 = vunpack.c.h.b16 %v3240
  %v3586 = vunpack.c.l.b16 %v3241
  %v3587 = vunpack.c.h.b16 %v3241
  %v3588 = vunpack.c.l.b16 %v3242
  %v3589 = vunpack.c.h.b16 %v3242
  %v3590 = vunpack.c.l.b16 %v3243
  %v3591 = vunpack.c.h.b16 %v3243
  %v3592 = vunpack.c.l.b16 %v3244
  %v3593 = vunpack.c.h.b16 %v3244
  %v3594 = vunpack.c.l.b16 %v3245
  %v3595 = vunpack.c.h.b16 %v3245
  %v3596 = vunpack.c.l.b16 %v3246
  %v3597 = vunpack.c.h.b16 %v3246
  %v3598 = vunpack.c.l.b16 %v3247
  %v3599 = vunpack.c.h.b16 %v3247
  %v3600 = vunpack.c.l.b16 %v3248
  %v3601 = vunpack.c.h.b16 %v3248
  %v3602 = vunpack.c.l.b16 %v3249
  %v3603 = vunpack.c.h.b16 %v3249
  %v3604 = vunpack.c.l.b16 %v3250
  %v3605 = vunpack.c.h.b16 %v3250
  %v3606 = vunpack.c.l.b16 %v3251
  %v3607 = vunpack.c.h.b16 %v3251
  %v3608 = vunpack.c.l.b16 %v3252
  %v3609 = vunpack.c.h.b16 %v3252
  %v3610 = vunpack.c.l.b16 %v3253
  %v3611 = vunpack.c.h.b16 %v3253
  %v3612 = vunpack.c.l.b16 %v3254
  %v3613 = vunpack.c.h.b16 %v3254
  %v3614 = vunpack.c.l.b16 %v3255
  %v3615 = vunpack.c.h.b16 %v3255
  %v3616 = vunpack.c.l.b16 %v3256
  %v3617 = vunpack.c.h.b16 %v3256
  %v3618 = vunpack.c.l.b16 %v3257
  %v3619 = vunpack.c.h.b16 %v3257
  %v3620 = vunpack.c.l.b16 %v3258
  %v3621 = vunpack.c.h.b16 %v3258
  %v3622 = vunpack.c.l.b16 %v3259
  %v3623 = vunpack.c.h.b16 %v3259
  %v3624 = vunpack.c.l.b16 %v3260
  %v3625 = vunpack.c.h.b16 %v3260
  %v3626 = vunpack.c.l.b16 %v3261
  %v3627 = vunpack.c.h.b16 %v3261
  %v3628 = vunpack.c.l.b16 %v3262
  %v3629 = vunpack.c.h.b16 %v3262
  %v3630 = vunpack.c.l.b16 %v3263
  %v3631 = vunpack.c.h.b16 %v3263
  %v3632 = vunpack.c.l.b16 %v3264
  %v3633 = vunpack.c.h.b16 %v3264
  %v3634 = vunpack.c.l.b16 %v3265
  %v3635 = vunpack.c.h.b16 %v3265
  %v3636 = vunpack.c.l.b16 %v3266
  %v3637 = vunpack.c.h.b16 %v3266
  %v3638 = vunpack.c.l.b16 %v3267
  %v3639 = vunpack.c.h.b16 %v3267
  %v3640 = vunpack.c.l.b16 %v3268
  %v3641 = vunpack.c.h.b16 %v3268
  %v3642 = vunpack.c.l.b16 %v3269
  %v3643 = vunpack.c.h.b16 %v3269
  %v3644 = vunpack.c.l.b16 %v3270
  %v3645 = vunpack.c.h.b16 %v3270
  %v3646 = vunpack.c.l.b16 %v3271
  %v3647 = vunpack.c.h.b16 %v3271
  %v3648 = vunpack.c.l.b16 %v3272
  %v3649 = vunpack.c.h.b16 %v3272
  %v3650 = vunpack.c.l.b16 %v3273
  %v3651 = vunpack.c.h.b16 %v3273
  %v3652 = vunpack.c.l.b16 %v3274
  %v3653 = vunpack.c.h.b16 %v3274
  %v3654 = vunpack.c.l.b16 %v3275
  %v3655 = vunpack.c.h.b16 %v3275
  %v3656 = vunpack.c.l.b16 %v3276
  %v3657 = vunpack.c.h.b16 %v3276
  %v3658 = vunpack.c.l.b16 %v3277
  %v3659 = vunpack.c.h.b16 %v3277
  %v3660 = vunpack.c.l.b16 %v3278
  %v3661 = vunpack.c.h.b16 %v3278
  %v3662 = vunpack.c.l.b16 %v3279
  %v3663 = vunpack.c.h.b16 %v3279
  %v3664 = vpack.c.b16 %v3408, %v3408
  %v3665 = vpack.c.b16 %v3409, %v3409
  %v3666 = vpack.c.b16 %v3410, %v3410
  %v3667 = vpack.c.b16 %v3411, %v3411
  %v3668 = vpack.c.b16 %v3412, %v3412
  %v3669 = vpack.c.b16 %v3413, %v3413
  %v3670 = vpack.c.b16 %v3414, %v3414
  %v3671 = vpack.c.b16 %v3415, %v3415
  %v3672 = vpack.c.b16 %v3416, %v3416
  %v3673 = vpack.c.b16 %v3417, %v3417
  %v3674 = vpack.c.b16 %v3418, %v3418
  %v3675 = vpack.c.b16 %v3419, %v3419
  %v3676 = vpack.c.b16 %v3420, %v3420
  %v3677 = vpack.c.b16 %v3421, %v3421
  %v3678 = vpack.c.b16 %v3422, %v3422
  %v3679 = vpack.c.b16 %v3423, %v3423
  %v3680 = vpack.c.b16 %v3424, %v3424
  %v3681 = vpack.c.b16 %v3425, %v3425
  %v3682 = vpack.c.b16 %v3426, %v3426
  %v3683 = vpack.c.b16 %v3427, %v3427
  %v3684 = vpack.c.b16 %v3428, %v3428
  %v3685 = vpack.c.b16 %v3429, %v3429
  %v3686 = vpack.c.b16 %v3430, %v3430
  %v3687 = vpack.c.b16 %v3431, %v3431
  %v3688 = vpack.c.b16 %v3432, %v3432
  %v3689 = vpack.c.b16 %v3433, %v3433
  %v3690 = vpack.c.b16 %v3434, %v3434
  %v3691 = vpack.c.b16 %v3435, %v3435
  %v3692 = vpack.c.b16 %v3436, %v3436
  %v3693 = vpack.c.b16 %v3437, %v3437
  %v3694 = vpack.c.b16 %v3438, %v3438
  %v3695 = vpack.c.b16 %v3439, %v3439
  %v3696 = vpack.c.b16 %v3440, %v3440
  %v3697 = vpack.c.b16 %v3441, %v3441
  %v3698 = vpack.c.b16 %v3442, %v3442
  %v3699 = vpack.c.b16 %v3443, %v3443
  %v3700 = vpack.c.b16 %v3444, %v3444
  %v3701 = vpack.c.b16 %v3445, %v3445
  %v3702 = vpack.c.b16 %v3446, %v3446
  %v3703 = vpack.c.b16 %v3447, %v3447
  %v3704 = vpack.c.b16 %v3448, %v3448
  %v3705 = vpack.c.b16 %v3449, %v3449
  %v3706 = vpack.c.b16 %v3450, %v3450
  %v3707 = vpack.c.b16 %v3451, %v3451
  %v3708 = vpack.c.b16 %v3452, %v3452
  %v3709 = vpack.c.b16 %v3453, %v3453
  %v3710 = vpack.c.b16 %v3454, %v3454
  %v3711 = vpack.c.b16 %v3455, %v3455
  %v3712 = vpack.c.b16 %v3456, %v3456
  %v3713 = vpack.c.b16 %v3457, %v3457
  %v3714 = vpack.c.b16 %v3458, %v3458
  %v3715 = vpack.c.b16 %v3459, %v3459
  %v3716 = vpack.c.b16 %v3460, %v3460
  %v3717 = vpack.c.b16 %v3461, %v3461
  %v3718 = vpack.c.b16 %v3462, %v3462
  %v3719 = vpack.c.b16 %v3463, %v3463
  %v3720 = vpack.c.b16 %v3464, %v3464
  %v3721 = vpack.c.b16 %v3465, %v3465
  %v3722 = vpack.c.b16 %v3466, %v3466
  %v3723 = vpack.c.b16 %v3467, %v3467
  %v3724 = vpack.c.b16 %v3468, %v3468
  %v3725 = vpack.c.b16 %v3469, %v3469
  %v3726 = vpack.c.b16 %v3470, %v3470
  %v3727 = vpack.c.b16 %v3471, %v3471
  %v3728 = vpack.c.b16 %v3472, %v3472
  %v3729 = vpack.c.b16 %v3473, %v3473
  %v3730 = vpack.c.b16 %v3474, %v3474
  %v3731 = vpack.c.b16 %v3475, %v3475
  %v3732 = vpack.c.b16 %v3476, %v3476
  %v3733 = vpack.c.b16 %v3477, %v3477
  %v3734 = vpack.c.b16 %v3478, %v3478
  %v3735 = vpack.c.b16 %v3479, %v3479
  %v3736 = vpack.c.b16 %v3480, %v3480
  %v3737 = vpack.c.b16 %v3481, %v3481
  %v3738 = vpack.c.b16 %v3482, %v3482
  %v3739 = vpack.c.b16 %v3483, %v3483
  %v3740 = vpack.c.b16 %v3484, %v3484
  %v3741 = vpack.c.b16 %v3485, %v3485
  %v3742 = vpack.c.b16 %v3486, %v3486
  %v3743 = vpack.c.b16 %v3487, %v3487
  %v3744 = vpack.c.b16 %v3488, %v3488
  %v3745 = vpack.c.b16 %v3489, %v3489
  %v3746 = vpack.c.b16 %v3490, %v3490
  %v3747 = vpack.c.b16 %v3491, %v3491
  %v3748 = vpack.c.b16 %v3492, %v3492
  %v3749 = vpack.c.b16 %v3493, %v3493
  %v3750 = vpack.c.b16 %v3494, %v3494
  %v3751 = vpack.c.b16 %v3495, %v3495
  %v3752 = vpack.c.b16 %v3496, %v3496
  %v3753 = vpack.c.b16 %v3497, %v3497
  %v3754 = vpack.c.b16 %v3498, %v3498
  %v3755 = vpack.c.b16 %v3499, %v3499
  %v3756 = vpack.c.b16 %v3500, %v3500
  %v3757 = vpack.c.b16 %v3501, %v3501
  %v3758 = vpack.c.b16 %v3502, %v3502
  %v3759 = vpack.c.b16 %v3503, %v3503
  %v3760 = vpack.c.b16 %v3504, %v3504
  %v3761 = vpack.c.b16 %v3505, %v3505
  %v3762 = vpack.c.b16 %v3506, %v3506
  %v3763 = vpack.c.b16 %v3507, %v3507
  %v3764 = vpack.c.b16 %v3508, %v3508
  %v3765 = vpack.c.b16 %v3509, %v3509
  %v3766 = vpack.c.b16 %v3510, %v3510
  %v3767 = vpack.c.b16 %v3511, %v3511
  %v3768 = vpack.c.b16 %v3512, %v3512
  %v3769 = vpack.c.b16 %v3513, %v3513
  %v3770 = vpack.c.b16 %v3514, %v3514
  %v3771 = vpack.c.b16 %v3515, %v3515
  %v3772 = vpack.c.b16 %v3516, %v3516
  %v3773 = vpack.c.b16 %v3517, %v3517
  %v3774 = vpack.c.b16 %v3518, %v3518
  %v3775 = vpack.c.b16 %v3519, %v3519
  %v3776 = vpack.c.b16 %v3520, %v3520
  %v3777 = vpack.c.b16 %v3521, %v3521
  %v3778 = vpack.c.b16 %v3522, %v3522
  %v3779 = vpack.c.b16 %v3523, %v3523
  %v3780 = vpack.c.b16 %v3524, %v3524
  %v3781 = vpack.c.b16 %v3525, %v3525
  %v3782 = vpack.c.b16 %v3526, %v3526
  %v3783 = vpack.c.b16 %v3527, %v3527
  %v3784 = vpack.c.b16 %v3528, %v3528
  %v3785 = vpack.c.b16 %v3529, %v3529
  %v3786 = vpack.c.b16 %v3530, %v3530
  %v3787 = vpack.c.b16 %v3531, %v3531
  %v3788 = vpack.c.b16 %v3532, %v3532
  %v3789 = vpack.c.b16 %v3533, %v3533
  %v3790 = vpack.c.b16 %v3534, %v3534
  %v3791 = vpack.c.b16 %v3535, %v3535
  %v3792 = vpack.c.b16 %v3536, %v3536
  %v3793 = vpack.c.b16 %v3537, %v3537
  %v3794 = vpack.c.b16 %v3538, %v3538
  %v3795 = vpack.c.b16 %v3539, %v3539
  %v3796 = vpack.c.b16 %v3540, %v3540
  %v3797 = vpack.c.b16 %v3541, %v3541
  %v3798 = vpack.c.b16 %v3542, %v3542
  %v3799 = vpack.c.b16 %v3543, %v3543
  %v3800 = vpack.c.b16 %v3544, %v3544
  %v3801 = vpack.c.b16 %v3545, %v3545
  %v3802 = vpack.c.b16 %v3546, %v3546
  %v3803 = vpack.c.b16 %v3547, %v3547
  %v3804 = vpack.c.b16 %v3548, %v3548
  %v3805 = vpack.c.b16 %v3549, %v3549
  %v3806 = vpack.c.b16 %v3550, %v3550
  %v3807 = vpack.c.b16 %v3551, %v3551
  %v3808 = vpack.c.b16 %v3552, %v3552
  %v3809 = vpack.c.b16 %v3553, %v3553
  %v3810 = vpack.c.b16 %v3554, %v3554
  %v3811 = vpack.c.b16 %v3555, %v3555
  %v3812 = vpack.c.b16 %v3556, %v3556
  %v3813 = vpack.c.b16 %v3557, %v3557
  %v3814 = vpack.c.b16 %v3558, %v3558
  %v3815 = vpack.c.b16 %v3559, %v3559
  %v3816 = vpack.c.b16 %v3560, %v3560
  %v3817 = vpack.c.b16 %v3561, %v3561
  %v3818 = vpack.c.b16 %v3562, %v3562
  %v3819 = vpack.c.b16 %v3563, %v3563
  %v3820 = vpack.c.b16 %v3564, %v3564
  %v3821 = vpack.c.b16 %v3565, %v3565
  %v3822 = vpack.c.b16 %v3566, %v3566
  %v3823 = vpack.c.b16 %v3567, %v3567
  %v3824 = vpack.c.b16 %v3568, %v3568
  %v3825 = vpack.c.b16 %v3569, %v3569
  %v3826 = vpack.c.b16 %v3570, %v3570
  %v3827 = vpack.c.b16 %v3571, %v3571
  %v3828 = vpack.c.b16 %v3572, %v3572
  %v3829 = vpack.c.b16 %v3573, %v3573
  %v3830 = vpack.c.b16 %v3574, %v3574
  %v3831 = vpack.c.b16 %v3575, %v3575
  %v3832 = vpack.c.b16 %v3576, %v3576
  %v3833 = vpack.c.b16 %v3577, %v3577
  %v3834 = vpack.c.b16 %v3578, %v3578
  %v3835 = vpack.c.b16 %v3579, %v3579
  %v3836 = vpack.c.b16 %v3580, %v3580
  %v3837 = vpack.c.b16 %v3581, %v3581
  %v3838 = vpack.c.b16 %v3582, %v3582
  %v3839 = vpack.c.b16 %v3583, %v3583
  %v3840 = vpack.c.b16 %v3584, %v3584
  %v3841 = vpack.c.b16 %v3585, %v3585
  %v3842 = vpack.c.b16 %v3586, %v3586
  %v3843 = vpack.c.b16 %v3587, %v3587
  %v3844 = vpack.c.b16 %v3588, %v3588
  %v3845 = vpack.c.b16 %v3589, %v3589
  %v3846 = vpack.c.b16 %v3590, %v3590
  %v3847 = vpack.c.b16 %v3591, %v3591
  %v3848 = vpack.c.b16 %v3592, %v3592
  %v3849 = vpack.c.b16 %v3593, %v3593
  %v3850 = vpack.c.b16 %v3594, %v3594
  %v3851 = vpack.c.b16 %v3595, %v3595
  %v3852 = vpack.c.b16 %v3596, %v3596
  %v3853 = vpack.c.b16 %v3597, %v3597
  %v3854 = vpack.c.b16 %v3598, %v3598
  %v3855 = vpack.c.b16 %v3599, %v3599
  %v3856 = vpack.c.b16 %v3600, %v3600
  %v3857 = vpack.c.b16 %v3601, %v3601
  %v3858 = vpack.c.b16 %v3602, %v3602
  %v3859 = vpack.c.b16 %v3603, %v3603
  %v3860 = vpack.c.b16 %v3604, %v3604
  %v3861 = vpack.c.b16 %v3605, %v3605
  %v3862 = vpack.c.b16 %v3606, %v3606
  %v3863 = vpack.c.b16 %v3607, %v3607
  %v3864 = vpack.c.b16 %v3608, %v3608
  %v3865 = vpack.c.b16 %v3609, %v3609
  %v3866 = vpack.c.b16 %v3610, %v3610
  %v3867 = vpack.c.b16 %v3611, %v3611
  %v3868 = vpack.c.b16 %v3612, %v3612
  %v3869 = vpack.c.b16 %v3613, %v3613
  %v3870 = vpack.c.b16 %v3614, %v3614
  %v3871 = vpack.c.b16 %v3615, %v3615
  %v3872 = vpack.c.b16 %v3616, %v3616
  %v3873 = vpack.c.b16 %v3617, %v3617
  %v3874 = vpack.c.b16 %v3618, %v3618
  %v3875 = vpack.c.b16 %v3619, %v3619
  %v3876 = vpack.c.b16 %v3620, %v3620
  %v3877 = vpack.c.b16 %v3621, %v3621
  %v3878 = vpack.c.b16 %v3622, %v3622
  %v3879 = vpack.c.b16 %v3623, %v3623
  %v3880 = vpack.c.b16 %v3624, %v3624
  %v3881 = vpack.c.b16 %v3625, %v3625
  %v3882 = vpack.c.b16 %v3626, %v3626
  %v3883 = vpack.c.b16 %v3627, %v3627
  %v3884 = vpack.c.b16 %v3628, %v3628
  %v3885 = vpack.c.b16 %v3629, %v3629
  %v3886 = vpack.c.b16 %v3630, %v3630
  %v3887 = vpack.c.b16 %v3631, %v3631
  %v3888 = vpack.c.b16 %v3632, %v3632
  %v3889 = vpack.c.b16 %v3633, %v3633
  %v3890 = vpack.c.b16 %v3634, %v3634
  %v3891 = vpack.c.b16 %v3635, %v3635
  %v3892 = vpack.c.b16 %v3636, %v3636
  %v3893 = vpack.c.b16 %v3637, %v3637
  %v3894 = vpack.c.b16 %v3638, %v3638
  %v3895 = vpack.c.b16 %v3639, %v3639
  %v3896 = vpack.c.b16 %v3640, %v3640
  %v3897 = vpack.c.b16 %v3641, %v3641
  %v3898 = vpack.c.b16 %v3642, %v3642
  %v3899 = vpack.c.b16 %v3643, %v3643
  %v3900 = vpack.c.b16 %v3644, %v3644
  %v3901 = vpack.c.b16 %v3645, %v3645
  %v3902 = vpack.c.b16 %v3646, %v3646
  %v3903 = vpack.c.b16 %v3647, %v3647
  %v3904 = vpack.c.b16 %v3648, %v3648
  %v3905 = vpack.c.b16 %v3649, %v3649
  %v3906 = vpack.c.b16 %v3650, %v3650
  %v3907 = vpack.c.b16 %v3651, %v3651
  %v3908 = vpack.c.b16 %v3652, %v3652
  %v3909 = vpack.c.b16 %v3653, %v3653
  %v3910 = vpack.c.b16 %v3654, %v3654
  %v3911 = vpack.c.b16 %v3655, %v3655
  %v3912 = vpack.c.b16 %v3656, %v3656
  %v3913 = vpack.c.b16 %v3657, %v3657
  %v3914 = vpack.c.b16 %v3658, %v3658
  %v3915 = vpack.c.b16 %v3659, %v3659
  %v3916 = vpack.c.b16 %v3660, %v3660
  %v3917 = vpack.c.b16 %v3661, %v3661
  %v3918 = vpack.c.b16 %v3662, %v3662
  %v3919 = vpack.c.b16 %v3663, %v3663
  %vm4176 = vcmask 125952
  %4177 = vst.msk [vmem:[%s3] sm:$0xf] %vm4176, %v3664
  %4178 = vst.msk [vmem:[%s3 + $0x4] sm:$0xf] %vm4176, %v3665
  %4179 = vst.msk [vmem:[%s3 + $0x8] sm:$0xf] %vm4176, %v3666
  %4180 = vst.msk [vmem:[%s3 + $0xc] sm:$0xf] %vm4176, %v3667
  %4181 = vst.msk [vmem:[%s3 + $0x10] sm:$0xf] %vm4176, %v3668
  %4182 = vst.msk [vmem:[%s3 + $0x14] sm:$0xf] %vm4176, %v3669
  %4183 = vst.msk [vmem:[%s3 + $0x18] sm:$0xf] %vm4176, %v3670
  %4184 = vst.msk [vmem:[%s3 + $0x1c] sm:$0xf] %vm4176, %v3671
  %4185 = vst.msk [vmem:[%s3 + $0x20] sm:$0xf] %vm4176, %v3672
  %4186 = vst.msk [vmem:[%s3 + $0x24] sm:$0xf] %vm4176, %v3673
  %4187 = vst.msk [vmem:[%s3 + $0x28] sm:$0xf] %vm4176, %v3674
  %4188 = vst.msk [vmem:[%s3 + $0x2c] sm:$0xf] %vm4176, %v3675
  %4189 = vst.msk [vmem:[%s3 + $0x30] sm:$0xf] %vm4176, %v3676
  %4190 = vst.msk [vmem:[%s3 + $0x34] sm:$0xf] %vm4176, %v3677
  %4191 = vst.msk [vmem:[%s3 + $0x38] sm:$0xf] %vm4176, %v3678
  %4192 = vst.msk [vmem:[%s3 + $0x3c] sm:$0xf] %vm4176, %v3679
  %4193 = vst.msk [vmem:[%s3 + $0x40] sm:$0xf] %vm4176, %v3680
  %4194 = vst.msk [vmem:[%s3 + $0x44] sm:$0xf] %vm4176, %v3681
  %4195 = vst.msk [vmem:[%s3 + $0x48] sm:$0xf] %vm4176, %v3682
  %4196 = vst.msk [vmem:[%s3 + $0x4c] sm:$0xf] %vm4176, %v3683
  %4197 = vst.msk [vmem:[%s3 + $0x50] sm:$0xf] %vm4176, %v3684
  %4198 = vst.msk [vmem:[%s3 + $0x54] sm:$0xf] %vm4176, %v3685
  %4199 = vst.msk [vmem:[%s3 + $0x58] sm:$0xf] %vm4176, %v3686
  %4200 = vst.msk [vmem:[%s3 + $0x5c] sm:$0xf] %vm4176, %v3687
  %4201 = vst.msk [vmem:[%s3 + $0x60] sm:$0xf] %vm4176, %v3688
  %4202 = vst.msk [vmem:[%s3 + $0x64] sm:$0xf] %vm4176, %v3689
  %4203 = vst.msk [vmem:[%s3 + $0x68] sm:$0xf] %vm4176, %v3690
  %4204 = vst.msk [vmem:[%s3 + $0x6c] sm:$0xf] %vm4176, %v3691
  %4205 = vst.msk [vmem:[%s3 + $0x70] sm:$0xf] %vm4176, %v3692
  %4206 = vst.msk [vmem:[%s3 + $0x74] sm:$0xf] %vm4176, %v3693
  %4207 = vst.msk [vmem:[%s3 + $0x78] sm:$0xf] %vm4176, %v3694
  %4208 = vst.msk [vmem:[%s3 + $0x7c] sm:$0xf] %vm4176, %v3695
  %4209 = vst.msk [vmem:[%s3 + $0x80] sm:$0xf] %vm4176, %v3696
  %4210 = vst.msk [vmem:[%s3 + $0x84] sm:$0xf] %vm4176, %v3697
  %4211 = vst.msk [vmem:[%s3 + $0x88] sm:$0xf] %vm4176, %v3698
  %4212 = vst.msk [vmem:[%s3 + $0x8c] sm:$0xf] %vm4176, %v3699
  %4213 = vst.msk [vmem:[%s3 + $0x90] sm:$0xf] %vm4176, %v3700
  %4214 = vst.msk [vmem:[%s3 + $0x94] sm:$0xf] %vm4176, %v3701
  %4215 = vst.msk [vmem:[%s3 + $0x98] sm:$0xf] %vm4176, %v3702
  %4216 = vst.msk [vmem:[%s3 + $0x9c] sm:$0xf] %vm4176, %v3703
  %4217 = vst.msk [vmem:[%s3 + $0xa0] sm:$0xf] %vm4176, %v3704
  %4218 = vst.msk [vmem:[%s3 + $0xa4] sm:$0xf] %vm4176, %v3705
  %4219 = vst.msk [vmem:[%s3 + $0xa8] sm:$0xf] %vm4176, %v3706
  %4220 = vst.msk [vmem:[%s3 + $0xac] sm:$0xf] %vm4176, %v3707
  %4221 = vst.msk [vmem:[%s3 + $0xb0] sm:$0xf] %vm4176, %v3708
  %4222 = vst.msk [vmem:[%s3 + $0xb4] sm:$0xf] %vm4176, %v3709
  %4223 = vst.msk [vmem:[%s3 + $0xb8] sm:$0xf] %vm4176, %v3710
  %4224 = vst.msk [vmem:[%s3 + $0xbc] sm:$0xf] %vm4176, %v3711
  %4225 = vst.msk [vmem:[%s3 + $0xc0] sm:$0xf] %vm4176, %v3712
  %4226 = vst.msk [vmem:[%s3 + $0xc4] sm:$0xf] %vm4176, %v3713
  %4227 = vst.msk [vmem:[%s3 + $0xc8] sm:$0xf] %vm4176, %v3714
  %4228 = vst.msk [vmem:[%s3 + $0xcc] sm:$0xf] %vm4176, %v3715
  %4229 = vst.msk [vmem:[%s3 + $0xd0] sm:$0xf] %vm4176, %v3716
  %4230 = vst.msk [vmem:[%s3 + $0xd4] sm:$0xf] %vm4176, %v3717
  %4231 = vst.msk [vmem:[%s3 + $0xd8] sm:$0xf] %vm4176, %v3718
  %4232 = vst.msk [vmem:[%s3 + $0xdc] sm:$0xf] %vm4176, %v3719
  %4233 = vst.msk [vmem:[%s3 + $0xe0] sm:$0xf] %vm4176, %v3720
  %4234 = vst.msk [vmem:[%s3 + $0xe4] sm:$0xf] %vm4176, %v3721
  %4235 = vst.msk [vmem:[%s3 + $0xe8] sm:$0xf] %vm4176, %v3722
  %4236 = vst.msk [vmem:[%s3 + $0xec] sm:$0xf] %vm4176, %v3723
  %4237 = vst.msk [vmem:[%s3 + $0xf0] sm:$0xf] %vm4176, %v3724
  %4238 = vst.msk [vmem:[%s3 + $0xf4] sm:$0xf] %vm4176, %v3725
  %4239 = vst.msk [vmem:[%s3 + $0xf8] sm:$0xf] %vm4176, %v3726
  %4240 = vst.msk [vmem:[%s3 + $0xfc] sm:$0xf] %vm4176, %v3727
  %4241 = vst.msk [vmem:[%s3 + $0x100] sm:$0xf] %vm4176, %v3728
  %4242 = vst.msk [vmem:[%s3 + $0x104] sm:$0xf] %vm4176, %v3729
  %4243 = vst.msk [vmem:[%s3 + $0x108] sm:$0xf] %vm4176, %v3730
  %4244 = vst.msk [vmem:[%s3 + $0x10c] sm:$0xf] %vm4176, %v3731
  %4245 = vst.msk [vmem:[%s3 + $0x110] sm:$0xf] %vm4176, %v3732
  %4246 = vst.msk [vmem:[%s3 + $0x114] sm:$0xf] %vm4176, %v3733
  %4247 = vst.msk [vmem:[%s3 + $0x118] sm:$0xf] %vm4176, %v3734
  %4248 = vst.msk [vmem:[%s3 + $0x11c] sm:$0xf] %vm4176, %v3735
  %4249 = vst.msk [vmem:[%s3 + $0x120] sm:$0xf] %vm4176, %v3736
  %4250 = vst.msk [vmem:[%s3 + $0x124] sm:$0xf] %vm4176, %v3737
  %4251 = vst.msk [vmem:[%s3 + $0x128] sm:$0xf] %vm4176, %v3738
  %4252 = vst.msk [vmem:[%s3 + $0x12c] sm:$0xf] %vm4176, %v3739
  %4253 = vst.msk [vmem:[%s3 + $0x130] sm:$0xf] %vm4176, %v3740
  %4254 = vst.msk [vmem:[%s3 + $0x134] sm:$0xf] %vm4176, %v3741
  %4255 = vst.msk [vmem:[%s3 + $0x138] sm:$0xf] %vm4176, %v3742
  %4256 = vst.msk [vmem:[%s3 + $0x13c] sm:$0xf] %vm4176, %v3743
  %4257 = vst.msk [vmem:[%s3 + $0x140] sm:$0xf] %vm4176, %v3744
  %4258 = vst.msk [vmem:[%s3 + $0x144] sm:$0xf] %vm4176, %v3745
  %4259 = vst.msk [vmem:[%s3 + $0x148] sm:$0xf] %vm4176, %v3746
  %4260 = vst.msk [vmem:[%s3 + $0x14c] sm:$0xf] %vm4176, %v3747
  %4261 = vst.msk [vmem:[%s3 + $0x150] sm:$0xf] %vm4176, %v3748
  %4262 = vst.msk [vmem:[%s3 + $0x154] sm:$0xf] %vm4176, %v3749
  %4263 = vst.msk [vmem:[%s3 + $0x158] sm:$0xf] %vm4176, %v3750
  %4264 = vst.msk [vmem:[%s3 + $0x15c] sm:$0xf] %vm4176, %v3751
  %4265 = vst.msk [vmem:[%s3 + $0x160] sm:$0xf] %vm4176, %v3752
  %4266 = vst.msk [vmem:[%s3 + $0x164] sm:$0xf] %vm4176, %v3753
  %4267 = vst.msk [vmem:[%s3 + $0x168] sm:$0xf] %vm4176, %v3754
  %4268 = vst.msk [vmem:[%s3 + $0x16c] sm:$0xf] %vm4176, %v3755
  %4269 = vst.msk [vmem:[%s3 + $0x170] sm:$0xf] %vm4176, %v3756
  %4270 = vst.msk [vmem:[%s3 + $0x174] sm:$0xf] %vm4176, %v3757
  %4271 = vst.msk [vmem:[%s3 + $0x178] sm:$0xf] %vm4176, %v3758
  %4272 = vst.msk [vmem:[%s3 + $0x17c] sm:$0xf] %vm4176, %v3759
  %4273 = vst.msk [vmem:[%s3 + $0x180] sm:$0xf] %vm4176, %v3760
  %4274 = vst.msk [vmem:[%s3 + $0x184] sm:$0xf] %vm4176, %v3761
  %4275 = vst.msk [vmem:[%s3 + $0x188] sm:$0xf] %vm4176, %v3762
  %4276 = vst.msk [vmem:[%s3 + $0x18c] sm:$0xf] %vm4176, %v3763
  %4277 = vst.msk [vmem:[%s3 + $0x190] sm:$0xf] %vm4176, %v3764
  %4278 = vst.msk [vmem:[%s3 + $0x194] sm:$0xf] %vm4176, %v3765
  %4279 = vst.msk [vmem:[%s3 + $0x198] sm:$0xf] %vm4176, %v3766
  %4280 = vst.msk [vmem:[%s3 + $0x19c] sm:$0xf] %vm4176, %v3767
  %4281 = vst.msk [vmem:[%s3 + $0x1a0] sm:$0xf] %vm4176, %v3768
  %4282 = vst.msk [vmem:[%s3 + $0x1a4] sm:$0xf] %vm4176, %v3769
  %4283 = vst.msk [vmem:[%s3 + $0x1a8] sm:$0xf] %vm4176, %v3770
  %4284 = vst.msk [vmem:[%s3 + $0x1ac] sm:$0xf] %vm4176, %v3771
  %4285 = vst.msk [vmem:[%s3 + $0x1b0] sm:$0xf] %vm4176, %v3772
  %4286 = vst.msk [vmem:[%s3 + $0x1b4] sm:$0xf] %vm4176, %v3773
  %4287 = vst.msk [vmem:[%s3 + $0x1b8] sm:$0xf] %vm4176, %v3774
  %4288 = vst.msk [vmem:[%s3 + $0x1bc] sm:$0xf] %vm4176, %v3775
  %4289 = vst.msk [vmem:[%s3 + $0x1c0] sm:$0xf] %vm4176, %v3776
  %4290 = vst.msk [vmem:[%s3 + $0x1c4] sm:$0xf] %vm4176, %v3777
  %4291 = vst.msk [vmem:[%s3 + $0x1c8] sm:$0xf] %vm4176, %v3778
  %4292 = vst.msk [vmem:[%s3 + $0x1cc] sm:$0xf] %vm4176, %v3779
  %4293 = vst.msk [vmem:[%s3 + $0x1d0] sm:$0xf] %vm4176, %v3780
  %4294 = vst.msk [vmem:[%s3 + $0x1d4] sm:$0xf] %vm4176, %v3781
  %4295 = vst.msk [vmem:[%s3 + $0x1d8] sm:$0xf] %vm4176, %v3782
  %4296 = vst.msk [vmem:[%s3 + $0x1dc] sm:$0xf] %vm4176, %v3783
  %4297 = vst.msk [vmem:[%s3 + $0x1e0] sm:$0xf] %vm4176, %v3784
  %4298 = vst.msk [vmem:[%s3 + $0x1e4] sm:$0xf] %vm4176, %v3785
  %4299 = vst.msk [vmem:[%s3 + $0x1e8] sm:$0xf] %vm4176, %v3786
  %4300 = vst.msk [vmem:[%s3 + $0x1ec] sm:$0xf] %vm4176, %v3787
  %4301 = vst.msk [vmem:[%s3 + $0x1f0] sm:$0xf] %vm4176, %v3788
  %4302 = vst.msk [vmem:[%s3 + $0x1f4] sm:$0xf] %vm4176, %v3789
  %4303 = vst.msk [vmem:[%s3 + $0x1f8] sm:$0xf] %vm4176, %v3790
  %4304 = vst.msk [vmem:[%s3 + $0x1fc] sm:$0xf] %vm4176, %v3791
  %4305 = vst.msk [vmem:[%s3 + $0x200] sm:$0xf] %vm4176, %v3792
  %4306 = vst.msk [vmem:[%s3 + $0x204] sm:$0xf] %vm4176, %v3793
  %4307 = vst.msk [vmem:[%s3 + $0x208] sm:$0xf] %vm4176, %v3794
  %4308 = vst.msk [vmem:[%s3 + $0x20c] sm:$0xf] %vm4176, %v3795
  %4309 = vst.msk [vmem:[%s3 + $0x210] sm:$0xf] %vm4176, %v3796
  %4310 = vst.msk [vmem:[%s3 + $0x214] sm:$0xf] %vm4176, %v3797
  %4311 = vst.msk [vmem:[%s3 + $0x218] sm:$0xf] %vm4176, %v3798
  %4312 = vst.msk [vmem:[%s3 + $0x21c] sm:$0xf] %vm4176, %v3799
  %4313 = vst.msk [vmem:[%s3 + $0x220] sm:$0xf] %vm4176, %v3800
  %4314 = vst.msk [vmem:[%s3 + $0x224] sm:$0xf] %vm4176, %v3801
  %4315 = vst.msk [vmem:[%s3 + $0x228] sm:$0xf] %vm4176, %v3802
  %4316 = vst.msk [vmem:[%s3 + $0x22c] sm:$0xf] %vm4176, %v3803
  %4317 = vst.msk [vmem:[%s3 + $0x230] sm:$0xf] %vm4176, %v3804
  %4318 = vst.msk [vmem:[%s3 + $0x234] sm:$0xf] %vm4176, %v3805
  %4319 = vst.msk [vmem:[%s3 + $0x238] sm:$0xf] %vm4176, %v3806
  %4320 = vst.msk [vmem:[%s3 + $0x23c] sm:$0xf] %vm4176, %v3807
  %4321 = vst.msk [vmem:[%s3 + $0x240] sm:$0xf] %vm4176, %v3808
  %4322 = vst.msk [vmem:[%s3 + $0x244] sm:$0xf] %vm4176, %v3809
  %4323 = vst.msk [vmem:[%s3 + $0x248] sm:$0xf] %vm4176, %v3810
  %4324 = vst.msk [vmem:[%s3 + $0x24c] sm:$0xf] %vm4176, %v3811
  %4325 = vst.msk [vmem:[%s3 + $0x250] sm:$0xf] %vm4176, %v3812
  %4326 = vst.msk [vmem:[%s3 + $0x254] sm:$0xf] %vm4176, %v3813
  %4327 = vst.msk [vmem:[%s3 + $0x258] sm:$0xf] %vm4176, %v3814
  %4328 = vst.msk [vmem:[%s3 + $0x25c] sm:$0xf] %vm4176, %v3815
  %4329 = vst.msk [vmem:[%s3 + $0x260] sm:$0xf] %vm4176, %v3816
  %4330 = vst.msk [vmem:[%s3 + $0x264] sm:$0xf] %vm4176, %v3817
  %4331 = vst.msk [vmem:[%s3 + $0x268] sm:$0xf] %vm4176, %v3818
  %4332 = vst.msk [vmem:[%s3 + $0x26c] sm:$0xf] %vm4176, %v3819
  %4333 = vst.msk [vmem:[%s3 + $0x270] sm:$0xf] %vm4176, %v3820
  %4334 = vst.msk [vmem:[%s3 + $0x274] sm:$0xf] %vm4176, %v3821
  %4335 = vst.msk [vmem:[%s3 + $0x278] sm:$0xf] %vm4176, %v3822
  %4336 = vst.msk [vmem:[%s3 + $0x27c] sm:$0xf] %vm4176, %v3823
  %4337 = vst.msk [vmem:[%s3 + $0x280] sm:$0xf] %vm4176, %v3824
  %4338 = vst.msk [vmem:[%s3 + $0x284] sm:$0xf] %vm4176, %v3825
  %4339 = vst.msk [vmem:[%s3 + $0x288] sm:$0xf] %vm4176, %v3826
  %4340 = vst.msk [vmem:[%s3 + $0x28c] sm:$0xf] %vm4176, %v3827
  %4341 = vst.msk [vmem:[%s3 + $0x290] sm:$0xf] %vm4176, %v3828
  %4342 = vst.msk [vmem:[%s3 + $0x294] sm:$0xf] %vm4176, %v3829
  %4343 = vst.msk [vmem:[%s3 + $0x298] sm:$0xf] %vm4176, %v3830
  %4344 = vst.msk [vmem:[%s3 + $0x29c] sm:$0xf] %vm4176, %v3831
  %4345 = vst.msk [vmem:[%s3 + $0x2a0] sm:$0xf] %vm4176, %v3832
  %4346 = vst.msk [vmem:[%s3 + $0x2a4] sm:$0xf] %vm4176, %v3833
  %4347 = vst.msk [vmem:[%s3 + $0x2a8] sm:$0xf] %vm4176, %v3834
  %4348 = vst.msk [vmem:[%s3 + $0x2ac] sm:$0xf] %vm4176, %v3835
  %4349 = vst.msk [vmem:[%s3 + $0x2b0] sm:$0xf] %vm4176, %v3836
  %4350 = vst.msk [vmem:[%s3 + $0x2b4] sm:$0xf] %vm4176, %v3837
  %4351 = vst.msk [vmem:[%s3 + $0x2b8] sm:$0xf] %vm4176, %v3838
  %4352 = vst.msk [vmem:[%s3 + $0x2bc] sm:$0xf] %vm4176, %v3839
  %4353 = vst.msk [vmem:[%s3 + $0x2c0] sm:$0xf] %vm4176, %v3840
  %4354 = vst.msk [vmem:[%s3 + $0x2c4] sm:$0xf] %vm4176, %v3841
  %4355 = vst.msk [vmem:[%s3 + $0x2c8] sm:$0xf] %vm4176, %v3842
  %4356 = vst.msk [vmem:[%s3 + $0x2cc] sm:$0xf] %vm4176, %v3843
  %4357 = vst.msk [vmem:[%s3 + $0x2d0] sm:$0xf] %vm4176, %v3844
  %4358 = vst.msk [vmem:[%s3 + $0x2d4] sm:$0xf] %vm4176, %v3845
  %4359 = vst.msk [vmem:[%s3 + $0x2d8] sm:$0xf] %vm4176, %v3846
  %4360 = vst.msk [vmem:[%s3 + $0x2dc] sm:$0xf] %vm4176, %v3847
  %4361 = vst.msk [vmem:[%s3 + $0x2e0] sm:$0xf] %vm4176, %v3848
  %4362 = vst.msk [vmem:[%s3 + $0x2e4] sm:$0xf] %vm4176, %v3849
  %4363 = vst.msk [vmem:[%s3 + $0x2e8] sm:$0xf] %vm4176, %v3850
  %4364 = vst.msk [vmem:[%s3 + $0x2ec] sm:$0xf] %vm4176, %v3851
  %4365 = vst.msk [vmem:[%s3 + $0x2f0] sm:$0xf] %vm4176, %v3852
  %4366 = vst.msk [vmem:[%s3 + $0x2f4] sm:$0xf] %vm4176, %v3853
  %4367 = vst.msk [vmem:[%s3 + $0x2f8] sm:$0xf] %vm4176, %v3854
  %4368 = vst.msk [vmem:[%s3 + $0x2fc] sm:$0xf] %vm4176, %v3855
  %4369 = vst.msk [vmem:[%s3 + $0x300] sm:$0xf] %vm4176, %v3856
  %4370 = vst.msk [vmem:[%s3 + $0x304] sm:$0xf] %vm4176, %v3857
  %4371 = vst.msk [vmem:[%s3 + $0x308] sm:$0xf] %vm4176, %v3858
  %4372 = vst.msk [vmem:[%s3 + $0x30c] sm:$0xf] %vm4176, %v3859
  %4373 = vst.msk [vmem:[%s3 + $0x310] sm:$0xf] %vm4176, %v3860
  %4374 = vst.msk [vmem:[%s3 + $0x314] sm:$0xf] %vm4176, %v3861
  %4375 = vst.msk [vmem:[%s3 + $0x318] sm:$0xf] %vm4176, %v3862
  %4376 = vst.msk [vmem:[%s3 + $0x31c] sm:$0xf] %vm4176, %v3863
  %4377 = vst.msk [vmem:[%s3 + $0x320] sm:$0xf] %vm4176, %v3864
  %4378 = vst.msk [vmem:[%s3 + $0x324] sm:$0xf] %vm4176, %v3865
  %4379 = vst.msk [vmem:[%s3 + $0x328] sm:$0xf] %vm4176, %v3866
  %4380 = vst.msk [vmem:[%s3 + $0x32c] sm:$0xf] %vm4176, %v3867
  %4381 = vst.msk [vmem:[%s3 + $0x330] sm:$0xf] %vm4176, %v3868
  %4382 = vst.msk [vmem:[%s3 + $0x334] sm:$0xf] %vm4176, %v3869
  %4383 = vst.msk [vmem:[%s3 + $0x338] sm:$0xf] %vm4176, %v3870
  %4384 = vst.msk [vmem:[%s3 + $0x33c] sm:$0xf] %vm4176, %v3871
  %4385 = vst.msk [vmem:[%s3 + $0x340] sm:$0xf] %vm4176, %v3872
  %4386 = vst.msk [vmem:[%s3 + $0x344] sm:$0xf] %vm4176, %v3873
  %4387 = vst.msk [vmem:[%s3 + $0x348] sm:$0xf] %vm4176, %v3874
  %4388 = vst.msk [vmem:[%s3 + $0x34c] sm:$0xf] %vm4176, %v3875
  %4389 = vst.msk [vmem:[%s3 + $0x350] sm:$0xf] %vm4176, %v3876
  %4390 = vst.msk [vmem:[%s3 + $0x354] sm:$0xf] %vm4176, %v3877
  %4391 = vst.msk [vmem:[%s3 + $0x358] sm:$0xf] %vm4176, %v3878
  %4392 = vst.msk [vmem:[%s3 + $0x35c] sm:$0xf] %vm4176, %v3879
  %4393 = vst.msk [vmem:[%s3 + $0x360] sm:$0xf] %vm4176, %v3880
  %4394 = vst.msk [vmem:[%s3 + $0x364] sm:$0xf] %vm4176, %v3881
  %4395 = vst.msk [vmem:[%s3 + $0x368] sm:$0xf] %vm4176, %v3882
  %4396 = vst.msk [vmem:[%s3 + $0x36c] sm:$0xf] %vm4176, %v3883
  %4397 = vst.msk [vmem:[%s3 + $0x370] sm:$0xf] %vm4176, %v3884
  %4398 = vst.msk [vmem:[%s3 + $0x374] sm:$0xf] %vm4176, %v3885
  %4399 = vst.msk [vmem:[%s3 + $0x378] sm:$0xf] %vm4176, %v3886
  %4400 = vst.msk [vmem:[%s3 + $0x37c] sm:$0xf] %vm4176, %v3887
  %4401 = vst.msk [vmem:[%s3 + $0x380] sm:$0xf] %vm4176, %v3888
  %4402 = vst.msk [vmem:[%s3 + $0x384] sm:$0xf] %vm4176, %v3889
  %4403 = vst.msk [vmem:[%s3 + $0x388] sm:$0xf] %vm4176, %v3890
  %4404 = vst.msk [vmem:[%s3 + $0x38c] sm:$0xf] %vm4176, %v3891
  %4405 = vst.msk [vmem:[%s3 + $0x390] sm:$0xf] %vm4176, %v3892
  %4406 = vst.msk [vmem:[%s3 + $0x394] sm:$0xf] %vm4176, %v3893
  %4407 = vst.msk [vmem:[%s3 + $0x398] sm:$0xf] %vm4176, %v3894
  %4408 = vst.msk [vmem:[%s3 + $0x39c] sm:$0xf] %vm4176, %v3895
  %4409 = vst.msk [vmem:[%s3 + $0x3a0] sm:$0xf] %vm4176, %v3896
  %4410 = vst.msk [vmem:[%s3 + $0x3a4] sm:$0xf] %vm4176, %v3897
  %4411 = vst.msk [vmem:[%s3 + $0x3a8] sm:$0xf] %vm4176, %v3898
  %4412 = vst.msk [vmem:[%s3 + $0x3ac] sm:$0xf] %vm4176, %v3899
  %4413 = vst.msk [vmem:[%s3 + $0x3b0] sm:$0xf] %vm4176, %v3900
  %4414 = vst.msk [vmem:[%s3 + $0x3b4] sm:$0xf] %vm4176, %v3901
  %4415 = vst.msk [vmem:[%s3 + $0x3b8] sm:$0xf] %vm4176, %v3902
  %4416 = vst.msk [vmem:[%s3 + $0x3bc] sm:$0xf] %vm4176, %v3903
  %4417 = vst.msk [vmem:[%s3 + $0x3c0] sm:$0xf] %vm4176, %v3904
  %4418 = vst.msk [vmem:[%s3 + $0x3c4] sm:$0xf] %vm4176, %v3905
  %4419 = vst.msk [vmem:[%s3 + $0x3c8] sm:$0xf] %vm4176, %v3906
  %4420 = vst.msk [vmem:[%s3 + $0x3cc] sm:$0xf] %vm4176, %v3907
  %4421 = vst.msk [vmem:[%s3 + $0x3d0] sm:$0xf] %vm4176, %v3908
  %4422 = vst.msk [vmem:[%s3 + $0x3d4] sm:$0xf] %vm4176, %v3909
  %4423 = vst.msk [vmem:[%s3 + $0x3d8] sm:$0xf] %vm4176, %v3910
  %4424 = vst.msk [vmem:[%s3 + $0x3dc] sm:$0xf] %vm4176, %v3911
  %4425 = vst.msk [vmem:[%s3 + $0x3e0] sm:$0xf] %vm4176, %v3912
  %4426 = vst.msk [vmem:[%s3 + $0x3e4] sm:$0xf] %vm4176, %v3913
  %4427 = vst.msk [vmem:[%s3 + $0x3e8] sm:$0xf] %vm4176, %v3914
  %4428 = vst.msk [vmem:[%s3 + $0x3ec] sm:$0xf] %vm4176, %v3915
  %4429 = vst.msk [vmem:[%s3 + $0x3f0] sm:$0xf] %vm4176, %v3916
  %4430 = vst.msk [vmem:[%s3 + $0x3f4] sm:$0xf] %vm4176, %v3917
  %4431 = vst.msk [vmem:[%s3 + $0x3f8] sm:$0xf] %vm4176, %v3918
  %4432 = vst.msk [vmem:[%s3 + $0x3fc] sm:$0xf] %vm4176, %v3919
  // Predicated region
  $region14: #{discriminator_forward.5} parent=0 // pred_check
    _
  $region15: #{discriminator_forward.5} parent=0 // pred_check_branch
    %4434 = sbr.rel (0) target = $region17
  $region16: #{discriminator_forward.5} parent=0 // pred_region
    _
  $region17: #{discriminator_forward.5} parent=0 // pred_fallthru
    _
  // Predicated region
  $region18: #{discriminator_forward.5} parent=0 // pred_check
    _
  $region19: #{discriminator_forward.5} parent=0 // pred_check_branch
    %4436 = sbr.rel (0) target = $region21
  $region20: #{discriminator_forward.5} parent=0 // pred_region
    _
  $region21: #{discriminator_forward.5} parent=0 // pred_fallthru
    _

// kernel: discriminator_forward.6
$region0: #{discriminator_forward.6}
  #allocation0 [shape = 'u32[]', space=smem, size = 0x4, offset = 0x4, fixed_abs, tag = 'smem constant byte address 0x4 - core index']
  #allocation1 [shape = 'u32[144,128]{1,0:T(1,128)}', space=vmem, size = 0x12000, scoped, tag = 'internal scratch']
  %s0 = inlined_call_operand.vmem [shape: bf16[512,256], index: 0, kind: input, shape index: {}]
  %s1 = inlined_call_operand.vmem [shape: bf16[256,32], index: 1, kind: input, shape index: {}]
  %s2 = inlined_call_operand.vmem [shape: f32[1,32], index: 2, kind: input, shape index: {}]
  %s3 = inlined_call_operand.vmem [shape: f32[1,32], index: 3, kind: input, shape index: {}]
  %s4 = inlined_call_operand.vmem [shape: f32[1,32], index: 4, kind: input, shape index: {}]
  %s5 = inlined_call_operand.vmem [shape: bf16[512,32], index: 5, kind: output, shape index: {}]
  %s6 = sld [smem:[#allocation0]]
  $region30: #{discriminator_forward.6} parent=0
    _
  %s8 = ssub.s32 1, %s6
  %s9 = scalar_select 0, %s8, %s6
  // Predicated region
  $region2: #{discriminator_forward.6} parent=0 // pred_check
    _
  $region3: #{discriminator_forward.6} parent=0 // pred_check_branch
    %11 = sbr.rel (0) target = $region5
  $region4: #{discriminator_forward.6} parent=0 // pred_region
    _
  $region5: #{discriminator_forward.6} parent=0 // pred_fallthru
    _
  // Predicated region
  $region6: #{discriminator_forward.6} parent=0 // pred_check
    _
  $region7: #{discriminator_forward.6} parent=0 // pred_check_branch
    %13 = sbr.rel (0) target = $region9
  $region8: #{discriminator_forward.6} parent=0 // pred_region
    _
  $region9: #{discriminator_forward.6} parent=0 // pred_fallthru
    _
  // Predicated region
  $region10: #{discriminator_forward.6} parent=0 // pred_check
    _
  $region11: #{discriminator_forward.6} parent=0 // pred_check_branch
    %15 = sbr.rel (0) target = $region13
  $region12: #{discriminator_forward.6} parent=0 // pred_region
    _
  $region13: #{discriminator_forward.6} parent=0 // pred_fallthru
    _
  // Predicated region
  $region14: #{discriminator_forward.6} parent=0 // pred_check
    _
  $region15: #{discriminator_forward.6} parent=0 // pred_check_branch
    %17 = sbr.rel (0) target = $region17
  $region16: #{discriminator_forward.6} parent=0 // pred_region
    _
  $region17: #{discriminator_forward.6} parent=0 // pred_fallthru
    _
  // Predicated region
  $region18: #{discriminator_forward.6} parent=0 // pred_check
    _
  $region19: #{discriminator_forward.6} parent=0 // pred_check_branch
    %19 = sbr.rel (0) target = $region21
  $region20: #{discriminator_forward.6} parent=0 // pred_region
    _
  $region21: #{discriminator_forward.6} parent=0 // pred_fallthru
    _
  %v21 = vld [vmem:[%s0] sm:$0xff]
  %v22 = vld [vmem:[%s0 + $0x8] sm:$0xff]
  %v23 = vld [vmem:[%s0 + $0x10] sm:$0xff]
  %v24 = vld [vmem:[%s0 + $0x18] sm:$0xff]
  %v25 = vld [vmem:[%s0 + $0x20] sm:$0xff]
  %v26 = vld [vmem:[%s0 + $0x28] sm:$0xff]
  %v27 = vld [vmem:[%s0 + $0x30] sm:$0xff]
  %v28 = vld [vmem:[%s0 + $0x38] sm:$0xff]
  %v29 = vld [vmem:[%s0 + $0x40] sm:$0xff]
  %v30 = vld [vmem:[%s0 + $0x48] sm:$0xff]
  %v31 = vld [vmem:[%s0 + $0x50] sm:$0xff]
  %v32 = vld [vmem:[%s0 + $0x58] sm:$0xff]
  %v33 = vld [vmem:[%s0 + $0x60] sm:$0xff]
  %v34 = vld [vmem:[%s0 + $0x68] sm:$0xff]
  %v35 = vld [vmem:[%s0 + $0x70] sm:$0xff]
  %v36 = vld [vmem:[%s0 + $0x78] sm:$0xff]
  %v37 = vld [vmem:[%s0 + $0x80] sm:$0xff]
  %v38 = vld [vmem:[%s0 + $0x88] sm:$0xff]
  %v39 = vld [vmem:[%s0 + $0x90] sm:$0xff]
  %v40 = vld [vmem:[%s0 + $0x98] sm:$0xff]
  %v41 = vld [vmem:[%s0 + $0xa0] sm:$0xff]
  %v42 = vld [vmem:[%s0 + $0xa8] sm:$0xff]
  %v43 = vld [vmem:[%s0 + $0xb0] sm:$0xff]
  %v44 = vld [vmem:[%s0 + $0xb8] sm:$0xff]
  %v45 = vld [vmem:[%s0 + $0xc0] sm:$0xff]
  %v46 = vld [vmem:[%s0 + $0xc8] sm:$0xff]
  %v47 = vld [vmem:[%s0 + $0xd0] sm:$0xff]
  %v48 = vld [vmem:[%s0 + $0xd8] sm:$0xff]
  %v49 = vld [vmem:[%s0 + $0xe0] sm:$0xff]
  %v50 = vld [vmem:[%s0 + $0xe8] sm:$0xff]
  %v51 = vld [vmem:[%s0 + $0xf0] sm:$0xff]
  %v52 = vld [vmem:[%s0 + $0xf8] sm:$0xff]
  %v53 = vld [vmem:[%s0 + $0x100] sm:$0xff]
  %v54 = vld [vmem:[%s0 + $0x108] sm:$0xff]
  %v55 = vld [vmem:[%s0 + $0x110] sm:$0xff]
  %v56 = vld [vmem:[%s0 + $0x118] sm:$0xff]
  %v57 = vld [vmem:[%s0 + $0x120] sm:$0xff]
  %v58 = vld [vmem:[%s0 + $0x128] sm:$0xff]
  %v59 = vld [vmem:[%s0 + $0x130] sm:$0xff]
  %v60 = vld [vmem:[%s0 + $0x138] sm:$0xff]
  %v61 = vld [vmem:[%s0 + $0x140] sm:$0xff]
  %v62 = vld [vmem:[%s0 + $0x148] sm:$0xff]
  %v63 = vld [vmem:[%s0 + $0x150] sm:$0xff]
  %v64 = vld [vmem:[%s0 + $0x158] sm:$0xff]
  %v65 = vld [vmem:[%s0 + $0x160] sm:$0xff]
  %v66 = vld [vmem:[%s0 + $0x168] sm:$0xff]
  %v67 = vld [vmem:[%s0 + $0x170] sm:$0xff]
  %v68 = vld [vmem:[%s0 + $0x178] sm:$0xff]
  %v69 = vld [vmem:[%s0 + $0x180] sm:$0xff]
  %v70 = vld [vmem:[%s0 + $0x188] sm:$0xff]
  %v71 = vld [vmem:[%s0 + $0x190] sm:$0xff]
  %v72 = vld [vmem:[%s0 + $0x198] sm:$0xff]
  %v73 = vld [vmem:[%s0 + $0x1a0] sm:$0xff]
  %v74 = vld [vmem:[%s0 + $0x1a8] sm:$0xff]
  %v75 = vld [vmem:[%s0 + $0x1b0] sm:$0xff]
  %v76 = vld [vmem:[%s0 + $0x1b8] sm:$0xff]
  %v77 = vld [vmem:[%s0 + $0x1c0] sm:$0xff]
  %v78 = vld [vmem:[%s0 + $0x1c8] sm:$0xff]
  %v79 = vld [vmem:[%s0 + $0x1d0] sm:$0xff]
  %v80 = vld [vmem:[%s0 + $0x1d8] sm:$0xff]
  %v81 = vld [vmem:[%s0 + $0x1e0] sm:$0xff]
  %v82 = vld [vmem:[%s0 + $0x1e8] sm:$0xff]
  %v83 = vld [vmem:[%s0 + $0x1f0] sm:$0xff]
  %v84 = vld [vmem:[%s0 + $0x1f8] sm:$0xff]
  %v85 = vld [vmem:[%s1] sm:$0xf]
  %v86 = vld [vmem:[%s1 + $0x4] sm:$0xf]
  %v87 = vld [vmem:[%s1 + $0x8] sm:$0xf]
  %v88 = vld [vmem:[%s1 + $0xc] sm:$0xf]
  %v89 = vld [vmem:[%s1 + $0x10] sm:$0xf]
  %v90 = vld [vmem:[%s1 + $0x14] sm:$0xf]
  %v91 = vld [vmem:[%s1 + $0x18] sm:$0xf]
  %v92 = vld [vmem:[%s1 + $0x1c] sm:$0xf]
  %v93 = vld [vmem:[%s1 + $0x20] sm:$0xf]
  %v94 = vld [vmem:[%s1 + $0x24] sm:$0xf]
  %v95 = vld [vmem:[%s1 + $0x28] sm:$0xf]
  %v96 = vld [vmem:[%s1 + $0x2c] sm:$0xf]
  %v97 = vld [vmem:[%s1 + $0x30] sm:$0xf]
  %v98 = vld [vmem:[%s1 + $0x34] sm:$0xf]
  %v99 = vld [vmem:[%s1 + $0x38] sm:$0xf]
  %v100 = vld [vmem:[%s1 + $0x3c] sm:$0xf]
  %v101 = vld [vmem:[%s1 + $0x40] sm:$0xf]
  %v102 = vld [vmem:[%s1 + $0x44] sm:$0xf]
  %v103 = vld [vmem:[%s1 + $0x48] sm:$0xf]
  %v104 = vld [vmem:[%s1 + $0x4c] sm:$0xf]
  %v105 = vld [vmem:[%s1 + $0x50] sm:$0xf]
  %v106 = vld [vmem:[%s1 + $0x54] sm:$0xf]
  %v107 = vld [vmem:[%s1 + $0x58] sm:$0xf]
  %v108 = vld [vmem:[%s1 + $0x5c] sm:$0xf]
  %v109 = vld [vmem:[%s1 + $0x60] sm:$0xf]
  %v110 = vld [vmem:[%s1 + $0x64] sm:$0xf]
  %v111 = vld [vmem:[%s1 + $0x68] sm:$0xf]
  %v112 = vld [vmem:[%s1 + $0x6c] sm:$0xf]
  %v113 = vld [vmem:[%s1 + $0x70] sm:$0xf]
  %v114 = vld [vmem:[%s1 + $0x74] sm:$0xf]
  %v115 = vld [vmem:[%s1 + $0x78] sm:$0xf]
  %v116 = vld [vmem:[%s1 + $0x7c] sm:$0xf]
  %v117 = vld [vmem:[%s2] sm:$0x1]
  %v119 = vlaneseq
  %v120 = vshrl.u32 %v119, 7
  %v121 = vsub.s32 0, %v120
  %v122 = vrot.slane %v117, %v121
  %v188 = vunpack.c.l.b16 %v21
  %v189 = vunpack.c.h.b16 %v21
  %v190 = vunpack.c.l.b16 %v22
  %v191 = vunpack.c.h.b16 %v22
  %v192 = vunpack.c.l.b16 %v23
  %v193 = vunpack.c.h.b16 %v23
  %v194 = vunpack.c.l.b16 %v24
  %v195 = vunpack.c.h.b16 %v24
  %v196 = vunpack.c.l.b16 %v25
  %v197 = vunpack.c.h.b16 %v25
  %v198 = vunpack.c.l.b16 %v26
  %v199 = vunpack.c.h.b16 %v26
  %v200 = vunpack.c.l.b16 %v27
  %v201 = vunpack.c.h.b16 %v27
  %v202 = vunpack.c.l.b16 %v28
  %v203 = vunpack.c.h.b16 %v28
  %v204 = vunpack.c.l.b16 %v29
  %v205 = vunpack.c.h.b16 %v29
  %v206 = vunpack.c.l.b16 %v30
  %v207 = vunpack.c.h.b16 %v30
  %v208 = vunpack.c.l.b16 %v31
  %v209 = vunpack.c.h.b16 %v31
  %v210 = vunpack.c.l.b16 %v32
  %v211 = vunpack.c.h.b16 %v32
  %v212 = vunpack.c.l.b16 %v33
  %v213 = vunpack.c.h.b16 %v33
  %v214 = vunpack.c.l.b16 %v34
  %v215 = vunpack.c.h.b16 %v34
  %v216 = vunpack.c.l.b16 %v35
  %v217 = vunpack.c.h.b16 %v35
  %v218 = vunpack.c.l.b16 %v36
  %v219 = vunpack.c.h.b16 %v36
  %v220 = vunpack.c.l.b16 %v37
  %v221 = vunpack.c.h.b16 %v37
  %v222 = vunpack.c.l.b16 %v38
  %v223 = vunpack.c.h.b16 %v38
  %v224 = vunpack.c.l.b16 %v39
  %v225 = vunpack.c.h.b16 %v39
  %v226 = vunpack.c.l.b16 %v40
  %v227 = vunpack.c.h.b16 %v40
  %v228 = vunpack.c.l.b16 %v41
  %v229 = vunpack.c.h.b16 %v41
  %v230 = vunpack.c.l.b16 %v42
  %v231 = vunpack.c.h.b16 %v42
  %v232 = vunpack.c.l.b16 %v43
  %v233 = vunpack.c.h.b16 %v43
  %v234 = vunpack.c.l.b16 %v44
  %v235 = vunpack.c.h.b16 %v44
  %v236 = vunpack.c.l.b16 %v45
  %v237 = vunpack.c.h.b16 %v45
  %v238 = vunpack.c.l.b16 %v46
  %v239 = vunpack.c.h.b16 %v46
  %v240 = vunpack.c.l.b16 %v47
  %v241 = vunpack.c.h.b16 %v47
  %v242 = vunpack.c.l.b16 %v48
  %v243 = vunpack.c.h.b16 %v48
  %v244 = vunpack.c.l.b16 %v49
  %v245 = vunpack.c.h.b16 %v49
  %v246 = vunpack.c.l.b16 %v50
  %v247 = vunpack.c.h.b16 %v50
  %v248 = vunpack.c.l.b16 %v51
  %v249 = vunpack.c.h.b16 %v51
  %v250 = vunpack.c.l.b16 %v52
  %v251 = vunpack.c.h.b16 %v52
  %v252 = vunpack.c.l.b16 %v53
  %v253 = vunpack.c.h.b16 %v53
  %v254 = vunpack.c.l.b16 %v54
  %v255 = vunpack.c.h.b16 %v54
  %v256 = vunpack.c.l.b16 %v55
  %v257 = vunpack.c.h.b16 %v55
  %v258 = vunpack.c.l.b16 %v56
  %v259 = vunpack.c.h.b16 %v56
  %v260 = vunpack.c.l.b16 %v57
  %v261 = vunpack.c.h.b16 %v57
  %v262 = vunpack.c.l.b16 %v58
  %v263 = vunpack.c.h.b16 %v58
  %v264 = vunpack.c.l.b16 %v59
  %v265 = vunpack.c.h.b16 %v59
  %v266 = vunpack.c.l.b16 %v60
  %v267 = vunpack.c.h.b16 %v60
  %v268 = vunpack.c.l.b16 %v61
  %v269 = vunpack.c.h.b16 %v61
  %v270 = vunpack.c.l.b16 %v62
  %v271 = vunpack.c.h.b16 %v62
  %v272 = vunpack.c.l.b16 %v63
  %v273 = vunpack.c.h.b16 %v63
  %v274 = vunpack.c.l.b16 %v64
  %v275 = vunpack.c.h.b16 %v64
  %v276 = vunpack.c.l.b16 %v65
  %v277 = vunpack.c.h.b16 %v65
  %v278 = vunpack.c.l.b16 %v66
  %v279 = vunpack.c.h.b16 %v66
  %v280 = vunpack.c.l.b16 %v67
  %v281 = vunpack.c.h.b16 %v67
  %v282 = vunpack.c.l.b16 %v68
  %v283 = vunpack.c.h.b16 %v68
  %v284 = vunpack.c.l.b16 %v69
  %v285 = vunpack.c.h.b16 %v69
  %v286 = vunpack.c.l.b16 %v70
  %v287 = vunpack.c.h.b16 %v70
  %v288 = vunpack.c.l.b16 %v71
  %v289 = vunpack.c.h.b16 %v71
  %v290 = vunpack.c.l.b16 %v72
  %v291 = vunpack.c.h.b16 %v72
  %v292 = vunpack.c.l.b16 %v73
  %v293 = vunpack.c.h.b16 %v73
  %v294 = vunpack.c.l.b16 %v74
  %v295 = vunpack.c.h.b16 %v74
  %v296 = vunpack.c.l.b16 %v75
  %v297 = vunpack.c.h.b16 %v75
  %v298 = vunpack.c.l.b16 %v76
  %v299 = vunpack.c.h.b16 %v76
  %v300 = vunpack.c.l.b16 %v77
  %v301 = vunpack.c.h.b16 %v77
  %v302 = vunpack.c.l.b16 %v78
  %v303 = vunpack.c.h.b16 %v78
  %v304 = vunpack.c.l.b16 %v79
  %v305 = vunpack.c.h.b16 %v79
  %v306 = vunpack.c.l.b16 %v80
  %v307 = vunpack.c.h.b16 %v80
  %v308 = vunpack.c.l.b16 %v81
  %v309 = vunpack.c.h.b16 %v81
  %v310 = vunpack.c.l.b16 %v82
  %v311 = vunpack.c.h.b16 %v82
  %v312 = vunpack.c.l.b16 %v83
  %v313 = vunpack.c.h.b16 %v83
  %v314 = vunpack.c.l.b16 %v84
  %v315 = vunpack.c.h.b16 %v84
  %v316 = vpack.c.b16 %v190, %v188
  %v317 = vpack.c.b16 %v191, %v189
  %v318 = vpack.c.b16 %v194, %v192
  %v319 = vpack.c.b16 %v195, %v193
  %v320 = vpack.c.b16 %v198, %v196
  %v321 = vpack.c.b16 %v199, %v197
  %v322 = vpack.c.b16 %v202, %v200
  %v323 = vpack.c.b16 %v203, %v201
  %v324 = vpack.c.b16 %v206, %v204
  %v325 = vpack.c.b16 %v207, %v205
  %v326 = vpack.c.b16 %v210, %v208
  %v327 = vpack.c.b16 %v211, %v209
  %v328 = vpack.c.b16 %v214, %v212
  %v329 = vpack.c.b16 %v215, %v213
  %v330 = vpack.c.b16 %v218, %v216
  %v331 = vpack.c.b16 %v219, %v217
  %v332 = vpack.c.b16 %v222, %v220
  %v333 = vpack.c.b16 %v223, %v221
  %v334 = vpack.c.b16 %v226, %v224
  %v335 = vpack.c.b16 %v227, %v225
  %v336 = vpack.c.b16 %v230, %v228
  %v337 = vpack.c.b16 %v231, %v229
  %v338 = vpack.c.b16 %v234, %v232
  %v339 = vpack.c.b16 %v235, %v233
  %v340 = vpack.c.b16 %v238, %v236
  %v341 = vpack.c.b16 %v239, %v237
  %v342 = vpack.c.b16 %v242, %v240
  %v343 = vpack.c.b16 %v243, %v241
  %v344 = vpack.c.b16 %v246, %v244
  %v345 = vpack.c.b16 %v247, %v245
  %v346 = vpack.c.b16 %v250, %v248
  %v347 = vpack.c.b16 %v251, %v249
  %v348 = vpack.c.b16 %v254, %v252
  %v349 = vpack.c.b16 %v255, %v253
  %v350 = vpack.c.b16 %v258, %v256
  %v351 = vpack.c.b16 %v259, %v257
  %v352 = vpack.c.b16 %v262, %v260
  %v353 = vpack.c.b16 %v263, %v261
  %v354 = vpack.c.b16 %v266, %v264
  %v355 = vpack.c.b16 %v267, %v265
  %v356 = vpack.c.b16 %v270, %v268
  %v357 = vpack.c.b16 %v271, %v269
  %v358 = vpack.c.b16 %v274, %v272
  %v359 = vpack.c.b16 %v275, %v273
  %v360 = vpack.c.b16 %v278, %v276
  %v361 = vpack.c.b16 %v279, %v277
  %v362 = vpack.c.b16 %v282, %v280
  %v363 = vpack.c.b16 %v283, %v281
  %v364 = vpack.c.b16 %v286, %v284
  %v365 = vpack.c.b16 %v287, %v285
  %v366 = vpack.c.b16 %v290, %v288
  %v367 = vpack.c.b16 %v291, %v289
  %v368 = vpack.c.b16 %v294, %v292
  %v369 = vpack.c.b16 %v295, %v293
  %v370 = vpack.c.b16 %v298, %v296
  %v371 = vpack.c.b16 %v299, %v297
  %v372 = vpack.c.b16 %v302, %v300
  %v373 = vpack.c.b16 %v303, %v301
  %v374 = vpack.c.b16 %v306, %v304
  %v375 = vpack.c.b16 %v307, %v305
  %v376 = vpack.c.b16 %v310, %v308
  %v377 = vpack.c.b16 %v311, %v309
  %v378 = vpack.c.b16 %v314, %v312
  %v379 = vpack.c.b16 %v315, %v313
  %v476 = vunpack.c.l.b16 %v85
  %v477 = vunpack.c.l.b16 %v86
  %v478 = vunpack.c.l.b16 %v87
  %v479 = vunpack.c.l.b16 %v88
  %v480 = vunpack.c.l.b16 %v89
  %v481 = vunpack.c.l.b16 %v90
  %v482 = vunpack.c.l.b16 %v91
  %v483 = vunpack.c.l.b16 %v92
  %v484 = vunpack.c.l.b16 %v93
  %v485 = vunpack.c.l.b16 %v94
  %v486 = vunpack.c.l.b16 %v95
  %v487 = vunpack.c.l.b16 %v96
  %v488 = vunpack.c.l.b16 %v97
  %v489 = vunpack.c.l.b16 %v98
  %v490 = vunpack.c.l.b16 %v99
  %v491 = vunpack.c.l.b16 %v100
  %v492 = vunpack.c.l.b16 %v101
  %v493 = vunpack.c.l.b16 %v102
  %v494 = vunpack.c.l.b16 %v103
  %v495 = vunpack.c.l.b16 %v104
  %v496 = vunpack.c.l.b16 %v105
  %v497 = vunpack.c.l.b16 %v106
  %v498 = vunpack.c.l.b16 %v107
  %v499 = vunpack.c.l.b16 %v108
  %v500 = vunpack.c.l.b16 %v109
  %v501 = vunpack.c.l.b16 %v110
  %v502 = vunpack.c.l.b16 %v111
  %v503 = vunpack.c.l.b16 %v112
  %v504 = vunpack.c.l.b16 %v113
  %v505 = vunpack.c.l.b16 %v114
  %v506 = vunpack.c.l.b16 %v115
  %v507 = vunpack.c.l.b16 %v116
  %v508 = vpack.c.b16 %v477, %v476
  %v509 = vpack.c.b16 %v479, %v478
  %v510 = vpack.c.b16 %v481, %v480
  %v511 = vpack.c.b16 %v483, %v482
  %v512 = vpack.c.b16 %v485, %v484
  %v513 = vpack.c.b16 %v487, %v486
  %v514 = vpack.c.b16 %v489, %v488
  %v515 = vpack.c.b16 %v491, %v490
  %v516 = vpack.c.b16 %v493, %v492
  %v517 = vpack.c.b16 %v495, %v494
  %v518 = vpack.c.b16 %v497, %v496
  %v519 = vpack.c.b16 %v499, %v498
  %v520 = vpack.c.b16 %v501, %v500
  %v521 = vpack.c.b16 %v503, %v502
  %v522 = vpack.c.b16 %v505, %v504
  %v523 = vpack.c.b16 %v507, %v506
  %540 = vmatprep.subr.bf16.mxu0 0
  %541 = vmatpush1.bf16.msra.mxu0 %v508
  %542 = vmatprep.subr.bf16.mxu0 0
  %543 = vmatpush1.bf16.msra.mxu0 %v509
  %544 = vmatprep.subr.bf16.mxu0 0
  %545 = vmatpush1.bf16.msra.mxu0 %v510
  %546 = vmatprep.subr.bf16.mxu0 0
  %547 = vmatpush1.bf16.msra.mxu0 %v511
  %548 = vmatprep.subr.bf16.mxu0 0
  %549 = vmatpush1.bf16.msra.mxu0 %v512
  %550 = vmatprep.subr.bf16.mxu0 0
  %551 = vmatpush1.bf16.msra.mxu0 %v513
  %552 = vmatprep.subr.bf16.mxu0 0
  %553 = vmatpush1.bf16.msra.mxu0 %v514
  %554 = vmatprep.subr.bf16.mxu0 0
  %555 = vmatpush1.bf16.msra.mxu0 %v515
  %556 = vmatprep.subr.bf16.mxu0 0
  %557 = vmatpush1.bf16.msra.mxu0 %v516
  %558 = vmatprep.subr.bf16.mxu0 0
  %559 = vmatpush1.bf16.msra.mxu0 %v517
  %560 = vmatprep.subr.bf16.mxu0 0
  %561 = vmatpush1.bf16.msra.mxu0 %v518
  %562 = vmatprep.subr.bf16.mxu0 0
  %563 = vmatpush1.bf16.msra.mxu0 %v519
  %564 = vmatprep.subr.bf16.mxu0 0
  %565 = vmatpush1.bf16.msra.mxu0 %v520
  %566 = vmatprep.subr.bf16.mxu0 0
  %567 = vmatpush1.bf16.msra.mxu0 %v521
  %568 = vmatprep.subr.bf16.mxu0 0
  %569 = vmatpush1.bf16.msra.mxu0 %v522
  %570 = vmatprep.subr.bf16.mxu0 0
  %571 = vmatpush1.bf16.msra.mxu0 %v523
  %572 = vmatprep.mubr.bf16.mxu0 %v317
  %573 = vmatmul.mubr.bf16.gmra.mrb[0].mxu0 %v316
  %v574 = vpop.f32.mrb[0].mxu0
  %v575 = vadd.f32 %v122, %v574
  %v576 = vpop.f32.mrb[0].mxu0
  %v577 = vpop.f32.mrb[0].mxu0
  %v578 = vadd.f32 %v122, %v577
  %v579 = vpop.f32.mrb[0].mxu0
  %580 = vmatprep.mubr.bf16.mxu0 %v319
  %581 = vmatmul.mubr.bf16.gmra.mrb[0].mxu0 %v318
  %v582 = vpop.f32.mrb[0].mxu0
  %v583 = vadd.f32 %v122, %v582
  %v584 = vpop.f32.mrb[0].mxu0
  %v585 = vpop.f32.mrb[0].mxu0
  %v586 = vadd.f32 %v122, %v585
  %v587 = vpop.f32.mrb[0].mxu0
  %588 = vmatprep.mubr.bf16.mxu0 %v321
  %589 = vmatmul.mubr.bf16.gmra.mrb[0].mxu0 %v320
  %v590 = vpop.f32.mrb[0].mxu0
  %v591 = vadd.f32 %v122, %v590
  %v592 = vpop.f32.mrb[0].mxu0
  %v593 = vpop.f32.mrb[0].mxu0
  %v594 = vadd.f32 %v122, %v593
  %v595 = vpop.f32.mrb[0].mxu0
  %596 = vmatprep.mubr.bf16.mxu0 %v323
  %597 = vmatmul.mubr.bf16.gmra.mrb[0].mxu0 %v322
  %v598 = vpop.f32.mrb[0].mxu0
  %v599 = vadd.f32 %v122, %v598
  %v600 = vpop.f32.mrb[0].mxu0
  %v601 = vpop.f32.mrb[0].mxu0
  %v602 = vadd.f32 %v122, %v601
  %v603 = vpop.f32.mrb[0].mxu0
  %604 = vmatprep.mubr.bf16.mxu0 %v325
  %605 = vmatmul.mubr.bf16.gmra.mrb[0].mxu0 %v324
  %v606 = vpop.f32.mrb[0].mxu0
  %v607 = vadd.f32 %v122, %v606
  %v608 = vpop.f32.mrb[0].mxu0
  %v609 = vpop.f32.mrb[0].mxu0
  %v610 = vadd.f32 %v122, %v609
  %v611 = vpop.f32.mrb[0].mxu0
  %612 = vmatprep.mubr.bf16.mxu0 %v327
  %613 = vmatmul.mubr.bf16.gmra.mrb[0].mxu0 %v326
  %v614 = vpop.f32.mrb[0].mxu0
  %v615 = vadd.f32 %v122, %v614
  %v616 = vpop.f32.mrb[0].mxu0
  %v617 = vpop.f32.mrb[0].mxu0
  %v618 = vadd.f32 %v122, %v617
  %v619 = vpop.f32.mrb[0].mxu0
  %620 = vmatprep.mubr.bf16.mxu0 %v329
  %621 = vmatmul.mubr.bf16.gmra.mrb[0].mxu0 %v328
  %v622 = vpop.f32.mrb[0].mxu0
  %v623 = vadd.f32 %v122, %v622
  %v624 = vpop.f32.mrb[0].mxu0
  %v625 = vpop.f32.mrb[0].mxu0
  %v626 = vadd.f32 %v122, %v625
  %v627 = vpop.f32.mrb[0].mxu0
  %628 = vmatprep.mubr.bf16.mxu0 %v331
  %629 = vmatmul.mubr.bf16.gmra.mrb[0].mxu0 %v330
  %v630 = vpop.f32.mrb[0].mxu0
  %v631 = vadd.f32 %v122, %v630
  %v632 = vpop.f32.mrb[0].mxu0
  %v633 = vpop.f32.mrb[0].mxu0
  %v634 = vadd.f32 %v122, %v633
  %v635 = vpop.f32.mrb[0].mxu0
  %636 = vmatprep.mubr.bf16.mxu0 %v333
  %637 = vmatmul.mubr.bf16.gmra.mrb[0].mxu0 %v332
  %v638 = vpop.f32.mrb[0].mxu0
  %v639 = vadd.f32 %v122, %v638
  %v640 = vpop.f32.mrb[0].mxu0
  %v641 = vpop.f32.mrb[0].mxu0
  %v642 = vadd.f32 %v122, %v641
  %v643 = vpop.f32.mrb[0].mxu0
  %644 = vmatprep.mubr.bf16.mxu0 %v335
  %645 = vmatmul.mubr.bf16.gmra.mrb[0].mxu0 %v334
  %v646 = vpop.f32.mrb[0].mxu0
  %v647 = vadd.f32 %v122, %v646
  %v648 = vpop.f32.mrb[0].mxu0
  %v649 = vpop.f32.mrb[0].mxu0
  %v650 = vadd.f32 %v122, %v649
  %v651 = vpop.f32.mrb[0].mxu0
  %652 = vmatprep.mubr.bf16.mxu0 %v337
  %653 = vmatmul.mubr.bf16.gmra.mrb[0].mxu0 %v336
  %v654 = vpop.f32.mrb[0].mxu0
  %v655 = vadd.f32 %v122, %v654
  %v656 = vpop.f32.mrb[0].mxu0
  %v657 = vpop.f32.mrb[0].mxu0
  %v658 = vadd.f32 %v122, %v657
  %v659 = vpop.f32.mrb[0].mxu0
  %660 = vmatprep.mubr.bf16.mxu0 %v339
  %661 = vmatmul.mubr.bf16.gmra.mrb[0].mxu0 %v338
  %v662 = vpop.f32.mrb[0].mxu0
  %v663 = vadd.f32 %v122, %v662
  %v664 = vpop.f32.mrb[0].mxu0
  %v665 = vpop.f32.mrb[0].mxu0
  %v666 = vadd.f32 %v122, %v665
  %v667 = vpop.f32.mrb[0].mxu0
  %668 = vmatprep.mubr.bf16.mxu0 %v341
  %669 = vmatmul.mubr.bf16.gmra.mrb[0].mxu0 %v340
  %v670 = vpop.f32.mrb[0].mxu0
  %v671 = vadd.f32 %v122, %v670
  %v672 = vpop.f32.mrb[0].mxu0
  %v673 = vpop.f32.mrb[0].mxu0
  %v674 = vadd.f32 %v122, %v673
  %v675 = vpop.f32.mrb[0].mxu0
  %676 = vmatprep.mubr.bf16.mxu0 %v343
  %677 = vmatmul.mubr.bf16.gmra.mrb[0].mxu0 %v342
  %v678 = vpop.f32.mrb[0].mxu0
  %v679 = vadd.f32 %v122, %v678
  %v680 = vpop.f32.mrb[0].mxu0
  %v681 = vpop.f32.mrb[0].mxu0
  %v682 = vadd.f32 %v122, %v681
  %v683 = vpop.f32.mrb[0].mxu0
  %684 = vmatprep.mubr.bf16.mxu0 %v345
  %685 = vmatmul.mubr.bf16.gmra.mrb[0].mxu0 %v344
  %v686 = vpop.f32.mrb[0].mxu0
  %v687 = vadd.f32 %v122, %v686
  %v688 = vpop.f32.mrb[0].mxu0
  %v689 = vpop.f32.mrb[0].mxu0
  %v690 = vadd.f32 %v122, %v689
  %v691 = vpop.f32.mrb[0].mxu0
  %692 = vmatprep.mubr.bf16.mxu0 %v347
  %693 = vmatmul.mubr.bf16.gmra.mrb[0].mxu0 %v346
  %v694 = vpop.f32.mrb[0].mxu0
  %v695 = vadd.f32 %v122, %v694
  %v696 = vpop.f32.mrb[0].mxu0
  %v697 = vpop.f32.mrb[0].mxu0
  %v698 = vadd.f32 %v122, %v697
  %v699 = vpop.f32.mrb[0].mxu0
  %700 = vmatprep.mubr.bf16.mxu0 %v349
  %701 = vmatmul.mubr.bf16.gmra.mrb[0].mxu0 %v348
  %v702 = vpop.f32.mrb[0].mxu0
  %v703 = vadd.f32 %v122, %v702
  %v704 = vpop.f32.mrb[0].mxu0
  %v705 = vpop.f32.mrb[0].mxu0
  %v706 = vadd.f32 %v122, %v705
  %v707 = vpop.f32.mrb[0].mxu0
  %708 = vmatprep.mubr.bf16.mxu0 %v351
  %709 = vmatmul.mubr.bf16.gmra.mrb[0].mxu0 %v350
  %v710 = vpop.f32.mrb[0].mxu0
  %v711 = vadd.f32 %v122, %v710
  %v712 = vpop.f32.mrb[0].mxu0
  %v713 = vpop.f32.mrb[0].mxu0
  %v714 = vadd.f32 %v122, %v713
  %v715 = vpop.f32.mrb[0].mxu0
  %716 = vmatprep.mubr.bf16.mxu0 %v353
  %717 = vmatmul.mubr.bf16.gmra.mrb[0].mxu0 %v352
  %v718 = vpop.f32.mrb[0].mxu0
  %v719 = vadd.f32 %v122, %v718
  %v720 = vpop.f32.mrb[0].mxu0
  %v721 = vpop.f32.mrb[0].mxu0
  %v722 = vadd.f32 %v122, %v721
  %v723 = vpop.f32.mrb[0].mxu0
  %724 = vmatprep.mubr.bf16.mxu0 %v355
  %725 = vmatmul.mubr.bf16.gmra.mrb[0].mxu0 %v354
  %v726 = vpop.f32.mrb[0].mxu0
  %v727 = vadd.f32 %v122, %v726
  %v728 = vpop.f32.mrb[0].mxu0
  %v729 = vpop.f32.mrb[0].mxu0
  %v730 = vadd.f32 %v122, %v729
  %v731 = vpop.f32.mrb[0].mxu0
  %732 = vmatprep.mubr.bf16.mxu0 %v357
  %733 = vmatmul.mubr.bf16.gmra.mrb[0].mxu0 %v356
  %v734 = vpop.f32.mrb[0].mxu0
  %v735 = vadd.f32 %v122, %v734
  %v736 = vpop.f32.mrb[0].mxu0
  %v737 = vpop.f32.mrb[0].mxu0
  %v738 = vadd.f32 %v122, %v737
  %v739 = vpop.f32.mrb[0].mxu0
  %740 = vmatprep.mubr.bf16.mxu0 %v359
  %741 = vmatmul.mubr.bf16.gmra.mrb[0].mxu0 %v358
  %v742 = vpop.f32.mrb[0].mxu0
  %v743 = vadd.f32 %v122, %v742
  %v744 = vpop.f32.mrb[0].mxu0
  %v745 = vpop.f32.mrb[0].mxu0
  %v746 = vadd.f32 %v122, %v745
  %v747 = vpop.f32.mrb[0].mxu0
  %748 = vmatprep.mubr.bf16.mxu0 %v361
  %749 = vmatmul.mubr.bf16.gmra.mrb[0].mxu0 %v360
  %v750 = vpop.f32.mrb[0].mxu0
  %v751 = vadd.f32 %v122, %v750
  %v752 = vpop.f32.mrb[0].mxu0
  %v753 = vpop.f32.mrb[0].mxu0
  %v754 = vadd.f32 %v122, %v753
  %v755 = vpop.f32.mrb[0].mxu0
  %756 = vmatprep.mubr.bf16.mxu0 %v363
  %757 = vmatmul.mubr.bf16.gmra.mrb[0].mxu0 %v362
  %v758 = vpop.f32.mrb[0].mxu0
  %v759 = vadd.f32 %v122, %v758
  %v760 = vpop.f32.mrb[0].mxu0
  %v761 = vpop.f32.mrb[0].mxu0
  %v762 = vadd.f32 %v122, %v761
  %v763 = vpop.f32.mrb[0].mxu0
  %764 = vmatprep.mubr.bf16.mxu0 %v365
  %765 = vmatmul.mubr.bf16.gmra.mrb[0].mxu0 %v364
  %v766 = vpop.f32.mrb[0].mxu0
  %v767 = vadd.f32 %v122, %v766
  %v768 = vpop.f32.mrb[0].mxu0
  %v769 = vpop.f32.mrb[0].mxu0
  %v770 = vadd.f32 %v122, %v769
  %v771 = vpop.f32.mrb[0].mxu0
  %772 = vmatprep.mubr.bf16.mxu0 %v367
  %773 = vmatmul.mubr.bf16.gmra.mrb[0].mxu0 %v366
  %v774 = vpop.f32.mrb[0].mxu0
  %v775 = vadd.f32 %v122, %v774
  %v776 = vpop.f32.mrb[0].mxu0
  %v777 = vpop.f32.mrb[0].mxu0
  %v778 = vadd.f32 %v122, %v777
  %v779 = vpop.f32.mrb[0].mxu0
  %780 = vmatprep.mubr.bf16.mxu0 %v369
  %781 = vmatmul.mubr.bf16.gmra.mrb[0].mxu0 %v368
  %v782 = vpop.f32.mrb[0].mxu0
  %v783 = vadd.f32 %v122, %v782
  %v784 = vpop.f32.mrb[0].mxu0
  %v785 = vpop.f32.mrb[0].mxu0
  %v786 = vadd.f32 %v122, %v785
  %v787 = vpop.f32.mrb[0].mxu0
  %788 = vmatprep.mubr.bf16.mxu0 %v371
  %789 = vmatmul.mubr.bf16.gmra.mrb[0].mxu0 %v370
  %v790 = vpop.f32.mrb[0].mxu0
  %v791 = vadd.f32 %v122, %v790
  %v792 = vpop.f32.mrb[0].mxu0
  %v793 = vpop.f32.mrb[0].mxu0
  %v794 = vadd.f32 %v122, %v793
  %v795 = vpop.f32.mrb[0].mxu0
  %796 = vmatprep.mubr.bf16.mxu0 %v373
  %797 = vmatmul.mubr.bf16.gmra.mrb[0].mxu0 %v372
  %v798 = vpop.f32.mrb[0].mxu0
  %v799 = vadd.f32 %v122, %v798
  %v800 = vpop.f32.mrb[0].mxu0
  %v801 = vpop.f32.mrb[0].mxu0
  %v802 = vadd.f32 %v122, %v801
  %v803 = vpop.f32.mrb[0].mxu0
  %804 = vmatprep.mubr.bf16.mxu0 %v375
  %805 = vmatmul.mubr.bf16.gmra.mrb[0].mxu0 %v374
  %v806 = vpop.f32.mrb[0].mxu0
  %v807 = vadd.f32 %v122, %v806
  %v808 = vpop.f32.mrb[0].mxu0
  %v809 = vpop.f32.mrb[0].mxu0
  %v810 = vadd.f32 %v122, %v809
  %v811 = vpop.f32.mrb[0].mxu0
  %812 = vmatprep.mubr.bf16.mxu0 %v377
  %813 = vmatmul.mubr.bf16.gmra.mrb[0].mxu0 %v376
  %v814 = vpop.f32.mrb[0].mxu0
  %v815 = vadd.f32 %v122, %v814
  %v816 = vpop.f32.mrb[0].mxu0
  %v817 = vpop.f32.mrb[0].mxu0
  %v818 = vadd.f32 %v122, %v817
  %v819 = vpop.f32.mrb[0].mxu0
  %820 = vmatprep.mubr.bf16.mxu0 %v379
  %821 = vmatmul.mubr.bf16.gmra.mrb[0].mxu0 %v378
  %v822 = vpop.f32.mrb[0].mxu0
  %v823 = vadd.f32 %v122, %v822
  %v824 = vpop.f32.mrb[0].mxu0
  %v825 = vpop.f32.mrb[0].mxu0
  %v826 = vadd.f32 %v122, %v825
  %v827 = vpop.f32.mrb[0].mxu0
  %828 = vdwg.mxu0
  %vm829 = vcmask 261120
  %v830 = vsel %vm829, %v575, 0.0
  %v831 = vsel %vm829, %v578, 0.0
  %v832 = vadd.f32 %v830, %v831
  %v833 = vsel %vm829, %v583, 0.0
  %v834 = vadd.f32 %v832, %v833
  %v835 = vsel %vm829, %v586, 0.0
  %v836 = vadd.f32 %v834, %v835
  %v837 = vsel %vm829, %v591, 0.0
  %v838 = vadd.f32 %v836, %v837
  %v839 = vsel %vm829, %v594, 0.0
  %v840 = vadd.f32 %v838, %v839
  %v841 = vsel %vm829, %v599, 0.0
  %v842 = vadd.f32 %v840, %v841
  %v843 = vsel %vm829, %v602, 0.0
  %v844 = vadd.f32 %v842, %v843
  %v845 = vsel %vm829, %v607, 0.0
  %v846 = vadd.f32 %v844, %v845
  %v847 = vsel %vm829, %v610, 0.0
  %v848 = vadd.f32 %v846, %v847
  %v849 = vsel %vm829, %v615, 0.0
  %v850 = vadd.f32 %v848, %v849
  %v851 = vsel %vm829, %v618, 0.0
  %v852 = vadd.f32 %v850, %v851
  %v853 = vsel %vm829, %v623, 0.0
  %v854 = vadd.f32 %v852, %v853
  %v855 = vsel %vm829, %v626, 0.0
  %v856 = vadd.f32 %v854, %v855
  %v857 = vsel %vm829, %v631, 0.0
  %v858 = vadd.f32 %v856, %v857
  %v859 = vsel %vm829, %v634, 0.0
  %v860 = vadd.f32 %v858, %v859
  %v861 = vsel %vm829, %v639, 0.0
  %v862 = vadd.f32 %v860, %v861
  %v863 = vsel %vm829, %v642, 0.0
  %v864 = vadd.f32 %v862, %v863
  %v865 = vsel %vm829, %v647, 0.0
  %v866 = vadd.f32 %v864, %v865
  %v867 = vsel %vm829, %v650, 0.0
  %v868 = vadd.f32 %v866, %v867
  %v869 = vsel %vm829, %v655, 0.0
  %v870 = vadd.f32 %v868, %v869
  %v871 = vsel %vm829, %v658, 0.0
  %v872 = vadd.f32 %v870, %v871
  %v873 = vsel %vm829, %v663, 0.0
  %v874 = vadd.f32 %v872, %v873
  %v875 = vsel %vm829, %v666, 0.0
  %v876 = vadd.f32 %v874, %v875
  %v877 = vsel %vm829, %v671, 0.0
  %v878 = vadd.f32 %v876, %v877
  %v879 = vsel %vm829, %v674, 0.0
  %v880 = vadd.f32 %v878, %v879
  %v881 = vsel %vm829, %v679, 0.0
  %v882 = vadd.f32 %v880, %v881
  %v883 = vsel %vm829, %v682, 0.0
  %v884 = vadd.f32 %v882, %v883
  %v885 = vsel %vm829, %v687, 0.0
  %v886 = vadd.f32 %v884, %v885
  %v887 = vsel %vm829, %v690, 0.0
  %v888 = vadd.f32 %v886, %v887
  %v889 = vsel %vm829, %v695, 0.0
  %v890 = vadd.f32 %v888, %v889
  %v891 = vsel %vm829, %v698, 0.0
  %v892 = vadd.f32 %v890, %v891
  %v893 = vsel %vm829, %v703, 0.0
  %v894 = vadd.f32 %v892, %v893
  %v895 = vsel %vm829, %v706, 0.0
  %v896 = vadd.f32 %v894, %v895
  %v897 = vsel %vm829, %v711, 0.0
  %v898 = vadd.f32 %v896, %v897
  %v899 = vsel %vm829, %v714, 0.0
  %v900 = vadd.f32 %v898, %v899
  %v901 = vsel %vm829, %v719, 0.0
  %v902 = vadd.f32 %v900, %v901
  %v903 = vsel %vm829, %v722, 0.0
  %v904 = vadd.f32 %v902, %v903
  %v905 = vsel %vm829, %v727, 0.0
  %v906 = vadd.f32 %v904, %v905
  %v907 = vsel %vm829, %v730, 0.0
  %v908 = vadd.f32 %v906, %v907
  %v909 = vsel %vm829, %v735, 0.0
  %v910 = vadd.f32 %v908, %v909
  %v911 = vsel %vm829, %v738, 0.0
  %v912 = vadd.f32 %v910, %v911
  %v913 = vsel %vm829, %v743, 0.0
  %v914 = vadd.f32 %v912, %v913
  %v915 = vsel %vm829, %v746, 0.0
  %v916 = vadd.f32 %v914, %v915
  %v917 = vsel %vm829, %v751, 0.0
  %v918 = vadd.f32 %v916, %v917
  %v919 = vsel %vm829, %v754, 0.0
  %v920 = vadd.f32 %v918, %v919
  %v921 = vsel %vm829, %v759, 0.0
  %v922 = vadd.f32 %v920, %v921
  %v923 = vsel %vm829, %v762, 0.0
  %v924 = vadd.f32 %v922, %v923
  %v925 = vsel %vm829, %v767, 0.0
  %v926 = vadd.f32 %v924, %v925
  %v927 = vsel %vm829, %v770, 0.0
  %v928 = vadd.f32 %v926, %v927
  %v929 = vsel %vm829, %v775, 0.0
  %v930 = vadd.f32 %v928, %v929
  %v931 = vsel %vm829, %v778, 0.0
  %v932 = vadd.f32 %v930, %v931
  %v933 = vsel %vm829, %v783, 0.0
  %v934 = vadd.f32 %v932, %v933
  %v935 = vsel %vm829, %v786, 0.0
  %v936 = vadd.f32 %v934, %v935
  %v937 = vsel %vm829, %v791, 0.0
  %v938 = vadd.f32 %v936, %v937
  %v939 = vsel %vm829, %v794, 0.0
  %v940 = vadd.f32 %v938, %v939
  %v941 = vsel %vm829, %v799, 0.0
  %v942 = vadd.f32 %v940, %v941
  %v943 = vsel %vm829, %v802, 0.0
  %v944 = vadd.f32 %v942, %v943
  %v945 = vsel %vm829, %v807, 0.0
  %v946 = vadd.f32 %v944, %v945
  %v947 = vsel %vm829, %v810, 0.0
  %v948 = vadd.f32 %v946, %v947
  %v949 = vsel %vm829, %v815, 0.0
  %v950 = vadd.f32 %v948, %v949
  %v951 = vsel %vm829, %v818, 0.0
  %v952 = vadd.f32 %v950, %v951
  %v953 = vsel %vm829, %v823, 0.0
  %v954 = vadd.f32 %v952, %v953
  %v955 = vsel %vm829, %v826, 0.0
  %v956 = vadd.f32 %v954, %v955
  %v957 = vrot.slane %v956, 4
  %v958 = vadd.f32 %v956, %v957
  %v959 = vrot.slane %v958, 2
  %v960 = vadd.f32 %v958, %v959
  %v961 = vrot.slane %v960, 1
  %v962 = vadd.f32 %v960, %v961
  %v963 = vmul.f32 %v962, 0.001953125
  %v964 = vmul.f32 %v575, %v575
  %v965 = vmul.f32 %v578, %v578
  %v966 = vmul.f32 %v583, %v583
  %v967 = vmul.f32 %v586, %v586
  %v968 = vmul.f32 %v591, %v591
  %v969 = vmul.f32 %v594, %v594
  %v970 = vmul.f32 %v599, %v599
  %v971 = vmul.f32 %v602, %v602
  %v972 = vmul.f32 %v607, %v607
  %v973 = vmul.f32 %v610, %v610
  %v974 = vmul.f32 %v615, %v615
  %v975 = vmul.f32 %v618, %v618
  %v976 = vmul.f32 %v623, %v623
  %v977 = vmul.f32 %v626, %v626
  %v978 = vmul.f32 %v631, %v631
  %v979 = vmul.f32 %v634, %v634
  %v980 = vmul.f32 %v639, %v639
  %v981 = vmul.f32 %v642, %v642
  %v982 = vmul.f32 %v647, %v647
  %v983 = vmul.f32 %v650, %v650
  %v984 = vmul.f32 %v655, %v655
  %v985 = vmul.f32 %v658, %v658
  %v986 = vmul.f32 %v663, %v663
  %v987 = vmul.f32 %v666, %v666
  %v988 = vmul.f32 %v671, %v671
  %v989 = vmul.f32 %v674, %v674
  %v990 = vmul.f32 %v679, %v679
  %v991 = vmul.f32 %v682, %v682
  %v992 = vmul.f32 %v687, %v687
  %v993 = vmul.f32 %v690, %v690
  %v994 = vmul.f32 %v695, %v695
  %v995 = vmul.f32 %v698, %v698
  %v996 = vmul.f32 %v703, %v703
  %v997 = vmul.f32 %v706, %v706
  %v998 = vmul.f32 %v711, %v711
  %v999 = vmul.f32 %v714, %v714
  %v1000 = vmul.f32 %v719, %v719
  %v1001 = vmul.f32 %v722, %v722
  %v1002 = vmul.f32 %v727, %v727
  %v1003 = vmul.f32 %v730, %v730
  %v1004 = vmul.f32 %v735, %v735
  %v1005 = vmul.f32 %v738, %v738
  %v1006 = vmul.f32 %v743, %v743
  %v1007 = vmul.f32 %v746, %v746
  %v1008 = vmul.f32 %v751, %v751
  %v1009 = vmul.f32 %v754, %v754
  %v1010 = vmul.f32 %v759, %v759
  %v1011 = vmul.f32 %v762, %v762
  %v1012 = vmul.f32 %v767, %v767
  %v1013 = vmul.f32 %v770, %v770
  %v1014 = vmul.f32 %v775, %v775
  %v1015 = vmul.f32 %v778, %v778
  %v1016 = vmul.f32 %v783, %v783
  %v1017 = vmul.f32 %v786, %v786
  %v1018 = vmul.f32 %v791, %v791
  %v1019 = vmul.f32 %v794, %v794
  %v1020 = vmul.f32 %v799, %v799
  %v1021 = vmul.f32 %v802, %v802
  %v1022 = vmul.f32 %v807, %v807
  %v1023 = vmul.f32 %v810, %v810
  %v1024 = vmul.f32 %v815, %v815
  %v1025 = vmul.f32 %v818, %v818
  %v1026 = vmul.f32 %v823, %v823
  %v1027 = vmul.f32 %v826, %v826
  %v1028 = vsel %vm829, %v964, 0.0
  %v1029 = vsel %vm829, %v965, 0.0
  %v1030 = vadd.f32 %v1028, %v1029
  %v1031 = vsel %vm829, %v966, 0.0
  %v1032 = vadd.f32 %v1030, %v1031
  %v1033 = vsel %vm829, %v967, 0.0
  %v1034 = vadd.f32 %v1032, %v1033
  %v1035 = vsel %vm829, %v968, 0.0
  %v1036 = vadd.f32 %v1034, %v1035
  %v1037 = vsel %vm829, %v969, 0.0
  %v1038 = vadd.f32 %v1036, %v1037
  %v1039 = vsel %vm829, %v970, 0.0
  %v1040 = vadd.f32 %v1038, %v1039
  %v1041 = vsel %vm829, %v971, 0.0
  %v1042 = vadd.f32 %v1040, %v1041
  %v1043 = vsel %vm829, %v972, 0.0
  %v1044 = vadd.f32 %v1042, %v1043
  %v1045 = vsel %vm829, %v973, 0.0
  %v1046 = vadd.f32 %v1044, %v1045
  %v1047 = vsel %vm829, %v974, 0.0
  %v1048 = vadd.f32 %v1046, %v1047
  %v1049 = vsel %vm829, %v975, 0.0
  %v1050 = vadd.f32 %v1048, %v1049
  %v1051 = vsel %vm829, %v976, 0.0
  %v1052 = vadd.f32 %v1050, %v1051
  %v1053 = vsel %vm829, %v977, 0.0
  %v1054 = vadd.f32 %v1052, %v1053
  %v1055 = vsel %vm829, %v978, 0.0
  %v1056 = vadd.f32 %v1054, %v1055
  %v1057 = vsel %vm829, %v979, 0.0
  %v1058 = vadd.f32 %v1056, %v1057
  %v1059 = vsel %vm829, %v980, 0.0
  %v1060 = vadd.f32 %v1058, %v1059
  %v1061 = vsel %vm829, %v981, 0.0
  %v1062 = vadd.f32 %v1060, %v1061
  %v1063 = vsel %vm829, %v982, 0.0
  %v1064 = vadd.f32 %v1062, %v1063
  %v1065 = vsel %vm829, %v983, 0.0
  %v1066 = vadd.f32 %v1064, %v1065
  %v1067 = vsel %vm829, %v984, 0.0
  %v1068 = vadd.f32 %v1066, %v1067
  %v1069 = vsel %vm829, %v985, 0.0
  %v1070 = vadd.f32 %v1068, %v1069
  %v1071 = vsel %vm829, %v986, 0.0
  %v1072 = vadd.f32 %v1070, %v1071
  %v1073 = vsel %vm829, %v987, 0.0
  %v1074 = vadd.f32 %v1072, %v1073
  %v1075 = vsel %vm829, %v988, 0.0
  %v1076 = vadd.f32 %v1074, %v1075
  %v1077 = vsel %vm829, %v989, 0.0
  %v1078 = vadd.f32 %v1076, %v1077
  %v1079 = vsel %vm829, %v990, 0.0
  %v1080 = vadd.f32 %v1078, %v1079
  %v1081 = vsel %vm829, %v991, 0.0
  %v1082 = vadd.f32 %v1080, %v1081
  %v1083 = vsel %vm829, %v992, 0.0
  %v1084 = vadd.f32 %v1082, %v1083
  %v1085 = vsel %vm829, %v993, 0.0
  %v1086 = vadd.f32 %v1084, %v1085
  %v1087 = vsel %vm829, %v994, 0.0
  %v1088 = vadd.f32 %v1086, %v1087
  %v1089 = vsel %vm829, %v995, 0.0
  %v1090 = vadd.f32 %v1088, %v1089
  %v1091 = vsel %vm829, %v996, 0.0
  %v1092 = vadd.f32 %v1090, %v1091
  %v1093 = vsel %vm829, %v997, 0.0
  %v1094 = vadd.f32 %v1092, %v1093
  %v1095 = vsel %vm829, %v998, 0.0
  %v1096 = vadd.f32 %v1094, %v1095
  %v1097 = vsel %vm829, %v999, 0.0
  %v1098 = vadd.f32 %v1096, %v1097
  %v1099 = vsel %vm829, %v1000, 0.0
  %v1100 = vadd.f32 %v1098, %v1099
  %v1101 = vsel %vm829, %v1001, 0.0
  %v1102 = vadd.f32 %v1100, %v1101
  %v1103 = vsel %vm829, %v1002, 0.0
  %v1104 = vadd.f32 %v1102, %v1103
  %v1105 = vsel %vm829, %v1003, 0.0
  %v1106 = vadd.f32 %v1104, %v1105
  %v1107 = vsel %vm829, %v1004, 0.0
  %v1108 = vadd.f32 %v1106, %v1107
  %v1109 = vsel %vm829, %v1005, 0.0
  %v1110 = vadd.f32 %v1108, %v1109
  %v1111 = vsel %vm829, %v1006, 0.0
  %v1112 = vadd.f32 %v1110, %v1111
  %v1113 = vsel %vm829, %v1007, 0.0
  %v1114 = vadd.f32 %v1112, %v1113
  %v1115 = vsel %vm829, %v1008, 0.0
  %v1116 = vadd.f32 %v1114, %v1115
  %v1117 = vsel %vm829, %v1009, 0.0
  %v1118 = vadd.f32 %v1116, %v1117
  %v1119 = vsel %vm829, %v1010, 0.0
  %v1120 = vadd.f32 %v1118, %v1119
  %v1121 = vsel %vm829, %v1011, 0.0
  %v1122 = vadd.f32 %v1120, %v1121
  %v1123 = vsel %vm829, %v1012, 0.0
  %v1124 = vadd.f32 %v1122, %v1123
  %v1125 = vsel %vm829, %v1013, 0.0
  %v1126 = vadd.f32 %v1124, %v1125
  %v1127 = vsel %vm829, %v1014, 0.0
  %v1128 = vadd.f32 %v1126, %v1127
  %v1129 = vsel %vm829, %v1015, 0.0
  %v1130 = vadd.f32 %v1128, %v1129
  %v1131 = vsel %vm829, %v1016, 0.0
  %v1132 = vadd.f32 %v1130, %v1131
  %v1133 = vsel %vm829, %v1017, 0.0
  %v1134 = vadd.f32 %v1132, %v1133
  %v1135 = vsel %vm829, %v1018, 0.0
  %v1136 = vadd.f32 %v1134, %v1135
  %v1137 = vsel %vm829, %v1019, 0.0
  %v1138 = vadd.f32 %v1136, %v1137
  %v1139 = vsel %vm829, %v1020, 0.0
  %v1140 = vadd.f32 %v1138, %v1139
  %v1141 = vsel %vm829, %v1021, 0.0
  %v1142 = vadd.f32 %v1140, %v1141
  %v1143 = vsel %vm829, %v1022, 0.0
  %v1144 = vadd.f32 %v1142, %v1143
  %v1145 = vsel %vm829, %v1023, 0.0
  %v1146 = vadd.f32 %v1144, %v1145
  %v1147 = vsel %vm829, %v1024, 0.0
  %v1148 = vadd.f32 %v1146, %v1147
  %v1149 = vsel %vm829, %v1025, 0.0
  %v1150 = vadd.f32 %v1148, %v1149
  %v1151 = vsel %vm829, %v1026, 0.0
  %v1152 = vadd.f32 %v1150, %v1151
  %v1153 = vsel %vm829, %v1027, 0.0
  %v1154 = vadd.f32 %v1152, %v1153
  %v1155 = vrot.slane %v1154, 4
  %v1156 = vadd.f32 %v1154, %v1155
  %v1157 = vrot.slane %v1156, 2
  %v1158 = vadd.f32 %v1156, %v1157
  %v1159 = vrot.slane %v1158, 1
  %v1160 = vadd.f32 %v1158, %v1159
  %v1161 = vmul.f32 %v1160, 0.001953125
  %v1162 = vmul.f32 %v963, %v963
  %v1163 = vsub.f32 %v1161, %v1162
  %v1164 = vld [vmem:[%s3] sm:$0x1]
  %v1165 = vadd.f32 %v1163, 1e-05
  %v1166 = vrsqrt.pop %v1165
  %v1167 = vmul.f32 %v1164, %v1166
  %v1168 = vld [vmem:[%s4] sm:$0x1]
  %v1169 = vmul.f32 %v963, %v1167
  %v1170 = vsub.f32 %v1168, %v1169
  %v1172 = vlaneseq
  %v1173 = vshrl.u32 %v1172, 7
  %v1174 = vsub.s32 0, %v1173
  %v1175 = vrot.slane %v1167, %v1174
  %v1177 = vmul.f32 %v575, %v1175
  %v1178 = vmul.f32 %v578, %v1175
  %v1179 = vmul.f32 %v583, %v1175
  %v1180 = vmul.f32 %v586, %v1175
  %v1181 = vmul.f32 %v591, %v1175
  %v1182 = vmul.f32 %v594, %v1175
  %v1183 = vmul.f32 %v599, %v1175
  %v1184 = vmul.f32 %v602, %v1175
  %v1185 = vmul.f32 %v607, %v1175
  %v1186 = vmul.f32 %v610, %v1175
  %v1187 = vmul.f32 %v615, %v1175
  %v1188 = vmul.f32 %v618, %v1175
  %v1189 = vmul.f32 %v623, %v1175
  %v1190 = vmul.f32 %v626, %v1175
  %v1191 = vmul.f32 %v631, %v1175
  %v1192 = vmul.f32 %v634, %v1175
  %v1193 = vmul.f32 %v639, %v1175
  %v1194 = vmul.f32 %v642, %v1175
  %v1195 = vmul.f32 %v647, %v1175
  %v1196 = vmul.f32 %v650, %v1175
  %v1197 = vmul.f32 %v655, %v1175
  %v1198 = vmul.f32 %v658, %v1175
  %v1199 = vmul.f32 %v663, %v1175
  %v1200 = vmul.f32 %v666, %v1175
  %v1201 = vmul.f32 %v671, %v1175
  %v1202 = vmul.f32 %v674, %v1175
  %v1203 = vmul.f32 %v679, %v1175
  %v1204 = vmul.f32 %v682, %v1175
  %v1205 = vmul.f32 %v687, %v1175
  %v1206 = vmul.f32 %v690, %v1175
  %v1207 = vmul.f32 %v695, %v1175
  %v1208 = vmul.f32 %v698, %v1175
  %v1209 = vmul.f32 %v703, %v1175
  %v1210 = vmul.f32 %v706, %v1175
  %v1211 = vmul.f32 %v711, %v1175
  %v1212 = vmul.f32 %v714, %v1175
  %v1213 = vmul.f32 %v719, %v1175
  %v1214 = vmul.f32 %v722, %v1175
  %v1215 = vmul.f32 %v727, %v1175
  %v1216 = vmul.f32 %v730, %v1175
  %v1217 = vmul.f32 %v735, %v1175
  %v1218 = vmul.f32 %v738, %v1175
  %v1219 = vmul.f32 %v743, %v1175
  %v1220 = vmul.f32 %v746, %v1175
  %v1221 = vmul.f32 %v751, %v1175
  %v1222 = vmul.f32 %v754, %v1175
  %v1223 = vmul.f32 %v759, %v1175
  %v1224 = vmul.f32 %v762, %v1175
  %v1225 = vmul.f32 %v767, %v1175
  %v1226 = vmul.f32 %v770, %v1175
  %v1227 = vmul.f32 %v775, %v1175
  %v1228 = vmul.f32 %v778, %v1175
  %v1229 = vmul.f32 %v783, %v1175
  %v1230 = vmul.f32 %v786, %v1175
  %v1231 = vmul.f32 %v791, %v1175
  %v1232 = vmul.f32 %v794, %v1175
  %v1233 = vmul.f32 %v799, %v1175
  %v1234 = vmul.f32 %v802, %v1175
  %v1235 = vmul.f32 %v807, %v1175
  %v1236 = vmul.f32 %v810, %v1175
  %v1237 = vmul.f32 %v815, %v1175
  %v1238 = vmul.f32 %v818, %v1175
  %v1239 = vmul.f32 %v823, %v1175
  %v1240 = vmul.f32 %v826, %v1175
  %v1242 = vlaneseq
  %v1243 = vshrl.u32 %v1242, 7
  %v1244 = vsub.s32 0, %v1243
  %v1245 = vrot.slane %v1170, %v1244
  %v1247 = vadd.f32 %v1177, %v1245
  %v1248 = vadd.f32 %v1178, %v1245
  %v1249 = vadd.f32 %v1179, %v1245
  %v1250 = vadd.f32 %v1180, %v1245
  %v1251 = vadd.f32 %v1181, %v1245
  %v1252 = vadd.f32 %v1182, %v1245
  %v1253 = vadd.f32 %v1183, %v1245
  %v1254 = vadd.f32 %v1184, %v1245
  %v1255 = vadd.f32 %v1185, %v1245
  %v1256 = vadd.f32 %v1186, %v1245
  %v1257 = vadd.f32 %v1187, %v1245
  %v1258 = vadd.f32 %v1188, %v1245
  %v1259 = vadd.f32 %v1189, %v1245
  %v1260 = vadd.f32 %v1190, %v1245
  %v1261 = vadd.f32 %v1191, %v1245
  %v1262 = vadd.f32 %v1192, %v1245
  %v1263 = vadd.f32 %v1193, %v1245
  %v1264 = vadd.f32 %v1194, %v1245
  %v1265 = vadd.f32 %v1195, %v1245
  %v1266 = vadd.f32 %v1196, %v1245
  %v1267 = vadd.f32 %v1197, %v1245
  %v1268 = vadd.f32 %v1198, %v1245
  %v1269 = vadd.f32 %v1199, %v1245
  %v1270 = vadd.f32 %v1200, %v1245
  %v1271 = vadd.f32 %v1201, %v1245
  %v1272 = vadd.f32 %v1202, %v1245
  %v1273 = vadd.f32 %v1203, %v1245
  %v1274 = vadd.f32 %v1204, %v1245
  %v1275 = vadd.f32 %v1205, %v1245
  %v1276 = vadd.f32 %v1206, %v1245
  %v1277 = vadd.f32 %v1207, %v1245
  %v1278 = vadd.f32 %v1208, %v1245
  %v1279 = vadd.f32 %v1209, %v1245
  %v1280 = vadd.f32 %v1210, %v1245
  %v1281 = vadd.f32 %v1211, %v1245
  %v1282 = vadd.f32 %v1212, %v1245
  %v1283 = vadd.f32 %v1213, %v1245
  %v1284 = vadd.f32 %v1214, %v1245
  %v1285 = vadd.f32 %v1215, %v1245
  %v1286 = vadd.f32 %v1216, %v1245
  %v1287 = vadd.f32 %v1217, %v1245
  %v1288 = vadd.f32 %v1218, %v1245
  %v1289 = vadd.f32 %v1219, %v1245
  %v1290 = vadd.f32 %v1220, %v1245
  %v1291 = vadd.f32 %v1221, %v1245
  %v1292 = vadd.f32 %v1222, %v1245
  %v1293 = vadd.f32 %v1223, %v1245
  %v1294 = vadd.f32 %v1224, %v1245
  %v1295 = vadd.f32 %v1225, %v1245
  %v1296 = vadd.f32 %v1226, %v1245
  %v1297 = vadd.f32 %v1227, %v1245
  %v1298 = vadd.f32 %v1228, %v1245
  %v1299 = vadd.f32 %v1229, %v1245
  %v1300 = vadd.f32 %v1230, %v1245
  %v1301 = vadd.f32 %v1231, %v1245
  %v1302 = vadd.f32 %v1232, %v1245
  %v1303 = vadd.f32 %v1233, %v1245
  %v1304 = vadd.f32 %v1234, %v1245
  %v1305 = vadd.f32 %v1235, %v1245
  %v1306 = vadd.f32 %v1236, %v1245
  %v1307 = vadd.f32 %v1237, %v1245
  %v1308 = vadd.f32 %v1238, %v1245
  %v1309 = vadd.f32 %v1239, %v1245
  %v1310 = vadd.f32 %v1240, %v1245
  %vm1311 = vcmp.ge.f32.partialorder %v1247, 0.0
  %vm1312 = vcmp.ge.f32.partialorder %v1248, 0.0
  %vm1313 = vcmp.ge.f32.partialorder %v1249, 0.0
  %vm1314 = vcmp.ge.f32.partialorder %v1250, 0.0
  %vm1315 = vcmp.ge.f32.partialorder %v1251, 0.0
  %vm1316 = vcmp.ge.f32.partialorder %v1252, 0.0
  %vm1317 = vcmp.ge.f32.partialorder %v1253, 0.0
  %vm1318 = vcmp.ge.f32.partialorder %v1254, 0.0
  %vm1319 = vcmp.ge.f32.partialorder %v1255, 0.0
  %vm1320 = vcmp.ge.f32.partialorder %v1256, 0.0
  %vm1321 = vcmp.ge.f32.partialorder %v1257, 0.0
  %vm1322 = vcmp.ge.f32.partialorder %v1258, 0.0
  %vm1323 = vcmp.ge.f32.partialorder %v1259, 0.0
  %vm1324 = vcmp.ge.f32.partialorder %v1260, 0.0
  %vm1325 = vcmp.ge.f32.partialorder %v1261, 0.0
  %vm1326 = vcmp.ge.f32.partialorder %v1262, 0.0
  %vm1327 = vcmp.ge.f32.partialorder %v1263, 0.0
  %vm1328 = vcmp.ge.f32.partialorder %v1264, 0.0
  %vm1329 = vcmp.ge.f32.partialorder %v1265, 0.0
  %vm1330 = vcmp.ge.f32.partialorder %v1266, 0.0
  %vm1331 = vcmp.ge.f32.partialorder %v1267, 0.0
  %vm1332 = vcmp.ge.f32.partialorder %v1268, 0.0
  %vm1333 = vcmp.ge.f32.partialorder %v1269, 0.0
  %vm1334 = vcmp.ge.f32.partialorder %v1270, 0.0
  %vm1335 = vcmp.ge.f32.partialorder %v1271, 0.0
  %vm1336 = vcmp.ge.f32.partialorder %v1272, 0.0
  %vm1337 = vcmp.ge.f32.partialorder %v1273, 0.0
  %vm1338 = vcmp.ge.f32.partialorder %v1274, 0.0
  %vm1339 = vcmp.ge.f32.partialorder %v1275, 0.0
  %vm1340 = vcmp.ge.f32.partialorder %v1276, 0.0
  %vm1341 = vcmp.ge.f32.partialorder %v1277, 0.0
  %vm1342 = vcmp.ge.f32.partialorder %v1278, 0.0
  %vm1343 = vcmp.ge.f32.partialorder %v1279, 0.0
  %vm1344 = vcmp.ge.f32.partialorder %v1280, 0.0
  %vm1345 = vcmp.ge.f32.partialorder %v1281, 0.0
  %vm1346 = vcmp.ge.f32.partialorder %v1282, 0.0
  %vm1347 = vcmp.ge.f32.partialorder %v1283, 0.0
  %vm1348 = vcmp.ge.f32.partialorder %v1284, 0.0
  %vm1349 = vcmp.ge.f32.partialorder %v1285, 0.0
  %vm1350 = vcmp.ge.f32.partialorder %v1286, 0.0
  %vm1351 = vcmp.ge.f32.partialorder %v1287, 0.0
  %vm1352 = vcmp.ge.f32.partialorder %v1288, 0.0
  %vm1353 = vcmp.ge.f32.partialorder %v1289, 0.0
  %vm1354 = vcmp.ge.f32.partialorder %v1290, 0.0
  %vm1355 = vcmp.ge.f32.partialorder %v1291, 0.0
  %vm1356 = vcmp.ge.f32.partialorder %v1292, 0.0
  %vm1357 = vcmp.ge.f32.partialorder %v1293, 0.0
  %vm1358 = vcmp.ge.f32.partialorder %v1294, 0.0
  %vm1359 = vcmp.ge.f32.partialorder %v1295, 0.0
  %vm1360 = vcmp.ge.f32.partialorder %v1296, 0.0
  %vm1361 = vcmp.ge.f32.partialorder %v1297, 0.0
  %vm1362 = vcmp.ge.f32.partialorder %v1298, 0.0
  %vm1363 = vcmp.ge.f32.partialorder %v1299, 0.0
  %vm1364 = vcmp.ge.f32.partialorder %v1300, 0.0
  %vm1365 = vcmp.ge.f32.partialorder %v1301, 0.0
  %vm1366 = vcmp.ge.f32.partialorder %v1302, 0.0
  %vm1367 = vcmp.ge.f32.partialorder %v1303, 0.0
  %vm1368 = vcmp.ge.f32.partialorder %v1304, 0.0
  %vm1369 = vcmp.ge.f32.partialorder %v1305, 0.0
  %vm1370 = vcmp.ge.f32.partialorder %v1306, 0.0
  %vm1371 = vcmp.ge.f32.partialorder %v1307, 0.0
  %vm1372 = vcmp.ge.f32.partialorder %v1308, 0.0
  %vm1373 = vcmp.ge.f32.partialorder %v1309, 0.0
  %vm1374 = vcmp.ge.f32.partialorder %v1310, 0.0
  %v1375 = vmul.f32 %v1247, 0.1
  %v1376 = vmul.f32 %v1248, 0.1
  %v1377 = vmul.f32 %v1249, 0.1
  %v1378 = vmul.f32 %v1250, 0.1
  %v1379 = vmul.f32 %v1251, 0.1
  %v1380 = vmul.f32 %v1252, 0.1
  %v1381 = vmul.f32 %v1253, 0.1
  %v1382 = vmul.f32 %v1254, 0.1
  %v1383 = vmul.f32 %v1255, 0.1
  %v1384 = vmul.f32 %v1256, 0.1
  %v1385 = vmul.f32 %v1257, 0.1
  %v1386 = vmul.f32 %v1258, 0.1
  %v1387 = vmul.f32 %v1259, 0.1
  %v1388 = vmul.f32 %v1260, 0.1
  %v1389 = vmul.f32 %v1261, 0.1
  %v1390 = vmul.f32 %v1262, 0.1
  %v1391 = vmul.f32 %v1263, 0.1
  %v1392 = vmul.f32 %v1264, 0.1
  %v1393 = vmul.f32 %v1265, 0.1
  %v1394 = vmul.f32 %v1266, 0.1
  %v1395 = vmul.f32 %v1267, 0.1
  %v1396 = vmul.f32 %v1268, 0.1
  %v1397 = vmul.f32 %v1269, 0.1
  %v1398 = vmul.f32 %v1270, 0.1
  %v1399 = vmul.f32 %v1271, 0.1
  %v1400 = vmul.f32 %v1272, 0.1
  %v1401 = vmul.f32 %v1273, 0.1
  %v1402 = vmul.f32 %v1274, 0.1
  %v1403 = vmul.f32 %v1275, 0.1
  %v1404 = vmul.f32 %v1276, 0.1
  %v1405 = vmul.f32 %v1277, 0.1
  %v1406 = vmul.f32 %v1278, 0.1
  %v1407 = vmul.f32 %v1279, 0.1
  %v1408 = vmul.f32 %v1280, 0.1
  %v1409 = vmul.f32 %v1281, 0.1
  %v1410 = vmul.f32 %v1282, 0.1
  %v1411 = vmul.f32 %v1283, 0.1
  %v1412 = vmul.f32 %v1284, 0.1
  %v1413 = vmul.f32 %v1285, 0.1
  %v1414 = vmul.f32 %v1286, 0.1
  %v1415 = vmul.f32 %v1287, 0.1
  %v1416 = vmul.f32 %v1288, 0.1
  %v1417 = vmul.f32 %v1289, 0.1
  %v1418 = vmul.f32 %v1290, 0.1
  %v1419 = vmul.f32 %v1291, 0.1
  %v1420 = vmul.f32 %v1292, 0.1
  %v1421 = vmul.f32 %v1293, 0.1
  %v1422 = vmul.f32 %v1294, 0.1
  %v1423 = vmul.f32 %v1295, 0.1
  %v1424 = vmul.f32 %v1296, 0.1
  %v1425 = vmul.f32 %v1297, 0.1
  %v1426 = vmul.f32 %v1298, 0.1
  %v1427 = vmul.f32 %v1299, 0.1
  %v1428 = vmul.f32 %v1300, 0.1
  %v1429 = vmul.f32 %v1301, 0.1
  %v1430 = vmul.f32 %v1302, 0.1
  %v1431 = vmul.f32 %v1303, 0.1
  %v1432 = vmul.f32 %v1304, 0.1
  %v1433 = vmul.f32 %v1305, 0.1
  %v1434 = vmul.f32 %v1306, 0.1
  %v1435 = vmul.f32 %v1307, 0.1
  %v1436 = vmul.f32 %v1308, 0.1
  %v1437 = vmul.f32 %v1309, 0.1
  %v1438 = vmul.f32 %v1310, 0.1
  %v1439 = vsel %vm1311, %v1247, %v1375
  %v1440 = vsel %vm1312, %v1248, %v1376
  %v1441 = vsel %vm1313, %v1249, %v1377
  %v1442 = vsel %vm1314, %v1250, %v1378
  %v1443 = vsel %vm1315, %v1251, %v1379
  %v1444 = vsel %vm1316, %v1252, %v1380
  %v1445 = vsel %vm1317, %v1253, %v1381
  %v1446 = vsel %vm1318, %v1254, %v1382
  %v1447 = vsel %vm1319, %v1255, %v1383
  %v1448 = vsel %vm1320, %v1256, %v1384
  %v1449 = vsel %vm1321, %v1257, %v1385
  %v1450 = vsel %vm1322, %v1258, %v1386
  %v1451 = vsel %vm1323, %v1259, %v1387
  %v1452 = vsel %vm1324, %v1260, %v1388
  %v1453 = vsel %vm1325, %v1261, %v1389
  %v1454 = vsel %vm1326, %v1262, %v1390
  %v1455 = vsel %vm1327, %v1263, %v1391
  %v1456 = vsel %vm1328, %v1264, %v1392
  %v1457 = vsel %vm1329, %v1265, %v1393
  %v1458 = vsel %vm1330, %v1266, %v1394
  %v1459 = vsel %vm1331, %v1267, %v1395
  %v1460 = vsel %vm1332, %v1268, %v1396
  %v1461 = vsel %vm1333, %v1269, %v1397
  %v1462 = vsel %vm1334, %v1270, %v1398
  %v1463 = vsel %vm1335, %v1271, %v1399
  %v1464 = vsel %vm1336, %v1272, %v1400
  %v1465 = vsel %vm1337, %v1273, %v1401
  %v1466 = vsel %vm1338, %v1274, %v1402
  %v1467 = vsel %vm1339, %v1275, %v1403
  %v1468 = vsel %vm1340, %v1276, %v1404
  %v1469 = vsel %vm1341, %v1277, %v1405
  %v1470 = vsel %vm1342, %v1278, %v1406
  %v1471 = vsel %vm1343, %v1279, %v1407
  %v1472 = vsel %vm1344, %v1280, %v1408
  %v1473 = vsel %vm1345, %v1281, %v1409
  %v1474 = vsel %vm1346, %v1282, %v1410
  %v1475 = vsel %vm1347, %v1283, %v1411
  %v1476 = vsel %vm1348, %v1284, %v1412
  %v1477 = vsel %vm1349, %v1285, %v1413
  %v1478 = vsel %vm1350, %v1286, %v1414
  %v1479 = vsel %vm1351, %v1287, %v1415
  %v1480 = vsel %vm1352, %v1288, %v1416
  %v1481 = vsel %vm1353, %v1289, %v1417
  %v1482 = vsel %vm1354, %v1290, %v1418
  %v1483 = vsel %vm1355, %v1291, %v1419
  %v1484 = vsel %vm1356, %v1292, %v1420
  %v1485 = vsel %vm1357, %v1293, %v1421
  %v1486 = vsel %vm1358, %v1294, %v1422
  %v1487 = vsel %vm1359, %v1295, %v1423
  %v1488 = vsel %vm1360, %v1296, %v1424
  %v1489 = vsel %vm1361, %v1297, %v1425
  %v1490 = vsel %vm1362, %v1298, %v1426
  %v1491 = vsel %vm1363, %v1299, %v1427
  %v1492 = vsel %vm1364, %v1300, %v1428
  %v1493 = vsel %vm1365, %v1301, %v1429
  %v1494 = vsel %vm1366, %v1302, %v1430
  %v1495 = vsel %vm1367, %v1303, %v1431
  %v1496 = vsel %vm1368, %v1304, %v1432
  %v1497 = vsel %vm1369, %v1305, %v1433
  %v1498 = vsel %vm1370, %v1306, %v1434
  %v1499 = vsel %vm1371, %v1307, %v1435
  %v1500 = vsel %vm1372, %v1308, %v1436
  %v1501 = vsel %vm1373, %v1309, %v1437
  %v1502 = vsel %vm1374, %v1310, %v1438
  %v1503 = vpack.c.bf16 %v1440, %v1439
  %v1504 = vpack.c.bf16 %v1442, %v1441
  %v1505 = vpack.c.bf16 %v1444, %v1443
  %v1506 = vpack.c.bf16 %v1446, %v1445
  %v1507 = vpack.c.bf16 %v1448, %v1447
  %v1508 = vpack.c.bf16 %v1450, %v1449
  %v1509 = vpack.c.bf16 %v1452, %v1451
  %v1510 = vpack.c.bf16 %v1454, %v1453
  %v1511 = vpack.c.bf16 %v1456, %v1455
  %v1512 = vpack.c.bf16 %v1458, %v1457
  %v1513 = vpack.c.bf16 %v1460, %v1459
  %v1514 = vpack.c.bf16 %v1462, %v1461
  %v1515 = vpack.c.bf16 %v1464, %v1463
  %v1516 = vpack.c.bf16 %v1466, %v1465
  %v1517 = vpack.c.bf16 %v1468, %v1467
  %v1518 = vpack.c.bf16 %v1470, %v1469
  %v1519 = vpack.c.bf16 %v1472, %v1471
  %v1520 = vpack.c.bf16 %v1474, %v1473
  %v1521 = vpack.c.bf16 %v1476, %v1475
  %v1522 = vpack.c.bf16 %v1478, %v1477
  %v1523 = vpack.c.bf16 %v1480, %v1479
  %v1524 = vpack.c.bf16 %v1482, %v1481
  %v1525 = vpack.c.bf16 %v1484, %v1483
  %v1526 = vpack.c.bf16 %v1486, %v1485
  %v1527 = vpack.c.bf16 %v1488, %v1487
  %v1528 = vpack.c.bf16 %v1490, %v1489
  %v1529 = vpack.c.bf16 %v1492, %v1491
  %v1530 = vpack.c.bf16 %v1494, %v1493
  %v1531 = vpack.c.bf16 %v1496, %v1495
  %v1532 = vpack.c.bf16 %v1498, %v1497
  %v1533 = vpack.c.bf16 %v1500, %v1499
  %v1534 = vpack.c.bf16 %v1502, %v1501
  %v1567 = vunpack.c.l.b16 %v1503
  %v1568 = vunpack.c.h.b16 %v1503
  %v1569 = vunpack.c.l.b16 %v1504
  %v1570 = vunpack.c.h.b16 %v1504
  %v1571 = vunpack.c.l.b16 %v1505
  %v1572 = vunpack.c.h.b16 %v1505
  %v1573 = vunpack.c.l.b16 %v1506
  %v1574 = vunpack.c.h.b16 %v1506
  %v1575 = vunpack.c.l.b16 %v1507
  %v1576 = vunpack.c.h.b16 %v1507
  %v1577 = vunpack.c.l.b16 %v1508
  %v1578 = vunpack.c.h.b16 %v1508
  %v1579 = vunpack.c.l.b16 %v1509
  %v1580 = vunpack.c.h.b16 %v1509
  %v1581 = vunpack.c.l.b16 %v1510
  %v1582 = vunpack.c.h.b16 %v1510
  %v1583 = vunpack.c.l.b16 %v1511
  %v1584 = vunpack.c.h.b16 %v1511
  %v1585 = vunpack.c.l.b16 %v1512
  %v1586 = vunpack.c.h.b16 %v1512
  %v1587 = vunpack.c.l.b16 %v1513
  %v1588 = vunpack.c.h.b16 %v1513
  %v1589 = vunpack.c.l.b16 %v1514
  %v1590 = vunpack.c.h.b16 %v1514
  %v1591 = vunpack.c.l.b16 %v1515
  %v1592 = vunpack.c.h.b16 %v1515
  %v1593 = vunpack.c.l.b16 %v1516
  %v1594 = vunpack.c.h.b16 %v1516
  %v1595 = vunpack.c.l.b16 %v1517
  %v1596 = vunpack.c.h.b16 %v1517
  %v1597 = vunpack.c.l.b16 %v1518
  %v1598 = vunpack.c.h.b16 %v1518
  %v1599 = vunpack.c.l.b16 %v1519
  %v1600 = vunpack.c.h.b16 %v1519
  %v1601 = vunpack.c.l.b16 %v1520
  %v1602 = vunpack.c.h.b16 %v1520
  %v1603 = vunpack.c.l.b16 %v1521
  %v1604 = vunpack.c.h.b16 %v1521
  %v1605 = vunpack.c.l.b16 %v1522
  %v1606 = vunpack.c.h.b16 %v1522
  %v1607 = vunpack.c.l.b16 %v1523
  %v1608 = vunpack.c.h.b16 %v1523
  %v1609 = vunpack.c.l.b16 %v1524
  %v1610 = vunpack.c.h.b16 %v1524
  %v1611 = vunpack.c.l.b16 %v1525
  %v1612 = vunpack.c.h.b16 %v1525
  %v1613 = vunpack.c.l.b16 %v1526
  %v1614 = vunpack.c.h.b16 %v1526
  %v1615 = vunpack.c.l.b16 %v1527
  %v1616 = vunpack.c.h.b16 %v1527
  %v1617 = vunpack.c.l.b16 %v1528
  %v1618 = vunpack.c.h.b16 %v1528
  %v1619 = vunpack.c.l.b16 %v1529
  %v1620 = vunpack.c.h.b16 %v1529
  %v1621 = vunpack.c.l.b16 %v1530
  %v1622 = vunpack.c.h.b16 %v1530
  %v1623 = vunpack.c.l.b16 %v1531
  %v1624 = vunpack.c.h.b16 %v1531
  %v1625 = vunpack.c.l.b16 %v1532
  %v1626 = vunpack.c.h.b16 %v1532
  %v1627 = vunpack.c.l.b16 %v1533
  %v1628 = vunpack.c.h.b16 %v1533
  %v1629 = vunpack.c.l.b16 %v1534
  %v1630 = vunpack.c.h.b16 %v1534
  %v1631 = vpack.c.b16 %v1567, %v1567
  %v1632 = vpack.c.b16 %v1568, %v1568
  %v1633 = vpack.c.b16 %v1569, %v1569
  %v1634 = vpack.c.b16 %v1570, %v1570
  %v1635 = vpack.c.b16 %v1571, %v1571
  %v1636 = vpack.c.b16 %v1572, %v1572
  %v1637 = vpack.c.b16 %v1573, %v1573
  %v1638 = vpack.c.b16 %v1574, %v1574
  %v1639 = vpack.c.b16 %v1575, %v1575
  %v1640 = vpack.c.b16 %v1576, %v1576
  %v1641 = vpack.c.b16 %v1577, %v1577
  %v1642 = vpack.c.b16 %v1578, %v1578
  %v1643 = vpack.c.b16 %v1579, %v1579
  %v1644 = vpack.c.b16 %v1580, %v1580
  %v1645 = vpack.c.b16 %v1581, %v1581
  %v1646 = vpack.c.b16 %v1582, %v1582
  %v1647 = vpack.c.b16 %v1583, %v1583
  %v1648 = vpack.c.b16 %v1584, %v1584
  %v1649 = vpack.c.b16 %v1585, %v1585
  %v1650 = vpack.c.b16 %v1586, %v1586
  %v1651 = vpack.c.b16 %v1587, %v1587
  %v1652 = vpack.c.b16 %v1588, %v1588
  %v1653 = vpack.c.b16 %v1589, %v1589
  %v1654 = vpack.c.b16 %v1590, %v1590
  %v1655 = vpack.c.b16 %v1591, %v1591
  %v1656 = vpack.c.b16 %v1592, %v1592
  %v1657 = vpack.c.b16 %v1593, %v1593
  %v1658 = vpack.c.b16 %v1594, %v1594
  %v1659 = vpack.c.b16 %v1595, %v1595
  %v1660 = vpack.c.b16 %v1596, %v1596
  %v1661 = vpack.c.b16 %v1597, %v1597
  %v1662 = vpack.c.b16 %v1598, %v1598
  %v1663 = vpack.c.b16 %v1599, %v1599
  %v1664 = vpack.c.b16 %v1600, %v1600
  %v1665 = vpack.c.b16 %v1601, %v1601
  %v1666 = vpack.c.b16 %v1602, %v1602
  %v1667 = vpack.c.b16 %v1603, %v1603
  %v1668 = vpack.c.b16 %v1604, %v1604
  %v1669 = vpack.c.b16 %v1605, %v1605
  %v1670 = vpack.c.b16 %v1606, %v1606
  %v1671 = vpack.c.b16 %v1607, %v1607
  %v1672 = vpack.c.b16 %v1608, %v1608
  %v1673 = vpack.c.b16 %v1609, %v1609
  %v1674 = vpack.c.b16 %v1610, %v1610
  %v1675 = vpack.c.b16 %v1611, %v1611
  %v1676 = vpack.c.b16 %v1612, %v1612
  %v1677 = vpack.c.b16 %v1613, %v1613
  %v1678 = vpack.c.b16 %v1614, %v1614
  %v1679 = vpack.c.b16 %v1615, %v1615
  %v1680 = vpack.c.b16 %v1616, %v1616
  %v1681 = vpack.c.b16 %v1617, %v1617
  %v1682 = vpack.c.b16 %v1618, %v1618
  %v1683 = vpack.c.b16 %v1619, %v1619
  %v1684 = vpack.c.b16 %v1620, %v1620
  %v1685 = vpack.c.b16 %v1621, %v1621
  %v1686 = vpack.c.b16 %v1622, %v1622
  %v1687 = vpack.c.b16 %v1623, %v1623
  %v1688 = vpack.c.b16 %v1624, %v1624
  %v1689 = vpack.c.b16 %v1625, %v1625
  %v1690 = vpack.c.b16 %v1626, %v1626
  %v1691 = vpack.c.b16 %v1627, %v1627
  %v1692 = vpack.c.b16 %v1628, %v1628
  %v1693 = vpack.c.b16 %v1629, %v1629
  %v1694 = vpack.c.b16 %v1630, %v1630
  %vm1759 = vcmask 257024
  %1760 = vst.msk [vmem:[%s5] sm:$0xf] %vm1759, %v1631
  %1761 = vst.msk [vmem:[%s5 + $0x4] sm:$0xf] %vm1759, %v1632
  %1762 = vst.msk [vmem:[%s5 + $0x8] sm:$0xf] %vm1759, %v1633
  %1763 = vst.msk [vmem:[%s5 + $0xc] sm:$0xf] %vm1759, %v1634
  %1764 = vst.msk [vmem:[%s5 + $0x10] sm:$0xf] %vm1759, %v1635
  %1765 = vst.msk [vmem:[%s5 + $0x14] sm:$0xf] %vm1759, %v1636
  %1766 = vst.msk [vmem:[%s5 + $0x18] sm:$0xf] %vm1759, %v1637
  %1767 = vst.msk [vmem:[%s5 + $0x1c] sm:$0xf] %vm1759, %v1638
  %1768 = vst.msk [vmem:[%s5 + $0x20] sm:$0xf] %vm1759, %v1639
  %1769 = vst.msk [vmem:[%s5 + $0x24] sm:$0xf] %vm1759, %v1640
  %1770 = vst.msk [vmem:[%s5 + $0x28] sm:$0xf] %vm1759, %v1641
  %1771 = vst.msk [vmem:[%s5 + $0x2c] sm:$0xf] %vm1759, %v1642
  %1772 = vst.msk [vmem:[%s5 + $0x30] sm:$0xf] %vm1759, %v1643
  %1773 = vst.msk [vmem:[%s5 + $0x34] sm:$0xf] %vm1759, %v1644
  %1774 = vst.msk [vmem:[%s5 + $0x38] sm:$0xf] %vm1759, %v1645
  %1775 = vst.msk [vmem:[%s5 + $0x3c] sm:$0xf] %vm1759, %v1646
  %1776 = vst.msk [vmem:[%s5 + $0x40] sm:$0xf] %vm1759, %v1647
  %1777 = vst.msk [vmem:[%s5 + $0x44] sm:$0xf] %vm1759, %v1648
  %1778 = vst.msk [vmem:[%s5 + $0x48] sm:$0xf] %vm1759, %v1649
  %1779 = vst.msk [vmem:[%s5 + $0x4c] sm:$0xf] %vm1759, %v1650
  %1780 = vst.msk [vmem:[%s5 + $0x50] sm:$0xf] %vm1759, %v1651
  %1781 = vst.msk [vmem:[%s5 + $0x54] sm:$0xf] %vm1759, %v1652
  %1782 = vst.msk [vmem:[%s5 + $0x58] sm:$0xf] %vm1759, %v1653
  %1783 = vst.msk [vmem:[%s5 + $0x5c] sm:$0xf] %vm1759, %v1654
  %1784 = vst.msk [vmem:[%s5 + $0x60] sm:$0xf] %vm1759, %v1655
  %1785 = vst.msk [vmem:[%s5 + $0x64] sm:$0xf] %vm1759, %v1656
  %1786 = vst.msk [vmem:[%s5 + $0x68] sm:$0xf] %vm1759, %v1657
  %1787 = vst.msk [vmem:[%s5 + $0x6c] sm:$0xf] %vm1759, %v1658
  %1788 = vst.msk [vmem:[%s5 + $0x70] sm:$0xf] %vm1759, %v1659
  %1789 = vst.msk [vmem:[%s5 + $0x74] sm:$0xf] %vm1759, %v1660
  %1790 = vst.msk [vmem:[%s5 + $0x78] sm:$0xf] %vm1759, %v1661
  %1791 = vst.msk [vmem:[%s5 + $0x7c] sm:$0xf] %vm1759, %v1662
  %1792 = vst.msk [vmem:[%s5 + $0x80] sm:$0xf] %vm1759, %v1663
  %1793 = vst.msk [vmem:[%s5 + $0x84] sm:$0xf] %vm1759, %v1664
  %1794 = vst.msk [vmem:[%s5 + $0x88] sm:$0xf] %vm1759, %v1665
  %1795 = vst.msk [vmem:[%s5 + $0x8c] sm:$0xf] %vm1759, %v1666
  %1796 = vst.msk [vmem:[%s5 + $0x90] sm:$0xf] %vm1759, %v1667
  %1797 = vst.msk [vmem:[%s5 + $0x94] sm:$0xf] %vm1759, %v1668
  %1798 = vst.msk [vmem:[%s5 + $0x98] sm:$0xf] %vm1759, %v1669
  %1799 = vst.msk [vmem:[%s5 + $0x9c] sm:$0xf] %vm1759, %v1670
  %1800 = vst.msk [vmem:[%s5 + $0xa0] sm:$0xf] %vm1759, %v1671
  %1801 = vst.msk [vmem:[%s5 + $0xa4] sm:$0xf] %vm1759, %v1672
  %1802 = vst.msk [vmem:[%s5 + $0xa8] sm:$0xf] %vm1759, %v1673
  %1803 = vst.msk [vmem:[%s5 + $0xac] sm:$0xf] %vm1759, %v1674
  %1804 = vst.msk [vmem:[%s5 + $0xb0] sm:$0xf] %vm1759, %v1675
  %1805 = vst.msk [vmem:[%s5 + $0xb4] sm:$0xf] %vm1759, %v1676
  %1806 = vst.msk [vmem:[%s5 + $0xb8] sm:$0xf] %vm1759, %v1677
  %1807 = vst.msk [vmem:[%s5 + $0xbc] sm:$0xf] %vm1759, %v1678
  %1808 = vst.msk [vmem:[%s5 + $0xc0] sm:$0xf] %vm1759, %v1679
  %1809 = vst.msk [vmem:[%s5 + $0xc4] sm:$0xf] %vm1759, %v1680
  %1810 = vst.msk [vmem:[%s5 + $0xc8] sm:$0xf] %vm1759, %v1681
  %1811 = vst.msk [vmem:[%s5 + $0xcc] sm:$0xf] %vm1759, %v1682
  %1812 = vst.msk [vmem:[%s5 + $0xd0] sm:$0xf] %vm1759, %v1683
  %1813 = vst.msk [vmem:[%s5 + $0xd4] sm:$0xf] %vm1759, %v1684
  %1814 = vst.msk [vmem:[%s5 + $0xd8] sm:$0xf] %vm1759, %v1685
  %1815 = vst.msk [vmem:[%s5 + $0xdc] sm:$0xf] %vm1759, %v1686
  %1816 = vst.msk [vmem:[%s5 + $0xe0] sm:$0xf] %vm1759, %v1687
  %1817 = vst.msk [vmem:[%s5 + $0xe4] sm:$0xf] %vm1759, %v1688
  %1818 = vst.msk [vmem:[%s5 + $0xe8] sm:$0xf] %vm1759, %v1689
  %1819 = vst.msk [vmem:[%s5 + $0xec] sm:$0xf] %vm1759, %v1690
  %1820 = vst.msk [vmem:[%s5 + $0xf0] sm:$0xf] %vm1759, %v1691
  %1821 = vst.msk [vmem:[%s5 + $0xf4] sm:$0xf] %vm1759, %v1692
  %1822 = vst.msk [vmem:[%s5 + $0xf8] sm:$0xf] %vm1759, %v1693
  %1823 = vst.msk [vmem:[%s5 + $0xfc] sm:$0xf] %vm1759, %v1694
  // Predicated region
  $region22: #{discriminator_forward.6} parent=0 // pred_check
    _
  $region23: #{discriminator_forward.6} parent=0 // pred_check_branch
    %1825 = sbr.rel (0) target = $region25
  $region24: #{discriminator_forward.6} parent=0 // pred_region
    _
  $region25: #{discriminator_forward.6} parent=0 // pred_fallthru
    _
  // Predicated region
  $region26: #{discriminator_forward.6} parent=0 // pred_check
    _
  $region27: #{discriminator_forward.6} parent=0 // pred_check_branch
    %1827 = sbr.rel (0) target = $region29
  $region28: #{discriminator_forward.6} parent=0 // pred_region
    _
  $region29: #{discriminator_forward.6} parent=0 // pred_fallthru
    _

// kernel: discriminator_forward.7
$region0: #{discriminator_forward.7}
  #allocation0 [shape = 'u32[]', space=smem, size = 0x4, offset = 0x4, fixed_abs, tag = 'smem constant byte address 0x4 - core index']
  #allocation1 [shape = 'u32[144,128]{1,0:T(1,128)}', space=vmem, size = 0x12000, scoped, tag = 'internal scratch']
  %s0 = inlined_call_operand.vmem [shape: bf16[128,512], index: 0, kind: input, shape index: {}]
  %s1 = inlined_call_operand.vmem [shape: bf16[512,64], index: 1, kind: input, shape index: {}]
  %s2 = inlined_call_operand.vmem [shape: f32[1,64], index: 2, kind: input, shape index: {}]
  %s3 = inlined_call_operand.vmem [shape: f32[1,64], index: 3, kind: input, shape index: {}]
  %s4 = inlined_call_operand.vmem [shape: f32[1,64], index: 4, kind: input, shape index: {}]
  %s5 = inlined_call_operand.vmem [shape: bf16[128,64], index: 5, kind: output, shape index: {}]
  %s6 = sld [smem:[#allocation0]]
  $region30: #{discriminator_forward.7} parent=0
    _
  %s8 = ssub.s32 1, %s6
  %s9 = scalar_select 0, %s8, %s6
  // Predicated region
  $region2: #{discriminator_forward.7} parent=0 // pred_check
    _
  $region3: #{discriminator_forward.7} parent=0 // pred_check_branch
    %11 = sbr.rel (0) target = $region5
  $region4: #{discriminator_forward.7} parent=0 // pred_region
    _
  $region5: #{discriminator_forward.7} parent=0 // pred_fallthru
    _
  // Predicated region
  $region6: #{discriminator_forward.7} parent=0 // pred_check
    _
  $region7: #{discriminator_forward.7} parent=0 // pred_check_branch
    %13 = sbr.rel (0) target = $region9
  $region8: #{discriminator_forward.7} parent=0 // pred_region
    _
  $region9: #{discriminator_forward.7} parent=0 // pred_fallthru
    _
  // Predicated region
  $region10: #{discriminator_forward.7} parent=0 // pred_check
    _
  $region11: #{discriminator_forward.7} parent=0 // pred_check_branch
    %15 = sbr.rel (0) target = $region13
  $region12: #{discriminator_forward.7} parent=0 // pred_region
    _
  $region13: #{discriminator_forward.7} parent=0 // pred_fallthru
    _
  // Predicated region
  $region14: #{discriminator_forward.7} parent=0 // pred_check
    _
  $region15: #{discriminator_forward.7} parent=0 // pred_check_branch
    %17 = sbr.rel (0) target = $region17
  $region16: #{discriminator_forward.7} parent=0 // pred_region
    _
  $region17: #{discriminator_forward.7} parent=0 // pred_fallthru
    _
  // Predicated region
  $region18: #{discriminator_forward.7} parent=0 // pred_check
    _
  $region19: #{discriminator_forward.7} parent=0 // pred_check_branch
    %19 = sbr.rel (0) target = $region21
  $region20: #{discriminator_forward.7} parent=0 // pred_region
    _
  $region21: #{discriminator_forward.7} parent=0 // pred_fallthru
    _
  %v21 = vld [vmem:[%s0] sm:$0xff]
  %v22 = vld [vmem:[%s0 + $0x8] sm:$0xff]
  %v23 = vld [vmem:[%s0 + $0x10] sm:$0xff]
  %v24 = vld [vmem:[%s0 + $0x18] sm:$0xff]
  %v25 = vld [vmem:[%s0 + $0x20] sm:$0xff]
  %v26 = vld [vmem:[%s0 + $0x28] sm:$0xff]
  %v27 = vld [vmem:[%s0 + $0x30] sm:$0xff]
  %v28 = vld [vmem:[%s0 + $0x38] sm:$0xff]
  %v29 = vld [vmem:[%s0 + $0x40] sm:$0xff]
  %v30 = vld [vmem:[%s0 + $0x48] sm:$0xff]
  %v31 = vld [vmem:[%s0 + $0x50] sm:$0xff]
  %v32 = vld [vmem:[%s0 + $0x58] sm:$0xff]
  %v33 = vld [vmem:[%s0 + $0x60] sm:$0xff]
  %v34 = vld [vmem:[%s0 + $0x68] sm:$0xff]
  %v35 = vld [vmem:[%s0 + $0x70] sm:$0xff]
  %v36 = vld [vmem:[%s0 + $0x78] sm:$0xff]
  %v37 = vld [vmem:[%s0 + $0x80] sm:$0xff]
  %v38 = vld [vmem:[%s0 + $0x88] sm:$0xff]
  %v39 = vld [vmem:[%s0 + $0x90] sm:$0xff]
  %v40 = vld [vmem:[%s0 + $0x98] sm:$0xff]
  %v41 = vld [vmem:[%s0 + $0xa0] sm:$0xff]
  %v42 = vld [vmem:[%s0 + $0xa8] sm:$0xff]
  %v43 = vld [vmem:[%s0 + $0xb0] sm:$0xff]
  %v44 = vld [vmem:[%s0 + $0xb8] sm:$0xff]
  %v45 = vld [vmem:[%s0 + $0xc0] sm:$0xff]
  %v46 = vld [vmem:[%s0 + $0xc8] sm:$0xff]
  %v47 = vld [vmem:[%s0 + $0xd0] sm:$0xff]
  %v48 = vld [vmem:[%s0 + $0xd8] sm:$0xff]
  %v49 = vld [vmem:[%s0 + $0xe0] sm:$0xff]
  %v50 = vld [vmem:[%s0 + $0xe8] sm:$0xff]
  %v51 = vld [vmem:[%s0 + $0xf0] sm:$0xff]
  %v52 = vld [vmem:[%s0 + $0xf8] sm:$0xff]
  %v53 = vld [vmem:[%s1] sm:$0xf]
  %v54 = vld [vmem:[%s1 + $0x4] sm:$0xf]
  %v55 = vld [vmem:[%s1 + $0x8] sm:$0xf]
  %v56 = vld [vmem:[%s1 + $0xc] sm:$0xf]
  %v57 = vld [vmem:[%s1 + $0x10] sm:$0xf]
  %v58 = vld [vmem:[%s1 + $0x14] sm:$0xf]
  %v59 = vld [vmem:[%s1 + $0x18] sm:$0xf]
  %v60 = vld [vmem:[%s1 + $0x1c] sm:$0xf]
  %v61 = vld [vmem:[%s1 + $0x20] sm:$0xf]
  %v62 = vld [vmem:[%s1 + $0x24] sm:$0xf]
  %v63 = vld [vmem:[%s1 + $0x28] sm:$0xf]
  %v64 = vld [vmem:[%s1 + $0x2c] sm:$0xf]
  %v65 = vld [vmem:[%s1 + $0x30] sm:$0xf]
  %v66 = vld [vmem:[%s1 + $0x34] sm:$0xf]
  %v67 = vld [vmem:[%s1 + $0x38] sm:$0xf]
  %v68 = vld [vmem:[%s1 + $0x3c] sm:$0xf]
  %v69 = vld [vmem:[%s1 + $0x40] sm:$0xf]
  %v70 = vld [vmem:[%s1 + $0x44] sm:$0xf]
  %v71 = vld [vmem:[%s1 + $0x48] sm:$0xf]
  %v72 = vld [vmem:[%s1 + $0x4c] sm:$0xf]
  %v73 = vld [vmem:[%s1 + $0x50] sm:$0xf]
  %v74 = vld [vmem:[%s1 + $0x54] sm:$0xf]
  %v75 = vld [vmem:[%s1 + $0x58] sm:$0xf]
  %v76 = vld [vmem:[%s1 + $0x5c] sm:$0xf]
  %v77 = vld [vmem:[%s1 + $0x60] sm:$0xf]
  %v78 = vld [vmem:[%s1 + $0x64] sm:$0xf]
  %v79 = vld [vmem:[%s1 + $0x68] sm:$0xf]
  %v80 = vld [vmem:[%s1 + $0x6c] sm:$0xf]
  %v81 = vld [vmem:[%s1 + $0x70] sm:$0xf]
  %v82 = vld [vmem:[%s1 + $0x74] sm:$0xf]
  %v83 = vld [vmem:[%s1 + $0x78] sm:$0xf]
  %v84 = vld [vmem:[%s1 + $0x7c] sm:$0xf]
  %v85 = vld [vmem:[%s1 + $0x80] sm:$0xf]
  %v86 = vld [vmem:[%s1 + $0x84] sm:$0xf]
  %v87 = vld [vmem:[%s1 + $0x88] sm:$0xf]
  %v88 = vld [vmem:[%s1 + $0x8c] sm:$0xf]
  %v89 = vld [vmem:[%s1 + $0x90] sm:$0xf]
  %v90 = vld [vmem:[%s1 + $0x94] sm:$0xf]
  %v91 = vld [vmem:[%s1 + $0x98] sm:$0xf]
  %v92 = vld [vmem:[%s1 + $0x9c] sm:$0xf]
  %v93 = vld [vmem:[%s1 + $0xa0] sm:$0xf]
  %v94 = vld [vmem:[%s1 + $0xa4] sm:$0xf]
  %v95 = vld [vmem:[%s1 + $0xa8] sm:$0xf]
  %v96 = vld [vmem:[%s1 + $0xac] sm:$0xf]
  %v97 = vld [vmem:[%s1 + $0xb0] sm:$0xf]
  %v98 = vld [vmem:[%s1 + $0xb4] sm:$0xf]
  %v99 = vld [vmem:[%s1 + $0xb8] sm:$0xf]
  %v100 = vld [vmem:[%s1 + $0xbc] sm:$0xf]
  %v101 = vld [vmem:[%s1 + $0xc0] sm:$0xf]
  %v102 = vld [vmem:[%s1 + $0xc4] sm:$0xf]
  %v103 = vld [vmem:[%s1 + $0xc8] sm:$0xf]
  %v104 = vld [vmem:[%s1 + $0xcc] sm:$0xf]
  %v105 = vld [vmem:[%s1 + $0xd0] sm:$0xf]
  %v106 = vld [vmem:[%s1 + $0xd4] sm:$0xf]
  %v107 = vld [vmem:[%s1 + $0xd8] sm:$0xf]
  %v108 = vld [vmem:[%s1 + $0xdc] sm:$0xf]
  %v109 = vld [vmem:[%s1 + $0xe0] sm:$0xf]
  %v110 = vld [vmem:[%s1 + $0xe4] sm:$0xf]
  %v111 = vld [vmem:[%s1 + $0xe8] sm:$0xf]
  %v112 = vld [vmem:[%s1 + $0xec] sm:$0xf]
  %v113 = vld [vmem:[%s1 + $0xf0] sm:$0xf]
  %v114 = vld [vmem:[%s1 + $0xf4] sm:$0xf]
  %v115 = vld [vmem:[%s1 + $0xf8] sm:$0xf]
  %v116 = vld [vmem:[%s1 + $0xfc] sm:$0xf]
  %v117 = vld [vmem:[%s2] sm:$0x1]
  %v119 = vlaneseq
  %v120 = vshrl.u32 %v119, 7
  %v121 = vsub.s32 0, %v120
  %v122 = vrot.slane %v117, %v121
  %v156 = vunpack.c.l.b16 %v21
  %v157 = vunpack.c.h.b16 %v21
  %v158 = vunpack.c.l.b16 %v22
  %v159 = vunpack.c.h.b16 %v22
  %v160 = vunpack.c.l.b16 %v23
  %v161 = vunpack.c.h.b16 %v23
  %v162 = vunpack.c.l.b16 %v24
  %v163 = vunpack.c.h.b16 %v24
  %v164 = vunpack.c.l.b16 %v25
  %v165 = vunpack.c.h.b16 %v25
  %v166 = vunpack.c.l.b16 %v26
  %v167 = vunpack.c.h.b16 %v26
  %v168 = vunpack.c.l.b16 %v27
  %v169 = vunpack.c.h.b16 %v27
  %v170 = vunpack.c.l.b16 %v28
  %v171 = vunpack.c.h.b16 %v28
  %v172 = vunpack.c.l.b16 %v29
  %v173 = vunpack.c.h.b16 %v29
  %v174 = vunpack.c.l.b16 %v30
  %v175 = vunpack.c.h.b16 %v30
  %v176 = vunpack.c.l.b16 %v31
  %v177 = vunpack.c.h.b16 %v31
  %v178 = vunpack.c.l.b16 %v32
  %v179 = vunpack.c.h.b16 %v32
  %v180 = vunpack.c.l.b16 %v33
  %v181 = vunpack.c.h.b16 %v33
  %v182 = vunpack.c.l.b16 %v34
  %v183 = vunpack.c.h.b16 %v34
  %v184 = vunpack.c.l.b16 %v35
  %v185 = vunpack.c.h.b16 %v35
  %v186 = vunpack.c.l.b16 %v36
  %v187 = vunpack.c.h.b16 %v36
  %v188 = vunpack.c.l.b16 %v37
  %v189 = vunpack.c.h.b16 %v37
  %v190 = vunpack.c.l.b16 %v38
  %v191 = vunpack.c.h.b16 %v38
  %v192 = vunpack.c.l.b16 %v39
  %v193 = vunpack.c.h.b16 %v39
  %v194 = vunpack.c.l.b16 %v40
  %v195 = vunpack.c.h.b16 %v40
  %v196 = vunpack.c.l.b16 %v41
  %v197 = vunpack.c.h.b16 %v41
  %v198 = vunpack.c.l.b16 %v42
  %v199 = vunpack.c.h.b16 %v42
  %v200 = vunpack.c.l.b16 %v43
  %v201 = vunpack.c.h.b16 %v43
  %v202 = vunpack.c.l.b16 %v44
  %v203 = vunpack.c.h.b16 %v44
  %v204 = vunpack.c.l.b16 %v45
  %v205 = vunpack.c.h.b16 %v45
  %v206 = vunpack.c.l.b16 %v46
  %v207 = vunpack.c.h.b16 %v46
  %v208 = vunpack.c.l.b16 %v47
  %v209 = vunpack.c.h.b16 %v47
  %v210 = vunpack.c.l.b16 %v48
  %v211 = vunpack.c.h.b16 %v48
  %v212 = vunpack.c.l.b16 %v49
  %v213 = vunpack.c.h.b16 %v49
  %v214 = vunpack.c.l.b16 %v50
  %v215 = vunpack.c.h.b16 %v50
  %v216 = vunpack.c.l.b16 %v51
  %v217 = vunpack.c.h.b16 %v51
  %v218 = vunpack.c.l.b16 %v52
  %v219 = vunpack.c.h.b16 %v52
  %v220 = vpack.c.b16 %v160, %v156
  %v221 = vpack.c.b16 %v161, %v157
  %v222 = vpack.c.b16 %v162, %v158
  %v223 = vpack.c.b16 %v163, %v159
  %v224 = vpack.c.b16 %v168, %v164
  %v225 = vpack.c.b16 %v169, %v165
  %v226 = vpack.c.b16 %v170, %v166
  %v227 = vpack.c.b16 %v171, %v167
  %v228 = vpack.c.b16 %v176, %v172
  %v229 = vpack.c.b16 %v177, %v173
  %v230 = vpack.c.b16 %v178, %v174
  %v231 = vpack.c.b16 %v179, %v175
  %v232 = vpack.c.b16 %v184, %v180
  %v233 = vpack.c.b16 %v185, %v181
  %v234 = vpack.c.b16 %v186, %v182
  %v235 = vpack.c.b16 %v187, %v183
  %v236 = vpack.c.b16 %v192, %v188
  %v237 = vpack.c.b16 %v193, %v189
  %v238 = vpack.c.b16 %v194, %v190
  %v239 = vpack.c.b16 %v195, %v191
  %v240 = vpack.c.b16 %v200, %v196
  %v241 = vpack.c.b16 %v201, %v197
  %v242 = vpack.c.b16 %v202, %v198
  %v243 = vpack.c.b16 %v203, %v199
  %v244 = vpack.c.b16 %v208, %v204
  %v245 = vpack.c.b16 %v209, %v205
  %v246 = vpack.c.b16 %v210, %v206
  %v247 = vpack.c.b16 %v211, %v207
  %v248 = vpack.c.b16 %v216, %v212
  %v249 = vpack.c.b16 %v217, %v213
  %v250 = vpack.c.b16 %v218, %v214
  %v251 = vpack.c.b16 %v219, %v215
  %v348 = vunpack.c.l.b16 %v53
  %v349 = vunpack.c.l.b16 %v54
  %v350 = vunpack.c.l.b16 %v55
  %v351 = vunpack.c.l.b16 %v56
  %v352 = vunpack.c.l.b16 %v57
  %v353 = vunpack.c.l.b16 %v58
  %v354 = vunpack.c.l.b16 %v59
  %v355 = vunpack.c.l.b16 %v60
  %v356 = vunpack.c.l.b16 %v61
  %v357 = vunpack.c.l.b16 %v62
  %v358 = vunpack.c.l.b16 %v63
  %v359 = vunpack.c.l.b16 %v64
  %v360 = vunpack.c.l.b16 %v65
  %v361 = vunpack.c.l.b16 %v66
  %v362 = vunpack.c.l.b16 %v67
  %v363 = vunpack.c.l.b16 %v68
  %v364 = vunpack.c.l.b16 %v69
  %v365 = vunpack.c.l.b16 %v70
  %v366 = vunpack.c.l.b16 %v71
  %v367 = vunpack.c.l.b16 %v72
  %v368 = vunpack.c.l.b16 %v73
  %v369 = vunpack.c.l.b16 %v74
  %v370 = vunpack.c.l.b16 %v75
  %v371 = vunpack.c.l.b16 %v76
  %v372 = vunpack.c.l.b16 %v77
  %v373 = vunpack.c.l.b16 %v78
  %v374 = vunpack.c.l.b16 %v79
  %v375 = vunpack.c.l.b16 %v80
  %v376 = vunpack.c.l.b16 %v81
  %v377 = vunpack.c.l.b16 %v82
  %v378 = vunpack.c.l.b16 %v83
  %v379 = vunpack.c.l.b16 %v84
  %v380 = vunpack.c.l.b16 %v85
  %v381 = vunpack.c.l.b16 %v86
  %v382 = vunpack.c.l.b16 %v87
  %v383 = vunpack.c.l.b16 %v88
  %v384 = vunpack.c.l.b16 %v89
  %v385 = vunpack.c.l.b16 %v90
  %v386 = vunpack.c.l.b16 %v91
  %v387 = vunpack.c.l.b16 %v92
  %v388 = vunpack.c.l.b16 %v93
  %v389 = vunpack.c.l.b16 %v94
  %v390 = vunpack.c.l.b16 %v95
  %v391 = vunpack.c.l.b16 %v96
  %v392 = vunpack.c.l.b16 %v97
  %v393 = vunpack.c.l.b16 %v98
  %v394 = vunpack.c.l.b16 %v99
  %v395 = vunpack.c.l.b16 %v100
  %v396 = vunpack.c.l.b16 %v101
  %v397 = vunpack.c.l.b16 %v102
  %v398 = vunpack.c.l.b16 %v103
  %v399 = vunpack.c.l.b16 %v104
  %v400 = vunpack.c.l.b16 %v105
  %v401 = vunpack.c.l.b16 %v106
  %v402 = vunpack.c.l.b16 %v107
  %v403 = vunpack.c.l.b16 %v108
  %v404 = vunpack.c.l.b16 %v109
  %v405 = vunpack.c.l.b16 %v110
  %v406 = vunpack.c.l.b16 %v111
  %v407 = vunpack.c.l.b16 %v112
  %v408 = vunpack.c.l.b16 %v113
  %v409 = vunpack.c.l.b16 %v114
  %v410 = vunpack.c.l.b16 %v115
  %v411 = vunpack.c.l.b16 %v116
  %v412 = vpack.c.b16 %v349, %v348
  %v413 = vpack.c.b16 %v351, %v350
  %v414 = vpack.c.b16 %v353, %v352
  %v415 = vpack.c.b16 %v355, %v354
  %v416 = vpack.c.b16 %v357, %v356
  %v417 = vpack.c.b16 %v359, %v358
  %v418 = vpack.c.b16 %v361, %v360
  %v419 = vpack.c.b16 %v363, %v362
  %v420 = vpack.c.b16 %v365, %v364
  %v421 = vpack.c.b16 %v367, %v366
  %v422 = vpack.c.b16 %v369, %v368
  %v423 = vpack.c.b16 %v371, %v370
  %v424 = vpack.c.b16 %v373, %v372
  %v425 = vpack.c.b16 %v375, %v374
  %v426 = vpack.c.b16 %v377, %v376
  %v427 = vpack.c.b16 %v379, %v378
  %v428 = vpack.c.b16 %v381, %v380
  %v429 = vpack.c.b16 %v383, %v382
  %v430 = vpack.c.b16 %v385, %v384
  %v431 = vpack.c.b16 %v387, %v386
  %v432 = vpack.c.b16 %v389, %v388
  %v433 = vpack.c.b16 %v391, %v390
  %v434 = vpack.c.b16 %v393, %v392
  %v435 = vpack.c.b16 %v395, %v394
  %v436 = vpack.c.b16 %v397, %v396
  %v437 = vpack.c.b16 %v399, %v398
  %v438 = vpack.c.b16 %v401, %v400
  %v439 = vpack.c.b16 %v403, %v402
  %v440 = vpack.c.b16 %v405, %v404
  %v441 = vpack.c.b16 %v407, %v406
  %v442 = vpack.c.b16 %v409, %v408
  %v443 = vpack.c.b16 %v411, %v410
  %476 = vmatprep.subr.bf16.mxu0 0
  %477 = vmatpush1.bf16.msra.mxu0 %v412
  %478 = vmatprep.subr.bf16.mxu0 0
  %479 = vmatpush1.bf16.msra.mxu0 %v413
  %480 = vmatprep.subr.bf16.mxu0 0
  %481 = vmatpush1.bf16.msra.mxu0 %v414
  %482 = vmatprep.subr.bf16.mxu0 0
  %483 = vmatpush1.bf16.msra.mxu0 %v415
  %484 = vmatprep.subr.bf16.mxu0 0
  %485 = vmatpush1.bf16.msra.mxu0 %v416
  %486 = vmatprep.subr.bf16.mxu0 0
  %487 = vmatpush1.bf16.msra.mxu0 %v417
  %488 = vmatprep.subr.bf16.mxu0 0
  %489 = vmatpush1.bf16.msra.mxu0 %v418
  %490 = vmatprep.subr.bf16.mxu0 0
  %491 = vmatpush1.bf16.msra.mxu0 %v419
  %492 = vmatprep.subr.bf16.mxu0 0
  %493 = vmatpush1.bf16.msra.mxu0 %v420
  %494 = vmatprep.subr.bf16.mxu0 0
  %495 = vmatpush1.bf16.msra.mxu0 %v421
  %496 = vmatprep.subr.bf16.mxu0 0
  %497 = vmatpush1.bf16.msra.mxu0 %v422
  %498 = vmatprep.subr.bf16.mxu0 0
  %499 = vmatpush1.bf16.msra.mxu0 %v423
  %500 = vmatprep.subr.bf16.mxu0 0
  %501 = vmatpush1.bf16.msra.mxu0 %v424
  %502 = vmatprep.subr.bf16.mxu0 0
  %503 = vmatpush1.bf16.msra.mxu0 %v425
  %504 = vmatprep.subr.bf16.mxu0 0
  %505 = vmatpush1.bf16.msra.mxu0 %v426
  %506 = vmatprep.subr.bf16.mxu0 0
  %507 = vmatpush1.bf16.msra.mxu0 %v427
  %508 = vmatprep.mubr.bf16.mxu0 %v221
  %509 = vmatmul.mubr.bf16.gmra.mrb[0].mxu0 %v220
  %v510 = vpop.f32.mrb[0].mxu0
  %v511 = vadd.f32 %v122, %v510
  %v512 = vpop.f32.mrb[0].mxu0
  %v513 = vpop.f32.mrb[0].mxu0
  %v514 = vadd.f32 %v122, %v513
  %v515 = vpop.f32.mrb[0].mxu0
  %516 = vmatprep.mubr.bf16.mxu0 %v225
  %517 = vmatmul.mubr.bf16.gmra.mrb[0].mxu0 %v224
  %v518 = vpop.f32.mrb[0].mxu0
  %v519 = vadd.f32 %v122, %v518
  %v520 = vpop.f32.mrb[0].mxu0
  %v521 = vpop.f32.mrb[0].mxu0
  %v522 = vadd.f32 %v122, %v521
  %v523 = vpop.f32.mrb[0].mxu0
  %524 = vmatprep.mubr.bf16.mxu0 %v229
  %525 = vmatmul.mubr.bf16.gmra.mrb[0].mxu0 %v228
  %v526 = vpop.f32.mrb[0].mxu0
  %v527 = vadd.f32 %v122, %v526
  %v528 = vpop.f32.mrb[0].mxu0
  %v529 = vpop.f32.mrb[0].mxu0
  %v530 = vadd.f32 %v122, %v529
  %v531 = vpop.f32.mrb[0].mxu0
  %532 = vmatprep.mubr.bf16.mxu0 %v233
  %533 = vmatmul.mubr.bf16.gmra.mrb[0].mxu0 %v232
  %v534 = vpop.f32.mrb[0].mxu0
  %v535 = vadd.f32 %v122, %v534
  %v536 = vpop.f32.mrb[0].mxu0
  %v537 = vpop.f32.mrb[0].mxu0
  %v538 = vadd.f32 %v122, %v537
  %v539 = vpop.f32.mrb[0].mxu0
  %540 = vmatprep.mubr.bf16.mxu0 %v237
  %541 = vmatmul.mubr.bf16.gmra.mrb[0].mxu0 %v236
  %v542 = vpop.f32.mrb[0].mxu0
  %v543 = vadd.f32 %v122, %v542
  %v544 = vpop.f32.mrb[0].mxu0
  %v545 = vpop.f32.mrb[0].mxu0
  %v546 = vadd.f32 %v122, %v545
  %v547 = vpop.f32.mrb[0].mxu0
  %548 = vmatprep.mubr.bf16.mxu0 %v241
  %549 = vmatmul.mubr.bf16.gmra.mrb[0].mxu0 %v240
  %v550 = vpop.f32.mrb[0].mxu0
  %v551 = vadd.f32 %v122, %v550
  %v552 = vpop.f32.mrb[0].mxu0
  %v553 = vpop.f32.mrb[0].mxu0
  %v554 = vadd.f32 %v122, %v553
  %v555 = vpop.f32.mrb[0].mxu0
  %556 = vmatprep.mubr.bf16.mxu0 %v245
  %557 = vmatmul.mubr.bf16.gmra.mrb[0].mxu0 %v244
  %v558 = vpop.f32.mrb[0].mxu0
  %v559 = vadd.f32 %v122, %v558
  %v560 = vpop.f32.mrb[0].mxu0
  %v561 = vpop.f32.mrb[0].mxu0
  %v562 = vadd.f32 %v122, %v561
  %v563 = vpop.f32.mrb[0].mxu0
  %564 = vmatprep.mubr.bf16.mxu0 %v249
  %565 = vmatmul.mubr.bf16.gmra.mrb[0].mxu0 %v248
  %v566 = vpop.f32.mrb[0].mxu0
  %v567 = vadd.f32 %v122, %v566
  %v568 = vpop.f32.mrb[0].mxu0
  %v569 = vpop.f32.mrb[0].mxu0
  %v570 = vadd.f32 %v122, %v569
  %v571 = vpop.f32.mrb[0].mxu0
  %572 = vdwg.mxu0
  %573 = vmatprep.subr.bf16.mxu0 0
  %574 = vmatpush1.bf16.msra.mxu0 %v428
  %575 = vmatprep.subr.bf16.mxu0 0
  %576 = vmatpush1.bf16.msra.mxu0 %v429
  %577 = vmatprep.subr.bf16.mxu0 0
  %578 = vmatpush1.bf16.msra.mxu0 %v430
  %579 = vmatprep.subr.bf16.mxu0 0
  %580 = vmatpush1.bf16.msra.mxu0 %v431
  %581 = vmatprep.subr.bf16.mxu0 0
  %582 = vmatpush1.bf16.msra.mxu0 %v432
  %583 = vmatprep.subr.bf16.mxu0 0
  %584 = vmatpush1.bf16.msra.mxu0 %v433
  %585 = vmatprep.subr.bf16.mxu0 0
  %586 = vmatpush1.bf16.msra.mxu0 %v434
  %587 = vmatprep.subr.bf16.mxu0 0
  %588 = vmatpush1.bf16.msra.mxu0 %v435
  %589 = vmatprep.subr.bf16.mxu0 0
  %590 = vmatpush1.bf16.msra.mxu0 %v436
  %591 = vmatprep.subr.bf16.mxu0 0
  %592 = vmatpush1.bf16.msra.mxu0 %v437
  %593 = vmatprep.subr.bf16.mxu0 0
  %594 = vmatpush1.bf16.msra.mxu0 %v438
  %595 = vmatprep.subr.bf16.mxu0 0
  %596 = vmatpush1.bf16.msra.mxu0 %v439
  %597 = vmatprep.subr.bf16.mxu0 0
  %598 = vmatpush1.bf16.msra.mxu0 %v440
  %599 = vmatprep.subr.bf16.mxu0 0
  %600 = vmatpush1.bf16.msra.mxu0 %v441
  %601 = vmatprep.subr.bf16.mxu0 0
  %602 = vmatpush1.bf16.msra.mxu0 %v442
  %603 = vmatprep.subr.bf16.mxu0 0
  %604 = vmatpush1.bf16.msra.mxu0 %v443
  %605 = vmatprep.mubr.bf16.mxu0 %v223
  %606 = vmatmul.mubr.bf16.gmra.mrb[0].mxu0 %v222
  %v607 = vpop.f32.mrb[0].mxu0
  %v608 = vadd.f32 %v511, %v607
  %v609 = vpop.f32.mrb[0].mxu0
  %v610 = vpop.f32.mrb[0].mxu0
  %v611 = vadd.f32 %v514, %v610
  %v612 = vpop.f32.mrb[0].mxu0
  %613 = vmatprep.mubr.bf16.mxu0 %v227
  %614 = vmatmul.mubr.bf16.gmra.mrb[0].mxu0 %v226
  %v615 = vpop.f32.mrb[0].mxu0
  %v616 = vadd.f32 %v519, %v615
  %v617 = vpop.f32.mrb[0].mxu0
  %v618 = vpop.f32.mrb[0].mxu0
  %v619 = vadd.f32 %v522, %v618
  %v620 = vpop.f32.mrb[0].mxu0
  %621 = vmatprep.mubr.bf16.mxu0 %v231
  %622 = vmatmul.mubr.bf16.gmra.mrb[0].mxu0 %v230
  %v623 = vpop.f32.mrb[0].mxu0
  %v624 = vadd.f32 %v527, %v623
  %v625 = vpop.f32.mrb[0].mxu0
  %v626 = vpop.f32.mrb[0].mxu0
  %v627 = vadd.f32 %v530, %v626
  %v628 = vpop.f32.mrb[0].mxu0
  %629 = vmatprep.mubr.bf16.mxu0 %v235
  %630 = vmatmul.mubr.bf16.gmra.mrb[0].mxu0 %v234
  %v631 = vpop.f32.mrb[0].mxu0
  %v632 = vadd.f32 %v535, %v631
  %v633 = vpop.f32.mrb[0].mxu0
  %v634 = vpop.f32.mrb[0].mxu0
  %v635 = vadd.f32 %v538, %v634
  %v636 = vpop.f32.mrb[0].mxu0
  %637 = vmatprep.mubr.bf16.mxu0 %v239
  %638 = vmatmul.mubr.bf16.gmra.mrb[0].mxu0 %v238
  %v639 = vpop.f32.mrb[0].mxu0
  %v640 = vadd.f32 %v543, %v639
  %v641 = vpop.f32.mrb[0].mxu0
  %v642 = vpop.f32.mrb[0].mxu0
  %v643 = vadd.f32 %v546, %v642
  %v644 = vpop.f32.mrb[0].mxu0
  %645 = vmatprep.mubr.bf16.mxu0 %v243
  %646 = vmatmul.mubr.bf16.gmra.mrb[0].mxu0 %v242
  %v647 = vpop.f32.mrb[0].mxu0
  %v648 = vadd.f32 %v551, %v647
  %v649 = vpop.f32.mrb[0].mxu0
  %v650 = vpop.f32.mrb[0].mxu0
  %v651 = vadd.f32 %v554, %v650
  %v652 = vpop.f32.mrb[0].mxu0
  %653 = vmatprep.mubr.bf16.mxu0 %v247
  %654 = vmatmul.mubr.bf16.gmra.mrb[0].mxu0 %v246
  %v655 = vpop.f32.mrb[0].mxu0
  %v656 = vadd.f32 %v559, %v655
  %v657 = vpop.f32.mrb[0].mxu0
  %v658 = vpop.f32.mrb[0].mxu0
  %v659 = vadd.f32 %v562, %v658
  %v660 = vpop.f32.mrb[0].mxu0
  %661 = vmatprep.mubr.bf16.mxu0 %v251
  %662 = vmatmul.mubr.bf16.gmra.mrb[0].mxu0 %v250
  %v663 = vpop.f32.mrb[0].mxu0
  %v664 = vadd.f32 %v567, %v663
  %v665 = vpop.f32.mrb[0].mxu0
  %v666 = vpop.f32.mrb[0].mxu0
  %v667 = vadd.f32 %v570, %v666
  %v668 = vpop.f32.mrb[0].mxu0
  %669 = vdwg.mxu0
  %vm670 = vcmask 523264
  %v671 = vsel %vm670, %v608, 0.0
  %v672 = vsel %vm670, %v611, 0.0
  %v673 = vadd.f32 %v671, %v672
  %v674 = vsel %vm670, %v616, 0.0
  %v675 = vadd.f32 %v673, %v674
  %v676 = vsel %vm670, %v619, 0.0
  %v677 = vadd.f32 %v675, %v676
  %v678 = vsel %vm670, %v624, 0.0
  %v679 = vadd.f32 %v677, %v678
  %v680 = vsel %vm670, %v627, 0.0
  %v681 = vadd.f32 %v679, %v680
  %v682 = vsel %vm670, %v632, 0.0
  %v683 = vadd.f32 %v681, %v682
  %v684 = vsel %vm670, %v635, 0.0
  %v685 = vadd.f32 %v683, %v684
  %v686 = vsel %vm670, %v640, 0.0
  %v687 = vadd.f32 %v685, %v686
  %v688 = vsel %vm670, %v643, 0.0
  %v689 = vadd.f32 %v687, %v688
  %v690 = vsel %vm670, %v648, 0.0
  %v691 = vadd.f32 %v689, %v690
  %v692 = vsel %vm670, %v651, 0.0
  %v693 = vadd.f32 %v691, %v692
  %v694 = vsel %vm670, %v656, 0.0
  %v695 = vadd.f32 %v693, %v694
  %v696 = vsel %vm670, %v659, 0.0
  %v697 = vadd.f32 %v695, %v696
  %v698 = vsel %vm670, %v664, 0.0
  %v699 = vadd.f32 %v697, %v698
  %v700 = vsel %vm670, %v667, 0.0
  %v701 = vadd.f32 %v699, %v700
  %v702 = vrot.slane %v701, 4
  %v703 = vadd.f32 %v701, %v702
  %v704 = vrot.slane %v703, 2
  %v705 = vadd.f32 %v703, %v704
  %v706 = vrot.slane %v705, 1
  %v707 = vadd.f32 %v705, %v706
  %v708 = vmul.f32 %v707, 0.0078125
  %v709 = vmul.f32 %v608, %v608
  %v710 = vmul.f32 %v611, %v611
  %v711 = vmul.f32 %v616, %v616
  %v712 = vmul.f32 %v619, %v619
  %v713 = vmul.f32 %v624, %v624
  %v714 = vmul.f32 %v627, %v627
  %v715 = vmul.f32 %v632, %v632
  %v716 = vmul.f32 %v635, %v635
  %v717 = vmul.f32 %v640, %v640
  %v718 = vmul.f32 %v643, %v643
  %v719 = vmul.f32 %v648, %v648
  %v720 = vmul.f32 %v651, %v651
  %v721 = vmul.f32 %v656, %v656
  %v722 = vmul.f32 %v659, %v659
  %v723 = vmul.f32 %v664, %v664
  %v724 = vmul.f32 %v667, %v667
  %v725 = vsel %vm670, %v709, 0.0
  %v726 = vsel %vm670, %v710, 0.0
  %v727 = vadd.f32 %v725, %v726
  %v728 = vsel %vm670, %v711, 0.0
  %v729 = vadd.f32 %v727, %v728
  %v730 = vsel %vm670, %v712, 0.0
  %v731 = vadd.f32 %v729, %v730
  %v732 = vsel %vm670, %v713, 0.0
  %v733 = vadd.f32 %v731, %v732
  %v734 = vsel %vm670, %v714, 0.0
  %v735 = vadd.f32 %v733, %v734
  %v736 = vsel %vm670, %v715, 0.0
  %v737 = vadd.f32 %v735, %v736
  %v738 = vsel %vm670, %v716, 0.0
  %v739 = vadd.f32 %v737, %v738
  %v740 = vsel %vm670, %v717, 0.0
  %v741 = vadd.f32 %v739, %v740
  %v742 = vsel %vm670, %v718, 0.0
  %v743 = vadd.f32 %v741, %v742
  %v744 = vsel %vm670, %v719, 0.0
  %v745 = vadd.f32 %v743, %v744
  %v746 = vsel %vm670, %v720, 0.0
  %v747 = vadd.f32 %v745, %v746
  %v748 = vsel %vm670, %v721, 0.0
  %v749 = vadd.f32 %v747, %v748
  %v750 = vsel %vm670, %v722, 0.0
  %v751 = vadd.f32 %v749, %v750
  %v752 = vsel %vm670, %v723, 0.0
  %v753 = vadd.f32 %v751, %v752
  %v754 = vsel %vm670, %v724, 0.0
  %v755 = vadd.f32 %v753, %v754
  %v756 = vrot.slane %v755, 4
  %v757 = vadd.f32 %v755, %v756
  %v758 = vrot.slane %v757, 2
  %v759 = vadd.f32 %v757, %v758
  %v760 = vrot.slane %v759, 1
  %v761 = vadd.f32 %v759, %v760
  %v762 = vmul.f32 %v761, 0.0078125
  %v763 = vmul.f32 %v708, %v708
  %v764 = vsub.f32 %v762, %v763
  %v765 = vld [vmem:[%s3] sm:$0x1]
  %v766 = vadd.f32 %v764, 1e-05
  %v767 = vrsqrt.pop %v766
  %v768 = vmul.f32 %v765, %v767
  %v769 = vld [vmem:[%s4] sm:$0x1]
  %v770 = vmul.f32 %v708, %v768
  %v771 = vsub.f32 %v769, %v770
  %v773 = vlaneseq
  %v774 = vshrl.u32 %v773, 7
  %v775 = vsub.s32 0, %v774
  %v776 = vrot.slane %v768, %v775
  %v778 = vmul.f32 %v608, %v776
  %v779 = vmul.f32 %v611, %v776
  %v780 = vmul.f32 %v616, %v776
  %v781 = vmul.f32 %v619, %v776
  %v782 = vmul.f32 %v624, %v776
  %v783 = vmul.f32 %v627, %v776
  %v784 = vmul.f32 %v632, %v776
  %v785 = vmul.f32 %v635, %v776
  %v786 = vmul.f32 %v640, %v776
  %v787 = vmul.f32 %v643, %v776
  %v788 = vmul.f32 %v648, %v776
  %v789 = vmul.f32 %v651, %v776
  %v790 = vmul.f32 %v656, %v776
  %v791 = vmul.f32 %v659, %v776
  %v792 = vmul.f32 %v664, %v776
  %v793 = vmul.f32 %v667, %v776
  %v795 = vlaneseq
  %v796 = vshrl.u32 %v795, 7
  %v797 = vsub.s32 0, %v796
  %v798 = vrot.slane %v771, %v797
  %v800 = vadd.f32 %v778, %v798
  %v801 = vadd.f32 %v779, %v798
  %v802 = vadd.f32 %v780, %v798
  %v803 = vadd.f32 %v781, %v798
  %v804 = vadd.f32 %v782, %v798
  %v805 = vadd.f32 %v783, %v798
  %v806 = vadd.f32 %v784, %v798
  %v807 = vadd.f32 %v785, %v798
  %v808 = vadd.f32 %v786, %v798
  %v809 = vadd.f32 %v787, %v798
  %v810 = vadd.f32 %v788, %v798
  %v811 = vadd.f32 %v789, %v798
  %v812 = vadd.f32 %v790, %v798
  %v813 = vadd.f32 %v791, %v798
  %v814 = vadd.f32 %v792, %v798
  %v815 = vadd.f32 %v793, %v798
  %vm816 = vcmp.ge.f32.partialorder %v800, 0.0
  %vm817 = vcmp.ge.f32.partialorder %v801, 0.0
  %vm818 = vcmp.ge.f32.partialorder %v802, 0.0
  %vm819 = vcmp.ge.f32.partialorder %v803, 0.0
  %vm820 = vcmp.ge.f32.partialorder %v804, 0.0
  %vm821 = vcmp.ge.f32.partialorder %v805, 0.0
  %vm822 = vcmp.ge.f32.partialorder %v806, 0.0
  %vm823 = vcmp.ge.f32.partialorder %v807, 0.0
  %vm824 = vcmp.ge.f32.partialorder %v808, 0.0
  %vm825 = vcmp.ge.f32.partialorder %v809, 0.0
  %vm826 = vcmp.ge.f32.partialorder %v810, 0.0
  %vm827 = vcmp.ge.f32.partialorder %v811, 0.0
  %vm828 = vcmp.ge.f32.partialorder %v812, 0.0
  %vm829 = vcmp.ge.f32.partialorder %v813, 0.0
  %vm830 = vcmp.ge.f32.partialorder %v814, 0.0
  %vm831 = vcmp.ge.f32.partialorder %v815, 0.0
  %v832 = vmul.f32 %v800, 0.1
  %v833 = vmul.f32 %v801, 0.1
  %v834 = vmul.f32 %v802, 0.1
  %v835 = vmul.f32 %v803, 0.1
  %v836 = vmul.f32 %v804, 0.1
  %v837 = vmul.f32 %v805, 0.1
  %v838 = vmul.f32 %v806, 0.1
  %v839 = vmul.f32 %v807, 0.1
  %v840 = vmul.f32 %v808, 0.1
  %v841 = vmul.f32 %v809, 0.1
  %v842 = vmul.f32 %v810, 0.1
  %v843 = vmul.f32 %v811, 0.1
  %v844 = vmul.f32 %v812, 0.1
  %v845 = vmul.f32 %v813, 0.1
  %v846 = vmul.f32 %v814, 0.1
  %v847 = vmul.f32 %v815, 0.1
  %v848 = vsel %vm816, %v800, %v832
  %v849 = vsel %vm817, %v801, %v833
  %v850 = vsel %vm818, %v802, %v834
  %v851 = vsel %vm819, %v803, %v835
  %v852 = vsel %vm820, %v804, %v836
  %v853 = vsel %vm821, %v805, %v837
  %v854 = vsel %vm822, %v806, %v838
  %v855 = vsel %vm823, %v807, %v839
  %v856 = vsel %vm824, %v808, %v840
  %v857 = vsel %vm825, %v809, %v841
  %v858 = vsel %vm826, %v810, %v842
  %v859 = vsel %vm827, %v811, %v843
  %v860 = vsel %vm828, %v812, %v844
  %v861 = vsel %vm829, %v813, %v845
  %v862 = vsel %vm830, %v814, %v846
  %v863 = vsel %vm831, %v815, %v847
  %v864 = vpack.c.bf16 %v849, %v848
  %v865 = vpack.c.bf16 %v851, %v850
  %v866 = vpack.c.bf16 %v853, %v852
  %v867 = vpack.c.bf16 %v855, %v854
  %v868 = vpack.c.bf16 %v857, %v856
  %v869 = vpack.c.bf16 %v859, %v858
  %v870 = vpack.c.bf16 %v861, %v860
  %v871 = vpack.c.bf16 %v863, %v862
  %v880 = vunpack.c.l.b16 %v864
  %v881 = vunpack.c.h.b16 %v864
  %v882 = vunpack.c.l.b16 %v865
  %v883 = vunpack.c.h.b16 %v865
  %v884 = vunpack.c.l.b16 %v866
  %v885 = vunpack.c.h.b16 %v866
  %v886 = vunpack.c.l.b16 %v867
  %v887 = vunpack.c.h.b16 %v867
  %v888 = vunpack.c.l.b16 %v868
  %v889 = vunpack.c.h.b16 %v868
  %v890 = vunpack.c.l.b16 %v869
  %v891 = vunpack.c.h.b16 %v869
  %v892 = vunpack.c.l.b16 %v870
  %v893 = vunpack.c.h.b16 %v870
  %v894 = vunpack.c.l.b16 %v871
  %v895 = vunpack.c.h.b16 %v871
  %v896 = vpack.c.b16 %v880, %v880
  %v897 = vpack.c.b16 %v881, %v881
  %v898 = vpack.c.b16 %v882, %v882
  %v899 = vpack.c.b16 %v883, %v883
  %v900 = vpack.c.b16 %v884, %v884
  %v901 = vpack.c.b16 %v885, %v885
  %v902 = vpack.c.b16 %v886, %v886
  %v903 = vpack.c.b16 %v887, %v887
  %v904 = vpack.c.b16 %v888, %v888
  %v905 = vpack.c.b16 %v889, %v889
  %v906 = vpack.c.b16 %v890, %v890
  %v907 = vpack.c.b16 %v891, %v891
  %v908 = vpack.c.b16 %v892, %v892
  %v909 = vpack.c.b16 %v893, %v893
  %v910 = vpack.c.b16 %v894, %v894
  %v911 = vpack.c.b16 %v895, %v895
  %vm928 = vcmask 519168
  %929 = vst.msk [vmem:[%s5] sm:$0xf] %vm928, %v896
  %930 = vst.msk [vmem:[%s5 + $0x4] sm:$0xf] %vm928, %v897
  %931 = vst.msk [vmem:[%s5 + $0x8] sm:$0xf] %vm928, %v898
  %932 = vst.msk [vmem:[%s5 + $0xc] sm:$0xf] %vm928, %v899
  %933 = vst.msk [vmem:[%s5 + $0x10] sm:$0xf] %vm928, %v900
  %934 = vst.msk [vmem:[%s5 + $0x14] sm:$0xf] %vm928, %v901
  %935 = vst.msk [vmem:[%s5 + $0x18] sm:$0xf] %vm928, %v902
  %936 = vst.msk [vmem:[%s5 + $0x1c] sm:$0xf] %vm928, %v903
  %937 = vst.msk [vmem:[%s5 + $0x20] sm:$0xf] %vm928, %v904
  %938 = vst.msk [vmem:[%s5 + $0x24] sm:$0xf] %vm928, %v905
  %939 = vst.msk [vmem:[%s5 + $0x28] sm:$0xf] %vm928, %v906
  %940 = vst.msk [vmem:[%s5 + $0x2c] sm:$0xf] %vm928, %v907
  %941 = vst.msk [vmem:[%s5 + $0x30] sm:$0xf] %vm928, %v908
  %942 = vst.msk [vmem:[%s5 + $0x34] sm:$0xf] %vm928, %v909
  %943 = vst.msk [vmem:[%s5 + $0x38] sm:$0xf] %vm928, %v910
  %944 = vst.msk [vmem:[%s5 + $0x3c] sm:$0xf] %vm928, %v911
  // Predicated region
  $region22: #{discriminator_forward.7} parent=0 // pred_check
    _
  $region23: #{discriminator_forward.7} parent=0 // pred_check_branch
    %946 = sbr.rel (0) target = $region25
  $region24: #{discriminator_forward.7} parent=0 // pred_region
    _
  $region25: #{discriminator_forward.7} parent=0 // pred_fallthru
    _
  // Predicated region
  $region26: #{discriminator_forward.7} parent=0 // pred_check
    _
  $region27: #{discriminator_forward.7} parent=0 // pred_check_branch
    %948 = sbr.rel (0) target = $region29
  $region28: #{discriminator_forward.7} parent=0 // pred_region
    _
  $region29: #{discriminator_forward.7} parent=0 // pred_fallthru
    _

// kernel: discriminator_forward.8
$region0: #{discriminator_forward.8}
  #allocation0 [shape = 'u32[]', space=smem, size = 0x4, offset = 0x4, fixed_abs, tag = 'smem constant byte address 0x4 - core index']
  #allocation1 [shape = 'u32[144,128]{1,0:T(1,128)}', space=vmem, size = 0x12000, scoped, tag = 'internal scratch']
  %s0 = inlined_call_operand.vmem [shape: bf16[32,1024], index: 0, kind: input, shape index: {}]
  %s1 = inlined_call_operand.vmem [shape: bf16[1024,128], index: 1, kind: input, shape index: {}]
  %s2 = inlined_call_operand.vmem [shape: f32[1,128], index: 2, kind: input, shape index: {}]
  %s3 = inlined_call_operand.vmem [shape: f32[1,128], index: 3, kind: input, shape index: {}]
  %s4 = inlined_call_operand.vmem [shape: f32[1,128], index: 4, kind: input, shape index: {}]
  %s5 = inlined_call_operand.vmem [shape: bf16[32,128], index: 5, kind: output, shape index: {}]
  %s6 = sld [smem:[#allocation0]]
  $region30: #{discriminator_forward.8} parent=0
    _
  %s8 = ssub.s32 1, %s6
  %s9 = scalar_select 0, %s8, %s6
  // Predicated region
  $region2: #{discriminator_forward.8} parent=0 // pred_check
    _
  $region3: #{discriminator_forward.8} parent=0 // pred_check_branch
    %11 = sbr.rel (0) target = $region5
  $region4: #{discriminator_forward.8} parent=0 // pred_region
    _
  $region5: #{discriminator_forward.8} parent=0 // pred_fallthru
    _
  // Predicated region
  $region6: #{discriminator_forward.8} parent=0 // pred_check
    _
  $region7: #{discriminator_forward.8} parent=0 // pred_check_branch
    %13 = sbr.rel (0) target = $region9
  $region8: #{discriminator_forward.8} parent=0 // pred_region
    _
  $region9: #{discriminator_forward.8} parent=0 // pred_fallthru
    _
  // Predicated region
  $region10: #{discriminator_forward.8} parent=0 // pred_check
    _
  $region11: #{discriminator_forward.8} parent=0 // pred_check_branch
    %15 = sbr.rel (0) target = $region13
  $region12: #{discriminator_forward.8} parent=0 // pred_region
    _
  $region13: #{discriminator_forward.8} parent=0 // pred_fallthru
    _
  // Predicated region
  $region14: #{discriminator_forward.8} parent=0 // pred_check
    _
  $region15: #{discriminator_forward.8} parent=0 // pred_check_branch
    %17 = sbr.rel (0) target = $region17
  $region16: #{discriminator_forward.8} parent=0 // pred_region
    _
  $region17: #{discriminator_forward.8} parent=0 // pred_fallthru
    _
  // Predicated region
  $region18: #{discriminator_forward.8} parent=0 // pred_check
    _
  $region19: #{discriminator_forward.8} parent=0 // pred_check_branch
    %19 = sbr.rel (0) target = $region21
  $region20: #{discriminator_forward.8} parent=0 // pred_region
    _
  $region21: #{discriminator_forward.8} parent=0 // pred_fallthru
    _
  %v21 = vld [vmem:[%s0] sm:$0xff]
  %v22 = vld [vmem:[%s0 + $0x8] sm:$0xff]
  %v23 = vld [vmem:[%s0 + $0x10] sm:$0xff]
  %v24 = vld [vmem:[%s0 + $0x18] sm:$0xff]
  %v25 = vld [vmem:[%s0 + $0x20] sm:$0xff]
  %v26 = vld [vmem:[%s0 + $0x28] sm:$0xff]
  %v27 = vld [vmem:[%s0 + $0x30] sm:$0xff]
  %v28 = vld [vmem:[%s0 + $0x38] sm:$0xff]
  %v29 = vld [vmem:[%s0 + $0x40] sm:$0xff]
  %v30 = vld [vmem:[%s0 + $0x48] sm:$0xff]
  %v31 = vld [vmem:[%s0 + $0x50] sm:$0xff]
  %v32 = vld [vmem:[%s0 + $0x58] sm:$0xff]
  %v33 = vld [vmem:[%s0 + $0x60] sm:$0xff]
  %v34 = vld [vmem:[%s0 + $0x68] sm:$0xff]
  %v35 = vld [vmem:[%s0 + $0x70] sm:$0xff]
  %v36 = vld [vmem:[%s0 + $0x78] sm:$0xff]
  %v37 = vld [vmem:[%s1] sm:$0xf]
  %v38 = vld [vmem:[%s1 + $0x4] sm:$0xf]
  %v39 = vld [vmem:[%s1 + $0x8] sm:$0xf]
  %v40 = vld [vmem:[%s1 + $0xc] sm:$0xf]
  %v41 = vld [vmem:[%s1 + $0x10] sm:$0xf]
  %v42 = vld [vmem:[%s1 + $0x14] sm:$0xf]
  %v43 = vld [vmem:[%s1 + $0x18] sm:$0xf]
  %v44 = vld [vmem:[%s1 + $0x1c] sm:$0xf]
  %v45 = vld [vmem:[%s1 + $0x20] sm:$0xf]
  %v46 = vld [vmem:[%s1 + $0x24] sm:$0xf]
  %v47 = vld [vmem:[%s1 + $0x28] sm:$0xf]
  %v48 = vld [vmem:[%s1 + $0x2c] sm:$0xf]
  %v49 = vld [vmem:[%s1 + $0x30] sm:$0xf]
  %v50 = vld [vmem:[%s1 + $0x34] sm:$0xf]
  %v51 = vld [vmem:[%s1 + $0x38] sm:$0xf]
  %v52 = vld [vmem:[%s1 + $0x3c] sm:$0xf]
  %v53 = vld [vmem:[%s1 + $0x40] sm:$0xf]
  %v54 = vld [vmem:[%s1 + $0x44] sm:$0xf]
  %v55 = vld [vmem:[%s1 + $0x48] sm:$0xf]
  %v56 = vld [vmem:[%s1 + $0x4c] sm:$0xf]
  %v57 = vld [vmem:[%s1 + $0x50] sm:$0xf]
  %v58 = vld [vmem:[%s1 + $0x54] sm:$0xf]
  %v59 = vld [vmem:[%s1 + $0x58] sm:$0xf]
  %v60 = vld [vmem:[%s1 + $0x5c] sm:$0xf]
  %v61 = vld [vmem:[%s1 + $0x60] sm:$0xf]
  %v62 = vld [vmem:[%s1 + $0x64] sm:$0xf]
  %v63 = vld [vmem:[%s1 + $0x68] sm:$0xf]
  %v64 = vld [vmem:[%s1 + $0x6c] sm:$0xf]
  %v65 = vld [vmem:[%s1 + $0x70] sm:$0xf]
  %v66 = vld [vmem:[%s1 + $0x74] sm:$0xf]
  %v67 = vld [vmem:[%s1 + $0x78] sm:$0xf]
  %v68 = vld [vmem:[%s1 + $0x7c] sm:$0xf]
  %v69 = vld [vmem:[%s1 + $0x80] sm:$0xf]
  %v70 = vld [vmem:[%s1 + $0x84] sm:$0xf]
  %v71 = vld [vmem:[%s1 + $0x88] sm:$0xf]
  %v72 = vld [vmem:[%s1 + $0x8c] sm:$0xf]
  %v73 = vld [vmem:[%s1 + $0x90] sm:$0xf]
  %v74 = vld [vmem:[%s1 + $0x94] sm:$0xf]
  %v75 = vld [vmem:[%s1 + $0x98] sm:$0xf]
  %v76 = vld [vmem:[%s1 + $0x9c] sm:$0xf]
  %v77 = vld [vmem:[%s1 + $0xa0] sm:$0xf]
  %v78 = vld [vmem:[%s1 + $0xa4] sm:$0xf]
  %v79 = vld [vmem:[%s1 + $0xa8] sm:$0xf]
  %v80 = vld [vmem:[%s1 + $0xac] sm:$0xf]
  %v81 = vld [vmem:[%s1 + $0xb0] sm:$0xf]
  %v82 = vld [vmem:[%s1 + $0xb4] sm:$0xf]
  %v83 = vld [vmem:[%s1 + $0xb8] sm:$0xf]
  %v84 = vld [vmem:[%s1 + $0xbc] sm:$0xf]
  %v85 = vld [vmem:[%s1 + $0xc0] sm:$0xf]
  %v86 = vld [vmem:[%s1 + $0xc4] sm:$0xf]
  %v87 = vld [vmem:[%s1 + $0xc8] sm:$0xf]
  %v88 = vld [vmem:[%s1 + $0xcc] sm:$0xf]
  %v89 = vld [vmem:[%s1 + $0xd0] sm:$0xf]
  %v90 = vld [vmem:[%s1 + $0xd4] sm:$0xf]
  %v91 = vld [vmem:[%s1 + $0xd8] sm:$0xf]
  %v92 = vld [vmem:[%s1 + $0xdc] sm:$0xf]
  %v93 = vld [vmem:[%s1 + $0xe0] sm:$0xf]
  %v94 = vld [vmem:[%s1 + $0xe4] sm:$0xf]
  %v95 = vld [vmem:[%s1 + $0xe8] sm:$0xf]
  %v96 = vld [vmem:[%s1 + $0xec] sm:$0xf]
  %v97 = vld [vmem:[%s1 + $0xf0] sm:$0xf]
  %v98 = vld [vmem:[%s1 + $0xf4] sm:$0xf]
  %v99 = vld [vmem:[%s1 + $0xf8] sm:$0xf]
  %v100 = vld [vmem:[%s1 + $0xfc] sm:$0xf]
  %v101 = vld [vmem:[%s1 + $0x100] sm:$0xf]
  %v102 = vld [vmem:[%s1 + $0x104] sm:$0xf]
  %v103 = vld [vmem:[%s1 + $0x108] sm:$0xf]
  %v104 = vld [vmem:[%s1 + $0x10c] sm:$0xf]
  %v105 = vld [vmem:[%s1 + $0x110] sm:$0xf]
  %v106 = vld [vmem:[%s1 + $0x114] sm:$0xf]
  %v107 = vld [vmem:[%s1 + $0x118] sm:$0xf]
  %v108 = vld [vmem:[%s1 + $0x11c] sm:$0xf]
  %v109 = vld [vmem:[%s1 + $0x120] sm:$0xf]
  %v110 = vld [vmem:[%s1 + $0x124] sm:$0xf]
  %v111 = vld [vmem:[%s1 + $0x128] sm:$0xf]
  %v112 = vld [vmem:[%s1 + $0x12c] sm:$0xf]
  %v113 = vld [vmem:[%s1 + $0x130] sm:$0xf]
  %v114 = vld [vmem:[%s1 + $0x134] sm:$0xf]
  %v115 = vld [vmem:[%s1 + $0x138] sm:$0xf]
  %v116 = vld [vmem:[%s1 + $0x13c] sm:$0xf]
  %v117 = vld [vmem:[%s1 + $0x140] sm:$0xf]
  %v118 = vld [vmem:[%s1 + $0x144] sm:$0xf]
  %v119 = vld [vmem:[%s1 + $0x148] sm:$0xf]
  %v120 = vld [vmem:[%s1 + $0x14c] sm:$0xf]
  %v121 = vld [vmem:[%s1 + $0x150] sm:$0xf]
  %v122 = vld [vmem:[%s1 + $0x154] sm:$0xf]
  %v123 = vld [vmem:[%s1 + $0x158] sm:$0xf]
  %v124 = vld [vmem:[%s1 + $0x15c] sm:$0xf]
  %v125 = vld [vmem:[%s1 + $0x160] sm:$0xf]
  %v126 = vld [vmem:[%s1 + $0x164] sm:$0xf]
  %v127 = vld [vmem:[%s1 + $0x168] sm:$0xf]
  %v128 = vld [vmem:[%s1 + $0x16c] sm:$0xf]
  %v129 = vld [vmem:[%s1 + $0x170] sm:$0xf]
  %v130 = vld [vmem:[%s1 + $0x174] sm:$0xf]
  %v131 = vld [vmem:[%s1 + $0x178] sm:$0xf]
  %v132 = vld [vmem:[%s1 + $0x17c] sm:$0xf]
  %v133 = vld [vmem:[%s1 + $0x180] sm:$0xf]
  %v134 = vld [vmem:[%s1 + $0x184] sm:$0xf]
  %v135 = vld [vmem:[%s1 + $0x188] sm:$0xf]
  %v136 = vld [vmem:[%s1 + $0x18c] sm:$0xf]
  %v137 = vld [vmem:[%s1 + $0x190] sm:$0xf]
  %v138 = vld [vmem:[%s1 + $0x194] sm:$0xf]
  %v139 = vld [vmem:[%s1 + $0x198] sm:$0xf]
  %v140 = vld [vmem:[%s1 + $0x19c] sm:$0xf]
  %v141 = vld [vmem:[%s1 + $0x1a0] sm:$0xf]
  %v142 = vld [vmem:[%s1 + $0x1a4] sm:$0xf]
  %v143 = vld [vmem:[%s1 + $0x1a8] sm:$0xf]
  %v144 = vld [vmem:[%s1 + $0x1ac] sm:$0xf]
  %v145 = vld [vmem:[%s1 + $0x1b0] sm:$0xf]
  %v146 = vld [vmem:[%s1 + $0x1b4] sm:$0xf]
  %v147 = vld [vmem:[%s1 + $0x1b8] sm:$0xf]
  %v148 = vld [vmem:[%s1 + $0x1bc] sm:$0xf]
  %v149 = vld [vmem:[%s1 + $0x1c0] sm:$0xf]
  %v150 = vld [vmem:[%s1 + $0x1c4] sm:$0xf]
  %v151 = vld [vmem:[%s1 + $0x1c8] sm:$0xf]
  %v152 = vld [vmem:[%s1 + $0x1cc] sm:$0xf]
  %v153 = vld [vmem:[%s1 + $0x1d0] sm:$0xf]
  %v154 = vld [vmem:[%s1 + $0x1d4] sm:$0xf]
  %v155 = vld [vmem:[%s1 + $0x1d8] sm:$0xf]
  %v156 = vld [vmem:[%s1 + $0x1dc] sm:$0xf]
  %v157 = vld [vmem:[%s1 + $0x1e0] sm:$0xf]
  %v158 = vld [vmem:[%s1 + $0x1e4] sm:$0xf]
  %v159 = vld [vmem:[%s1 + $0x1e8] sm:$0xf]
  %v160 = vld [vmem:[%s1 + $0x1ec] sm:$0xf]
  %v161 = vld [vmem:[%s1 + $0x1f0] sm:$0xf]
  %v162 = vld [vmem:[%s1 + $0x1f4] sm:$0xf]
  %v163 = vld [vmem:[%s1 + $0x1f8] sm:$0xf]
  %v164 = vld [vmem:[%s1 + $0x1fc] sm:$0xf]
  %v165 = vld [vmem:[%s2] sm:$0x1]
  %v167 = vlaneseq
  %v168 = vshrl.u32 %v167, 7
  %v169 = vsub.s32 0, %v168
  %v170 = vrot.slane %v165, %v169
  %v188 = vunpack.c.l.b16 %v21
  %v189 = vunpack.c.h.b16 %v21
  %v190 = vunpack.c.l.b16 %v22
  %v191 = vunpack.c.h.b16 %v22
  %v192 = vunpack.c.l.b16 %v23
  %v193 = vunpack.c.h.b16 %v23
  %v194 = vunpack.c.l.b16 %v24
  %v195 = vunpack.c.h.b16 %v24
  %v196 = vunpack.c.l.b16 %v25
  %v197 = vunpack.c.h.b16 %v25
  %v198 = vunpack.c.l.b16 %v26
  %v199 = vunpack.c.h.b16 %v26
  %v200 = vunpack.c.l.b16 %v27
  %v201 = vunpack.c.h.b16 %v27
  %v202 = vunpack.c.l.b16 %v28
  %v203 = vunpack.c.h.b16 %v28
  %v204 = vunpack.c.l.b16 %v29
  %v205 = vunpack.c.h.b16 %v29
  %v206 = vunpack.c.l.b16 %v30
  %v207 = vunpack.c.h.b16 %v30
  %v208 = vunpack.c.l.b16 %v31
  %v209 = vunpack.c.h.b16 %v31
  %v210 = vunpack.c.l.b16 %v32
  %v211 = vunpack.c.h.b16 %v32
  %v212 = vunpack.c.l.b16 %v33
  %v213 = vunpack.c.h.b16 %v33
  %v214 = vunpack.c.l.b16 %v34
  %v215 = vunpack.c.h.b16 %v34
  %v216 = vunpack.c.l.b16 %v35
  %v217 = vunpack.c.h.b16 %v35
  %v218 = vunpack.c.l.b16 %v36
  %v219 = vunpack.c.h.b16 %v36
  %v220 = vpack.c.b16 %v196, %v188
  %v221 = vpack.c.b16 %v197, %v189
  %v222 = vpack.c.b16 %v198, %v190
  %v223 = vpack.c.b16 %v199, %v191
  %v224 = vpack.c.b16 %v200, %v192
  %v225 = vpack.c.b16 %v201, %v193
  %v226 = vpack.c.b16 %v202, %v194
  %v227 = vpack.c.b16 %v203, %v195
  %v228 = vpack.c.b16 %v212, %v204
  %v229 = vpack.c.b16 %v213, %v205
  %v230 = vpack.c.b16 %v214, %v206
  %v231 = vpack.c.b16 %v215, %v207
  %v232 = vpack.c.b16 %v216, %v208
  %v233 = vpack.c.b16 %v217, %v209
  %v234 = vpack.c.b16 %v218, %v210
  %v235 = vpack.c.b16 %v219, %v211
  %v380 = vunpack.c.l.b16 %v37
  %v381 = vunpack.c.l.b16 %v38
  %v382 = vunpack.c.l.b16 %v39
  %v383 = vunpack.c.l.b16 %v40
  %v384 = vunpack.c.l.b16 %v41
  %v385 = vunpack.c.l.b16 %v42
  %v386 = vunpack.c.l.b16 %v43
  %v387 = vunpack.c.l.b16 %v44
  %v388 = vunpack.c.l.b16 %v45
  %v389 = vunpack.c.l.b16 %v46
  %v390 = vunpack.c.l.b16 %v47
  %v391 = vunpack.c.l.b16 %v48
  %v392 = vunpack.c.l.b16 %v49
  %v393 = vunpack.c.l.b16 %v50
  %v394 = vunpack.c.l.b16 %v51
  %v395 = vunpack.c.l.b16 %v52
  %v396 = vunpack.c.l.b16 %v53
  %v397 = vunpack.c.l.b16 %v54
  %v398 = vunpack.c.l.b16 %v55
  %v399 = vunpack.c.l.b16 %v56
  %v400 = vunpack.c.l.b16 %v57
  %v401 = vunpack.c.l.b16 %v58
  %v402 = vunpack.c.l.b16 %v59
  %v403 = vunpack.c.l.b16 %v60
  %v404 = vunpack.c.l.b16 %v61
  %v405 = vunpack.c.l.b16 %v62
  %v406 = vunpack.c.l.b16 %v63
  %v407 = vunpack.c.l.b16 %v64
  %v408 = vunpack.c.l.b16 %v65
  %v409 = vunpack.c.l.b16 %v66
  %v410 = vunpack.c.l.b16 %v67
  %v411 = vunpack.c.l.b16 %v68
  %v412 = vunpack.c.l.b16 %v69
  %v413 = vunpack.c.l.b16 %v70
  %v414 = vunpack.c.l.b16 %v71
  %v415 = vunpack.c.l.b16 %v72
  %v416 = vunpack.c.l.b16 %v73
  %v417 = vunpack.c.l.b16 %v74
  %v418 = vunpack.c.l.b16 %v75
  %v419 = vunpack.c.l.b16 %v76
  %v420 = vunpack.c.l.b16 %v77
  %v421 = vunpack.c.l.b16 %v78
  %v422 = vunpack.c.l.b16 %v79
  %v423 = vunpack.c.l.b16 %v80
  %v424 = vunpack.c.l.b16 %v81
  %v425 = vunpack.c.l.b16 %v82
  %v426 = vunpack.c.l.b16 %v83
  %v427 = vunpack.c.l.b16 %v84
  %v428 = vunpack.c.l.b16 %v85
  %v429 = vunpack.c.l.b16 %v86
  %v430 = vunpack.c.l.b16 %v87
  %v431 = vunpack.c.l.b16 %v88
  %v432 = vunpack.c.l.b16 %v89
  %v433 = vunpack.c.l.b16 %v90
  %v434 = vunpack.c.l.b16 %v91
  %v435 = vunpack.c.l.b16 %v92
  %v436 = vunpack.c.l.b16 %v93
  %v437 = vunpack.c.l.b16 %v94
  %v438 = vunpack.c.l.b16 %v95
  %v439 = vunpack.c.l.b16 %v96
  %v440 = vunpack.c.l.b16 %v97
  %v441 = vunpack.c.l.b16 %v98
  %v442 = vunpack.c.l.b16 %v99
  %v443 = vunpack.c.l.b16 %v100
  %v444 = vunpack.c.l.b16 %v101
  %v445 = vunpack.c.l.b16 %v102
  %v446 = vunpack.c.l.b16 %v103
  %v447 = vunpack.c.l.b16 %v104
  %v448 = vunpack.c.l.b16 %v105
  %v449 = vunpack.c.l.b16 %v106
  %v450 = vunpack.c.l.b16 %v107
  %v451 = vunpack.c.l.b16 %v108
  %v452 = vunpack.c.l.b16 %v109
  %v453 = vunpack.c.l.b16 %v110
  %v454 = vunpack.c.l.b16 %v111
  %v455 = vunpack.c.l.b16 %v112
  %v456 = vunpack.c.l.b16 %v113
  %v457 = vunpack.c.l.b16 %v114
  %v458 = vunpack.c.l.b16 %v115
  %v459 = vunpack.c.l.b16 %v116
  %v460 = vunpack.c.l.b16 %v117
  %v461 = vunpack.c.l.b16 %v118
  %v462 = vunpack.c.l.b16 %v119
  %v463 = vunpack.c.l.b16 %v120
  %v464 = vunpack.c.l.b16 %v121
  %v465 = vunpack.c.l.b16 %v122
  %v466 = vunpack.c.l.b16 %v123
  %v467 = vunpack.c.l.b16 %v124
  %v468 = vunpack.c.l.b16 %v125
  %v469 = vunpack.c.l.b16 %v126
  %v470 = vunpack.c.l.b16 %v127
  %v471 = vunpack.c.l.b16 %v128
  %v472 = vunpack.c.l.b16 %v129
  %v473 = vunpack.c.l.b16 %v130
  %v474 = vunpack.c.l.b16 %v131
  %v475 = vunpack.c.l.b16 %v132
  %v476 = vunpack.c.l.b16 %v133
  %v477 = vunpack.c.l.b16 %v134
  %v478 = vunpack.c.l.b16 %v135
  %v479 = vunpack.c.l.b16 %v136
  %v480 = vunpack.c.l.b16 %v137
  %v481 = vunpack.c.l.b16 %v138
  %v482 = vunpack.c.l.b16 %v139
  %v483 = vunpack.c.l.b16 %v140
  %v484 = vunpack.c.l.b16 %v141
  %v485 = vunpack.c.l.b16 %v142
  %v486 = vunpack.c.l.b16 %v143
  %v487 = vunpack.c.l.b16 %v144
  %v488 = vunpack.c.l.b16 %v145
  %v489 = vunpack.c.l.b16 %v146
  %v490 = vunpack.c.l.b16 %v147
  %v491 = vunpack.c.l.b16 %v148
  %v492 = vunpack.c.l.b16 %v149
  %v493 = vunpack.c.l.b16 %v150
  %v494 = vunpack.c.l.b16 %v151
  %v495 = vunpack.c.l.b16 %v152
  %v496 = vunpack.c.l.b16 %v153
  %v497 = vunpack.c.l.b16 %v154
  %v498 = vunpack.c.l.b16 %v155
  %v499 = vunpack.c.l.b16 %v156
  %v500 = vunpack.c.l.b16 %v157
  %v501 = vunpack.c.l.b16 %v158
  %v502 = vunpack.c.l.b16 %v159
  %v503 = vunpack.c.l.b16 %v160
  %v504 = vunpack.c.l.b16 %v161
  %v505 = vunpack.c.l.b16 %v162
  %v506 = vunpack.c.l.b16 %v163
  %v507 = vunpack.c.l.b16 %v164
  %v508 = vpack.c.b16 %v381, %v380
  %v509 = vpack.c.b16 %v383, %v382
  %v510 = vpack.c.b16 %v385, %v384
  %v511 = vpack.c.b16 %v387, %v386
  %v512 = vpack.c.b16 %v389, %v388
  %v513 = vpack.c.b16 %v391, %v390
  %v514 = vpack.c.b16 %v393, %v392
  %v515 = vpack.c.b16 %v395, %v394
  %v516 = vpack.c.b16 %v397, %v396
  %v517 = vpack.c.b16 %v399, %v398
  %v518 = vpack.c.b16 %v401, %v400
  %v519 = vpack.c.b16 %v403, %v402
  %v520 = vpack.c.b16 %v405, %v404
  %v521 = vpack.c.b16 %v407, %v406
  %v522 = vpack.c.b16 %v409, %v408
  %v523 = vpack.c.b16 %v411, %v410
  %v524 = vpack.c.b16 %v413, %v412
  %v525 = vpack.c.b16 %v415, %v414
  %v526 = vpack.c.b16 %v417, %v416
  %v527 = vpack.c.b16 %v419, %v418
  %v528 = vpack.c.b16 %v421, %v420
  %v529 = vpack.c.b16 %v423, %v422
  %v530 = vpack.c.b16 %v425, %v424
  %v531 = vpack.c.b16 %v427, %v426
  %v532 = vpack.c.b16 %v429, %v428
  %v533 = vpack.c.b16 %v431, %v430
  %v534 = vpack.c.b16 %v433, %v432
  %v535 = vpack.c.b16 %v435, %v434
  %v536 = vpack.c.b16 %v437, %v436
  %v537 = vpack.c.b16 %v439, %v438
  %v538 = vpack.c.b16 %v441, %v440
  %v539 = vpack.c.b16 %v443, %v442
  %v540 = vpack.c.b16 %v445, %v444
  %v541 = vpack.c.b16 %v447, %v446
  %v542 = vpack.c.b16 %v449, %v448
  %v543 = vpack.c.b16 %v451, %v450
  %v544 = vpack.c.b16 %v453, %v452
  %v545 = vpack.c.b16 %v455, %v454
  %v546 = vpack.c.b16 %v457, %v456
  %v547 = vpack.c.b16 %v459, %v458
  %v548 = vpack.c.b16 %v461, %v460
  %v549 = vpack.c.b16 %v463, %v462
  %v550 = vpack.c.b16 %v465, %v464
  %v551 = vpack.c.b16 %v467, %v466
  %v552 = vpack.c.b16 %v469, %v468
  %v553 = vpack.c.b16 %v471, %v470
  %v554 = vpack.c.b16 %v473, %v472
  %v555 = vpack.c.b16 %v475, %v474
  %v556 = vpack.c.b16 %v477, %v476
  %v557 = vpack.c.b16 %v479, %v478
  %v558 = vpack.c.b16 %v481, %v480
  %v559 = vpack.c.b16 %v483, %v482
  %v560 = vpack.c.b16 %v485, %v484
  %v561 = vpack.c.b16 %v487, %v486
  %v562 = vpack.c.b16 %v489, %v488
  %v563 = vpack.c.b16 %v491, %v490
  %v564 = vpack.c.b16 %v493, %v492
  %v565 = vpack.c.b16 %v495, %v494
  %v566 = vpack.c.b16 %v497, %v496
  %v567 = vpack.c.b16 %v499, %v498
  %v568 = vpack.c.b16 %v501, %v500
  %v569 = vpack.c.b16 %v503, %v502
  %v570 = vpack.c.b16 %v505, %v504
  %v571 = vpack.c.b16 %v507, %v506
  %636 = vmatprep.subr.bf16.mxu0 0
  %637 = vmatpush1.bf16.msra.mxu0 %v508
  %638 = vmatprep.subr.bf16.mxu0 0
  %639 = vmatpush1.bf16.msra.mxu0 %v509
  %640 = vmatprep.subr.bf16.mxu0 0
  %641 = vmatpush1.bf16.msra.mxu0 %v510
  %642 = vmatprep.subr.bf16.mxu0 0
  %643 = vmatpush1.bf16.msra.mxu0 %v511
  %644 = vmatprep.subr.bf16.mxu0 0
  %645 = vmatpush1.bf16.msra.mxu0 %v512
  %646 = vmatprep.subr.bf16.mxu0 0
  %647 = vmatpush1.bf16.msra.mxu0 %v513
  %648 = vmatprep.subr.bf16.mxu0 0
  %649 = vmatpush1.bf16.msra.mxu0 %v514
  %650 = vmatprep.subr.bf16.mxu0 0
  %651 = vmatpush1.bf16.msra.mxu0 %v515
  %652 = vmatprep.subr.bf16.mxu0 0
  %653 = vmatpush1.bf16.msra.mxu0 %v516
  %654 = vmatprep.subr.bf16.mxu0 0
  %655 = vmatpush1.bf16.msra.mxu0 %v517
  %656 = vmatprep.subr.bf16.mxu0 0
  %657 = vmatpush1.bf16.msra.mxu0 %v518
  %658 = vmatprep.subr.bf16.mxu0 0
  %659 = vmatpush1.bf16.msra.mxu0 %v519
  %660 = vmatprep.subr.bf16.mxu0 0
  %661 = vmatpush1.bf16.msra.mxu0 %v520
  %662 = vmatprep.subr.bf16.mxu0 0
  %663 = vmatpush1.bf16.msra.mxu0 %v521
  %664 = vmatprep.subr.bf16.mxu0 0
  %665 = vmatpush1.bf16.msra.mxu0 %v522
  %666 = vmatprep.subr.bf16.mxu0 0
  %667 = vmatpush1.bf16.msra.mxu0 %v523
  %668 = vmatprep.mubr.bf16.mxu0 %v221
  %669 = vmatmul.mubr.bf16.gmra.mrb[0].mxu0 %v220
  %v670 = vpop.f32.mrb[0].mxu0
  %v671 = vadd.f32 %v170, %v670
  %v672 = vpop.f32.mrb[0].mxu0
  %v673 = vpop.f32.mrb[0].mxu0
  %v674 = vadd.f32 %v170, %v673
  %v675 = vpop.f32.mrb[0].mxu0
  %676 = vmatprep.mubr.bf16.mxu0 %v229
  %677 = vmatmul.mubr.bf16.gmra.mrb[0].mxu0 %v228
  %v678 = vpop.f32.mrb[0].mxu0
  %v679 = vadd.f32 %v170, %v678
  %v680 = vpop.f32.mrb[0].mxu0
  %v681 = vpop.f32.mrb[0].mxu0
  %v682 = vadd.f32 %v170, %v681
  %v683 = vpop.f32.mrb[0].mxu0
  %684 = vdwg.mxu0
  %685 = vmatprep.subr.bf16.mxu0 0
  %686 = vmatpush1.bf16.msra.mxu0 %v524
  %687 = vmatprep.subr.bf16.mxu0 0
  %688 = vmatpush1.bf16.msra.mxu0 %v525
  %689 = vmatprep.subr.bf16.mxu0 0
  %690 = vmatpush1.bf16.msra.mxu0 %v526
  %691 = vmatprep.subr.bf16.mxu0 0
  %692 = vmatpush1.bf16.msra.mxu0 %v527
  %693 = vmatprep.subr.bf16.mxu0 0
  %694 = vmatpush1.bf16.msra.mxu0 %v528
  %695 = vmatprep.subr.bf16.mxu0 0
  %696 = vmatpush1.bf16.msra.mxu0 %v529
  %697 = vmatprep.subr.bf16.mxu0 0
  %698 = vmatpush1.bf16.msra.mxu0 %v530
  %699 = vmatprep.subr.bf16.mxu0 0
  %700 = vmatpush1.bf16.msra.mxu0 %v531
  %701 = vmatprep.subr.bf16.mxu0 0
  %702 = vmatpush1.bf16.msra.mxu0 %v532
  %703 = vmatprep.subr.bf16.mxu0 0
  %704 = vmatpush1.bf16.msra.mxu0 %v533
  %705 = vmatprep.subr.bf16.mxu0 0
  %706 = vmatpush1.bf16.msra.mxu0 %v534
  %707 = vmatprep.subr.bf16.mxu0 0
  %708 = vmatpush1.bf16.msra.mxu0 %v535
  %709 = vmatprep.subr.bf16.mxu0 0
  %710 = vmatpush1.bf16.msra.mxu0 %v536
  %711 = vmatprep.subr.bf16.mxu0 0
  %712 = vmatpush1.bf16.msra.mxu0 %v537
  %713 = vmatprep.subr.bf16.mxu0 0
  %714 = vmatpush1.bf16.msra.mxu0 %v538
  %715 = vmatprep.subr.bf16.mxu0 0
  %716 = vmatpush1.bf16.msra.mxu0 %v539
  %717 = vmatprep.mubr.bf16.mxu0 %v223
  %718 = vmatmul.mubr.bf16.gmra.mrb[0].mxu0 %v222
  %v719 = vpop.f32.mrb[0].mxu0
  %v720 = vadd.f32 %v671, %v719
  %v721 = vpop.f32.mrb[0].mxu0
  %v722 = vpop.f32.mrb[0].mxu0
  %v723 = vadd.f32 %v674, %v722
  %v724 = vpop.f32.mrb[0].mxu0
  %725 = vmatprep.mubr.bf16.mxu0 %v231
  %726 = vmatmul.mubr.bf16.gmra.mrb[0].mxu0 %v230
  %v727 = vpop.f32.mrb[0].mxu0
  %v728 = vadd.f32 %v679, %v727
  %v729 = vpop.f32.mrb[0].mxu0
  %v730 = vpop.f32.mrb[0].mxu0
  %v731 = vadd.f32 %v682, %v730
  %v732 = vpop.f32.mrb[0].mxu0
  %733 = vdwg.mxu0
  %734 = vmatprep.subr.bf16.mxu0 0
  %735 = vmatpush1.bf16.msra.mxu0 %v540
  %736 = vmatprep.subr.bf16.mxu0 0
  %737 = vmatpush1.bf16.msra.mxu0 %v541
  %738 = vmatprep.subr.bf16.mxu0 0
  %739 = vmatpush1.bf16.msra.mxu0 %v542
  %740 = vmatprep.subr.bf16.mxu0 0
  %741 = vmatpush1.bf16.msra.mxu0 %v543
  %742 = vmatprep.subr.bf16.mxu0 0
  %743 = vmatpush1.bf16.msra.mxu0 %v544
  %744 = vmatprep.subr.bf16.mxu0 0
  %745 = vmatpush1.bf16.msra.mxu0 %v545
  %746 = vmatprep.subr.bf16.mxu0 0
  %747 = vmatpush1.bf16.msra.mxu0 %v546
  %748 = vmatprep.subr.bf16.mxu0 0
  %749 = vmatpush1.bf16.msra.mxu0 %v547
  %750 = vmatprep.subr.bf16.mxu0 0
  %751 = vmatpush1.bf16.msra.mxu0 %v548
  %752 = vmatprep.subr.bf16.mxu0 0
  %753 = vmatpush1.bf16.msra.mxu0 %v549
  %754 = vmatprep.subr.bf16.mxu0 0
  %755 = vmatpush1.bf16.msra.mxu0 %v550
  %756 = vmatprep.subr.bf16.mxu0 0
  %757 = vmatpush1.bf16.msra.mxu0 %v551
  %758 = vmatprep.subr.bf16.mxu0 0
  %759 = vmatpush1.bf16.msra.mxu0 %v552
  %760 = vmatprep.subr.bf16.mxu0 0
  %761 = vmatpush1.bf16.msra.mxu0 %v553
  %762 = vmatprep.subr.bf16.mxu0 0
  %763 = vmatpush1.bf16.msra.mxu0 %v554
  %764 = vmatprep.subr.bf16.mxu0 0
  %765 = vmatpush1.bf16.msra.mxu0 %v555
  %766 = vmatprep.mubr.bf16.mxu0 %v225
  %767 = vmatmul.mubr.bf16.gmra.mrb[0].mxu0 %v224
  %v768 = vpop.f32.mrb[0].mxu0
  %v769 = vadd.f32 %v720, %v768
  %v770 = vpop.f32.mrb[0].mxu0
  %v771 = vpop.f32.mrb[0].mxu0
  %v772 = vadd.f32 %v723, %v771
  %v773 = vpop.f32.mrb[0].mxu0
  %774 = vmatprep.mubr.bf16.mxu0 %v233
  %775 = vmatmul.mubr.bf16.gmra.mrb[0].mxu0 %v232
  %v776 = vpop.f32.mrb[0].mxu0
  %v777 = vadd.f32 %v728, %v776
  %v778 = vpop.f32.mrb[0].mxu0
  %v779 = vpop.f32.mrb[0].mxu0
  %v780 = vadd.f32 %v731, %v779
  %v781 = vpop.f32.mrb[0].mxu0
  %782 = vdwg.mxu0
  %783 = vmatprep.subr.bf16.mxu0 0
  %784 = vmatpush1.bf16.msra.mxu0 %v556
  %785 = vmatprep.subr.bf16.mxu0 0
  %786 = vmatpush1.bf16.msra.mxu0 %v557
  %787 = vmatprep.subr.bf16.mxu0 0
  %788 = vmatpush1.bf16.msra.mxu0 %v558
  %789 = vmatprep.subr.bf16.mxu0 0
  %790 = vmatpush1.bf16.msra.mxu0 %v559
  %791 = vmatprep.subr.bf16.mxu0 0
  %792 = vmatpush1.bf16.msra.mxu0 %v560
  %793 = vmatprep.subr.bf16.mxu0 0
  %794 = vmatpush1.bf16.msra.mxu0 %v561
  %795 = vmatprep.subr.bf16.mxu0 0
  %796 = vmatpush1.bf16.msra.mxu0 %v562
  %797 = vmatprep.subr.bf16.mxu0 0
  %798 = vmatpush1.bf16.msra.mxu0 %v563
  %799 = vmatprep.subr.bf16.mxu0 0
  %800 = vmatpush1.bf16.msra.mxu0 %v564
  %801 = vmatprep.subr.bf16.mxu0 0
  %802 = vmatpush1.bf16.msra.mxu0 %v565
  %803 = vmatprep.subr.bf16.mxu0 0
  %804 = vmatpush1.bf16.msra.mxu0 %v566
  %805 = vmatprep.subr.bf16.mxu0 0
  %806 = vmatpush1.bf16.msra.mxu0 %v567
  %807 = vmatprep.subr.bf16.mxu0 0
  %808 = vmatpush1.bf16.msra.mxu0 %v568
  %809 = vmatprep.subr.bf16.mxu0 0
  %810 = vmatpush1.bf16.msra.mxu0 %v569
  %811 = vmatprep.subr.bf16.mxu0 0
  %812 = vmatpush1.bf16.msra.mxu0 %v570
  %813 = vmatprep.subr.bf16.mxu0 0
  %814 = vmatpush1.bf16.msra.mxu0 %v571
  %815 = vmatprep.mubr.bf16.mxu0 %v227
  %816 = vmatmul.mubr.bf16.gmra.mrb[0].mxu0 %v226
  %v817 = vpop.f32.mrb[0].mxu0
  %v818 = vadd.f32 %v769, %v817
  %v819 = vpop.f32.mrb[0].mxu0
  %v820 = vpop.f32.mrb[0].mxu0
  %v821 = vadd.f32 %v772, %v820
  %v822 = vpop.f32.mrb[0].mxu0
  %823 = vmatprep.mubr.bf16.mxu0 %v235
  %824 = vmatmul.mubr.bf16.gmra.mrb[0].mxu0 %v234
  %v825 = vpop.f32.mrb[0].mxu0
  %v826 = vadd.f32 %v777, %v825
  %v827 = vpop.f32.mrb[0].mxu0
  %v828 = vpop.f32.mrb[0].mxu0
  %v829 = vadd.f32 %v780, %v828
  %v830 = vpop.f32.mrb[0].mxu0
  %831 = vdwg.mxu0
  %v832 = vadd.f32 %v818, %v821
  %v833 = vadd.f32 %v832, %v826
  %v834 = vadd.f32 %v833, %v829
  %v835 = vrot.slane %v834, 4
  %v836 = vadd.f32 %v834, %v835
  %v837 = vrot.slane %v836, 2
  %v838 = vadd.f32 %v836, %v837
  %v839 = vrot.slane %v838, 1
  %v840 = vadd.f32 %v838, %v839
  %v841 = vmul.f32 %v840, 0.03125
  %v842 = vmul.f32 %v818, %v818
  %v843 = vmul.f32 %v821, %v821
  %v844 = vmul.f32 %v826, %v826
  %v845 = vmul.f32 %v829, %v829
  %v846 = vadd.f32 %v842, %v843
  %v847 = vadd.f32 %v846, %v844
  %v848 = vadd.f32 %v847, %v845
  %v849 = vrot.slane %v848, 4
  %v850 = vadd.f32 %v848, %v849
  %v851 = vrot.slane %v850, 2
  %v852 = vadd.f32 %v850, %v851
  %v853 = vrot.slane %v852, 1
  %v854 = vadd.f32 %v852, %v853
  %v855 = vmul.f32 %v854, 0.03125
  %v856 = vmul.f32 %v841, %v841
  %v857 = vsub.f32 %v855, %v856
  %v858 = vld [vmem:[%s3] sm:$0x1]
  %v859 = vadd.f32 %v857, 1e-05
  %v860 = vrsqrt.pop %v859
  %v861 = vmul.f32 %v858, %v860
  %v862 = vld [vmem:[%s4] sm:$0x1]
  %v863 = vmul.f32 %v841, %v861
  %v864 = vsub.f32 %v862, %v863
  %v866 = vlaneseq
  %v867 = vshrl.u32 %v866, 7
  %v868 = vsub.s32 0, %v867
  %v869 = vrot.slane %v861, %v868
  %v871 = vmul.f32 %v818, %v869
  %v872 = vmul.f32 %v821, %v869
  %v873 = vmul.f32 %v826, %v869
  %v874 = vmul.f32 %v829, %v869
  %v876 = vlaneseq
  %v877 = vshrl.u32 %v876, 7
  %v878 = vsub.s32 0, %v877
  %v879 = vrot.slane %v864, %v878
  %v881 = vadd.f32 %v871, %v879
  %v882 = vadd.f32 %v872, %v879
  %v883 = vadd.f32 %v873, %v879
  %v884 = vadd.f32 %v874, %v879
  %vm885 = vcmp.ge.f32.partialorder %v881, 0.0
  %vm886 = vcmp.ge.f32.partialorder %v882, 0.0
  %vm887 = vcmp.ge.f32.partialorder %v883, 0.0
  %vm888 = vcmp.ge.f32.partialorder %v884, 0.0
  %v889 = vmul.f32 %v881, 0.1
  %v890 = vmul.f32 %v882, 0.1
  %v891 = vmul.f32 %v883, 0.1
  %v892 = vmul.f32 %v884, 0.1
  %v893 = vsel %vm885, %v881, %v889
  %v894 = vsel %vm886, %v882, %v890
  %v895 = vsel %vm887, %v883, %v891
  %v896 = vsel %vm888, %v884, %v892
  %v897 = vpack.c.bf16 %v894, %v893
  %v898 = vpack.c.bf16 %v896, %v895
  %v901 = vunpack.c.l.b16 %v897
  %v902 = vunpack.c.h.b16 %v897
  %v903 = vunpack.c.l.b16 %v898
  %v904 = vunpack.c.h.b16 %v898
  %v905 = vpack.c.b16 %v901, %v901
  %v906 = vpack.c.b16 %v902, %v902
  %v907 = vpack.c.b16 %v903, %v903
  %v908 = vpack.c.b16 %v904, %v904
  %913 = vst [vmem:[%s5] sm:$0xf] %v905
  %914 = vst [vmem:[%s5 + $0x4] sm:$0xf] %v906
  %915 = vst [vmem:[%s5 + $0x8] sm:$0xf] %v907
  %916 = vst [vmem:[%s5 + $0xc] sm:$0xf] %v908
  // Predicated region
  $region22: #{discriminator_forward.8} parent=0 // pred_check
    _
  $region23: #{discriminator_forward.8} parent=0 // pred_check_branch
    %918 = sbr.rel (0) target = $region25
  $region24: #{discriminator_forward.8} parent=0 // pred_region
    _
  $region25: #{discriminator_forward.8} parent=0 // pred_fallthru
    _
  // Predicated region
  $region26: #{discriminator_forward.8} parent=0 // pred_check
    _
  $region27: #{discriminator_forward.8} parent=0 // pred_check_branch
    %920 = sbr.rel (0) target = $region29
  $region28: #{discriminator_forward.8} parent=0 // pred_region
    _
  $region29: #{discriminator_forward.8} parent=0 // pred_fallthru
    _

// kernel: tile.7
$region0: #{tile.7}
  %s0 = inlined_call_operand.vmem [shape: f32[2,4,256], index: 0, kind: input, shape index: {}]
  %s1 = inlined_call_operand.vmem [shape: f32[8,256], index: 1, kind: output, shape index: {}]
  $region1: #{tile.7} parent=0
    #allocation0 [shape = 'u8[16384]{0}', space=vmem, size = 0x4000, scoped, tag = 'scoped mem for input reshape']
    %s3 = sshllo.u32 0, 4
    %s4 = smul.addr 4, 3
    %s5 = scalar_lea.vmem %s0, %s4
    %v6 = vld [vmem:[%s5] sm:%s3]
    %s7 = scalar_lea.vmem [#allocation0], 24
    %8 = vst [vmem:[%s7] sm:%s3] %v6
    %s9 = smul.addr 4, 2
    %s10 = scalar_lea.vmem %s0, %s9
    %v11 = vld [vmem:[%s10] sm:%s3]
    %s12 = scalar_lea.vmem [#allocation0], 16
    %13 = vst [vmem:[%s12] sm:%s3] %v11
    %s14 = scalar_lea.vmem %s0, 4
    %v15 = vld [vmem:[%s14] sm:%s3]
    %s16 = scalar_lea.vmem [#allocation0], 8
    %17 = vst [vmem:[%s16] sm:%s3] %v15
    %v18 = vld [vmem:[%s0] sm:%s3]
    %19 = vst [vmem:[#allocation0] sm:%s3] %v18
    %v20 = vld [vmem:[#allocation0] sm:$0xf]
    %21 = vst [vmem:[%s1] sm:$0xf] %v20
    %s22 = scalar_lea.vmem [#allocation0], 8
    %v23 = vld [vmem:[%s22] sm:$0xf]
    %s24 = scalar_lea.vmem %s1, 8
    %25 = vst [vmem:[%s24] sm:$0xf] %v23
    %s26 = scalar_lea.vmem [#allocation0], 16
    %v27 = vld [vmem:[%s26] sm:$0xf]
    %s28 = scalar_lea.vmem %s1, 4
    %29 = vst [vmem:[%s28] sm:$0xf] %v27
    %s30 = scalar_lea.vmem [#allocation0], 24
    %v31 = vld [vmem:[%s30] sm:$0xf]
    %s32 = scalar_lea.vmem %s1, 12
    %33 = vst [vmem:[%s32] sm:$0xf] %v31

// kernel: discriminator_forward.9
$region0: #{discriminator_forward.9}
  #allocation0 [shape = 'u32[]', space=smem, size = 0x4, offset = 0x4, fixed_abs, tag = 'smem constant byte address 0x4 - core index']
  #allocation1 [shape = 'u32[144,128]{1,0:T(1,128)}', space=vmem, size = 0x12000, scoped, tag = 'internal scratch']
  #allocation2 [shape = 'f32[1,1]{1,0:T(1,128)S(1)}', space=vmem, size = 0x200, scoped, tag = 'scoped memory for discriminator_forward.9']
  %s0 = inlined_call_operand.vmem [shape: bf16[8,2048], index: 0, kind: input, shape index: {}]
  %s1 = inlined_call_operand.vmem [shape: bf16[2048,256], index: 1, kind: input, shape index: {}]
  %s2 = inlined_call_operand.vmem [shape: f32[1,256], index: 2, kind: input, shape index: {}]
  %s3 = inlined_call_operand.vmem [shape: f32[1,256], index: 3, kind: input, shape index: {}]
  %s4 = inlined_call_operand.vmem [shape: f32[1,256], index: 4, kind: input, shape index: {}]
  %s5 = inlined_call_operand.vmem [shape: f32[8,256], index: 5, kind: input, shape index: {}]
  %s6 = inlined_call_operand.vmem [shape: f32[2,8], index: 6, kind: input, shape index: {}]
  %s7 = inlined_call_operand.<no memory space> [shape: f32[1,1], index: 7, kind: input, shape index: {}]
  %s8 = inlined_call_operand.vmem [shape: f32[2,1], index: 8, kind: output, shape index: {}]
  %s9 = sld [smem:[#allocation0]]
  $region42: #{discriminator_forward.9} parent=0
    _
  %s11 = ssub.s32 1, %s9
  %s12 = scalar_select 0, %s11, %s9
  %v13 = vstv %s7
  %14 = vst [vmem:[#allocation2] sm:$0x1] %v13
  // Predicated region
  $region2: #{discriminator_forward.9} parent=0 // pred_check
    _
  $region3: #{discriminator_forward.9} parent=0 // pred_check_branch
    %16 = sbr.rel (0) target = $region5
  $region4: #{discriminator_forward.9} parent=0 // pred_region
    _
  $region5: #{discriminator_forward.9} parent=0 // pred_fallthru
    _
  // Predicated region
  $region6: #{discriminator_forward.9} parent=0 // pred_check
    _
  $region7: #{discriminator_forward.9} parent=0 // pred_check_branch
    %18 = sbr.rel (0) target = $region9
  $region8: #{discriminator_forward.9} parent=0 // pred_region
    _
  $region9: #{discriminator_forward.9} parent=0 // pred_fallthru
    _
  // Predicated region
  $region10: #{discriminator_forward.9} parent=0 // pred_check
    _
  $region11: #{discriminator_forward.9} parent=0 // pred_check_branch
    %20 = sbr.rel (0) target = $region13
  $region12: #{discriminator_forward.9} parent=0 // pred_region
    _
  $region13: #{discriminator_forward.9} parent=0 // pred_fallthru
    _
  // Predicated region
  $region14: #{discriminator_forward.9} parent=0 // pred_check
    _
  $region15: #{discriminator_forward.9} parent=0 // pred_check_branch
    %22 = sbr.rel (0) target = $region17
  $region16: #{discriminator_forward.9} parent=0 // pred_region
    _
  $region17: #{discriminator_forward.9} parent=0 // pred_fallthru
    _
  // Predicated region
  $region18: #{discriminator_forward.9} parent=0 // pred_check
    _
  $region19: #{discriminator_forward.9} parent=0 // pred_check_branch
    %24 = sbr.rel (0) target = $region21
  $region20: #{discriminator_forward.9} parent=0 // pred_region
    _
  $region21: #{discriminator_forward.9} parent=0 // pred_fallthru
    _
  // Predicated region
  $region22: #{discriminator_forward.9} parent=0 // pred_check
    _
  $region23: #{discriminator_forward.9} parent=0 // pred_check_branch
    %26 = sbr.rel (0) target = $region25
  $region24: #{discriminator_forward.9} parent=0 // pred_region
    _
  $region25: #{discriminator_forward.9} parent=0 // pred_fallthru
    _
  // Predicated region
  $region26: #{discriminator_forward.9} parent=0 // pred_check
    _
  $region27: #{discriminator_forward.9} parent=0 // pred_check_branch
    %28 = sbr.rel (0) target = $region29
  $region28: #{discriminator_forward.9} parent=0 // pred_region
    _
  $region29: #{discriminator_forward.9} parent=0 // pred_fallthru
    _
  // Predicated region
  $region30: #{discriminator_forward.9} parent=0 // pred_check
    _
  $region31: #{discriminator_forward.9} parent=0 // pred_check_branch
    %30 = sbr.rel (0) target = $region33
  $region32: #{discriminator_forward.9} parent=0 // pred_region
    _
  $region33: #{discriminator_forward.9} parent=0 // pred_fallthru
    _
  %v31 = vld [vmem:[%s0] sm:$0xff]
  %v32 = vld [vmem:[%s0 + $0x8] sm:$0xff]
  %v33 = vld [vmem:[%s0 + $0x10] sm:$0xff]
  %v34 = vld [vmem:[%s0 + $0x18] sm:$0xff]
  %v35 = vld [vmem:[%s0 + $0x20] sm:$0xff]
  %v36 = vld [vmem:[%s0 + $0x28] sm:$0xff]
  %v37 = vld [vmem:[%s0 + $0x30] sm:$0xff]
  %v38 = vld [vmem:[%s0 + $0x38] sm:$0xff]
  %v39 = vld [vmem:[%s1] sm:$0xff]
  %v40 = vld [vmem:[%s1 + $0x8] sm:$0xff]
  %v41 = vld [vmem:[%s1 + $0x10] sm:$0xff]
  %v42 = vld [vmem:[%s1 + $0x18] sm:$0xff]
  %v43 = vld [vmem:[%s1 + $0x20] sm:$0xff]
  %v44 = vld [vmem:[%s1 + $0x28] sm:$0xff]
  %v45 = vld [vmem:[%s1 + $0x30] sm:$0xff]
  %v46 = vld [vmem:[%s1 + $0x38] sm:$0xff]
  %v47 = vld [vmem:[%s1 + $0x40] sm:$0xff]
  %v48 = vld [vmem:[%s1 + $0x48] sm:$0xff]
  %v49 = vld [vmem:[%s1 + $0x50] sm:$0xff]
  %v50 = vld [vmem:[%s1 + $0x58] sm:$0xff]
  %v51 = vld [vmem:[%s1 + $0x60] sm:$0xff]
  %v52 = vld [vmem:[%s1 + $0x68] sm:$0xff]
  %v53 = vld [vmem:[%s1 + $0x70] sm:$0xff]
  %v54 = vld [vmem:[%s1 + $0x78] sm:$0xff]
  %v55 = vld [vmem:[%s1 + $0x80] sm:$0xff]
  %v56 = vld [vmem:[%s1 + $0x88] sm:$0xff]
  %v57 = vld [vmem:[%s1 + $0x90] sm:$0xff]
  %v58 = vld [vmem:[%s1 + $0x98] sm:$0xff]
  %v59 = vld [vmem:[%s1 + $0xa0] sm:$0xff]
  %v60 = vld [vmem:[%s1 + $0xa8] sm:$0xff]
  %v61 = vld [vmem:[%s1 + $0xb0] sm:$0xff]
  %v62 = vld [vmem:[%s1 + $0xb8] sm:$0xff]
  %v63 = vld [vmem:[%s1 + $0xc0] sm:$0xff]
  %v64 = vld [vmem:[%s1 + $0xc8] sm:$0xff]
  %v65 = vld [vmem:[%s1 + $0xd0] sm:$0xff]
  %v66 = vld [vmem:[%s1 + $0xd8] sm:$0xff]
  %v67 = vld [vmem:[%s1 + $0xe0] sm:$0xff]
  %v68 = vld [vmem:[%s1 + $0xe8] sm:$0xff]
  %v69 = vld [vmem:[%s1 + $0xf0] sm:$0xff]
  %v70 = vld [vmem:[%s1 + $0xf8] sm:$0xff]
  %v71 = vld [vmem:[%s1 + $0x100] sm:$0xff]
  %v72 = vld [vmem:[%s1 + $0x108] sm:$0xff]
  %v73 = vld [vmem:[%s1 + $0x110] sm:$0xff]
  %v74 = vld [vmem:[%s1 + $0x118] sm:$0xff]
  %v75 = vld [vmem:[%s1 + $0x120] sm:$0xff]
  %v76 = vld [vmem:[%s1 + $0x128] sm:$0xff]
  %v77 = vld [vmem:[%s1 + $0x130] sm:$0xff]
  %v78 = vld [vmem:[%s1 + $0x138] sm:$0xff]
  %v79 = vld [vmem:[%s1 + $0x140] sm:$0xff]
  %v80 = vld [vmem:[%s1 + $0x148] sm:$0xff]
  %v81 = vld [vmem:[%s1 + $0x150] sm:$0xff]
  %v82 = vld [vmem:[%s1 + $0x158] sm:$0xff]
  %v83 = vld [vmem:[%s1 + $0x160] sm:$0xff]
  %v84 = vld [vmem:[%s1 + $0x168] sm:$0xff]
  %v85 = vld [vmem:[%s1 + $0x170] sm:$0xff]
  %v86 = vld [vmem:[%s1 + $0x178] sm:$0xff]
  %v87 = vld [vmem:[%s1 + $0x180] sm:$0xff]
  %v88 = vld [vmem:[%s1 + $0x188] sm:$0xff]
  %v89 = vld [vmem:[%s1 + $0x190] sm:$0xff]
  %v90 = vld [vmem:[%s1 + $0x198] sm:$0xff]
  %v91 = vld [vmem:[%s1 + $0x1a0] sm:$0xff]
  %v92 = vld [vmem:[%s1 + $0x1a8] sm:$0xff]
  %v93 = vld [vmem:[%s1 + $0x1b0] sm:$0xff]
  %v94 = vld [vmem:[%s1 + $0x1b8] sm:$0xff]
  %v95 = vld [vmem:[%s1 + $0x1c0] sm:$0xff]
  %v96 = vld [vmem:[%s1 + $0x1c8] sm:$0xff]
  %v97 = vld [vmem:[%s1 + $0x1d0] sm:$0xff]
  %v98 = vld [vmem:[%s1 + $0x1d8] sm:$0xff]
  %v99 = vld [vmem:[%s1 + $0x1e0] sm:$0xff]
  %v100 = vld [vmem:[%s1 + $0x1e8] sm:$0xff]
  %v101 = vld [vmem:[%s1 + $0x1f0] sm:$0xff]
  %v102 = vld [vmem:[%s1 + $0x1f8] sm:$0xff]
  %v103 = vld [vmem:[%s1 + $0x200] sm:$0xff]
  %v104 = vld [vmem:[%s1 + $0x208] sm:$0xff]
  %v105 = vld [vmem:[%s1 + $0x210] sm:$0xff]
  %v106 = vld [vmem:[%s1 + $0x218] sm:$0xff]
  %v107 = vld [vmem:[%s1 + $0x220] sm:$0xff]
  %v108 = vld [vmem:[%s1 + $0x228] sm:$0xff]
  %v109 = vld [vmem:[%s1 + $0x230] sm:$0xff]
  %v110 = vld [vmem:[%s1 + $0x238] sm:$0xff]
  %v111 = vld [vmem:[%s1 + $0x240] sm:$0xff]
  %v112 = vld [vmem:[%s1 + $0x248] sm:$0xff]
  %v113 = vld [vmem:[%s1 + $0x250] sm:$0xff]
  %v114 = vld [vmem:[%s1 + $0x258] sm:$0xff]
  %v115 = vld [vmem:[%s1 + $0x260] sm:$0xff]
  %v116 = vld [vmem:[%s1 + $0x268] sm:$0xff]
  %v117 = vld [vmem:[%s1 + $0x270] sm:$0xff]
  %v118 = vld [vmem:[%s1 + $0x278] sm:$0xff]
  %v119 = vld [vmem:[%s1 + $0x280] sm:$0xff]
  %v120 = vld [vmem:[%s1 + $0x288] sm:$0xff]
  %v121 = vld [vmem:[%s1 + $0x290] sm:$0xff]
  %v122 = vld [vmem:[%s1 + $0x298] sm:$0xff]
  %v123 = vld [vmem:[%s1 + $0x2a0] sm:$0xff]
  %v124 = vld [vmem:[%s1 + $0x2a8] sm:$0xff]
  %v125 = vld [vmem:[%s1 + $0x2b0] sm:$0xff]
  %v126 = vld [vmem:[%s1 + $0x2b8] sm:$0xff]
  %v127 = vld [vmem:[%s1 + $0x2c0] sm:$0xff]
  %v128 = vld [vmem:[%s1 + $0x2c8] sm:$0xff]
  %v129 = vld [vmem:[%s1 + $0x2d0] sm:$0xff]
  %v130 = vld [vmem:[%s1 + $0x2d8] sm:$0xff]
  %v131 = vld [vmem:[%s1 + $0x2e0] sm:$0xff]
  %v132 = vld [vmem:[%s1 + $0x2e8] sm:$0xff]
  %v133 = vld [vmem:[%s1 + $0x2f0] sm:$0xff]
  %v134 = vld [vmem:[%s1 + $0x2f8] sm:$0xff]
  %v135 = vld [vmem:[%s1 + $0x300] sm:$0xff]
  %v136 = vld [vmem:[%s1 + $0x308] sm:$0xff]
  %v137 = vld [vmem:[%s1 + $0x310] sm:$0xff]
  %v138 = vld [vmem:[%s1 + $0x318] sm:$0xff]
  %v139 = vld [vmem:[%s1 + $0x320] sm:$0xff]
  %v140 = vld [vmem:[%s1 + $0x328] sm:$0xff]
  %v141 = vld [vmem:[%s1 + $0x330] sm:$0xff]
  %v142 = vld [vmem:[%s1 + $0x338] sm:$0xff]
  %v143 = vld [vmem:[%s1 + $0x340] sm:$0xff]
  %v144 = vld [vmem:[%s1 + $0x348] sm:$0xff]
  %v145 = vld [vmem:[%s1 + $0x350] sm:$0xff]
  %v146 = vld [vmem:[%s1 + $0x358] sm:$0xff]
  %v147 = vld [vmem:[%s1 + $0x360] sm:$0xff]
  %v148 = vld [vmem:[%s1 + $0x368] sm:$0xff]
  %v149 = vld [vmem:[%s1 + $0x370] sm:$0xff]
  %v150 = vld [vmem:[%s1 + $0x378] sm:$0xff]
  %v151 = vld [vmem:[%s1 + $0x380] sm:$0xff]
  %v152 = vld [vmem:[%s1 + $0x388] sm:$0xff]
  %v153 = vld [vmem:[%s1 + $0x390] sm:$0xff]
  %v154 = vld [vmem:[%s1 + $0x398] sm:$0xff]
  %v155 = vld [vmem:[%s1 + $0x3a0] sm:$0xff]
  %v156 = vld [vmem:[%s1 + $0x3a8] sm:$0xff]
  %v157 = vld [vmem:[%s1 + $0x3b0] sm:$0xff]
  %v158 = vld [vmem:[%s1 + $0x3b8] sm:$0xff]
  %v159 = vld [vmem:[%s1 + $0x3c0] sm:$0xff]
  %v160 = vld [vmem:[%s1 + $0x3c8] sm:$0xff]
  %v161 = vld [vmem:[%s1 + $0x3d0] sm:$0xff]
  %v162 = vld [vmem:[%s1 + $0x3d8] sm:$0xff]
  %v163 = vld [vmem:[%s1 + $0x3e0] sm:$0xff]
  %v164 = vld [vmem:[%s1 + $0x3e8] sm:$0xff]
  %v165 = vld [vmem:[%s1 + $0x3f0] sm:$0xff]
  %v166 = vld [vmem:[%s1 + $0x3f8] sm:$0xff]
  %v167 = vld [vmem:[%s1 + $0x400] sm:$0xff]
  %v168 = vld [vmem:[%s1 + $0x408] sm:$0xff]
  %v169 = vld [vmem:[%s1 + $0x410] sm:$0xff]
  %v170 = vld [vmem:[%s1 + $0x418] sm:$0xff]
  %v171 = vld [vmem:[%s1 + $0x420] sm:$0xff]
  %v172 = vld [vmem:[%s1 + $0x428] sm:$0xff]
  %v173 = vld [vmem:[%s1 + $0x430] sm:$0xff]
  %v174 = vld [vmem:[%s1 + $0x438] sm:$0xff]
  %v175 = vld [vmem:[%s1 + $0x440] sm:$0xff]
  %v176 = vld [vmem:[%s1 + $0x448] sm:$0xff]
  %v177 = vld [vmem:[%s1 + $0x450] sm:$0xff]
  %v178 = vld [vmem:[%s1 + $0x458] sm:$0xff]
  %v179 = vld [vmem:[%s1 + $0x460] sm:$0xff]
  %v180 = vld [vmem:[%s1 + $0x468] sm:$0xff]
  %v181 = vld [vmem:[%s1 + $0x470] sm:$0xff]
  %v182 = vld [vmem:[%s1 + $0x478] sm:$0xff]
  %v183 = vld [vmem:[%s1 + $0x480] sm:$0xff]
  %v184 = vld [vmem:[%s1 + $0x488] sm:$0xff]
  %v185 = vld [vmem:[%s1 + $0x490] sm:$0xff]
  %v186 = vld [vmem:[%s1 + $0x498] sm:$0xff]
  %v187 = vld [vmem:[%s1 + $0x4a0] sm:$0xff]
  %v188 = vld [vmem:[%s1 + $0x4a8] sm:$0xff]
  %v189 = vld [vmem:[%s1 + $0x4b0] sm:$0xff]
  %v190 = vld [vmem:[%s1 + $0x4b8] sm:$0xff]
  %v191 = vld [vmem:[%s1 + $0x4c0] sm:$0xff]
  %v192 = vld [vmem:[%s1 + $0x4c8] sm:$0xff]
  %v193 = vld [vmem:[%s1 + $0x4d0] sm:$0xff]
  %v194 = vld [vmem:[%s1 + $0x4d8] sm:$0xff]
  %v195 = vld [vmem:[%s1 + $0x4e0] sm:$0xff]
  %v196 = vld [vmem:[%s1 + $0x4e8] sm:$0xff]
  %v197 = vld [vmem:[%s1 + $0x4f0] sm:$0xff]
  %v198 = vld [vmem:[%s1 + $0x4f8] sm:$0xff]
  %v199 = vld [vmem:[%s1 + $0x500] sm:$0xff]
  %v200 = vld [vmem:[%s1 + $0x508] sm:$0xff]
  %v201 = vld [vmem:[%s1 + $0x510] sm:$0xff]
  %v202 = vld [vmem:[%s1 + $0x518] sm:$0xff]
  %v203 = vld [vmem:[%s1 + $0x520] sm:$0xff]
  %v204 = vld [vmem:[%s1 + $0x528] sm:$0xff]
  %v205 = vld [vmem:[%s1 + $0x530] sm:$0xff]
  %v206 = vld [vmem:[%s1 + $0x538] sm:$0xff]
  %v207 = vld [vmem:[%s1 + $0x540] sm:$0xff]
  %v208 = vld [vmem:[%s1 + $0x548] sm:$0xff]
  %v209 = vld [vmem:[%s1 + $0x550] sm:$0xff]
  %v210 = vld [vmem:[%s1 + $0x558] sm:$0xff]
  %v211 = vld [vmem:[%s1 + $0x560] sm:$0xff]
  %v212 = vld [vmem:[%s1 + $0x568] sm:$0xff]
  %v213 = vld [vmem:[%s1 + $0x570] sm:$0xff]
  %v214 = vld [vmem:[%s1 + $0x578] sm:$0xff]
  %v215 = vld [vmem:[%s1 + $0x580] sm:$0xff]
  %v216 = vld [vmem:[%s1 + $0x588] sm:$0xff]
  %v217 = vld [vmem:[%s1 + $0x590] sm:$0xff]
  %v218 = vld [vmem:[%s1 + $0x598] sm:$0xff]
  %v219 = vld [vmem:[%s1 + $0x5a0] sm:$0xff]
  %v220 = vld [vmem:[%s1 + $0x5a8] sm:$0xff]
  %v221 = vld [vmem:[%s1 + $0x5b0] sm:$0xff]
  %v222 = vld [vmem:[%s1 + $0x5b8] sm:$0xff]
  %v223 = vld [vmem:[%s1 + $0x5c0] sm:$0xff]
  %v224 = vld [vmem:[%s1 + $0x5c8] sm:$0xff]
  %v225 = vld [vmem:[%s1 + $0x5d0] sm:$0xff]
  %v226 = vld [vmem:[%s1 + $0x5d8] sm:$0xff]
  %v227 = vld [vmem:[%s1 + $0x5e0] sm:$0xff]
  %v228 = vld [vmem:[%s1 + $0x5e8] sm:$0xff]
  %v229 = vld [vmem:[%s1 + $0x5f0] sm:$0xff]
  %v230 = vld [vmem:[%s1 + $0x5f8] sm:$0xff]
  %v231 = vld [vmem:[%s1 + $0x600] sm:$0xff]
  %v232 = vld [vmem:[%s1 + $0x608] sm:$0xff]
  %v233 = vld [vmem:[%s1 + $0x610] sm:$0xff]
  %v234 = vld [vmem:[%s1 + $0x618] sm:$0xff]
  %v235 = vld [vmem:[%s1 + $0x620] sm:$0xff]
  %v236 = vld [vmem:[%s1 + $0x628] sm:$0xff]
  %v237 = vld [vmem:[%s1 + $0x630] sm:$0xff]
  %v238 = vld [vmem:[%s1 + $0x638] sm:$0xff]
  %v239 = vld [vmem:[%s1 + $0x640] sm:$0xff]
  %v240 = vld [vmem:[%s1 + $0x648] sm:$0xff]
  %v241 = vld [vmem:[%s1 + $0x650] sm:$0xff]
  %v242 = vld [vmem:[%s1 + $0x658] sm:$0xff]
  %v243 = vld [vmem:[%s1 + $0x660] sm:$0xff]
  %v244 = vld [vmem:[%s1 + $0x668] sm:$0xff]
  %v245 = vld [vmem:[%s1 + $0x670] sm:$0xff]
  %v246 = vld [vmem:[%s1 + $0x678] sm:$0xff]
  %v247 = vld [vmem:[%s1 + $0x680] sm:$0xff]
  %v248 = vld [vmem:[%s1 + $0x688] sm:$0xff]
  %v249 = vld [vmem:[%s1 + $0x690] sm:$0xff]
  %v250 = vld [vmem:[%s1 + $0x698] sm:$0xff]
  %v251 = vld [vmem:[%s1 + $0x6a0] sm:$0xff]
  %v252 = vld [vmem:[%s1 + $0x6a8] sm:$0xff]
  %v253 = vld [vmem:[%s1 + $0x6b0] sm:$0xff]
  %v254 = vld [vmem:[%s1 + $0x6b8] sm:$0xff]
  %v255 = vld [vmem:[%s1 + $0x6c0] sm:$0xff]
  %v256 = vld [vmem:[%s1 + $0x6c8] sm:$0xff]
  %v257 = vld [vmem:[%s1 + $0x6d0] sm:$0xff]
  %v258 = vld [vmem:[%s1 + $0x6d8] sm:$0xff]
  %v259 = vld [vmem:[%s1 + $0x6e0] sm:$0xff]
  %v260 = vld [vmem:[%s1 + $0x6e8] sm:$0xff]
  %v261 = vld [vmem:[%s1 + $0x6f0] sm:$0xff]
  %v262 = vld [vmem:[%s1 + $0x6f8] sm:$0xff]
  %v263 = vld [vmem:[%s1 + $0x700] sm:$0xff]
  %v264 = vld [vmem:[%s1 + $0x708] sm:$0xff]
  %v265 = vld [vmem:[%s1 + $0x710] sm:$0xff]
  %v266 = vld [vmem:[%s1 + $0x718] sm:$0xff]
  %v267 = vld [vmem:[%s1 + $0x720] sm:$0xff]
  %v268 = vld [vmem:[%s1 + $0x728] sm:$0xff]
  %v269 = vld [vmem:[%s1 + $0x730] sm:$0xff]
  %v270 = vld [vmem:[%s1 + $0x738] sm:$0xff]
  %v271 = vld [vmem:[%s1 + $0x740] sm:$0xff]
  %v272 = vld [vmem:[%s1 + $0x748] sm:$0xff]
  %v273 = vld [vmem:[%s1 + $0x750] sm:$0xff]
  %v274 = vld [vmem:[%s1 + $0x758] sm:$0xff]
  %v275 = vld [vmem:[%s1 + $0x760] sm:$0xff]
  %v276 = vld [vmem:[%s1 + $0x768] sm:$0xff]
  %v277 = vld [vmem:[%s1 + $0x770] sm:$0xff]
  %v278 = vld [vmem:[%s1 + $0x778] sm:$0xff]
  %v279 = vld [vmem:[%s1 + $0x780] sm:$0xff]
  %v280 = vld [vmem:[%s1 + $0x788] sm:$0xff]
  %v281 = vld [vmem:[%s1 + $0x790] sm:$0xff]
  %v282 = vld [vmem:[%s1 + $0x798] sm:$0xff]
  %v283 = vld [vmem:[%s1 + $0x7a0] sm:$0xff]
  %v284 = vld [vmem:[%s1 + $0x7a8] sm:$0xff]
  %v285 = vld [vmem:[%s1 + $0x7b0] sm:$0xff]
  %v286 = vld [vmem:[%s1 + $0x7b8] sm:$0xff]
  %v287 = vld [vmem:[%s1 + $0x7c0] sm:$0xff]
  %v288 = vld [vmem:[%s1 + $0x7c8] sm:$0xff]
  %v289 = vld [vmem:[%s1 + $0x7d0] sm:$0xff]
  %v290 = vld [vmem:[%s1 + $0x7d8] sm:$0xff]
  %v291 = vld [vmem:[%s1 + $0x7e0] sm:$0xff]
  %v292 = vld [vmem:[%s1 + $0x7e8] sm:$0xff]
  %v293 = vld [vmem:[%s1 + $0x7f0] sm:$0xff]
  %v294 = vld [vmem:[%s1 + $0x7f8] sm:$0xff]
  %v295 = vld [vmem:[%s2] sm:$0x3]
  %v297 = vlaneseq
  %v298 = vshrl.u32 %v297, 7
  %v299 = vsub.s32 0, %v298
  %v300 = vrot.slane %v295, %v299
  %v301 = vlaneseq
  %v302 = vshrl.u32 %v301, 7
  %v303 = vsub.s32 1, %v302
  %v304 = vrot.slane %v295, %v303
  %v315 = vunpack.c.l.b16 %v31
  %v316 = vunpack.c.h.b16 %v31
  %v317 = vunpack.c.l.b16 %v32
  %v318 = vunpack.c.h.b16 %v32
  %v319 = vunpack.c.l.b16 %v33
  %v320 = vunpack.c.h.b16 %v33
  %v321 = vunpack.c.l.b16 %v34
  %v322 = vunpack.c.h.b16 %v34
  %v323 = vunpack.c.l.b16 %v35
  %v324 = vunpack.c.h.b16 %v35
  %v325 = vunpack.c.l.b16 %v36
  %v326 = vunpack.c.h.b16 %v36
  %v327 = vunpack.c.l.b16 %v37
  %v328 = vunpack.c.h.b16 %v37
  %v329 = vunpack.c.l.b16 %v38
  %v330 = vunpack.c.h.b16 %v38
  %v331 = vpack.c.b16 %v315, %v315
  %v332 = vpack.c.b16 %v316, %v316
  %v333 = vpack.c.b16 %v317, %v317
  %v334 = vpack.c.b16 %v318, %v318
  %v335 = vpack.c.b16 %v319, %v319
  %v336 = vpack.c.b16 %v320, %v320
  %v337 = vpack.c.b16 %v321, %v321
  %v338 = vpack.c.b16 %v322, %v322
  %v339 = vpack.c.b16 %v323, %v323
  %v340 = vpack.c.b16 %v324, %v324
  %v341 = vpack.c.b16 %v325, %v325
  %v342 = vpack.c.b16 %v326, %v326
  %v343 = vpack.c.b16 %v327, %v327
  %v344 = vpack.c.b16 %v328, %v328
  %v345 = vpack.c.b16 %v329, %v329
  %v346 = vpack.c.b16 %v330, %v330
  %v619 = vunpack.c.l.b16 %v39
  %v620 = vunpack.c.h.b16 %v39
  %v621 = vunpack.c.l.b16 %v40
  %v622 = vunpack.c.h.b16 %v40
  %v623 = vunpack.c.l.b16 %v41
  %v624 = vunpack.c.h.b16 %v41
  %v625 = vunpack.c.l.b16 %v42
  %v626 = vunpack.c.h.b16 %v42
  %v627 = vunpack.c.l.b16 %v43
  %v628 = vunpack.c.h.b16 %v43
  %v629 = vunpack.c.l.b16 %v44
  %v630 = vunpack.c.h.b16 %v44
  %v631 = vunpack.c.l.b16 %v45
  %v632 = vunpack.c.h.b16 %v45
  %v633 = vunpack.c.l.b16 %v46
  %v634 = vunpack.c.h.b16 %v46
  %v635 = vunpack.c.l.b16 %v47
  %v636 = vunpack.c.h.b16 %v47
  %v637 = vunpack.c.l.b16 %v48
  %v638 = vunpack.c.h.b16 %v48
  %v639 = vunpack.c.l.b16 %v49
  %v640 = vunpack.c.h.b16 %v49
  %v641 = vunpack.c.l.b16 %v50
  %v642 = vunpack.c.h.b16 %v50
  %v643 = vunpack.c.l.b16 %v51
  %v644 = vunpack.c.h.b16 %v51
  %v645 = vunpack.c.l.b16 %v52
  %v646 = vunpack.c.h.b16 %v52
  %v647 = vunpack.c.l.b16 %v53
  %v648 = vunpack.c.h.b16 %v53
  %v649 = vunpack.c.l.b16 %v54
  %v650 = vunpack.c.h.b16 %v54
  %v651 = vunpack.c.l.b16 %v55
  %v652 = vunpack.c.h.b16 %v55
  %v653 = vunpack.c.l.b16 %v56
  %v654 = vunpack.c.h.b16 %v56
  %v655 = vunpack.c.l.b16 %v57
  %v656 = vunpack.c.h.b16 %v57
  %v657 = vunpack.c.l.b16 %v58
  %v658 = vunpack.c.h.b16 %v58
  %v659 = vunpack.c.l.b16 %v59
  %v660 = vunpack.c.h.b16 %v59
  %v661 = vunpack.c.l.b16 %v60
  %v662 = vunpack.c.h.b16 %v60
  %v663 = vunpack.c.l.b16 %v61
  %v664 = vunpack.c.h.b16 %v61
  %v665 = vunpack.c.l.b16 %v62
  %v666 = vunpack.c.h.b16 %v62
  %v667 = vunpack.c.l.b16 %v63
  %v668 = vunpack.c.h.b16 %v63
  %v669 = vunpack.c.l.b16 %v64
  %v670 = vunpack.c.h.b16 %v64
  %v671 = vunpack.c.l.b16 %v65
  %v672 = vunpack.c.h.b16 %v65
  %v673 = vunpack.c.l.b16 %v66
  %v674 = vunpack.c.h.b16 %v66
  %v675 = vunpack.c.l.b16 %v67
  %v676 = vunpack.c.h.b16 %v67
  %v677 = vunpack.c.l.b16 %v68
  %v678 = vunpack.c.h.b16 %v68
  %v679 = vunpack.c.l.b16 %v69
  %v680 = vunpack.c.h.b16 %v69
  %v681 = vunpack.c.l.b16 %v70
  %v682 = vunpack.c.h.b16 %v70
  %v683 = vunpack.c.l.b16 %v71
  %v684 = vunpack.c.h.b16 %v71
  %v685 = vunpack.c.l.b16 %v72
  %v686 = vunpack.c.h.b16 %v72
  %v687 = vunpack.c.l.b16 %v73
  %v688 = vunpack.c.h.b16 %v73
  %v689 = vunpack.c.l.b16 %v74
  %v690 = vunpack.c.h.b16 %v74
  %v691 = vunpack.c.l.b16 %v75
  %v692 = vunpack.c.h.b16 %v75
  %v693 = vunpack.c.l.b16 %v76
  %v694 = vunpack.c.h.b16 %v76
  %v695 = vunpack.c.l.b16 %v77
  %v696 = vunpack.c.h.b16 %v77
  %v697 = vunpack.c.l.b16 %v78
  %v698 = vunpack.c.h.b16 %v78
  %v699 = vunpack.c.l.b16 %v79
  %v700 = vunpack.c.h.b16 %v79
  %v701 = vunpack.c.l.b16 %v80
  %v702 = vunpack.c.h.b16 %v80
  %v703 = vunpack.c.l.b16 %v81
  %v704 = vunpack.c.h.b16 %v81
  %v705 = vunpack.c.l.b16 %v82
  %v706 = vunpack.c.h.b16 %v82
  %v707 = vunpack.c.l.b16 %v83
  %v708 = vunpack.c.h.b16 %v83
  %v709 = vunpack.c.l.b16 %v84
  %v710 = vunpack.c.h.b16 %v84
  %v711 = vunpack.c.l.b16 %v85
  %v712 = vunpack.c.h.b16 %v85
  %v713 = vunpack.c.l.b16 %v86
  %v714 = vunpack.c.h.b16 %v86
  %v715 = vunpack.c.l.b16 %v87
  %v716 = vunpack.c.h.b16 %v87
  %v717 = vunpack.c.l.b16 %v88
  %v718 = vunpack.c.h.b16 %v88
  %v719 = vunpack.c.l.b16 %v89
  %v720 = vunpack.c.h.b16 %v89
  %v721 = vunpack.c.l.b16 %v90
  %v722 = vunpack.c.h.b16 %v90
  %v723 = vunpack.c.l.b16 %v91
  %v724 = vunpack.c.h.b16 %v91
  %v725 = vunpack.c.l.b16 %v92
  %v726 = vunpack.c.h.b16 %v92
  %v727 = vunpack.c.l.b16 %v93
  %v728 = vunpack.c.h.b16 %v93
  %v729 = vunpack.c.l.b16 %v94
  %v730 = vunpack.c.h.b16 %v94
  %v731 = vunpack.c.l.b16 %v95
  %v732 = vunpack.c.h.b16 %v95
  %v733 = vunpack.c.l.b16 %v96
  %v734 = vunpack.c.h.b16 %v96
  %v735 = vunpack.c.l.b16 %v97
  %v736 = vunpack.c.h.b16 %v97
  %v737 = vunpack.c.l.b16 %v98
  %v738 = vunpack.c.h.b16 %v98
  %v739 = vunpack.c.l.b16 %v99
  %v740 = vunpack.c.h.b16 %v99
  %v741 = vunpack.c.l.b16 %v100
  %v742 = vunpack.c.h.b16 %v100
  %v743 = vunpack.c.l.b16 %v101
  %v744 = vunpack.c.h.b16 %v101
  %v745 = vunpack.c.l.b16 %v102
  %v746 = vunpack.c.h.b16 %v102
  %v747 = vunpack.c.l.b16 %v103
  %v748 = vunpack.c.h.b16 %v103
  %v749 = vunpack.c.l.b16 %v104
  %v750 = vunpack.c.h.b16 %v104
  %v751 = vunpack.c.l.b16 %v105
  %v752 = vunpack.c.h.b16 %v105
  %v753 = vunpack.c.l.b16 %v106
  %v754 = vunpack.c.h.b16 %v106
  %v755 = vunpack.c.l.b16 %v107
  %v756 = vunpack.c.h.b16 %v107
  %v757 = vunpack.c.l.b16 %v108
  %v758 = vunpack.c.h.b16 %v108
  %v759 = vunpack.c.l.b16 %v109
  %v760 = vunpack.c.h.b16 %v109
  %v761 = vunpack.c.l.b16 %v110
  %v762 = vunpack.c.h.b16 %v110
  %v763 = vunpack.c.l.b16 %v111
  %v764 = vunpack.c.h.b16 %v111
  %v765 = vunpack.c.l.b16 %v112
  %v766 = vunpack.c.h.b16 %v112
  %v767 = vunpack.c.l.b16 %v113
  %v768 = vunpack.c.h.b16 %v113
  %v769 = vunpack.c.l.b16 %v114
  %v770 = vunpack.c.h.b16 %v114
  %v771 = vunpack.c.l.b16 %v115
  %v772 = vunpack.c.h.b16 %v115
  %v773 = vunpack.c.l.b16 %v116
  %v774 = vunpack.c.h.b16 %v116
  %v775 = vunpack.c.l.b16 %v117
  %v776 = vunpack.c.h.b16 %v117
  %v777 = vunpack.c.l.b16 %v118
  %v778 = vunpack.c.h.b16 %v118
  %v779 = vunpack.c.l.b16 %v119
  %v780 = vunpack.c.h.b16 %v119
  %v781 = vunpack.c.l.b16 %v120
  %v782 = vunpack.c.h.b16 %v120
  %v783 = vunpack.c.l.b16 %v121
  %v784 = vunpack.c.h.b16 %v121
  %v785 = vunpack.c.l.b16 %v122
  %v786 = vunpack.c.h.b16 %v122
  %v787 = vunpack.c.l.b16 %v123
  %v788 = vunpack.c.h.b16 %v123
  %v789 = vunpack.c.l.b16 %v124
  %v790 = vunpack.c.h.b16 %v124
  %v791 = vunpack.c.l.b16 %v125
  %v792 = vunpack.c.h.b16 %v125
  %v793 = vunpack.c.l.b16 %v126
  %v794 = vunpack.c.h.b16 %v126
  %v795 = vunpack.c.l.b16 %v127
  %v796 = vunpack.c.h.b16 %v127
  %v797 = vunpack.c.l.b16 %v128
  %v798 = vunpack.c.h.b16 %v128
  %v799 = vunpack.c.l.b16 %v129
  %v800 = vunpack.c.h.b16 %v129
  %v801 = vunpack.c.l.b16 %v130
  %v802 = vunpack.c.h.b16 %v130
  %v803 = vunpack.c.l.b16 %v131
  %v804 = vunpack.c.h.b16 %v131
  %v805 = vunpack.c.l.b16 %v132
  %v806 = vunpack.c.h.b16 %v132
  %v807 = vunpack.c.l.b16 %v133
  %v808 = vunpack.c.h.b16 %v133
  %v809 = vunpack.c.l.b16 %v134
  %v810 = vunpack.c.h.b16 %v134
  %v811 = vunpack.c.l.b16 %v135
  %v812 = vunpack.c.h.b16 %v135
  %v813 = vunpack.c.l.b16 %v136
  %v814 = vunpack.c.h.b16 %v136
  %v815 = vunpack.c.l.b16 %v137
  %v816 = vunpack.c.h.b16 %v137
  %v817 = vunpack.c.l.b16 %v138
  %v818 = vunpack.c.h.b16 %v138
  %v819 = vunpack.c.l.b16 %v139
  %v820 = vunpack.c.h.b16 %v139
  %v821 = vunpack.c.l.b16 %v140
  %v822 = vunpack.c.h.b16 %v140
  %v823 = vunpack.c.l.b16 %v141
  %v824 = vunpack.c.h.b16 %v141
  %v825 = vunpack.c.l.b16 %v142
  %v826 = vunpack.c.h.b16 %v142
  %v827 = vunpack.c.l.b16 %v143
  %v828 = vunpack.c.h.b16 %v143
  %v829 = vunpack.c.l.b16 %v144
  %v830 = vunpack.c.h.b16 %v144
  %v831 = vunpack.c.l.b16 %v145
  %v832 = vunpack.c.h.b16 %v145
  %v833 = vunpack.c.l.b16 %v146
  %v834 = vunpack.c.h.b16 %v146
  %v835 = vunpack.c.l.b16 %v147
  %v836 = vunpack.c.h.b16 %v147
  %v837 = vunpack.c.l.b16 %v148
  %v838 = vunpack.c.h.b16 %v148
  %v839 = vunpack.c.l.b16 %v149
  %v840 = vunpack.c.h.b16 %v149
  %v841 = vunpack.c.l.b16 %v150
  %v842 = vunpack.c.h.b16 %v150
  %v843 = vunpack.c.l.b16 %v151
  %v844 = vunpack.c.h.b16 %v151
  %v845 = vunpack.c.l.b16 %v152
  %v846 = vunpack.c.h.b16 %v152
  %v847 = vunpack.c.l.b16 %v153
  %v848 = vunpack.c.h.b16 %v153
  %v849 = vunpack.c.l.b16 %v154
  %v850 = vunpack.c.h.b16 %v154
  %v851 = vunpack.c.l.b16 %v155
  %v852 = vunpack.c.h.b16 %v155
  %v853 = vunpack.c.l.b16 %v156
  %v854 = vunpack.c.h.b16 %v156
  %v855 = vunpack.c.l.b16 %v157
  %v856 = vunpack.c.h.b16 %v157
  %v857 = vunpack.c.l.b16 %v158
  %v858 = vunpack.c.h.b16 %v158
  %v859 = vunpack.c.l.b16 %v159
  %v860 = vunpack.c.h.b16 %v159
  %v861 = vunpack.c.l.b16 %v160
  %v862 = vunpack.c.h.b16 %v160
  %v863 = vunpack.c.l.b16 %v161
  %v864 = vunpack.c.h.b16 %v161
  %v865 = vunpack.c.l.b16 %v162
  %v866 = vunpack.c.h.b16 %v162
  %v867 = vunpack.c.l.b16 %v163
  %v868 = vunpack.c.h.b16 %v163
  %v869 = vunpack.c.l.b16 %v164
  %v870 = vunpack.c.h.b16 %v164
  %v871 = vunpack.c.l.b16 %v165
  %v872 = vunpack.c.h.b16 %v165
  %v873 = vunpack.c.l.b16 %v166
  %v874 = vunpack.c.h.b16 %v166
  %v875 = vunpack.c.l.b16 %v167
  %v876 = vunpack.c.h.b16 %v167
  %v877 = vunpack.c.l.b16 %v168
  %v878 = vunpack.c.h.b16 %v168
  %v879 = vunpack.c.l.b16 %v169
  %v880 = vunpack.c.h.b16 %v169
  %v881 = vunpack.c.l.b16 %v170
  %v882 = vunpack.c.h.b16 %v170
  %v883 = vunpack.c.l.b16 %v171
  %v884 = vunpack.c.h.b16 %v171
  %v885 = vunpack.c.l.b16 %v172
  %v886 = vunpack.c.h.b16 %v172
  %v887 = vunpack.c.l.b16 %v173
  %v888 = vunpack.c.h.b16 %v173
  %v889 = vunpack.c.l.b16 %v174
  %v890 = vunpack.c.h.b16 %v174
  %v891 = vunpack.c.l.b16 %v175
  %v892 = vunpack.c.h.b16 %v175
  %v893 = vunpack.c.l.b16 %v176
  %v894 = vunpack.c.h.b16 %v176
  %v895 = vunpack.c.l.b16 %v177
  %v896 = vunpack.c.h.b16 %v177
  %v897 = vunpack.c.l.b16 %v178
  %v898 = vunpack.c.h.b16 %v178
  %v899 = vunpack.c.l.b16 %v179
  %v900 = vunpack.c.h.b16 %v179
  %v901 = vunpack.c.l.b16 %v180
  %v902 = vunpack.c.h.b16 %v180
  %v903 = vunpack.c.l.b16 %v181
  %v904 = vunpack.c.h.b16 %v181
  %v905 = vunpack.c.l.b16 %v182
  %v906 = vunpack.c.h.b16 %v182
  %v907 = vunpack.c.l.b16 %v183
  %v908 = vunpack.c.h.b16 %v183
  %v909 = vunpack.c.l.b16 %v184
  %v910 = vunpack.c.h.b16 %v184
  %v911 = vunpack.c.l.b16 %v185
  %v912 = vunpack.c.h.b16 %v185
  %v913 = vunpack.c.l.b16 %v186
  %v914 = vunpack.c.h.b16 %v186
  %v915 = vunpack.c.l.b16 %v187
  %v916 = vunpack.c.h.b16 %v187
  %v917 = vunpack.c.l.b16 %v188
  %v918 = vunpack.c.h.b16 %v188
  %v919 = vunpack.c.l.b16 %v189
  %v920 = vunpack.c.h.b16 %v189
  %v921 = vunpack.c.l.b16 %v190
  %v922 = vunpack.c.h.b16 %v190
  %v923 = vunpack.c.l.b16 %v191
  %v924 = vunpack.c.h.b16 %v191
  %v925 = vunpack.c.l.b16 %v192
  %v926 = vunpack.c.h.b16 %v192
  %v927 = vunpack.c.l.b16 %v193
  %v928 = vunpack.c.h.b16 %v193
  %v929 = vunpack.c.l.b16 %v194
  %v930 = vunpack.c.h.b16 %v194
  %v931 = vunpack.c.l.b16 %v195
  %v932 = vunpack.c.h.b16 %v195
  %v933 = vunpack.c.l.b16 %v196
  %v934 = vunpack.c.h.b16 %v196
  %v935 = vunpack.c.l.b16 %v197
  %v936 = vunpack.c.h.b16 %v197
  %v937 = vunpack.c.l.b16 %v198
  %v938 = vunpack.c.h.b16 %v198
  %v939 = vunpack.c.l.b16 %v199
  %v940 = vunpack.c.h.b16 %v199
  %v941 = vunpack.c.l.b16 %v200
  %v942 = vunpack.c.h.b16 %v200
  %v943 = vunpack.c.l.b16 %v201
  %v944 = vunpack.c.h.b16 %v201
  %v945 = vunpack.c.l.b16 %v202
  %v946 = vunpack.c.h.b16 %v202
  %v947 = vunpack.c.l.b16 %v203
  %v948 = vunpack.c.h.b16 %v203
  %v949 = vunpack.c.l.b16 %v204
  %v950 = vunpack.c.h.b16 %v204
  %v951 = vunpack.c.l.b16 %v205
  %v952 = vunpack.c.h.b16 %v205
  %v953 = vunpack.c.l.b16 %v206
  %v954 = vunpack.c.h.b16 %v206
  %v955 = vunpack.c.l.b16 %v207
  %v956 = vunpack.c.h.b16 %v207
  %v957 = vunpack.c.l.b16 %v208
  %v958 = vunpack.c.h.b16 %v208
  %v959 = vunpack.c.l.b16 %v209
  %v960 = vunpack.c.h.b16 %v209
  %v961 = vunpack.c.l.b16 %v210
  %v962 = vunpack.c.h.b16 %v210
  %v963 = vunpack.c.l.b16 %v211
  %v964 = vunpack.c.h.b16 %v211
  %v965 = vunpack.c.l.b16 %v212
  %v966 = vunpack.c.h.b16 %v212
  %v967 = vunpack.c.l.b16 %v213
  %v968 = vunpack.c.h.b16 %v213
  %v969 = vunpack.c.l.b16 %v214
  %v970 = vunpack.c.h.b16 %v214
  %v971 = vunpack.c.l.b16 %v215
  %v972 = vunpack.c.h.b16 %v215
  %v973 = vunpack.c.l.b16 %v216
  %v974 = vunpack.c.h.b16 %v216
  %v975 = vunpack.c.l.b16 %v217
  %v976 = vunpack.c.h.b16 %v217
  %v977 = vunpack.c.l.b16 %v218
  %v978 = vunpack.c.h.b16 %v218
  %v979 = vunpack.c.l.b16 %v219
  %v980 = vunpack.c.h.b16 %v219
  %v981 = vunpack.c.l.b16 %v220
  %v982 = vunpack.c.h.b16 %v220
  %v983 = vunpack.c.l.b16 %v221
  %v984 = vunpack.c.h.b16 %v221
  %v985 = vunpack.c.l.b16 %v222
  %v986 = vunpack.c.h.b16 %v222
  %v987 = vunpack.c.l.b16 %v223
  %v988 = vunpack.c.h.b16 %v223
  %v989 = vunpack.c.l.b16 %v224
  %v990 = vunpack.c.h.b16 %v224
  %v991 = vunpack.c.l.b16 %v225
  %v992 = vunpack.c.h.b16 %v225
  %v993 = vunpack.c.l.b16 %v226
  %v994 = vunpack.c.h.b16 %v226
  %v995 = vunpack.c.l.b16 %v227
  %v996 = vunpack.c.h.b16 %v227
  %v997 = vunpack.c.l.b16 %v228
  %v998 = vunpack.c.h.b16 %v228
  %v999 = vunpack.c.l.b16 %v229
  %v1000 = vunpack.c.h.b16 %v229
  %v1001 = vunpack.c.l.b16 %v230
  %v1002 = vunpack.c.h.b16 %v230
  %v1003 = vunpack.c.l.b16 %v231
  %v1004 = vunpack.c.h.b16 %v231
  %v1005 = vunpack.c.l.b16 %v232
  %v1006 = vunpack.c.h.b16 %v232
  %v1007 = vunpack.c.l.b16 %v233
  %v1008 = vunpack.c.h.b16 %v233
  %v1009 = vunpack.c.l.b16 %v234
  %v1010 = vunpack.c.h.b16 %v234
  %v1011 = vunpack.c.l.b16 %v235
  %v1012 = vunpack.c.h.b16 %v235
  %v1013 = vunpack.c.l.b16 %v236
  %v1014 = vunpack.c.h.b16 %v236
  %v1015 = vunpack.c.l.b16 %v237
  %v1016 = vunpack.c.h.b16 %v237
  %v1017 = vunpack.c.l.b16 %v238
  %v1018 = vunpack.c.h.b16 %v238
  %v1019 = vunpack.c.l.b16 %v239
  %v1020 = vunpack.c.h.b16 %v239
  %v1021 = vunpack.c.l.b16 %v240
  %v1022 = vunpack.c.h.b16 %v240
  %v1023 = vunpack.c.l.b16 %v241
  %v1024 = vunpack.c.h.b16 %v241
  %v1025 = vunpack.c.l.b16 %v242
  %v1026 = vunpack.c.h.b16 %v242
  %v1027 = vunpack.c.l.b16 %v243
  %v1028 = vunpack.c.h.b16 %v243
  %v1029 = vunpack.c.l.b16 %v244
  %v1030 = vunpack.c.h.b16 %v244
  %v1031 = vunpack.c.l.b16 %v245
  %v1032 = vunpack.c.h.b16 %v245
  %v1033 = vunpack.c.l.b16 %v246
  %v1034 = vunpack.c.h.b16 %v246
  %v1035 = vunpack.c.l.b16 %v247
  %v1036 = vunpack.c.h.b16 %v247
  %v1037 = vunpack.c.l.b16 %v248
  %v1038 = vunpack.c.h.b16 %v248
  %v1039 = vunpack.c.l.b16 %v249
  %v1040 = vunpack.c.h.b16 %v249
  %v1041 = vunpack.c.l.b16 %v250
  %v1042 = vunpack.c.h.b16 %v250
  %v1043 = vunpack.c.l.b16 %v251
  %v1044 = vunpack.c.h.b16 %v251
  %v1045 = vunpack.c.l.b16 %v252
  %v1046 = vunpack.c.h.b16 %v252
  %v1047 = vunpack.c.l.b16 %v253
  %v1048 = vunpack.c.h.b16 %v253
  %v1049 = vunpack.c.l.b16 %v254
  %v1050 = vunpack.c.h.b16 %v254
  %v1051 = vunpack.c.l.b16 %v255
  %v1052 = vunpack.c.h.b16 %v255
  %v1053 = vunpack.c.l.b16 %v256
  %v1054 = vunpack.c.h.b16 %v256
  %v1055 = vunpack.c.l.b16 %v257
  %v1056 = vunpack.c.h.b16 %v257
  %v1057 = vunpack.c.l.b16 %v258
  %v1058 = vunpack.c.h.b16 %v258
  %v1059 = vunpack.c.l.b16 %v259
  %v1060 = vunpack.c.h.b16 %v259
  %v1061 = vunpack.c.l.b16 %v260
  %v1062 = vunpack.c.h.b16 %v260
  %v1063 = vunpack.c.l.b16 %v261
  %v1064 = vunpack.c.h.b16 %v261
  %v1065 = vunpack.c.l.b16 %v262
  %v1066 = vunpack.c.h.b16 %v262
  %v1067 = vunpack.c.l.b16 %v263
  %v1068 = vunpack.c.h.b16 %v263
  %v1069 = vunpack.c.l.b16 %v264
  %v1070 = vunpack.c.h.b16 %v264
  %v1071 = vunpack.c.l.b16 %v265
  %v1072 = vunpack.c.h.b16 %v265
  %v1073 = vunpack.c.l.b16 %v266
  %v1074 = vunpack.c.h.b16 %v266
  %v1075 = vunpack.c.l.b16 %v267
  %v1076 = vunpack.c.h.b16 %v267
  %v1077 = vunpack.c.l.b16 %v268
  %v1078 = vunpack.c.h.b16 %v268
  %v1079 = vunpack.c.l.b16 %v269
  %v1080 = vunpack.c.h.b16 %v269
  %v1081 = vunpack.c.l.b16 %v270
  %v1082 = vunpack.c.h.b16 %v270
  %v1083 = vunpack.c.l.b16 %v271
  %v1084 = vunpack.c.h.b16 %v271
  %v1085 = vunpack.c.l.b16 %v272
  %v1086 = vunpack.c.h.b16 %v272
  %v1087 = vunpack.c.l.b16 %v273
  %v1088 = vunpack.c.h.b16 %v273
  %v1089 = vunpack.c.l.b16 %v274
  %v1090 = vunpack.c.h.b16 %v274
  %v1091 = vunpack.c.l.b16 %v275
  %v1092 = vunpack.c.h.b16 %v275
  %v1093 = vunpack.c.l.b16 %v276
  %v1094 = vunpack.c.h.b16 %v276
  %v1095 = vunpack.c.l.b16 %v277
  %v1096 = vunpack.c.h.b16 %v277
  %v1097 = vunpack.c.l.b16 %v278
  %v1098 = vunpack.c.h.b16 %v278
  %v1099 = vunpack.c.l.b16 %v279
  %v1100 = vunpack.c.h.b16 %v279
  %v1101 = vunpack.c.l.b16 %v280
  %v1102 = vunpack.c.h.b16 %v280
  %v1103 = vunpack.c.l.b16 %v281
  %v1104 = vunpack.c.h.b16 %v281
  %v1105 = vunpack.c.l.b16 %v282
  %v1106 = vunpack.c.h.b16 %v282
  %v1107 = vunpack.c.l.b16 %v283
  %v1108 = vunpack.c.h.b16 %v283
  %v1109 = vunpack.c.l.b16 %v284
  %v1110 = vunpack.c.h.b16 %v284
  %v1111 = vunpack.c.l.b16 %v285
  %v1112 = vunpack.c.h.b16 %v285
  %v1113 = vunpack.c.l.b16 %v286
  %v1114 = vunpack.c.h.b16 %v286
  %v1115 = vunpack.c.l.b16 %v287
  %v1116 = vunpack.c.h.b16 %v287
  %v1117 = vunpack.c.l.b16 %v288
  %v1118 = vunpack.c.h.b16 %v288
  %v1119 = vunpack.c.l.b16 %v289
  %v1120 = vunpack.c.h.b16 %v289
  %v1121 = vunpack.c.l.b16 %v290
  %v1122 = vunpack.c.h.b16 %v290
  %v1123 = vunpack.c.l.b16 %v291
  %v1124 = vunpack.c.h.b16 %v291
  %v1125 = vunpack.c.l.b16 %v292
  %v1126 = vunpack.c.h.b16 %v292
  %v1127 = vunpack.c.l.b16 %v293
  %v1128 = vunpack.c.h.b16 %v293
  %v1129 = vunpack.c.l.b16 %v294
  %v1130 = vunpack.c.h.b16 %v294
  %v1131 = vpack.c.b16 %v621, %v619
  %v1132 = vpack.c.b16 %v622, %v620
  %v1133 = vpack.c.b16 %v625, %v623
  %v1134 = vpack.c.b16 %v626, %v624
  %v1135 = vpack.c.b16 %v629, %v627
  %v1136 = vpack.c.b16 %v630, %v628
  %v1137 = vpack.c.b16 %v633, %v631
  %v1138 = vpack.c.b16 %v634, %v632
  %v1139 = vpack.c.b16 %v637, %v635
  %v1140 = vpack.c.b16 %v638, %v636
  %v1141 = vpack.c.b16 %v641, %v639
  %v1142 = vpack.c.b16 %v642, %v640
  %v1143 = vpack.c.b16 %v645, %v643
  %v1144 = vpack.c.b16 %v646, %v644
  %v1145 = vpack.c.b16 %v649, %v647
  %v1146 = vpack.c.b16 %v650, %v648
  %v1147 = vpack.c.b16 %v653, %v651
  %v1148 = vpack.c.b16 %v654, %v652
  %v1149 = vpack.c.b16 %v657, %v655
  %v1150 = vpack.c.b16 %v658, %v656
  %v1151 = vpack.c.b16 %v661, %v659
  %v1152 = vpack.c.b16 %v662, %v660
  %v1153 = vpack.c.b16 %v665, %v663
  %v1154 = vpack.c.b16 %v666, %v664
  %v1155 = vpack.c.b16 %v669, %v667
  %v1156 = vpack.c.b16 %v670, %v668
  %v1157 = vpack.c.b16 %v673, %v671
  %v1158 = vpack.c.b16 %v674, %v672
  %v1159 = vpack.c.b16 %v677, %v675
  %v1160 = vpack.c.b16 %v678, %v676
  %v1161 = vpack.c.b16 %v681, %v679
  %v1162 = vpack.c.b16 %v682, %v680
  %v1163 = vpack.c.b16 %v685, %v683
  %v1164 = vpack.c.b16 %v686, %v684
  %v1165 = vpack.c.b16 %v689, %v687
  %v1166 = vpack.c.b16 %v690, %v688
  %v1167 = vpack.c.b16 %v693, %v691
  %v1168 = vpack.c.b16 %v694, %v692
  %v1169 = vpack.c.b16 %v697, %v695
  %v1170 = vpack.c.b16 %v698, %v696
  %v1171 = vpack.c.b16 %v701, %v699
  %v1172 = vpack.c.b16 %v702, %v700
  %v1173 = vpack.c.b16 %v705, %v703
  %v1174 = vpack.c.b16 %v706, %v704
  %v1175 = vpack.c.b16 %v709, %v707
  %v1176 = vpack.c.b16 %v710, %v708
  %v1177 = vpack.c.b16 %v713, %v711
  %v1178 = vpack.c.b16 %v714, %v712
  %v1179 = vpack.c.b16 %v717, %v715
  %v1180 = vpack.c.b16 %v718, %v716
  %v1181 = vpack.c.b16 %v721, %v719
  %v1182 = vpack.c.b16 %v722, %v720
  %v1183 = vpack.c.b16 %v725, %v723
  %v1184 = vpack.c.b16 %v726, %v724
  %v1185 = vpack.c.b16 %v729, %v727
  %v1186 = vpack.c.b16 %v730, %v728
  %v1187 = vpack.c.b16 %v733, %v731
  %v1188 = vpack.c.b16 %v734, %v732
  %v1189 = vpack.c.b16 %v737, %v735
  %v1190 = vpack.c.b16 %v738, %v736
  %v1191 = vpack.c.b16 %v741, %v739
  %v1192 = vpack.c.b16 %v742, %v740
  %v1193 = vpack.c.b16 %v745, %v743
  %v1194 = vpack.c.b16 %v746, %v744
  %v1195 = vpack.c.b16 %v749, %v747
  %v1196 = vpack.c.b16 %v750, %v748
  %v1197 = vpack.c.b16 %v753, %v751
  %v1198 = vpack.c.b16 %v754, %v752
  %v1199 = vpack.c.b16 %v757, %v755
  %v1200 = vpack.c.b16 %v758, %v756
  %v1201 = vpack.c.b16 %v761, %v759
  %v1202 = vpack.c.b16 %v762, %v760
  %v1203 = vpack.c.b16 %v765, %v763
  %v1204 = vpack.c.b16 %v766, %v764
  %v1205 = vpack.c.b16 %v769, %v767
  %v1206 = vpack.c.b16 %v770, %v768
  %v1207 = vpack.c.b16 %v773, %v771
  %v1208 = vpack.c.b16 %v774, %v772
  %v1209 = vpack.c.b16 %v777, %v775
  %v1210 = vpack.c.b16 %v778, %v776
  %v1211 = vpack.c.b16 %v781, %v779
  %v1212 = vpack.c.b16 %v782, %v780
  %v1213 = vpack.c.b16 %v785, %v783
  %v1214 = vpack.c.b16 %v786, %v784
  %v1215 = vpack.c.b16 %v789, %v787
  %v1216 = vpack.c.b16 %v790, %v788
  %v1217 = vpack.c.b16 %v793, %v791
  %v1218 = vpack.c.b16 %v794, %v792
  %v1219 = vpack.c.b16 %v797, %v795
  %v1220 = vpack.c.b16 %v798, %v796
  %v1221 = vpack.c.b16 %v801, %v799
  %v1222 = vpack.c.b16 %v802, %v800
  %v1223 = vpack.c.b16 %v805, %v803
  %v1224 = vpack.c.b16 %v806, %v804
  %v1225 = vpack.c.b16 %v809, %v807
  %v1226 = vpack.c.b16 %v810, %v808
  %v1227 = vpack.c.b16 %v813, %v811
  %v1228 = vpack.c.b16 %v814, %v812
  %v1229 = vpack.c.b16 %v817, %v815
  %v1230 = vpack.c.b16 %v818, %v816
  %v1231 = vpack.c.b16 %v821, %v819
  %v1232 = vpack.c.b16 %v822, %v820
  %v1233 = vpack.c.b16 %v825, %v823
  %v1234 = vpack.c.b16 %v826, %v824
  %v1235 = vpack.c.b16 %v829, %v827
  %v1236 = vpack.c.b16 %v830, %v828
  %v1237 = vpack.c.b16 %v833, %v831
  %v1238 = vpack.c.b16 %v834, %v832
  %v1239 = vpack.c.b16 %v837, %v835
  %v1240 = vpack.c.b16 %v838, %v836
  %v1241 = vpack.c.b16 %v841, %v839
  %v1242 = vpack.c.b16 %v842, %v840
  %v1243 = vpack.c.b16 %v845, %v843
  %v1244 = vpack.c.b16 %v846, %v844
  %v1245 = vpack.c.b16 %v849, %v847
  %v1246 = vpack.c.b16 %v850, %v848
  %v1247 = vpack.c.b16 %v853, %v851
  %v1248 = vpack.c.b16 %v854, %v852
  %v1249 = vpack.c.b16 %v857, %v855
  %v1250 = vpack.c.b16 %v858, %v856
  %v1251 = vpack.c.b16 %v861, %v859
  %v1252 = vpack.c.b16 %v862, %v860
  %v1253 = vpack.c.b16 %v865, %v863
  %v1254 = vpack.c.b16 %v866, %v864
  %v1255 = vpack.c.b16 %v869, %v867
  %v1256 = vpack.c.b16 %v870, %v868
  %v1257 = vpack.c.b16 %v873, %v871
  %v1258 = vpack.c.b16 %v874, %v872
  %v1259 = vpack.c.b16 %v877, %v875
  %v1260 = vpack.c.b16 %v878, %v876
  %v1261 = vpack.c.b16 %v881, %v879
  %v1262 = vpack.c.b16 %v882, %v880
  %v1263 = vpack.c.b16 %v885, %v883
  %v1264 = vpack.c.b16 %v886, %v884
  %v1265 = vpack.c.b16 %v889, %v887
  %v1266 = vpack.c.b16 %v890, %v888
  %v1267 = vpack.c.b16 %v893, %v891
  %v1268 = vpack.c.b16 %v894, %v892
  %v1269 = vpack.c.b16 %v897, %v895
  %v1270 = vpack.c.b16 %v898, %v896
  %v1271 = vpack.c.b16 %v901, %v899
  %v1272 = vpack.c.b16 %v902, %v900
  %v1273 = vpack.c.b16 %v905, %v903
  %v1274 = vpack.c.b16 %v906, %v904
  %v1275 = vpack.c.b16 %v909, %v907
  %v1276 = vpack.c.b16 %v910, %v908
  %v1277 = vpack.c.b16 %v913, %v911
  %v1278 = vpack.c.b16 %v914, %v912
  %v1279 = vpack.c.b16 %v917, %v915
  %v1280 = vpack.c.b16 %v918, %v916
  %v1281 = vpack.c.b16 %v921, %v919
  %v1282 = vpack.c.b16 %v922, %v920
  %v1283 = vpack.c.b16 %v925, %v923
  %v1284 = vpack.c.b16 %v926, %v924
  %v1285 = vpack.c.b16 %v929, %v927
  %v1286 = vpack.c.b16 %v930, %v928
  %v1287 = vpack.c.b16 %v933, %v931
  %v1288 = vpack.c.b16 %v934, %v932
  %v1289 = vpack.c.b16 %v937, %v935
  %v1290 = vpack.c.b16 %v938, %v936
  %v1291 = vpack.c.b16 %v941, %v939
  %v1292 = vpack.c.b16 %v942, %v940
  %v1293 = vpack.c.b16 %v945, %v943
  %v1294 = vpack.c.b16 %v946, %v944
  %v1295 = vpack.c.b16 %v949, %v947
  %v1296 = vpack.c.b16 %v950, %v948
  %v1297 = vpack.c.b16 %v953, %v951
  %v1298 = vpack.c.b16 %v954, %v952
  %v1299 = vpack.c.b16 %v957, %v955
  %v1300 = vpack.c.b16 %v958, %v956
  %v1301 = vpack.c.b16 %v961, %v959
  %v1302 = vpack.c.b16 %v962, %v960
  %v1303 = vpack.c.b16 %v965, %v963
  %v1304 = vpack.c.b16 %v966, %v964
  %v1305 = vpack.c.b16 %v969, %v967
  %v1306 = vpack.c.b16 %v970, %v968
  %v1307 = vpack.c.b16 %v973, %v971
  %v1308 = vpack.c.b16 %v974, %v972
  %v1309 = vpack.c.b16 %v977, %v975
  %v1310 = vpack.c.b16 %v978, %v976
  %v1311 = vpack.c.b16 %v981, %v979
  %v1312 = vpack.c.b16 %v982, %v980
  %v1313 = vpack.c.b16 %v985, %v983
  %v1314 = vpack.c.b16 %v986, %v984
  %v1315 = vpack.c.b16 %v989, %v987
  %v1316 = vpack.c.b16 %v990, %v988
  %v1317 = vpack.c.b16 %v993, %v991
  %v1318 = vpack.c.b16 %v994, %v992
  %v1319 = vpack.c.b16 %v997, %v995
  %v1320 = vpack.c.b16 %v998, %v996
  %v1321 = vpack.c.b16 %v1001, %v999
  %v1322 = vpack.c.b16 %v1002, %v1000
  %v1323 = vpack.c.b16 %v1005, %v1003
  %v1324 = vpack.c.b16 %v1006, %v1004
  %v1325 = vpack.c.b16 %v1009, %v1007
  %v1326 = vpack.c.b16 %v1010, %v1008
  %v1327 = vpack.c.b16 %v1013, %v1011
  %v1328 = vpack.c.b16 %v1014, %v1012
  %v1329 = vpack.c.b16 %v1017, %v1015
  %v1330 = vpack.c.b16 %v1018, %v1016
  %v1331 = vpack.c.b16 %v1021, %v1019
  %v1332 = vpack.c.b16 %v1022, %v1020
  %v1333 = vpack.c.b16 %v1025, %v1023
  %v1334 = vpack.c.b16 %v1026, %v1024
  %v1335 = vpack.c.b16 %v1029, %v1027
  %v1336 = vpack.c.b16 %v1030, %v1028
  %v1337 = vpack.c.b16 %v1033, %v1031
  %v1338 = vpack.c.b16 %v1034, %v1032
  %v1339 = vpack.c.b16 %v1037, %v1035
  %v1340 = vpack.c.b16 %v1038, %v1036
  %v1341 = vpack.c.b16 %v1041, %v1039
  %v1342 = vpack.c.b16 %v1042, %v1040
  %v1343 = vpack.c.b16 %v1045, %v1043
  %v1344 = vpack.c.b16 %v1046, %v1044
  %v1345 = vpack.c.b16 %v1049, %v1047
  %v1346 = vpack.c.b16 %v1050, %v1048
  %v1347 = vpack.c.b16 %v1053, %v1051
  %v1348 = vpack.c.b16 %v1054, %v1052
  %v1349 = vpack.c.b16 %v1057, %v1055
  %v1350 = vpack.c.b16 %v1058, %v1056
  %v1351 = vpack.c.b16 %v1061, %v1059
  %v1352 = vpack.c.b16 %v1062, %v1060
  %v1353 = vpack.c.b16 %v1065, %v1063
  %v1354 = vpack.c.b16 %v1066, %v1064
  %v1355 = vpack.c.b16 %v1069, %v1067
  %v1356 = vpack.c.b16 %v1070, %v1068
  %v1357 = vpack.c.b16 %v1073, %v1071
  %v1358 = vpack.c.b16 %v1074, %v1072
  %v1359 = vpack.c.b16 %v1077, %v1075
  %v1360 = vpack.c.b16 %v1078, %v1076
  %v1361 = vpack.c.b16 %v1081, %v1079
  %v1362 = vpack.c.b16 %v1082, %v1080
  %v1363 = vpack.c.b16 %v1085, %v1083
  %v1364 = vpack.c.b16 %v1086, %v1084
  %v1365 = vpack.c.b16 %v1089, %v1087
  %v1366 = vpack.c.b16 %v1090, %v1088
  %v1367 = vpack.c.b16 %v1093, %v1091
  %v1368 = vpack.c.b16 %v1094, %v1092
  %v1369 = vpack.c.b16 %v1097, %v1095
  %v1370 = vpack.c.b16 %v1098, %v1096
  %v1371 = vpack.c.b16 %v1101, %v1099
  %v1372 = vpack.c.b16 %v1102, %v1100
  %v1373 = vpack.c.b16 %v1105, %v1103
  %v1374 = vpack.c.b16 %v1106, %v1104
  %v1375 = vpack.c.b16 %v1109, %v1107
  %v1376 = vpack.c.b16 %v1110, %v1108
  %v1377 = vpack.c.b16 %v1113, %v1111
  %v1378 = vpack.c.b16 %v1114, %v1112
  %v1379 = vpack.c.b16 %v1117, %v1115
  %v1380 = vpack.c.b16 %v1118, %v1116
  %v1381 = vpack.c.b16 %v1121, %v1119
  %v1382 = vpack.c.b16 %v1122, %v1120
  %v1383 = vpack.c.b16 %v1125, %v1123
  %v1384 = vpack.c.b16 %v1126, %v1124
  %v1385 = vpack.c.b16 %v1129, %v1127
  %v1386 = vpack.c.b16 %v1130, %v1128
  %1643 = vmatprep.subr.bf16.mxu0 %v1132
  %1644 = vmatpush1.bf16.msra.mxu0 %v1131
  %1645 = vmatprep.subr.bf16.mxu0 %v1134
  %1646 = vmatpush1.bf16.msra.mxu0 %v1133
  %1647 = vmatprep.subr.bf16.mxu0 %v1136
  %1648 = vmatpush1.bf16.msra.mxu0 %v1135
  %1649 = vmatprep.subr.bf16.mxu0 %v1138
  %1650 = vmatpush1.bf16.msra.mxu0 %v1137
  %1651 = vmatprep.subr.bf16.mxu0 %v1140
  %1652 = vmatpush1.bf16.msra.mxu0 %v1139
  %1653 = vmatprep.subr.bf16.mxu0 %v1142
  %1654 = vmatpush1.bf16.msra.mxu0 %v1141
  %1655 = vmatprep.subr.bf16.mxu0 %v1144
  %1656 = vmatpush1.bf16.msra.mxu0 %v1143
  %1657 = vmatprep.subr.bf16.mxu0 %v1146
  %1658 = vmatpush1.bf16.msra.mxu0 %v1145
  %1659 = vmatprep.subr.bf16.mxu0 %v1148
  %1660 = vmatpush1.bf16.msra.mxu0 %v1147
  %1661 = vmatprep.subr.bf16.mxu0 %v1150
  %1662 = vmatpush1.bf16.msra.mxu0 %v1149
  %1663 = vmatprep.subr.bf16.mxu0 %v1152
  %1664 = vmatpush1.bf16.msra.mxu0 %v1151
  %1665 = vmatprep.subr.bf16.mxu0 %v1154
  %1666 = vmatpush1.bf16.msra.mxu0 %v1153
  %1667 = vmatprep.subr.bf16.mxu0 %v1156
  %1668 = vmatpush1.bf16.msra.mxu0 %v1155
  %1669 = vmatprep.subr.bf16.mxu0 %v1158
  %1670 = vmatpush1.bf16.msra.mxu0 %v1157
  %1671 = vmatprep.subr.bf16.mxu0 %v1160
  %1672 = vmatpush1.bf16.msra.mxu0 %v1159
  %1673 = vmatprep.subr.bf16.mxu0 %v1162
  %1674 = vmatpush1.bf16.msra.mxu0 %v1161
  %1675 = vmatprep.mubr.bf16.mxu0 %v332
  %1676 = vmatmul.mubr.bf16.gmra.mrb[0].mxu0 %v331
  %v1677 = vpop.f32.mrb[0].mxu0
  %v1678 = vadd.f32 %v300, %v1677
  %v1679 = vpop.f32.mrb[0].mxu0
  %v1680 = vadd.f32 %v304, %v1679
  %v1681 = vpop.f32.mrb[0].mxu0
  %v1682 = vpop.f32.mrb[0].mxu0
  %1683 = vdwg.mxu0
  %1684 = vmatprep.subr.bf16.mxu0 %v1164
  %1685 = vmatpush1.bf16.msra.mxu0 %v1163
  %1686 = vmatprep.subr.bf16.mxu0 %v1166
  %1687 = vmatpush1.bf16.msra.mxu0 %v1165
  %1688 = vmatprep.subr.bf16.mxu0 %v1168
  %1689 = vmatpush1.bf16.msra.mxu0 %v1167
  %1690 = vmatprep.subr.bf16.mxu0 %v1170
  %1691 = vmatpush1.bf16.msra.mxu0 %v1169
  %1692 = vmatprep.subr.bf16.mxu0 %v1172
  %1693 = vmatpush1.bf16.msra.mxu0 %v1171
  %1694 = vmatprep.subr.bf16.mxu0 %v1174
  %1695 = vmatpush1.bf16.msra.mxu0 %v1173
  %1696 = vmatprep.subr.bf16.mxu0 %v1176
  %1697 = vmatpush1.bf16.msra.mxu0 %v1175
  %1698 = vmatprep.subr.bf16.mxu0 %v1178
  %1699 = vmatpush1.bf16.msra.mxu0 %v1177
  %1700 = vmatprep.subr.bf16.mxu0 %v1180
  %1701 = vmatpush1.bf16.msra.mxu0 %v1179
  %1702 = vmatprep.subr.bf16.mxu0 %v1182
  %1703 = vmatpush1.bf16.msra.mxu0 %v1181
  %1704 = vmatprep.subr.bf16.mxu0 %v1184
  %1705 = vmatpush1.bf16.msra.mxu0 %v1183
  %1706 = vmatprep.subr.bf16.mxu0 %v1186
  %1707 = vmatpush1.bf16.msra.mxu0 %v1185
  %1708 = vmatprep.subr.bf16.mxu0 %v1188
  %1709 = vmatpush1.bf16.msra.mxu0 %v1187
  %1710 = vmatprep.subr.bf16.mxu0 %v1190
  %1711 = vmatpush1.bf16.msra.mxu0 %v1189
  %1712 = vmatprep.subr.bf16.mxu0 %v1192
  %1713 = vmatpush1.bf16.msra.mxu0 %v1191
  %1714 = vmatprep.subr.bf16.mxu0 %v1194
  %1715 = vmatpush1.bf16.msra.mxu0 %v1193
  %1716 = vmatprep.mubr.bf16.mxu0 %v334
  %1717 = vmatmul.mubr.bf16.gmra.mrb[0].mxu0 %v333
  %v1718 = vpop.f32.mrb[0].mxu0
  %v1719 = vadd.f32 %v1678, %v1718
  %v1720 = vpop.f32.mrb[0].mxu0
  %v1721 = vadd.f32 %v1680, %v1720
  %v1722 = vpop.f32.mrb[0].mxu0
  %v1723 = vpop.f32.mrb[0].mxu0
  %1724 = vdwg.mxu0
  %1725 = vmatprep.subr.bf16.mxu0 %v1196
  %1726 = vmatpush1.bf16.msra.mxu0 %v1195
  %1727 = vmatprep.subr.bf16.mxu0 %v1198
  %1728 = vmatpush1.bf16.msra.mxu0 %v1197
  %1729 = vmatprep.subr.bf16.mxu0 %v1200
  %1730 = vmatpush1.bf16.msra.mxu0 %v1199
  %1731 = vmatprep.subr.bf16.mxu0 %v1202
  %1732 = vmatpush1.bf16.msra.mxu0 %v1201
  %1733 = vmatprep.subr.bf16.mxu0 %v1204
  %1734 = vmatpush1.bf16.msra.mxu0 %v1203
  %1735 = vmatprep.subr.bf16.mxu0 %v1206
  %1736 = vmatpush1.bf16.msra.mxu0 %v1205
  %1737 = vmatprep.subr.bf16.mxu0 %v1208
  %1738 = vmatpush1.bf16.msra.mxu0 %v1207
  %1739 = vmatprep.subr.bf16.mxu0 %v1210
  %1740 = vmatpush1.bf16.msra.mxu0 %v1209
  %1741 = vmatprep.subr.bf16.mxu0 %v1212
  %1742 = vmatpush1.bf16.msra.mxu0 %v1211
  %1743 = vmatprep.subr.bf16.mxu0 %v1214
  %1744 = vmatpush1.bf16.msra.mxu0 %v1213
  %1745 = vmatprep.subr.bf16.mxu0 %v1216
  %1746 = vmatpush1.bf16.msra.mxu0 %v1215
  %1747 = vmatprep.subr.bf16.mxu0 %v1218
  %1748 = vmatpush1.bf16.msra.mxu0 %v1217
  %1749 = vmatprep.subr.bf16.mxu0 %v1220
  %1750 = vmatpush1.bf16.msra.mxu0 %v1219
  %1751 = vmatprep.subr.bf16.mxu0 %v1222
  %1752 = vmatpush1.bf16.msra.mxu0 %v1221
  %1753 = vmatprep.subr.bf16.mxu0 %v1224
  %1754 = vmatpush1.bf16.msra.mxu0 %v1223
  %1755 = vmatprep.subr.bf16.mxu0 %v1226
  %1756 = vmatpush1.bf16.msra.mxu0 %v1225
  %1757 = vmatprep.mubr.bf16.mxu0 %v336
  %1758 = vmatmul.mubr.bf16.gmra.mrb[0].mxu0 %v335
  %v1759 = vpop.f32.mrb[0].mxu0
  %v1760 = vadd.f32 %v1719, %v1759
  %v1761 = vpop.f32.mrb[0].mxu0
  %v1762 = vadd.f32 %v1721, %v1761
  %v1763 = vpop.f32.mrb[0].mxu0
  %v1764 = vpop.f32.mrb[0].mxu0
  %1765 = vdwg.mxu0
  %1766 = vmatprep.subr.bf16.mxu0 %v1228
  %1767 = vmatpush1.bf16.msra.mxu0 %v1227
  %1768 = vmatprep.subr.bf16.mxu0 %v1230
  %1769 = vmatpush1.bf16.msra.mxu0 %v1229
  %1770 = vmatprep.subr.bf16.mxu0 %v1232
  %1771 = vmatpush1.bf16.msra.mxu0 %v1231
  %1772 = vmatprep.subr.bf16.mxu0 %v1234
  %1773 = vmatpush1.bf16.msra.mxu0 %v1233
  %1774 = vmatprep.subr.bf16.mxu0 %v1236
  %1775 = vmatpush1.bf16.msra.mxu0 %v1235
  %1776 = vmatprep.subr.bf16.mxu0 %v1238
  %1777 = vmatpush1.bf16.msra.mxu0 %v1237
  %1778 = vmatprep.subr.bf16.mxu0 %v1240
  %1779 = vmatpush1.bf16.msra.mxu0 %v1239
  %1780 = vmatprep.subr.bf16.mxu0 %v1242
  %1781 = vmatpush1.bf16.msra.mxu0 %v1241
  %1782 = vmatprep.subr.bf16.mxu0 %v1244
  %1783 = vmatpush1.bf16.msra.mxu0 %v1243
  %1784 = vmatprep.subr.bf16.mxu0 %v1246
  %1785 = vmatpush1.bf16.msra.mxu0 %v1245
  %1786 = vmatprep.subr.bf16.mxu0 %v1248
  %1787 = vmatpush1.bf16.msra.mxu0 %v1247
  %1788 = vmatprep.subr.bf16.mxu0 %v1250
  %1789 = vmatpush1.bf16.msra.mxu0 %v1249
  %1790 = vmatprep.subr.bf16.mxu0 %v1252
  %1791 = vmatpush1.bf16.msra.mxu0 %v1251
  %1792 = vmatprep.subr.bf16.mxu0 %v1254
  %1793 = vmatpush1.bf16.msra.mxu0 %v1253
  %1794 = vmatprep.subr.bf16.mxu0 %v1256
  %1795 = vmatpush1.bf16.msra.mxu0 %v1255
  %1796 = vmatprep.subr.bf16.mxu0 %v1258
  %1797 = vmatpush1.bf16.msra.mxu0 %v1257
  %1798 = vmatprep.mubr.bf16.mxu0 %v338
  %1799 = vmatmul.mubr.bf16.gmra.mrb[0].mxu0 %v337
  %v1800 = vpop.f32.mrb[0].mxu0
  %v1801 = vadd.f32 %v1760, %v1800
  %v1802 = vpop.f32.mrb[0].mxu0
  %v1803 = vadd.f32 %v1762, %v1802
  %v1804 = vpop.f32.mrb[0].mxu0
  %v1805 = vpop.f32.mrb[0].mxu0
  %1806 = vdwg.mxu0
  %1807 = vmatprep.subr.bf16.mxu0 %v1260
  %1808 = vmatpush1.bf16.msra.mxu0 %v1259
  %1809 = vmatprep.subr.bf16.mxu0 %v1262
  %1810 = vmatpush1.bf16.msra.mxu0 %v1261
  %1811 = vmatprep.subr.bf16.mxu0 %v1264
  %1812 = vmatpush1.bf16.msra.mxu0 %v1263
  %1813 = vmatprep.subr.bf16.mxu0 %v1266
  %1814 = vmatpush1.bf16.msra.mxu0 %v1265
  %1815 = vmatprep.subr.bf16.mxu0 %v1268
  %1816 = vmatpush1.bf16.msra.mxu0 %v1267
  %1817 = vmatprep.subr.bf16.mxu0 %v1270
  %1818 = vmatpush1.bf16.msra.mxu0 %v1269
  %1819 = vmatprep.subr.bf16.mxu0 %v1272
  %1820 = vmatpush1.bf16.msra.mxu0 %v1271
  %1821 = vmatprep.subr.bf16.mxu0 %v1274
  %1822 = vmatpush1.bf16.msra.mxu0 %v1273
  %1823 = vmatprep.subr.bf16.mxu0 %v1276
  %1824 = vmatpush1.bf16.msra.mxu0 %v1275
  %1825 = vmatprep.subr.bf16.mxu0 %v1278
  %1826 = vmatpush1.bf16.msra.mxu0 %v1277
  %1827 = vmatprep.subr.bf16.mxu0 %v1280
  %1828 = vmatpush1.bf16.msra.mxu0 %v1279
  %1829 = vmatprep.subr.bf16.mxu0 %v1282
  %1830 = vmatpush1.bf16.msra.mxu0 %v1281
  %1831 = vmatprep.subr.bf16.mxu0 %v1284
  %1832 = vmatpush1.bf16.msra.mxu0 %v1283
  %1833 = vmatprep.subr.bf16.mxu0 %v1286
  %1834 = vmatpush1.bf16.msra.mxu0 %v1285
  %1835 = vmatprep.subr.bf16.mxu0 %v1288
  %1836 = vmatpush1.bf16.msra.mxu0 %v1287
  %1837 = vmatprep.subr.bf16.mxu0 %v1290
  %1838 = vmatpush1.bf16.msra.mxu0 %v1289
  %1839 = vmatprep.mubr.bf16.mxu0 %v340
  %1840 = vmatmul.mubr.bf16.gmra.mrb[0].mxu0 %v339
  %v1841 = vpop.f32.mrb[0].mxu0
  %v1842 = vadd.f32 %v1801, %v1841
  %v1843 = vpop.f32.mrb[0].mxu0
  %v1844 = vadd.f32 %v1803, %v1843
  %v1845 = vpop.f32.mrb[0].mxu0
  %v1846 = vpop.f32.mrb[0].mxu0
  %1847 = vdwg.mxu0
  %1848 = vmatprep.subr.bf16.mxu0 %v1292
  %1849 = vmatpush1.bf16.msra.mxu0 %v1291
  %1850 = vmatprep.subr.bf16.mxu0 %v1294
  %1851 = vmatpush1.bf16.msra.mxu0 %v1293
  %1852 = vmatprep.subr.bf16.mxu0 %v1296
  %1853 = vmatpush1.bf16.msra.mxu0 %v1295
  %1854 = vmatprep.subr.bf16.mxu0 %v1298
  %1855 = vmatpush1.bf16.msra.mxu0 %v1297
  %1856 = vmatprep.subr.bf16.mxu0 %v1300
  %1857 = vmatpush1.bf16.msra.mxu0 %v1299
  %1858 = vmatprep.subr.bf16.mxu0 %v1302
  %1859 = vmatpush1.bf16.msra.mxu0 %v1301
  %1860 = vmatprep.subr.bf16.mxu0 %v1304
  %1861 = vmatpush1.bf16.msra.mxu0 %v1303
  %1862 = vmatprep.subr.bf16.mxu0 %v1306
  %1863 = vmatpush1.bf16.msra.mxu0 %v1305
  %1864 = vmatprep.subr.bf16.mxu0 %v1308
  %1865 = vmatpush1.bf16.msra.mxu0 %v1307
  %1866 = vmatprep.subr.bf16.mxu0 %v1310
  %1867 = vmatpush1.bf16.msra.mxu0 %v1309
  %1868 = vmatprep.subr.bf16.mxu0 %v1312
  %1869 = vmatpush1.bf16.msra.mxu0 %v1311
  %1870 = vmatprep.subr.bf16.mxu0 %v1314
  %1871 = vmatpush1.bf16.msra.mxu0 %v1313
  %1872 = vmatprep.subr.bf16.mxu0 %v1316
  %1873 = vmatpush1.bf16.msra.mxu0 %v1315
  %1874 = vmatprep.subr.bf16.mxu0 %v1318
  %1875 = vmatpush1.bf16.msra.mxu0 %v1317
  %1876 = vmatprep.subr.bf16.mxu0 %v1320
  %1877 = vmatpush1.bf16.msra.mxu0 %v1319
  %1878 = vmatprep.subr.bf16.mxu0 %v1322
  %1879 = vmatpush1.bf16.msra.mxu0 %v1321
  %1880 = vmatprep.mubr.bf16.mxu0 %v342
  %1881 = vmatmul.mubr.bf16.gmra.mrb[0].mxu0 %v341
  %v1882 = vpop.f32.mrb[0].mxu0
  %v1883 = vadd.f32 %v1842, %v1882
  %v1884 = vpop.f32.mrb[0].mxu0
  %v1885 = vadd.f32 %v1844, %v1884
  %v1886 = vpop.f32.mrb[0].mxu0
  %v1887 = vpop.f32.mrb[0].mxu0
  %1888 = vdwg.mxu0
  %1889 = vmatprep.subr.bf16.mxu0 %v1324
  %1890 = vmatpush1.bf16.msra.mxu0 %v1323
  %1891 = vmatprep.subr.bf16.mxu0 %v1326
  %1892 = vmatpush1.bf16.msra.mxu0 %v1325
  %1893 = vmatprep.subr.bf16.mxu0 %v1328
  %1894 = vmatpush1.bf16.msra.mxu0 %v1327
  %1895 = vmatprep.subr.bf16.mxu0 %v1330
  %1896 = vmatpush1.bf16.msra.mxu0 %v1329
  %1897 = vmatprep.subr.bf16.mxu0 %v1332
  %1898 = vmatpush1.bf16.msra.mxu0 %v1331
  %1899 = vmatprep.subr.bf16.mxu0 %v1334
  %1900 = vmatpush1.bf16.msra.mxu0 %v1333
  %1901 = vmatprep.subr.bf16.mxu0 %v1336
  %1902 = vmatpush1.bf16.msra.mxu0 %v1335
  %1903 = vmatprep.subr.bf16.mxu0 %v1338
  %1904 = vmatpush1.bf16.msra.mxu0 %v1337
  %1905 = vmatprep.subr.bf16.mxu0 %v1340
  %1906 = vmatpush1.bf16.msra.mxu0 %v1339
  %1907 = vmatprep.subr.bf16.mxu0 %v1342
  %1908 = vmatpush1.bf16.msra.mxu0 %v1341
  %1909 = vmatprep.subr.bf16.mxu0 %v1344
  %1910 = vmatpush1.bf16.msra.mxu0 %v1343
  %1911 = vmatprep.subr.bf16.mxu0 %v1346
  %1912 = vmatpush1.bf16.msra.mxu0 %v1345
  %1913 = vmatprep.subr.bf16.mxu0 %v1348
  %1914 = vmatpush1.bf16.msra.mxu0 %v1347
  %1915 = vmatprep.subr.bf16.mxu0 %v1350
  %1916 = vmatpush1.bf16.msra.mxu0 %v1349
  %1917 = vmatprep.subr.bf16.mxu0 %v1352
  %1918 = vmatpush1.bf16.msra.mxu0 %v1351
  %1919 = vmatprep.subr.bf16.mxu0 %v1354
  %1920 = vmatpush1.bf16.msra.mxu0 %v1353
  %1921 = vmatprep.mubr.bf16.mxu0 %v344
  %1922 = vmatmul.mubr.bf16.gmra.mrb[0].mxu0 %v343
  %v1923 = vpop.f32.mrb[0].mxu0
  %v1924 = vadd.f32 %v1883, %v1923
  %v1925 = vpop.f32.mrb[0].mxu0
  %v1926 = vadd.f32 %v1885, %v1925
  %v1927 = vpop.f32.mrb[0].mxu0
  %v1928 = vpop.f32.mrb[0].mxu0
  %1929 = vdwg.mxu0
  %1930 = vmatprep.subr.bf16.mxu0 %v1356
  %1931 = vmatpush1.bf16.msra.mxu0 %v1355
  %1932 = vmatprep.subr.bf16.mxu0 %v1358
  %1933 = vmatpush1.bf16.msra.mxu0 %v1357
  %1934 = vmatprep.subr.bf16.mxu0 %v1360
  %1935 = vmatpush1.bf16.msra.mxu0 %v1359
  %1936 = vmatprep.subr.bf16.mxu0 %v1362
  %1937 = vmatpush1.bf16.msra.mxu0 %v1361
  %1938 = vmatprep.subr.bf16.mxu0 %v1364
  %1939 = vmatpush1.bf16.msra.mxu0 %v1363
  %1940 = vmatprep.subr.bf16.mxu0 %v1366
  %1941 = vmatpush1.bf16.msra.mxu0 %v1365
  %1942 = vmatprep.subr.bf16.mxu0 %v1368
  %1943 = vmatpush1.bf16.msra.mxu0 %v1367
  %1944 = vmatprep.subr.bf16.mxu0 %v1370
  %1945 = vmatpush1.bf16.msra.mxu0 %v1369
  %1946 = vmatprep.subr.bf16.mxu0 %v1372
  %1947 = vmatpush1.bf16.msra.mxu0 %v1371
  %1948 = vmatprep.subr.bf16.mxu0 %v1374
  %1949 = vmatpush1.bf16.msra.mxu0 %v1373
  %1950 = vmatprep.subr.bf16.mxu0 %v1376
  %1951 = vmatpush1.bf16.msra.mxu0 %v1375
  %1952 = vmatprep.subr.bf16.mxu0 %v1378
  %1953 = vmatpush1.bf16.msra.mxu0 %v1377
  %1954 = vmatprep.subr.bf16.mxu0 %v1380
  %1955 = vmatpush1.bf16.msra.mxu0 %v1379
  %1956 = vmatprep.subr.bf16.mxu0 %v1382
  %1957 = vmatpush1.bf16.msra.mxu0 %v1381
  %1958 = vmatprep.subr.bf16.mxu0 %v1384
  %1959 = vmatpush1.bf16.msra.mxu0 %v1383
  %1960 = vmatprep.subr.bf16.mxu0 %v1386
  %1961 = vmatpush1.bf16.msra.mxu0 %v1385
  %1962 = vmatprep.mubr.bf16.mxu0 %v346
  %1963 = vmatmul.mubr.bf16.gmra.mrb[0].mxu0 %v345
  %v1964 = vpop.f32.mrb[0].mxu0
  %v1965 = vadd.f32 %v1924, %v1964
  %v1966 = vpop.f32.mrb[0].mxu0
  %v1967 = vadd.f32 %v1926, %v1966
  %v1968 = vpop.f32.mrb[0].mxu0
  %v1969 = vpop.f32.mrb[0].mxu0
  %1970 = vdwg.mxu0
  %v1971 = vrot.slane %v1965, 4
  %v1972 = vadd.f32 %v1965, %v1971
  %v1973 = vrot.slane %v1972, 2
  %v1974 = vadd.f32 %v1972, %v1973
  %v1975 = vrot.slane %v1974, 1
  %v1976 = vadd.f32 %v1974, %v1975
  %v1977 = vrot.slane %v1967, 4
  %v1978 = vadd.f32 %v1967, %v1977
  %v1979 = vrot.slane %v1978, 2
  %v1980 = vadd.f32 %v1978, %v1979
  %v1981 = vrot.slane %v1980, 1
  %v1982 = vadd.f32 %v1980, %v1981
  %v1983 = vmul.f32 %v1976, 0.125
  %v1984 = vmul.f32 %v1982, 0.125
  %v1985 = vmul.f32 %v1965, %v1965
  %v1986 = vmul.f32 %v1967, %v1967
  %v1987 = vrot.slane %v1985, 4
  %v1988 = vadd.f32 %v1985, %v1987
  %v1989 = vrot.slane %v1988, 2
  %v1990 = vadd.f32 %v1988, %v1989
  %v1991 = vrot.slane %v1990, 1
  %v1992 = vadd.f32 %v1990, %v1991
  %v1993 = vrot.slane %v1986, 4
  %v1994 = vadd.f32 %v1986, %v1993
  %v1995 = vrot.slane %v1994, 2
  %v1996 = vadd.f32 %v1994, %v1995
  %v1997 = vrot.slane %v1996, 1
  %v1998 = vadd.f32 %v1996, %v1997
  %v1999 = vmul.f32 %v1992, 0.125
  %v2000 = vmul.f32 %v1998, 0.125
  %v2001 = vmul.f32 %v1983, %v1983
  %v2002 = vmul.f32 %v1984, %v1984
  %v2003 = vsub.f32 %v1999, %v2001
  %v2004 = vsub.f32 %v2000, %v2002
  %v2005 = vld [vmem:[%s3] sm:$0x3]
  %v2006 = vadd.f32 %v2003, 1e-05
  %v2007 = vadd.f32 %v2004, 1e-05
  %v2008 = vrsqrt.pop %v2006
  %v2009 = vrsqrt.pop %v2007
  %v2012 = vcombine.low %v2008, %v2009
  %v2014 = vunpack.c.l.s4 1966171168
  %v2015 = vunpack.c.0.s8 %v2014
  %v2016 = vlaneseq
  %v2017 = vshrl.u32 %v2016, 7
  %v2018 = vsub.s32 %v2015, %v2017
  %v2019 = vrot.slane %v2012, %v2018
  %v2021 = vunpack.c.l.s4 1966171168
  %v2022 = vunpack.c.0.s8 %v2021
  %v2023 = vlaneseq
  %v2024 = vshrl.u32 %v2023, 7
  %v2025 = vsub.s32 %v2022, %v2024
  %v2026 = vrot.slane %v2019, %v2025
  %v2028 = vmul.f32 %v2005, %v2026
  %v2029 = vld [vmem:[%s4] sm:$0x3]
  %v2031 = vlaneseq
  %v2032 = vshrl.u32 %v2031, 7
  %v2033 = vsub.s32 0, %v2032
  %v2034 = vrot.slane %v2028, %v2033
  %v2035 = vlaneseq
  %v2036 = vshrl.u32 %v2035, 7
  %v2037 = vsub.s32 1, %v2036
  %v2038 = vrot.slane %v2028, %v2037
  %v2041 = vmul.f32 %v1983, %v2034
  %v2042 = vmul.f32 %v1984, %v2038
  %v2045 = vcombine.low %v2041, %v2042
  %v2047 = vunpack.c.l.s4 1966171168
  %v2048 = vunpack.c.0.s8 %v2047
  %v2049 = vlaneseq
  %v2050 = vshrl.u32 %v2049, 7
  %v2051 = vsub.s32 %v2048, %v2050
  %v2052 = vrot.slane %v2045, %v2051
  %v2054 = vunpack.c.l.s4 1966171168
  %v2055 = vunpack.c.0.s8 %v2054
  %v2056 = vlaneseq
  %v2057 = vshrl.u32 %v2056, 7
  %v2058 = vsub.s32 %v2055, %v2057
  %v2059 = vrot.slane %v2052, %v2058
  %v2061 = vsub.f32 %v2029, %v2059
  %v2062 = vmul.f32 %v1965, %v2034
  %v2063 = vmul.f32 %v1967, %v2038
  %v2065 = vlaneseq
  %v2066 = vshrl.u32 %v2065, 7
  %v2067 = vsub.s32 0, %v2066
  %v2068 = vrot.slane %v2061, %v2067
  %v2069 = vlaneseq
  %v2070 = vshrl.u32 %v2069, 7
  %v2071 = vsub.s32 1, %v2070
  %v2072 = vrot.slane %v2061, %v2071
  %v2075 = vadd.f32 %v2062, %v2068
  %v2076 = vadd.f32 %v2063, %v2072
  %vm2077 = vcmp.ge.f32.partialorder %v2075, 0.0
  %vm2078 = vcmp.ge.f32.partialorder %v2076, 0.0
  %v2079 = vmul.f32 %v2075, 0.1
  %v2080 = vmul.f32 %v2076, 0.1
  %v2081 = vsel %vm2077, %v2075, %v2079
  %v2082 = vsel %vm2078, %v2076, %v2080
  %v2083 = vld [vmem:[%s5] sm:$0xff]
  %v2084 = vld [vmem:[%s5 + $0x8] sm:$0xff]
  %v2085 = vmul.f32 %v2081, %v2083
  %v2086 = vmul.f32 %v2082, %v2084
  %v2087 = vld [vmem:[%s6] sm:$0x3]
  %vm2088 = vcmask 64512
  %v2090 = vsel %vm2088, %v2087, 0
  %v2092 = vand.u32 %v2086, 4294901760
  %2093 = vmatprep.subr.mxu0 %v2092
  %v2094 = vand.u32 %v2085, 4294901760
  %2095 = vmatpush1.msra.mxu0 %v2094
  %2096 = vmatprep.subr.mxu0 0.0
  %2097 = vmatpush1.msra.mxu0 0.0
  %2098 = vmatprep.subr.mxu0 0.0
  %2099 = vmatpush1.msra.mxu0 0.0
  %2100 = vmatprep.subr.mxu0 0.0
  %2101 = vmatpush1.msra.mxu0 0.0
  %2102 = vmatprep.subr.mxu0 0.0
  %2103 = vmatpush1.msra.mxu0 0.0
  %2104 = vmatprep.subr.mxu0 0.0
  %2105 = vmatpush1.msra.mxu0 0.0
  %2106 = vmatprep.subr.mxu0 0.0
  %2107 = vmatpush1.msra.mxu0 0.0
  %2108 = vmatprep.subr.mxu0 0.0
  %2109 = vmatpush1.msra.mxu0 0.0
  %2110 = vmatprep.subr.mxu0 0.0
  %2111 = vmatpush1.msra.mxu0 0.0
  %2112 = vmatprep.subr.mxu0 0.0
  %2113 = vmatpush1.msra.mxu0 0.0
  %2114 = vmatprep.subr.mxu0 0.0
  %2115 = vmatpush1.msra.mxu0 0.0
  %2116 = vmatprep.subr.mxu0 0.0
  %2117 = vmatpush1.msra.mxu0 0.0
  %2118 = vmatprep.subr.mxu0 0.0
  %2119 = vmatpush1.msra.mxu0 0.0
  %2120 = vmatprep.subr.mxu0 0.0
  %2121 = vmatpush1.msra.mxu0 0.0
  %2122 = vmatprep.subr.mxu0 0.0
  %2123 = vmatpush1.msra.mxu0 0.0
  %2124 = vmatprep.subr.mxu0 0.0
  %2125 = vmatpush1.msra.mxu0 0.0
  %2126 = vmatprep.subr.mxu0 0.0
  %2127 = vmatpush1.msra.mxu0 0.0
  %2128 = vmatprep.subr.mxu0 0.0
  %2129 = vmatpush1.msra.mxu0 0.0
  %2130 = vmatprep.subr.mxu0 0.0
  %2131 = vmatpush1.msra.mxu0 0.0
  %2132 = vmatprep.subr.mxu0 0.0
  %2133 = vmatpush1.msra.mxu0 0.0
  %2134 = vmatprep.subr.mxu0 0.0
  %2135 = vmatpush1.msra.mxu0 0.0
  %2136 = vmatprep.subr.mxu0 0.0
  %2137 = vmatpush1.msra.mxu0 0.0
  %2138 = vmatprep.subr.mxu0 0.0
  %2139 = vmatpush1.msra.mxu0 0.0
  %2140 = vmatprep.subr.mxu0 0.0
  %2141 = vmatpush1.msra.mxu0 0.0
  %2142 = vmatprep.subr.mxu0 0.0
  %2143 = vmatpush1.msra.mxu0 0.0
  %2144 = vmatprep.subr.mxu0 0.0
  %2145 = vmatpush1.msra.mxu0 0.0
  %2146 = vmatprep.subr.mxu0 0.0
  %2147 = vmatpush1.msra.mxu0 0.0
  %2148 = vmatprep.subr.mxu0 0.0
  %2149 = vmatpush1.msra.mxu0 0.0
  %2150 = vmatprep.subr.mxu0 0.0
  %2151 = vmatpush1.msra.mxu0 0.0
  %2152 = vmatprep.subr.mxu0 0.0
  %2153 = vmatpush1.msra.mxu0 0.0
  %2154 = vmatprep.subr.mxu0 0.0
  %2155 = vmatpush1.msra.mxu0 0.0
  %2156 = vmatprep.subr.mxu0 0.0
  %2157 = vmatpush1.msra.mxu0 0.0
  %2158 = vmatprep.mubr.f32.mxu0 0.0
  %v2159 = vand.u32 %v2090, 4294901760
  %v2160 = vsub.f32 %v2090, %v2159
  %v2161 = vand.u32 %v2160, 4294901760
  %v2162 = vsub.f32 %v2160, %v2161
  %v2163 = vand.u32 %v2162, 4294901760
  %2164 = vmatmul.mubr.f32.gmra.mrb[0].mxu0 %v2163
  %v2165 = vpop.f32.mrb[0].mxu0
  %v2166 = vadd.f32 0.0, %v2165
  %v2167 = vpop.f32.mrb[0].mxu0
  %v2168 = vadd.f32 0.0, %v2167
  %2169 = vdwg.mxu0
  %v2170 = vand.u32 %v2086, 4294901760
  %v2171 = vsub.f32 %v2086, %v2170
  %v2172 = vand.u32 %v2171, 4294901760
  %v2173 = vsub.f32 %v2171, %v2172
  %v2174 = vand.u32 %v2173, 4294901760
  %2175 = vmatprep.subr.mxu0 %v2174
  %v2176 = vand.u32 %v2085, 4294901760
  %v2177 = vsub.f32 %v2085, %v2176
  %v2178 = vand.u32 %v2177, 4294901760
  %v2179 = vsub.f32 %v2177, %v2178
  %v2180 = vand.u32 %v2179, 4294901760
  %2181 = vmatpush1.msra.mxu0 %v2180
  %2182 = vmatprep.subr.mxu0 0.0
  %2183 = vmatpush1.msra.mxu0 0.0
  %2184 = vmatprep.subr.mxu0 0.0
  %2185 = vmatpush1.msra.mxu0 0.0
  %2186 = vmatprep.subr.mxu0 0.0
  %2187 = vmatpush1.msra.mxu0 0.0
  %2188 = vmatprep.subr.mxu0 0.0
  %2189 = vmatpush1.msra.mxu0 0.0
  %2190 = vmatprep.subr.mxu0 0.0
  %2191 = vmatpush1.msra.mxu0 0.0
  %2192 = vmatprep.subr.mxu0 0.0
  %2193 = vmatpush1.msra.mxu0 0.0
  %2194 = vmatprep.subr.mxu0 0.0
  %2195 = vmatpush1.msra.mxu0 0.0
  %2196 = vmatprep.subr.mxu0 0.0
  %2197 = vmatpush1.msra.mxu0 0.0
  %2198 = vmatprep.subr.mxu0 0.0
  %2199 = vmatpush1.msra.mxu0 0.0
  %2200 = vmatprep.subr.mxu0 0.0
  %2201 = vmatpush1.msra.mxu0 0.0
  %2202 = vmatprep.subr.mxu0 0.0
  %2203 = vmatpush1.msra.mxu0 0.0
  %2204 = vmatprep.subr.mxu0 0.0
  %2205 = vmatpush1.msra.mxu0 0.0
  %2206 = vmatprep.subr.mxu0 0.0
  %2207 = vmatpush1.msra.mxu0 0.0
  %2208 = vmatprep.subr.mxu0 0.0
  %2209 = vmatpush1.msra.mxu0 0.0
  %2210 = vmatprep.subr.mxu0 0.0
  %2211 = vmatpush1.msra.mxu0 0.0
  %2212 = vmatprep.subr.mxu0 0.0
  %2213 = vmatpush1.msra.mxu0 0.0
  %2214 = vmatprep.subr.mxu0 0.0
  %2215 = vmatpush1.msra.mxu0 0.0
  %2216 = vmatprep.subr.mxu0 0.0
  %2217 = vmatpush1.msra.mxu0 0.0
  %2218 = vmatprep.subr.mxu0 0.0
  %2219 = vmatpush1.msra.mxu0 0.0
  %2220 = vmatprep.subr.mxu0 0.0
  %2221 = vmatpush1.msra.mxu0 0.0
  %2222 = vmatprep.subr.mxu0 0.0
  %2223 = vmatpush1.msra.mxu0 0.0
  %2224 = vmatprep.subr.mxu0 0.0
  %2225 = vmatpush1.msra.mxu0 0.0
  %2226 = vmatprep.subr.mxu0 0.0
  %2227 = vmatpush1.msra.mxu0 0.0
  %2228 = vmatprep.subr.mxu0 0.0
  %2229 = vmatpush1.msra.mxu0 0.0
  %2230 = vmatprep.subr.mxu0 0.0
  %2231 = vmatpush1.msra.mxu0 0.0
  %2232 = vmatprep.subr.mxu0 0.0
  %2233 = vmatpush1.msra.mxu0 0.0
  %2234 = vmatprep.subr.mxu0 0.0
  %2235 = vmatpush1.msra.mxu0 0.0
  %2236 = vmatprep.subr.mxu0 0.0
  %2237 = vmatpush1.msra.mxu0 0.0
  %2238 = vmatprep.subr.mxu0 0.0
  %2239 = vmatpush1.msra.mxu0 0.0
  %2240 = vmatprep.subr.mxu0 0.0
  %2241 = vmatpush1.msra.mxu0 0.0
  %2242 = vmatprep.subr.mxu0 0.0
  %2243 = vmatpush1.msra.mxu0 0.0
  %2244 = vmatprep.mubr.f32.mxu0 0.0
  %v2245 = vand.u32 %v2090, 4294901760
  %2246 = vmatmul.mubr.f32.gmra.mrb[0].mxu0 %v2245
  %v2247 = vpop.f32.mrb[0].mxu0
  %v2248 = vadd.f32 %v2166, %v2247
  %v2249 = vpop.f32.mrb[0].mxu0
  %v2250 = vadd.f32 %v2168, %v2249
  %2251 = vdwg.mxu0
  %v2252 = vand.u32 %v2086, 4294901760
  %v2253 = vsub.f32 %v2086, %v2252
  %2254 = vmatprep.subr.mxu0 %v2253
  %v2255 = vand.u32 %v2085, 4294901760
  %v2256 = vsub.f32 %v2085, %v2255
  %2257 = vmatpush1.msra.mxu0 %v2256
  %2258 = vmatprep.subr.mxu0 0.0
  %2259 = vmatpush1.msra.mxu0 0.0
  %2260 = vmatprep.subr.mxu0 0.0
  %2261 = vmatpush1.msra.mxu0 0.0
  %2262 = vmatprep.subr.mxu0 0.0
  %2263 = vmatpush1.msra.mxu0 0.0
  %2264 = vmatprep.subr.mxu0 0.0
  %2265 = vmatpush1.msra.mxu0 0.0
  %2266 = vmatprep.subr.mxu0 0.0
  %2267 = vmatpush1.msra.mxu0 0.0
  %2268 = vmatprep.subr.mxu0 0.0
  %2269 = vmatpush1.msra.mxu0 0.0
  %2270 = vmatprep.subr.mxu0 0.0
  %2271 = vmatpush1.msra.mxu0 0.0
  %2272 = vmatprep.subr.mxu0 0.0
  %2273 = vmatpush1.msra.mxu0 0.0
  %2274 = vmatprep.subr.mxu0 0.0
  %2275 = vmatpush1.msra.mxu0 0.0
  %2276 = vmatprep.subr.mxu0 0.0
  %2277 = vmatpush1.msra.mxu0 0.0
  %2278 = vmatprep.subr.mxu0 0.0
  %2279 = vmatpush1.msra.mxu0 0.0
  %2280 = vmatprep.subr.mxu0 0.0
  %2281 = vmatpush1.msra.mxu0 0.0
  %2282 = vmatprep.subr.mxu0 0.0
  %2283 = vmatpush1.msra.mxu0 0.0
  %2284 = vmatprep.subr.mxu0 0.0
  %2285 = vmatpush1.msra.mxu0 0.0
  %2286 = vmatprep.subr.mxu0 0.0
  %2287 = vmatpush1.msra.mxu0 0.0
  %2288 = vmatprep.subr.mxu0 0.0
  %2289 = vmatpush1.msra.mxu0 0.0
  %2290 = vmatprep.subr.mxu0 0.0
  %2291 = vmatpush1.msra.mxu0 0.0
  %2292 = vmatprep.subr.mxu0 0.0
  %2293 = vmatpush1.msra.mxu0 0.0
  %2294 = vmatprep.subr.mxu0 0.0
  %2295 = vmatpush1.msra.mxu0 0.0
  %2296 = vmatprep.subr.mxu0 0.0
  %2297 = vmatpush1.msra.mxu0 0.0
  %2298 = vmatprep.subr.mxu0 0.0
  %2299 = vmatpush1.msra.mxu0 0.0
  %2300 = vmatprep.subr.mxu0 0.0
  %2301 = vmatpush1.msra.mxu0 0.0
  %2302 = vmatprep.subr.mxu0 0.0
  %2303 = vmatpush1.msra.mxu0 0.0
  %2304 = vmatprep.subr.mxu0 0.0
  %2305 = vmatpush1.msra.mxu0 0.0
  %2306 = vmatprep.subr.mxu0 0.0
  %2307 = vmatpush1.msra.mxu0 0.0
  %2308 = vmatprep.subr.mxu0 0.0
  %2309 = vmatpush1.msra.mxu0 0.0
  %2310 = vmatprep.subr.mxu0 0.0
  %2311 = vmatpush1.msra.mxu0 0.0
  %2312 = vmatprep.subr.mxu0 0.0
  %2313 = vmatpush1.msra.mxu0 0.0
  %2314 = vmatprep.subr.mxu0 0.0
  %2315 = vmatpush1.msra.mxu0 0.0
  %2316 = vmatprep.subr.mxu0 0.0
  %2317 = vmatpush1.msra.mxu0 0.0
  %2318 = vmatprep.subr.mxu0 0.0
  %2319 = vmatpush1.msra.mxu0 0.0
  %2320 = vmatprep.mubr.f32.mxu0 0.0
  %v2321 = vand.u32 %v2090, 4294901760
  %v2322 = vsub.f32 %v2090, %v2321
  %2323 = vmatmul.mubr.f32.gmra.mrb[0].mxu0 %v2322
  %v2324 = vpop.f32.mrb[0].mxu0
  %v2325 = vadd.f32 %v2248, %v2324
  %v2326 = vpop.f32.mrb[0].mxu0
  %v2327 = vadd.f32 %v2250, %v2326
  %2328 = vdwg.mxu0
  %v2329 = vand.u32 %v2086, 4294901760
  %2330 = vmatprep.subr.mxu0 %v2329
  %v2331 = vand.u32 %v2085, 4294901760
  %2332 = vmatpush1.msra.mxu0 %v2331
  %2333 = vmatprep.subr.mxu0 0.0
  %2334 = vmatpush1.msra.mxu0 0.0
  %2335 = vmatprep.subr.mxu0 0.0
  %2336 = vmatpush1.msra.mxu0 0.0
  %2337 = vmatprep.subr.mxu0 0.0
  %2338 = vmatpush1.msra.mxu0 0.0
  %2339 = vmatprep.subr.mxu0 0.0
  %2340 = vmatpush1.msra.mxu0 0.0
  %2341 = vmatprep.subr.mxu0 0.0
  %2342 = vmatpush1.msra.mxu0 0.0
  %2343 = vmatprep.subr.mxu0 0.0
  %2344 = vmatpush1.msra.mxu0 0.0
  %2345 = vmatprep.subr.mxu0 0.0
  %2346 = vmatpush1.msra.mxu0 0.0
  %2347 = vmatprep.subr.mxu0 0.0
  %2348 = vmatpush1.msra.mxu0 0.0
  %2349 = vmatprep.subr.mxu0 0.0
  %2350 = vmatpush1.msra.mxu0 0.0
  %2351 = vmatprep.subr.mxu0 0.0
  %2352 = vmatpush1.msra.mxu0 0.0
  %2353 = vmatprep.subr.mxu0 0.0
  %2354 = vmatpush1.msra.mxu0 0.0
  %2355 = vmatprep.subr.mxu0 0.0
  %2356 = vmatpush1.msra.mxu0 0.0
  %2357 = vmatprep.subr.mxu0 0.0
  %2358 = vmatpush1.msra.mxu0 0.0
  %2359 = vmatprep.subr.mxu0 0.0
  %2360 = vmatpush1.msra.mxu0 0.0
  %2361 = vmatprep.subr.mxu0 0.0
  %2362 = vmatpush1.msra.mxu0 0.0
  %2363 = vmatprep.subr.mxu0 0.0
  %2364 = vmatpush1.msra.mxu0 0.0
  %2365 = vmatprep.subr.mxu0 0.0
  %2366 = vmatpush1.msra.mxu0 0.0
  %2367 = vmatprep.subr.mxu0 0.0
  %2368 = vmatpush1.msra.mxu0 0.0
  %2369 = vmatprep.subr.mxu0 0.0
  %2370 = vmatpush1.msra.mxu0 0.0
  %2371 = vmatprep.subr.mxu0 0.0
  %2372 = vmatpush1.msra.mxu0 0.0
  %2373 = vmatprep.subr.mxu0 0.0
  %2374 = vmatpush1.msra.mxu0 0.0
  %2375 = vmatprep.subr.mxu0 0.0
  %2376 = vmatpush1.msra.mxu0 0.0
  %2377 = vmatprep.subr.mxu0 0.0
  %2378 = vmatpush1.msra.mxu0 0.0
  %2379 = vmatprep.subr.mxu0 0.0
  %2380 = vmatpush1.msra.mxu0 0.0
  %2381 = vmatprep.subr.mxu0 0.0
  %2382 = vmatpush1.msra.mxu0 0.0
  %2383 = vmatprep.subr.mxu0 0.0
  %2384 = vmatpush1.msra.mxu0 0.0
  %2385 = vmatprep.subr.mxu0 0.0
  %2386 = vmatpush1.msra.mxu0 0.0
  %2387 = vmatprep.subr.mxu0 0.0
  %2388 = vmatpush1.msra.mxu0 0.0
  %2389 = vmatprep.subr.mxu0 0.0
  %2390 = vmatpush1.msra.mxu0 0.0
  %2391 = vmatprep.subr.mxu0 0.0
  %2392 = vmatpush1.msra.mxu0 0.0
  %2393 = vmatprep.subr.mxu0 0.0
  %2394 = vmatpush1.msra.mxu0 0.0
  %2395 = vmatprep.mubr.f32.mxu0 0.0
  %v2396 = vand.u32 %v2090, 4294901760
  %v2397 = vsub.f32 %v2090, %v2396
  %v2398 = vand.u32 %v2397, 4294901760
  %2399 = vmatmul.mubr.f32.gmra.mrb[0].mxu0 %v2398
  %v2400 = vpop.f32.mrb[0].mxu0
  %v2401 = vadd.f32 %v2325, %v2400
  %v2402 = vpop.f32.mrb[0].mxu0
  %v2403 = vadd.f32 %v2327, %v2402
  %2404 = vdwg.mxu0
  %v2405 = vand.u32 %v2086, 4294901760
  %v2406 = vsub.f32 %v2086, %v2405
  %v2407 = vand.u32 %v2406, 4294901760
  %2408 = vmatprep.subr.mxu0 %v2407
  %v2409 = vand.u32 %v2085, 4294901760
  %v2410 = vsub.f32 %v2085, %v2409
  %v2411 = vand.u32 %v2410, 4294901760
  %2412 = vmatpush1.msra.mxu0 %v2411
  %2413 = vmatprep.subr.mxu0 0.0
  %2414 = vmatpush1.msra.mxu0 0.0
  %2415 = vmatprep.subr.mxu0 0.0
  %2416 = vmatpush1.msra.mxu0 0.0
  %2417 = vmatprep.subr.mxu0 0.0
  %2418 = vmatpush1.msra.mxu0 0.0
  %2419 = vmatprep.subr.mxu0 0.0
  %2420 = vmatpush1.msra.mxu0 0.0
  %2421 = vmatprep.subr.mxu0 0.0
  %2422 = vmatpush1.msra.mxu0 0.0
  %2423 = vmatprep.subr.mxu0 0.0
  %2424 = vmatpush1.msra.mxu0 0.0
  %2425 = vmatprep.subr.mxu0 0.0
  %2426 = vmatpush1.msra.mxu0 0.0
  %2427 = vmatprep.subr.mxu0 0.0
  %2428 = vmatpush1.msra.mxu0 0.0
  %2429 = vmatprep.subr.mxu0 0.0
  %2430 = vmatpush1.msra.mxu0 0.0
  %2431 = vmatprep.subr.mxu0 0.0
  %2432 = vmatpush1.msra.mxu0 0.0
  %2433 = vmatprep.subr.mxu0 0.0
  %2434 = vmatpush1.msra.mxu0 0.0
  %2435 = vmatprep.subr.mxu0 0.0
  %2436 = vmatpush1.msra.mxu0 0.0
  %2437 = vmatprep.subr.mxu0 0.0
  %2438 = vmatpush1.msra.mxu0 0.0
  %2439 = vmatprep.subr.mxu0 0.0
  %2440 = vmatpush1.msra.mxu0 0.0
  %2441 = vmatprep.subr.mxu0 0.0
  %2442 = vmatpush1.msra.mxu0 0.0
  %2443 = vmatprep.subr.mxu0 0.0
  %2444 = vmatpush1.msra.mxu0 0.0
  %2445 = vmatprep.subr.mxu0 0.0
  %2446 = vmatpush1.msra.mxu0 0.0
  %2447 = vmatprep.subr.mxu0 0.0
  %2448 = vmatpush1.msra.mxu0 0.0
  %2449 = vmatprep.subr.mxu0 0.0
  %2450 = vmatpush1.msra.mxu0 0.0
  %2451 = vmatprep.subr.mxu0 0.0
  %2452 = vmatpush1.msra.mxu0 0.0
  %2453 = vmatprep.subr.mxu0 0.0
  %2454 = vmatpush1.msra.mxu0 0.0
  %2455 = vmatprep.subr.mxu0 0.0
  %2456 = vmatpush1.msra.mxu0 0.0
  %2457 = vmatprep.subr.mxu0 0.0
  %2458 = vmatpush1.msra.mxu0 0.0
  %2459 = vmatprep.subr.mxu0 0.0
  %2460 = vmatpush1.msra.mxu0 0.0
  %2461 = vmatprep.subr.mxu0 0.0
  %2462 = vmatpush1.msra.mxu0 0.0
  %2463 = vmatprep.subr.mxu0 0.0
  %2464 = vmatpush1.msra.mxu0 0.0
  %2465 = vmatprep.subr.mxu0 0.0
  %2466 = vmatpush1.msra.mxu0 0.0
  %2467 = vmatprep.subr.mxu0 0.0
  %2468 = vmatpush1.msra.mxu0 0.0
  %2469 = vmatprep.subr.mxu0 0.0
  %2470 = vmatpush1.msra.mxu0 0.0
  %2471 = vmatprep.subr.mxu0 0.0
  %2472 = vmatpush1.msra.mxu0 0.0
  %2473 = vmatprep.subr.mxu0 0.0
  %2474 = vmatpush1.msra.mxu0 0.0
  %2475 = vmatprep.mubr.f32.mxu0 0.0
  %v2476 = vand.u32 %v2090, 4294901760
  %2477 = vmatmul.mubr.f32.gmra.mrb[0].mxu0 %v2476
  %v2478 = vpop.f32.mrb[0].mxu0
  %v2479 = vadd.f32 %v2401, %v2478
  %v2480 = vpop.f32.mrb[0].mxu0
  %v2481 = vadd.f32 %v2403, %v2480
  %2482 = vdwg.mxu0
  %v2483 = vand.u32 %v2086, 4294901760
  %2484 = vmatprep.subr.mxu0 %v2483
  %v2485 = vand.u32 %v2085, 4294901760
  %2486 = vmatpush1.msra.mxu0 %v2485
  %2487 = vmatprep.subr.mxu0 0.0
  %2488 = vmatpush1.msra.mxu0 0.0
  %2489 = vmatprep.subr.mxu0 0.0
  %2490 = vmatpush1.msra.mxu0 0.0
  %2491 = vmatprep.subr.mxu0 0.0
  %2492 = vmatpush1.msra.mxu0 0.0
  %2493 = vmatprep.subr.mxu0 0.0
  %2494 = vmatpush1.msra.mxu0 0.0
  %2495 = vmatprep.subr.mxu0 0.0
  %2496 = vmatpush1.msra.mxu0 0.0
  %2497 = vmatprep.subr.mxu0 0.0
  %2498 = vmatpush1.msra.mxu0 0.0
  %2499 = vmatprep.subr.mxu0 0.0
  %2500 = vmatpush1.msra.mxu0 0.0
  %2501 = vmatprep.subr.mxu0 0.0
  %2502 = vmatpush1.msra.mxu0 0.0
  %2503 = vmatprep.subr.mxu0 0.0
  %2504 = vmatpush1.msra.mxu0 0.0
  %2505 = vmatprep.subr.mxu0 0.0
  %2506 = vmatpush1.msra.mxu0 0.0
  %2507 = vmatprep.subr.mxu0 0.0
  %2508 = vmatpush1.msra.mxu0 0.0
  %2509 = vmatprep.subr.mxu0 0.0
  %2510 = vmatpush1.msra.mxu0 0.0
  %2511 = vmatprep.subr.mxu0 0.0
  %2512 = vmatpush1.msra.mxu0 0.0
  %2513 = vmatprep.subr.mxu0 0.0
  %2514 = vmatpush1.msra.mxu0 0.0
  %2515 = vmatprep.subr.mxu0 0.0
  %2516 = vmatpush1.msra.mxu0 0.0
  %2517 = vmatprep.subr.mxu0 0.0
  %2518 = vmatpush1.msra.mxu0 0.0
  %2519 = vmatprep.subr.mxu0 0.0
  %2520 = vmatpush1.msra.mxu0 0.0
  %2521 = vmatprep.subr.mxu0 0.0
  %2522 = vmatpush1.msra.mxu0 0.0
  %2523 = vmatprep.subr.mxu0 0.0
  %2524 = vmatpush1.msra.mxu0 0.0
  %2525 = vmatprep.subr.mxu0 0.0
  %2526 = vmatpush1.msra.mxu0 0.0
  %2527 = vmatprep.subr.mxu0 0.0
  %2528 = vmatpush1.msra.mxu0 0.0
  %2529 = vmatprep.subr.mxu0 0.0
  %2530 = vmatpush1.msra.mxu0 0.0
  %2531 = vmatprep.subr.mxu0 0.0
  %2532 = vmatpush1.msra.mxu0 0.0
  %2533 = vmatprep.subr.mxu0 0.0
  %2534 = vmatpush1.msra.mxu0 0.0
  %2535 = vmatprep.subr.mxu0 0.0
  %2536 = vmatpush1.msra.mxu0 0.0
  %2537 = vmatprep.subr.mxu0 0.0
  %2538 = vmatpush1.msra.mxu0 0.0
  %2539 = vmatprep.subr.mxu0 0.0
  %2540 = vmatpush1.msra.mxu0 0.0
  %2541 = vmatprep.subr.mxu0 0.0
  %2542 = vmatpush1.msra.mxu0 0.0
  %2543 = vmatprep.subr.mxu0 0.0
  %2544 = vmatpush1.msra.mxu0 0.0
  %2545 = vmatprep.subr.mxu0 0.0
  %2546 = vmatpush1.msra.mxu0 0.0
  %2547 = vmatprep.subr.mxu0 0.0
  %2548 = vmatpush1.msra.mxu0 0.0
  %2549 = vmatprep.mubr.f32.mxu0 0.0
  %v2550 = vand.u32 %v2090, 4294901760
  %2551 = vmatmul.mubr.f32.gmra.mrb[0].mxu0 %v2550
  %v2552 = vpop.f32.mrb[0].mxu0
  %v2553 = vadd.f32 %v2479, %v2552
  %v2554 = vpop.f32.mrb[0].mxu0
  %v2555 = vadd.f32 %v2481, %v2554
  %2556 = vdwg.mxu0
  %vm2557 = vcmask 1041408
  %v2558 = vsel %vm2557, %v2553, 0.0
  %v2559 = vsel %vm2557, %v2555, 0.0
  %v2560 = vadd.f32 %v2558, %v2559
  %2561 = vadd.xlane.f32.xlu0 %v2560
  %v2562 = vpop.xlane.xlu0 %2561
  %v2563 = vld [vmem:[#allocation2] sm:$0x1]
  %v2565 = vlaneseq
  %v2566 = vshrl.u32 %v2565, 7
  %v2567 = vsub.s32 0, %v2566
  %v2568 = vrot.slane %v2563, %v2567
  %v2570 = vadd.f32 %v2562, %v2568
  %v2571 = vxor.u32 %v2570, 2147483648
  %v2572 = vmul.f32 %v2571, 1.442695
  %v2573 = vpow.pop %v2572
  %v2574 = vadd.f32 %v2573, 1.0
  %v2575 = vrcp.pop %v2574
  %v2576 = vmul.f32 1.0, %v2575
  %vm2577 = vcmask 1024
  %2578 = vst.msk [vmem:[%s8] sm:$0x3] %vm2577, %v2576
  // Predicated region
  $region34: #{discriminator_forward.9} parent=0 // pred_check
    _
  $region35: #{discriminator_forward.9} parent=0 // pred_check_branch
    %2580 = sbr.rel (0) target = $region37
  $region36: #{discriminator_forward.9} parent=0 // pred_region
    _
  $region37: #{discriminator_forward.9} parent=0 // pred_fallthru
    _
  // Predicated region
  $region38: #{discriminator_forward.9} parent=0 // pred_check
    _
  $region39: #{discriminator_forward.9} parent=0 // pred_check_branch
    %2582 = sbr.rel (0) target = $region41
  $region40: #{discriminator_forward.9} parent=0 // pred_region
    _
  $region41: #{discriminator_forward.9} parent=0 // pred_fallthru
    _

</llo_original>
